<compile_context>
chip_gen: v7x
topology: tpu7x:2x2x1
jax: 0.10.0
libtpu: 0.0.40
codegen_flags: <defaults>
</compile_context>

<pallas_src>
import functools

import jax
import jax.numpy as jnp
from jax.experimental import pallas as pl
from jax.experimental.pallas import tpu as pltpu

LANE = 128   # lane width; channels are zero-padded to a multiple of this
K = 5        # conv kernel size
PAD = 2      # 'same' padding for k=5, dilation=1
EPS = 1e-5   # BatchNorm1d default eps


def _round_up(n, m):
    return ((n + m - 1) // m) * m


def _postnet_layer_kernel(x_ref, w_ref, g_ref, b_ref, m_ref, o_ref, *,
                          bs, n_valid, apply_tanh, eps):
    """One Conv1d(k=5, pad=2, no bias) + training-mode BatchNorm1d (+ Tanh)
    for ONE tile of output channels.

    x_ref : (bs + 2*PAD, Cin_p)   bf16 canonical halo buffer (shared block)
    w_ref : (K, Cin_p, TILE_N)    bf16 conv weights for this channel tile
    g_ref : (1, TILE_N)           f32 BN gamma
    b_ref : (1, TILE_N)           f32 BN beta
    m_ref : (bs, 1)               f32 row-validity mask (1 on real time steps)
    o_ref : (bs + 2*PAD, TILE_N)  output in the same canonical halo layout
    """
    tile_n = w_ref.shape[2]

    # --- Conv1d as K shifted matmuls on the MXU (bf16 operands, f32 acc) ----
    acc = jnp.zeros((bs, tile_n), jnp.float32)
    for k in range(K):                               # static unroll over taps
        xk = x_ref[k:k + bs, :]                      # (bs, Cin_p) bf16
        wk = w_ref[k]                                # (Cin_p, TILE_N) bf16
        acc = acc + jnp.dot(xk, wk, preferred_element_type=jnp.float32)

    # Halo rows of `acc` contain cross-batch garbage; mask before the stats.
    maskf = m_ref[...]                               # (bs, 1) f32
    acc = acc * maskf

    # --- BatchNorm1d (training mode) fused into one scale/shift -------------
    inv_n = 1.0 / n_valid
    mean = jnp.sum(acc, axis=0, keepdims=True) * inv_n           # (1, TILE_N)
    ex2 = jnp.sum(acc * acc, axis=0, keepdims=True) * inv_n
    var = ex2 - mean * mean
    scale = g_ref[...] * jax.lax.rsqrt(var + eps)                # (1, TILE_N)
    shift = b_ref[...] - mean * scale
    y = acc * scale + shift
    if apply_tanh:
        y = jnp.tanh(y)
    y = y * maskf                                    # re-zero halo rows

    # --- Store in canonical halo layout (global pad rows are zero) ----------
    zpad = jnp.zeros((PAD, tile_n), o_ref.dtype)
    o_ref[0:PAD, :] = zpad
    o_ref[PAD:PAD + bs, :] = y.astype(o_ref.dtype)
    o_ref[PAD + bs:PAD + bs + PAD, :] = zpad


def _conv_bn_layer(x_buf, mask, w_p, g_p, b_p, *,
                   n_valid, apply_tanh, out_dtype):
    """x_buf: (bs + 2*PAD, Cin_p) bf16 canonical buffer.  w_p/g_p/b_p are the
    lane-padded parameters from prepare_postnet_params.  Returns the same
    layout with Cout_p (lane-padded) channels in `out_dtype`."""
    rtot, cin_p = x_buf.shape
    bs = rtot - 2 * PAD
    cout_p = w_p.shape[2]
    tile_n = min(256, cout_p)                 # 256-wide tiles (v6e/v7x MXU)
    n_tiles = cout_p // tile_n

    kernel = functools.partial(
        _postnet_layer_kernel, bs=bs, n_valid=n_valid,
        apply_tanh=apply_tanh, eps=EPS)

    return pl.pallas_call(
        kernel,
        out_shape=jax.ShapeDtypeStruct((rtot, cout_p), out_dtype),
        grid=(n_tiles,),
        in_specs=[
            pl.BlockSpec((rtot, cin_p), lambda j: (0, 0)),          # shared x
            pl.BlockSpec((K, cin_p, tile_n), lambda j: (0, 0, j)),  # weights
            pl.BlockSpec((1, tile_n), lambda j: (0, j)),            # gamma
            pl.BlockSpec((1, tile_n), lambda j: (0, j)),            # beta
            pl.BlockSpec((bs, 1), lambda j: (0, 0)),                # row mask
        ],
        out_specs=pl.BlockSpec((rtot, tile_n), lambda j: (0, j)),
        compiler_params=pltpu.CompilerParams(
            dimension_semantics=("parallel",),       # split Cout tiles / TC
            vmem_limit_bytes=48 * 1024 * 1024),
    )(x_buf, w_p, g_p, b_p, mask)


def init_postnet_params(key):
    """Deterministic synthetic parameters matching the PyTorch __init__ shapes."""
    chans = [(80, 512), (512, 512), (512, 512), (512, 512), (512, 80)]
    params = []
    for cin, cout in chans:
        key, kw, kb = jax.random.split(key, 3)
        bound = 1.0 / ((cin * K) ** 0.5)      # Conv1d default uniform bound
        # PyTorch Conv1d weight is (Cout, Cin, K); stored here as (K, Cin, Cout).
        w = jax.random.uniform(kw, (K, cin, cout), jnp.float32, -bound, bound)
        # Conv bias kept for shape parity; it is a no-op under training-mode BN.
        b = jax.random.uniform(kb, (cout,), jnp.float32, -bound, bound)
        gamma = jnp.ones((cout,), jnp.float32)    # BatchNorm1d default weight
        beta = jnp.zeros((cout,), jnp.float32)    # BatchNorm1d default bias
        params.append((w, b, gamma, beta))
    return params


def prepare_postnet_params(params):
    """One-time parameter glue: lane-pad channels, cast weights to bf16.
    Zero weight rows kill any zero-padded input channels, so padding is exact."""
    prepared = []
    for (w, _b, gamma, beta) in params:      # conv bias dropped (BN cancels it)
        _, cin, cout = w.shape
        cin_p = _round_up(cin, LANE)
        cout_p = _round_up(cout, LANE)
        w_p = jnp.pad(w, ((0, 0), (0, cin_p - cin), (0, cout_p - cout)))
        w_p = w_p.astype(jnp.bfloat16)
        g_p = jnp.pad(gamma, (0, cout_p - cout)).reshape(1, cout_p)
        b_p = jnp.pad(beta, (0, cout_p - cout)).reshape(1, cout_p)
        prepared.append((w_p, g_p, b_p, cout))
    return prepared


def postnet_forward(x_bct, prepared_params):
    """x_bct: (B, 80, T) as in the PyTorch forward; returns (B, 80, T)."""
    B, C, T = x_bct.shape
    S = T + 2 * PAD              # per-batch segment length (with halos)
    bs = B * S                   # rows the kernel computes on
    c_out_final = prepared_params[-1][3]
    cin_p = _round_up(C, LANE)

    # Build the canonical flattened activation buffer ONCE (NCL -> rows x chan):
    # [global PAD zeros | b0: PAD zeros, T data, PAD zeros | b1: ... | global PAD zeros]
    x_btc = jnp.transpose(x_bct, (0, 2, 1)).astype(jnp.float32)     # (B, T, C)
    x_seg = jnp.pad(x_btc, ((0, 0), (PAD, PAD), (0, cin_p - C)))    # (B, S, Cin_p)
    x_buf = jnp.pad(x_seg.reshape(bs, cin_p), ((PAD, PAD), (0, 0)))
    x_buf = x_buf.astype(jnp.bfloat16)

    # Row-validity mask (1 on real time steps, 0 on halo rows).
    pos = jnp.arange(S)
    seg_mask = ((pos >= PAD) & (pos < PAD + T)).astype(jnp.float32)
    mask = jnp.tile(seg_mask, B).reshape(bs, 1)

    n_layers = len(prepared_params)
    n_valid = B * T
    for i, (w_p, g_p, b_p, _cout) in enumerate(prepared_params):
        last = (i == n_layers - 1)
        x_buf = _conv_bn_layer(
            x_buf, mask, w_p, g_p, b_p,
            n_valid=n_valid,
            apply_tanh=not last,
            out_dtype=jnp.float32 if last else jnp.bfloat16)

    # Extract the valid rows / channels and go back to NCL.
    mid = x_buf[PAD:PAD + bs, :c_out_final].reshape(B, S, c_out_final)
    out = mid[:, PAD:PAD + T, :]                                   # (B, T, 80)
    return jnp.transpose(out, (0, 2, 1))                           # (B, 80, T)


if __name__ == "__main__":
    key = jax.random.PRNGKey(0)
    kx, kp = jax.random.split(key)

    B, C, T = 2, 80, 16        # (batch, input_channels=80 mels, time)
    x = jax.random.normal(kx, (B, C, T), jnp.float32)
    params = init_postnet_params(kp)
    prepared = prepare_postnet_params(params)

    out = jax.jit(lambda inp: postnet_forward(inp, prepared))(x)
    out = jax.block_until_ready(out)

    assert out.shape == (B, C, T), out.shape
    assert bool(jnp.all(jnp.isfinite(out)))
    print("KERNEL_OK")
</pallas_src>

<mosaic_0001>
module attributes {stable_mosaic.version = 11 : i64} {
  func.func @_postnet_layer_kernel(%arg0: i32, %arg1: memref<44x128xbf16, #tpu.memory_space<vmem>>, %arg2: memref<5x128x256xbf16, #tpu.memory_space<vmem>>, %arg3: memref<1x256xf32, #tpu.memory_space<vmem>>, %arg4: memref<1x256xf32, #tpu.memory_space<vmem>>, %arg5: memref<40x1xf32, #tpu.memory_space<vmem>>, %arg6: memref<44x256xbf16, #tpu.memory_space<vmem>>) attributes {dimension_semantics = [#tpu.dimension_semantics<parallel>], iteration_bounds = array<i64: 2>, scalar_prefetch = 0 : i64, scratch_operands = 0 : i64, tpu.core_type = #tpu.core_type<tc>, window_params = [{pipeline_mode = #tpu.pipeline_mode<synchronous>, transform_indices = @transform_0, window_bounds = array<i64: 44, 128>}, {transform_indices = @transform_1, window_bounds = array<i64: 5, 128, 256>}, {transform_indices = @transform_2, window_bounds = array<i64: 1, 256>}, {transform_indices = @transform_3, window_bounds = array<i64: 1, 256>}, {pipeline_mode = #tpu.pipeline_mode<synchronous>, transform_indices = @transform_4, window_bounds = array<i64: 40, 1>}, {transform_indices = @transform_5, window_bounds = array<i64: 44, 256>}]} {
    %cst = arith.constant 0.000000e+00 : f32
    %0 = vector.broadcast %cst : f32 to vector<40x256xf32>
    %c0 = arith.constant 0 : index
    %c0_0 = arith.constant 0 : index
    %1 = vector.load %arg1[%c0, %c0_0] : memref<44x128xbf16, #tpu.memory_space<vmem>>, vector<40x128xbf16>
    %c0_1 = arith.constant 0 : index
    %c0_2 = arith.constant 0 : index
    %c0_3 = arith.constant 0 : index
    %2 = vector.load %arg2[%c0_1, %c0_2, %c0_3] : memref<5x128x256xbf16, #tpu.memory_space<vmem>>, vector<1x128x256xbf16>
    %3 = vector.shape_cast %2 : vector<1x128x256xbf16> to vector<128x256xbf16>
    %cst_4 = arith.constant dense<0.000000e+00> : vector<40x256xf32>
    %4 = tpu.matmul %1, %3, %cst_4 {dimension_numbers = #tpu.dot_dimension_numbers<[1], [0], [0], [1], [0, 0, 1, 1], [], []>} : vector<40x128xbf16>, vector<128x256xbf16>, vector<40x256xf32> -> vector<40x256xf32>
    %5 = arith.addf %0, %4 : vector<40x256xf32>
    %c1 = arith.constant 1 : index
    %c0_5 = arith.constant 0 : index
    %6 = vector.load %arg1[%c1, %c0_5] : memref<44x128xbf16, #tpu.memory_space<vmem>>, vector<40x128xbf16>
    %c1_6 = arith.constant 1 : index
    %c0_7 = arith.constant 0 : index
    %c0_8 = arith.constant 0 : index
    %7 = vector.load %arg2[%c1_6, %c0_7, %c0_8] : memref<5x128x256xbf16, #tpu.memory_space<vmem>>, vector<1x128x256xbf16>
    %8 = vector.shape_cast %7 : vector<1x128x256xbf16> to vector<128x256xbf16>
    %cst_9 = arith.constant dense<0.000000e+00> : vector<40x256xf32>
    %9 = tpu.matmul %6, %8, %cst_9 {dimension_numbers = #tpu.dot_dimension_numbers<[1], [0], [0], [1], [0, 0, 1, 1], [], []>} : vector<40x128xbf16>, vector<128x256xbf16>, vector<40x256xf32> -> vector<40x256xf32>
    %10 = arith.addf %5, %9 : vector<40x256xf32>
    %c2 = arith.constant 2 : index
    %c0_10 = arith.constant 0 : index
    %11 = vector.load %arg1[%c2, %c0_10] : memref<44x128xbf16, #tpu.memory_space<vmem>>, vector<40x128xbf16>
    %c2_11 = arith.constant 2 : index
    %c0_12 = arith.constant 0 : index
    %c0_13 = arith.constant 0 : index
    %12 = vector.load %arg2[%c2_11, %c0_12, %c0_13] : memref<5x128x256xbf16, #tpu.memory_space<vmem>>, vector<1x128x256xbf16>
    %13 = vector.shape_cast %12 : vector<1x128x256xbf16> to vector<128x256xbf16>
    %cst_14 = arith.constant dense<0.000000e+00> : vector<40x256xf32>
    %14 = tpu.matmul %11, %13, %cst_14 {dimension_numbers = #tpu.dot_dimension_numbers<[1], [0], [0], [1], [0, 0, 1, 1], [], []>} : vector<40x128xbf16>, vector<128x256xbf16>, vector<40x256xf32> -> vector<40x256xf32>
    %15 = arith.addf %10, %14 : vector<40x256xf32>
    %c3 = arith.constant 3 : index
    %c0_15 = arith.constant 0 : index
    %16 = vector.load %arg1[%c3, %c0_15] : memref<44x128xbf16, #tpu.memory_space<vmem>>, vector<40x128xbf16>
    %c3_16 = arith.constant 3 : index
    %c0_17 = arith.constant 0 : index
    %c0_18 = arith.constant 0 : index
    %17 = vector.load %arg2[%c3_16, %c0_17, %c0_18] : memref<5x128x256xbf16, #tpu.memory_space<vmem>>, vector<1x128x256xbf16>
    %18 = vector.shape_cast %17 : vector<1x128x256xbf16> to vector<128x256xbf16>
    %cst_19 = arith.constant dense<0.000000e+00> : vector<40x256xf32>
    %19 = tpu.matmul %16, %18, %cst_19 {dimension_numbers = #tpu.dot_dimension_numbers<[1], [0], [0], [1], [0, 0, 1, 1], [], []>} : vector<40x128xbf16>, vector<128x256xbf16>, vector<40x256xf32> -> vector<40x256xf32>
    %20 = arith.addf %15, %19 : vector<40x256xf32>
    %c4 = arith.constant 4 : index
    %c0_20 = arith.constant 0 : index
    %21 = vector.load %arg1[%c4, %c0_20] : memref<44x128xbf16, #tpu.memory_space<vmem>>, vector<40x128xbf16>
    %c4_21 = arith.constant 4 : index
    %c0_22 = arith.constant 0 : index
    %c0_23 = arith.constant 0 : index
    %22 = vector.load %arg2[%c4_21, %c0_22, %c0_23] : memref<5x128x256xbf16, #tpu.memory_space<vmem>>, vector<1x128x256xbf16>
    %23 = vector.shape_cast %22 : vector<1x128x256xbf16> to vector<128x256xbf16>
    %cst_24 = arith.constant dense<0.000000e+00> : vector<40x256xf32>
    %24 = tpu.matmul %21, %23, %cst_24 {dimension_numbers = #tpu.dot_dimension_numbers<[1], [0], [0], [1], [0, 0, 1, 1], [], []>} : vector<40x128xbf16>, vector<128x256xbf16>, vector<40x256xf32> -> vector<40x256xf32>
    %25 = arith.addf %20, %24 : vector<40x256xf32>
    %c0_25 = arith.constant 0 : index
    %c0_26 = arith.constant 0 : index
    %26 = vector.load %arg5[%c0_25, %c0_26] : memref<40x1xf32, #tpu.memory_space<vmem>>, vector<40x1xf32>
    %27 = vector.broadcast %26 : vector<40x1xf32> to vector<40x256xf32>
    %28 = arith.mulf %25, %27 : vector<40x256xf32>
    %cst_27 = arith.constant dense<0.000000e+00> : vector<256xf32>
    %29 = vector.multi_reduction <add>, %28, %cst_27 [0] : vector<40x256xf32> to vector<256xf32>
    %30 = vector.shape_cast %29 : vector<256xf32> to vector<1x256xf32>
    %cst_28 = arith.constant 3.125000e-02 : f32
    %31 = vector.broadcast %cst_28 : f32 to vector<1x256xf32>
    %32 = arith.mulf %30, %31 : vector<1x256xf32>
    %33 = arith.mulf %28, %28 : vector<40x256xf32>
    %cst_29 = arith.constant dense<0.000000e+00> : vector<256xf32>
    %34 = vector.multi_reduction <add>, %33, %cst_29 [0] : vector<40x256xf32> to vector<256xf32>
    %35 = vector.shape_cast %34 : vector<256xf32> to vector<1x256xf32>
    %cst_30 = arith.constant 3.125000e-02 : f32
    %36 = vector.broadcast %cst_30 : f32 to vector<1x256xf32>
    %37 = arith.mulf %35, %36 : vector<1x256xf32>
    %38 = arith.mulf %32, %32 : vector<1x256xf32>
    %39 = arith.subf %37, %38 : vector<1x256xf32>
    %c0_31 = arith.constant 0 : index
    %c0_32 = arith.constant 0 : index
    %40 = vector.load %arg3[%c0_31, %c0_32] : memref<1x256xf32, #tpu.memory_space<vmem>>, vector<1x256xf32>
    %cst_33 = arith.constant 9.99999974E-6 : f32
    %41 = vector.broadcast %cst_33 : f32 to vector<1x256xf32>
    %42 = arith.addf %39, %41 : vector<1x256xf32>
    %43 = math.rsqrt %42 : vector<1x256xf32>
    %44 = arith.mulf %40, %43 : vector<1x256xf32>
    %c0_34 = arith.constant 0 : index
    %c0_35 = arith.constant 0 : index
    %45 = vector.load %arg4[%c0_34, %c0_35] : memref<1x256xf32, #tpu.memory_space<vmem>>, vector<1x256xf32>
    %46 = arith.mulf %32, %44 : vector<1x256xf32>
    %47 = arith.subf %45, %46 : vector<1x256xf32>
    %48 = vector.broadcast %44 : vector<1x256xf32> to vector<40x256xf32>
    %49 = arith.mulf %28, %48 : vector<40x256xf32>
    %50 = vector.broadcast %47 : vector<1x256xf32> to vector<40x256xf32>
    %51 = arith.addf %49, %50 : vector<40x256xf32>
    %52 = math.tanh %51 : vector<40x256xf32>
    %53 = vector.broadcast %26 : vector<40x1xf32> to vector<40x256xf32>
    %54 = arith.mulf %52, %53 : vector<40x256xf32>
    %cst_36 = arith.constant 0.000000e+00 : bf16
    %55 = vector.broadcast %cst_36 : bf16 to vector<2x256xbf16>
    %c0_37 = arith.constant 0 : index
    %c0_38 = arith.constant 0 : index
    %56 = vector.load %arg6[%c0_37, %c0_38] : memref<44x256xbf16, #tpu.memory_space<vmem>>, vector<2x256xbf16>
    tpu.vector_store %arg6[%c0_37, %c0_38], %55 {strides = array<i32>} : memref<44x256xbf16, #tpu.memory_space<vmem>>, vector<2x256xbf16>,
    %57 = arith.truncf %54 : vector<40x256xf32> to vector<40x256xbf16>
    %c2_39 = arith.constant 2 : index
    %c0_40 = arith.constant 0 : index
    %58 = vector.load %arg6[%c2_39, %c0_40] : memref<44x256xbf16, #tpu.memory_space<vmem>>, vector<40x256xbf16>
    tpu.vector_store %arg6[%c2_39, %c0_40], %57 {strides = array<i32>} : memref<44x256xbf16, #tpu.memory_space<vmem>>, vector<40x256xbf16>,
    %c42 = arith.constant 42 : index
    %c0_41 = arith.constant 0 : index
    %59 = vector.load %arg6[%c42, %c0_41] : memref<44x256xbf16, #tpu.memory_space<vmem>>, vector<2x256xbf16>
    tpu.vector_store %arg6[%c42, %c0_41], %55 {strides = array<i32>} : memref<44x256xbf16, #tpu.memory_space<vmem>>, vector<2x256xbf16>,
    return
  }
  func.func @transform_0(%arg0: i32) -> (i32, i32) {
    %c0_i32 = arith.constant 0 : i32
    %c0_i32_0 = arith.constant 0 : i32
    %c0_i32_1 = arith.constant 0 : i32
    return %c0_i32, %c0_i32_0 : i32, i32
  }
  func.func @transform_1(%arg0: i32) -> (i32, i32, i32) {
    %c0_i32 = arith.constant 0 : i32
    %c0_i32_0 = arith.constant 0 : i32
    %c0_i32_1 = arith.constant 0 : i32
    return %c0_i32, %c0_i32_0, %arg0 : i32, i32, i32
  }
  func.func @transform_2(%arg0: i32) -> (i32, i32) {
    %c0_i32 = arith.constant 0 : i32
    %c0_i32_0 = arith.constant 0 : i32
    return %c0_i32, %arg0 : i32, i32
  }
  func.func @transform_3(%arg0: i32) -> (i32, i32) {
    %c0_i32 = arith.constant 0 : i32
    %c0_i32_0 = arith.constant 0 : i32
    return %c0_i32, %arg0 : i32, i32
  }
  func.func @transform_4(%arg0: i32) -> (i32, i32) {
    %c0_i32 = arith.constant 0 : i32
    %c0_i32_0 = arith.constant 0 : i32
    %c0_i32_1 = arith.constant 0 : i32
    return %c0_i32, %c0_i32_0 : i32, i32
  }
  func.func @transform_5(%arg0: i32) -> (i32, i32) {
    %c0_i32 = arith.constant 0 : i32
    %c0_i32_0 = arith.constant 0 : i32
    return %c0_i32, %arg0 : i32, i32
  }
}

module attributes {stable_mosaic.version = 11 : i64} {
  func.func @_postnet_layer_kernel(%arg0: i32, %arg1: memref<44x512xbf16, #tpu.memory_space<vmem>>, %arg2: memref<5x512x256xbf16, #tpu.memory_space<vmem>>, %arg3: memref<1x256xf32, #tpu.memory_space<vmem>>, %arg4: memref<1x256xf32, #tpu.memory_space<vmem>>, %arg5: memref<40x1xf32, #tpu.memory_space<vmem>>, %arg6: memref<44x256xbf16, #tpu.memory_space<vmem>>) attributes {dimension_semantics = [#tpu.dimension_semantics<parallel>], iteration_bounds = array<i64: 2>, scalar_prefetch = 0 : i64, scratch_operands = 0 : i64, tpu.core_type = #tpu.core_type<tc>, window_params = [{pipeline_mode = #tpu.pipeline_mode<synchronous>, transform_indices = @transform_0, window_bounds = array<i64: 44, 512>}, {transform_indices = @transform_1, window_bounds = array<i64: 5, 512, 256>}, {transform_indices = @transform_2, window_bounds = array<i64: 1, 256>}, {transform_indices = @transform_3, window_bounds = array<i64: 1, 256>}, {pipeline_mode = #tpu.pipeline_mode<synchronous>, transform_indices = @transform_4, window_bounds = array<i64: 40, 1>}, {transform_indices = @transform_5, window_bounds = array<i64: 44, 256>}]} {
    %cst = arith.constant 0.000000e+00 : f32
    %0 = vector.broadcast %cst : f32 to vector<40x256xf32>
    %c0 = arith.constant 0 : index
    %c0_0 = arith.constant 0 : index
    %1 = vector.load %arg1[%c0, %c0_0] : memref<44x512xbf16, #tpu.memory_space<vmem>>, vector<40x512xbf16>
    %c0_1 = arith.constant 0 : index
    %c0_2 = arith.constant 0 : index
    %c0_3 = arith.constant 0 : index
    %2 = vector.load %arg2[%c0_1, %c0_2, %c0_3] : memref<5x512x256xbf16, #tpu.memory_space<vmem>>, vector<1x512x256xbf16>
    %3 = vector.shape_cast %2 : vector<1x512x256xbf16> to vector<512x256xbf16>
    %cst_4 = arith.constant dense<0.000000e+00> : vector<40x256xf32>
    %4 = tpu.matmul %1, %3, %cst_4 {dimension_numbers = #tpu.dot_dimension_numbers<[1], [0], [0], [1], [0, 0, 1, 1], [], []>} : vector<40x512xbf16>, vector<512x256xbf16>, vector<40x256xf32> -> vector<40x256xf32>
    %5 = arith.addf %0, %4 : vector<40x256xf32>
    %c1 = arith.constant 1 : index
    %c0_5 = arith.constant 0 : index
    %6 = vector.load %arg1[%c1, %c0_5] : memref<44x512xbf16, #tpu.memory_space<vmem>>, vector<40x512xbf16>
    %c1_6 = arith.constant 1 : index
    %c0_7 = arith.constant 0 : index
    %c0_8 = arith.constant 0 : index
    %7 = vector.load %arg2[%c1_6, %c0_7, %c0_8] : memref<5x512x256xbf16, #tpu.memory_space<vmem>>, vector<1x512x256xbf16>
    %8 = vector.shape_cast %7 : vector<1x512x256xbf16> to vector<512x256xbf16>
    %cst_9 = arith.constant dense<0.000000e+00> : vector<40x256xf32>
    %9 = tpu.matmul %6, %8, %cst_9 {dimension_numbers = #tpu.dot_dimension_numbers<[1], [0], [0], [1], [0, 0, 1, 1], [], []>} : vector<40x512xbf16>, vector<512x256xbf16>, vector<40x256xf32> -> vector<40x256xf32>
    %10 = arith.addf %5, %9 : vector<40x256xf32>
    %c2 = arith.constant 2 : index
    %c0_10 = arith.constant 0 : index
    %11 = vector.load %arg1[%c2, %c0_10] : memref<44x512xbf16, #tpu.memory_space<vmem>>, vector<40x512xbf16>
    %c2_11 = arith.constant 2 : index
    %c0_12 = arith.constant 0 : index
    %c0_13 = arith.constant 0 : index
    %12 = vector.load %arg2[%c2_11, %c0_12, %c0_13] : memref<5x512x256xbf16, #tpu.memory_space<vmem>>, vector<1x512x256xbf16>
    %13 = vector.shape_cast %12 : vector<1x512x256xbf16> to vector<512x256xbf16>
    %cst_14 = arith.constant dense<0.000000e+00> : vector<40x256xf32>
    %14 = tpu.matmul %11, %13, %cst_14 {dimension_numbers = #tpu.dot_dimension_numbers<[1], [0], [0], [1], [0, 0, 1, 1], [], []>} : vector<40x512xbf16>, vector<512x256xbf16>, vector<40x256xf32> -> vector<40x256xf32>
    %15 = arith.addf %10, %14 : vector<40x256xf32>
    %c3 = arith.constant 3 : index
    %c0_15 = arith.constant 0 : index
    %16 = vector.load %arg1[%c3, %c0_15] : memref<44x512xbf16, #tpu.memory_space<vmem>>, vector<40x512xbf16>
    %c3_16 = arith.constant 3 : index
    %c0_17 = arith.constant 0 : index
    %c0_18 = arith.constant 0 : index
    %17 = vector.load %arg2[%c3_16, %c0_17, %c0_18] : memref<5x512x256xbf16, #tpu.memory_space<vmem>>, vector<1x512x256xbf16>
    %18 = vector.shape_cast %17 : vector<1x512x256xbf16> to vector<512x256xbf16>
    %cst_19 = arith.constant dense<0.000000e+00> : vector<40x256xf32>
    %19 = tpu.matmul %16, %18, %cst_19 {dimension_numbers = #tpu.dot_dimension_numbers<[1], [0], [0], [1], [0, 0, 1, 1], [], []>} : vector<40x512xbf16>, vector<512x256xbf16>, vector<40x256xf32> -> vector<40x256xf32>
    %20 = arith.addf %15, %19 : vector<40x256xf32>
    %c4 = arith.constant 4 : index
    %c0_20 = arith.constant 0 : index
    %21 = vector.load %arg1[%c4, %c0_20] : memref<44x512xbf16, #tpu.memory_space<vmem>>, vector<40x512xbf16>
    %c4_21 = arith.constant 4 : index
    %c0_22 = arith.constant 0 : index
    %c0_23 = arith.constant 0 : index
    %22 = vector.load %arg2[%c4_21, %c0_22, %c0_23] : memref<5x512x256xbf16, #tpu.memory_space<vmem>>, vector<1x512x256xbf16>
    %23 = vector.shape_cast %22 : vector<1x512x256xbf16> to vector<512x256xbf16>
    %cst_24 = arith.constant dense<0.000000e+00> : vector<40x256xf32>
    %24 = tpu.matmul %21, %23, %cst_24 {dimension_numbers = #tpu.dot_dimension_numbers<[1], [0], [0], [1], [0, 0, 1, 1], [], []>} : vector<40x512xbf16>, vector<512x256xbf16>, vector<40x256xf32> -> vector<40x256xf32>
    %25 = arith.addf %20, %24 : vector<40x256xf32>
    %c0_25 = arith.constant 0 : index
    %c0_26 = arith.constant 0 : index
    %26 = vector.load %arg5[%c0_25, %c0_26] : memref<40x1xf32, #tpu.memory_space<vmem>>, vector<40x1xf32>
    %27 = vector.broadcast %26 : vector<40x1xf32> to vector<40x256xf32>
    %28 = arith.mulf %25, %27 : vector<40x256xf32>
    %cst_27 = arith.constant dense<0.000000e+00> : vector<256xf32>
    %29 = vector.multi_reduction <add>, %28, %cst_27 [0] : vector<40x256xf32> to vector<256xf32>
    %30 = vector.shape_cast %29 : vector<256xf32> to vector<1x256xf32>
    %cst_28 = arith.constant 3.125000e-02 : f32
    %31 = vector.broadcast %cst_28 : f32 to vector<1x256xf32>
    %32 = arith.mulf %30, %31 : vector<1x256xf32>
    %33 = arith.mulf %28, %28 : vector<40x256xf32>
    %cst_29 = arith.constant dense<0.000000e+00> : vector<256xf32>
    %34 = vector.multi_reduction <add>, %33, %cst_29 [0] : vector<40x256xf32> to vector<256xf32>
    %35 = vector.shape_cast %34 : vector<256xf32> to vector<1x256xf32>
    %cst_30 = arith.constant 3.125000e-02 : f32
    %36 = vector.broadcast %cst_30 : f32 to vector<1x256xf32>
    %37 = arith.mulf %35, %36 : vector<1x256xf32>
    %38 = arith.mulf %32, %32 : vector<1x256xf32>
    %39 = arith.subf %37, %38 : vector<1x256xf32>
    %c0_31 = arith.constant 0 : index
    %c0_32 = arith.constant 0 : index
    %40 = vector.load %arg3[%c0_31, %c0_32] : memref<1x256xf32, #tpu.memory_space<vmem>>, vector<1x256xf32>
    %cst_33 = arith.constant 9.99999974E-6 : f32
    %41 = vector.broadcast %cst_33 : f32 to vector<1x256xf32>
    %42 = arith.addf %39, %41 : vector<1x256xf32>
    %43 = math.rsqrt %42 : vector<1x256xf32>
    %44 = arith.mulf %40, %43 : vector<1x256xf32>
    %c0_34 = arith.constant 0 : index
    %c0_35 = arith.constant 0 : index
    %45 = vector.load %arg4[%c0_34, %c0_35] : memref<1x256xf32, #tpu.memory_space<vmem>>, vector<1x256xf32>
    %46 = arith.mulf %32, %44 : vector<1x256xf32>
    %47 = arith.subf %45, %46 : vector<1x256xf32>
    %48 = vector.broadcast %44 : vector<1x256xf32> to vector<40x256xf32>
    %49 = arith.mulf %28, %48 : vector<40x256xf32>
    %50 = vector.broadcast %47 : vector<1x256xf32> to vector<40x256xf32>
    %51 = arith.addf %49, %50 : vector<40x256xf32>
    %52 = math.tanh %51 : vector<40x256xf32>
    %53 = vector.broadcast %26 : vector<40x1xf32> to vector<40x256xf32>
    %54 = arith.mulf %52, %53 : vector<40x256xf32>
    %cst_36 = arith.constant 0.000000e+00 : bf16
    %55 = vector.broadcast %cst_36 : bf16 to vector<2x256xbf16>
    %c0_37 = arith.constant 0 : index
    %c0_38 = arith.constant 0 : index
    %56 = vector.load %arg6[%c0_37, %c0_38] : memref<44x256xbf16, #tpu.memory_space<vmem>>, vector<2x256xbf16>
    tpu.vector_store %arg6[%c0_37, %c0_38], %55 {strides = array<i32>} : memref<44x256xbf16, #tpu.memory_space<vmem>>, vector<2x256xbf16>,
    %57 = arith.truncf %54 : vector<40x256xf32> to vector<40x256xbf16>
    %c2_39 = arith.constant 2 : index
    %c0_40 = arith.constant 0 : index
    %58 = vector.load %arg6[%c2_39, %c0_40] : memref<44x256xbf16, #tpu.memory_space<vmem>>, vector<40x256xbf16>
    tpu.vector_store %arg6[%c2_39, %c0_40], %57 {strides = array<i32>} : memref<44x256xbf16, #tpu.memory_space<vmem>>, vector<40x256xbf16>,
    %c42 = arith.constant 42 : index
    %c0_41 = arith.constant 0 : index
    %59 = vector.load %arg6[%c42, %c0_41] : memref<44x256xbf16, #tpu.memory_space<vmem>>, vector<2x256xbf16>
    tpu.vector_store %arg6[%c42, %c0_41], %55 {strides = array<i32>} : memref<44x256xbf16, #tpu.memory_space<vmem>>, vector<2x256xbf16>,
    return
  }
  func.func @transform_0(%arg0: i32) -> (i32, i32) {
    %c0_i32 = arith.constant 0 : i32
    %c0_i32_0 = arith.constant 0 : i32
    %c0_i32_1 = arith.constant 0 : i32
    return %c0_i32, %c0_i32_0 : i32, i32
  }
  func.func @transform_1(%arg0: i32) -> (i32, i32, i32) {
    %c0_i32 = arith.constant 0 : i32
    %c0_i32_0 = arith.constant 0 : i32
    %c0_i32_1 = arith.constant 0 : i32
    return %c0_i32, %c0_i32_0, %arg0 : i32, i32, i32
  }
  func.func @transform_2(%arg0: i32) -> (i32, i32) {
    %c0_i32 = arith.constant 0 : i32
    %c0_i32_0 = arith.constant 0 : i32
    return %c0_i32, %arg0 : i32, i32
  }
  func.func @transform_3(%arg0: i32) -> (i32, i32) {
    %c0_i32 = arith.constant 0 : i32
    %c0_i32_0 = arith.constant 0 : i32
    return %c0_i32, %arg0 : i32, i32
  }
  func.func @transform_4(%arg0: i32) -> (i32, i32) {
    %c0_i32 = arith.constant 0 : i32
    %c0_i32_0 = arith.constant 0 : i32
    %c0_i32_1 = arith.constant 0 : i32
    return %c0_i32, %c0_i32_0 : i32, i32
  }
  func.func @transform_5(%arg0: i32) -> (i32, i32) {
    %c0_i32 = arith.constant 0 : i32
    %c0_i32_0 = arith.constant 0 : i32
    return %c0_i32, %arg0 : i32, i32
  }
}

module attributes {stable_mosaic.version = 11 : i64} {
  func.func @_postnet_layer_kernel(%arg0: i32, %arg1: memref<44x512xbf16, #tpu.memory_space<vmem>>, %arg2: memref<5x512x128xbf16, #tpu.memory_space<vmem>>, %arg3: memref<1x128xf32, #tpu.memory_space<vmem>>, %arg4: memref<1x128xf32, #tpu.memory_space<vmem>>, %arg5: memref<40x1xf32, #tpu.memory_space<vmem>>, %arg6: memref<44x128xf32, #tpu.memory_space<vmem>>) attributes {dimension_semantics = [#tpu.dimension_semantics<parallel>], iteration_bounds = array<i64: 1>, scalar_prefetch = 0 : i64, scratch_operands = 0 : i64, tpu.core_type = #tpu.core_type<tc>, window_params = [{pipeline_mode = #tpu.pipeline_mode<synchronous>, transform_indices = @transform_0, window_bounds = array<i64: 44, 512>}, {transform_indices = @transform_1, window_bounds = array<i64: 5, 512, 128>}, {transform_indices = @transform_2, window_bounds = array<i64: 1, 128>}, {transform_indices = @transform_3, window_bounds = array<i64: 1, 128>}, {pipeline_mode = #tpu.pipeline_mode<synchronous>, transform_indices = @transform_4, window_bounds = array<i64: 40, 1>}, {transform_indices = @transform_5, window_bounds = array<i64: 44, 128>}]} {
    %cst = arith.constant 0.000000e+00 : f32
    %0 = vector.broadcast %cst : f32 to vector<40x128xf32>
    %c0 = arith.constant 0 : index
    %c0_0 = arith.constant 0 : index
    %1 = vector.load %arg1[%c0, %c0_0] : memref<44x512xbf16, #tpu.memory_space<vmem>>, vector<40x512xbf16>
    %c0_1 = arith.constant 0 : index
    %c0_2 = arith.constant 0 : index
    %c0_3 = arith.constant 0 : index
    %2 = vector.load %arg2[%c0_1, %c0_2, %c0_3] : memref<5x512x128xbf16, #tpu.memory_space<vmem>>, vector<1x512x128xbf16>
    %3 = vector.shape_cast %2 : vector<1x512x128xbf16> to vector<512x128xbf16>
    %cst_4 = arith.constant dense<0.000000e+00> : vector<40x128xf32>
    %4 = tpu.matmul %1, %3, %cst_4 {dimension_numbers = #tpu.dot_dimension_numbers<[1], [0], [0], [1], [0, 0, 1, 1], [], []>} : vector<40x512xbf16>, vector<512x128xbf16>, vector<40x128xf32> -> vector<40x128xf32>
    %5 = arith.addf %0, %4 : vector<40x128xf32>
    %c1 = arith.constant 1 : index
    %c0_5 = arith.constant 0 : index
    %6 = vector.load %arg1[%c1, %c0_5] : memref<44x512xbf16, #tpu.memory_space<vmem>>, vector<40x512xbf16>
    %c1_6 = arith.constant 1 : index
    %c0_7 = arith.constant 0 : index
    %c0_8 = arith.constant 0 : index
    %7 = vector.load %arg2[%c1_6, %c0_7, %c0_8] : memref<5x512x128xbf16, #tpu.memory_space<vmem>>, vector<1x512x128xbf16>
    %8 = vector.shape_cast %7 : vector<1x512x128xbf16> to vector<512x128xbf16>
    %cst_9 = arith.constant dense<0.000000e+00> : vector<40x128xf32>
    %9 = tpu.matmul %6, %8, %cst_9 {dimension_numbers = #tpu.dot_dimension_numbers<[1], [0], [0], [1], [0, 0, 1, 1], [], []>} : vector<40x512xbf16>, vector<512x128xbf16>, vector<40x128xf32> -> vector<40x128xf32>
    %10 = arith.addf %5, %9 : vector<40x128xf32>
    %c2 = arith.constant 2 : index
    %c0_10 = arith.constant 0 : index
    %11 = vector.load %arg1[%c2, %c0_10] : memref<44x512xbf16, #tpu.memory_space<vmem>>, vector<40x512xbf16>
    %c2_11 = arith.constant 2 : index
    %c0_12 = arith.constant 0 : index
    %c0_13 = arith.constant 0 : index
    %12 = vector.load %arg2[%c2_11, %c0_12, %c0_13] : memref<5x512x128xbf16, #tpu.memory_space<vmem>>, vector<1x512x128xbf16>
    %13 = vector.shape_cast %12 : vector<1x512x128xbf16> to vector<512x128xbf16>
    %cst_14 = arith.constant dense<0.000000e+00> : vector<40x128xf32>
    %14 = tpu.matmul %11, %13, %cst_14 {dimension_numbers = #tpu.dot_dimension_numbers<[1], [0], [0], [1], [0, 0, 1, 1], [], []>} : vector<40x512xbf16>, vector<512x128xbf16>, vector<40x128xf32> -> vector<40x128xf32>
    %15 = arith.addf %10, %14 : vector<40x128xf32>
    %c3 = arith.constant 3 : index
    %c0_15 = arith.constant 0 : index
    %16 = vector.load %arg1[%c3, %c0_15] : memref<44x512xbf16, #tpu.memory_space<vmem>>, vector<40x512xbf16>
    %c3_16 = arith.constant 3 : index
    %c0_17 = arith.constant 0 : index
    %c0_18 = arith.constant 0 : index
    %17 = vector.load %arg2[%c3_16, %c0_17, %c0_18] : memref<5x512x128xbf16, #tpu.memory_space<vmem>>, vector<1x512x128xbf16>
    %18 = vector.shape_cast %17 : vector<1x512x128xbf16> to vector<512x128xbf16>
    %cst_19 = arith.constant dense<0.000000e+00> : vector<40x128xf32>
    %19 = tpu.matmul %16, %18, %cst_19 {dimension_numbers = #tpu.dot_dimension_numbers<[1], [0], [0], [1], [0, 0, 1, 1], [], []>} : vector<40x512xbf16>, vector<512x128xbf16>, vector<40x128xf32> -> vector<40x128xf32>
    %20 = arith.addf %15, %19 : vector<40x128xf32>
    %c4 = arith.constant 4 : index
    %c0_20 = arith.constant 0 : index
    %21 = vector.load %arg1[%c4, %c0_20] : memref<44x512xbf16, #tpu.memory_space<vmem>>, vector<40x512xbf16>
    %c4_21 = arith.constant 4 : index
    %c0_22 = arith.constant 0 : index
    %c0_23 = arith.constant 0 : index
    %22 = vector.load %arg2[%c4_21, %c0_22, %c0_23] : memref<5x512x128xbf16, #tpu.memory_space<vmem>>, vector<1x512x128xbf16>
    %23 = vector.shape_cast %22 : vector<1x512x128xbf16> to vector<512x128xbf16>
    %cst_24 = arith.constant dense<0.000000e+00> : vector<40x128xf32>
    %24 = tpu.matmul %21, %23, %cst_24 {dimension_numbers = #tpu.dot_dimension_numbers<[1], [0], [0], [1], [0, 0, 1, 1], [], []>} : vector<40x512xbf16>, vector<512x128xbf16>, vector<40x128xf32> -> vector<40x128xf32>
    %25 = arith.addf %20, %24 : vector<40x128xf32>
    %c0_25 = arith.constant 0 : index
    %c0_26 = arith.constant 0 : index
    %26 = vector.load %arg5[%c0_25, %c0_26] : memref<40x1xf32, #tpu.memory_space<vmem>>, vector<40x1xf32>
    %27 = vector.broadcast %26 : vector<40x1xf32> to vector<40x128xf32>
    %28 = arith.mulf %25, %27 : vector<40x128xf32>
    %cst_27 = arith.constant dense<0.000000e+00> : vector<128xf32>
    %29 = vector.multi_reduction <add>, %28, %cst_27 [0] : vector<40x128xf32> to vector<128xf32>
    %30 = vector.shape_cast %29 : vector<128xf32> to vector<1x128xf32>
    %cst_28 = arith.constant 3.125000e-02 : f32
    %31 = vector.broadcast %cst_28 : f32 to vector<1x128xf32>
    %32 = arith.mulf %30, %31 : vector<1x128xf32>
    %33 = arith.mulf %28, %28 : vector<40x128xf32>
    %cst_29 = arith.constant dense<0.000000e+00> : vector<128xf32>
    %34 = vector.multi_reduction <add>, %33, %cst_29 [0] : vector<40x128xf32> to vector<128xf32>
    %35 = vector.shape_cast %34 : vector<128xf32> to vector<1x128xf32>
    %cst_30 = arith.constant 3.125000e-02 : f32
    %36 = vector.broadcast %cst_30 : f32 to vector<1x128xf32>
    %37 = arith.mulf %35, %36 : vector<1x128xf32>
    %38 = arith.mulf %32, %32 : vector<1x128xf32>
    %39 = arith.subf %37, %38 : vector<1x128xf32>
    %c0_31 = arith.constant 0 : index
    %c0_32 = arith.constant 0 : index
    %40 = vector.load %arg3[%c0_31, %c0_32] : memref<1x128xf32, #tpu.memory_space<vmem>>, vector<1x128xf32>
    %cst_33 = arith.constant 9.99999974E-6 : f32
    %41 = vector.broadcast %cst_33 : f32 to vector<1x128xf32>
    %42 = arith.addf %39, %41 : vector<1x128xf32>
    %43 = math.rsqrt %42 : vector<1x128xf32>
    %44 = arith.mulf %40, %43 : vector<1x128xf32>
    %c0_34 = arith.constant 0 : index
    %c0_35 = arith.constant 0 : index
    %45 = vector.load %arg4[%c0_34, %c0_35] : memref<1x128xf32, #tpu.memory_space<vmem>>, vector<1x128xf32>
    %46 = arith.mulf %32, %44 : vector<1x128xf32>
    %47 = arith.subf %45, %46 : vector<1x128xf32>
    %48 = vector.broadcast %44 : vector<1x128xf32> to vector<40x128xf32>
    %49 = arith.mulf %28, %48 : vector<40x128xf32>
    %50 = vector.broadcast %47 : vector<1x128xf32> to vector<40x128xf32>
    %51 = arith.addf %49, %50 : vector<40x128xf32>
    %52 = vector.broadcast %26 : vector<40x1xf32> to vector<40x128xf32>
    %53 = arith.mulf %51, %52 : vector<40x128xf32>
    %cst_36 = arith.constant 0.000000e+00 : f32
    %54 = vector.broadcast %cst_36 : f32 to vector<2x128xf32>
    %c0_37 = arith.constant 0 : index
    %c0_38 = arith.constant 0 : index
    %55 = vector.load %arg6[%c0_37, %c0_38] : memref<44x128xf32, #tpu.memory_space<vmem>>, vector<2x128xf32>
    tpu.vector_store %arg6[%c0_37, %c0_38], %54 {strides = array<i32>} : memref<44x128xf32, #tpu.memory_space<vmem>>, vector<2x128xf32>,
    %c2_39 = arith.constant 2 : index
    %c0_40 = arith.constant 0 : index
    %56 = vector.load %arg6[%c2_39, %c0_40] : memref<44x128xf32, #tpu.memory_space<vmem>>, vector<40x128xf32>
    tpu.vector_store %arg6[%c2_39, %c0_40], %53 {strides = array<i32>} : memref<44x128xf32, #tpu.memory_space<vmem>>, vector<40x128xf32>,
    %c42 = arith.constant 42 : index
    %c0_41 = arith.constant 0 : index
    %57 = vector.load %arg6[%c42, %c0_41] : memref<44x128xf32, #tpu.memory_space<vmem>>, vector<2x128xf32>
    tpu.vector_store %arg6[%c42, %c0_41], %54 {strides = array<i32>} : memref<44x128xf32, #tpu.memory_space<vmem>>, vector<2x128xf32>,
    return
  }
  func.func @transform_0(%arg0: i32) -> (i32, i32) {
    %c0_i32 = arith.constant 0 : i32
    %c0_i32_0 = arith.constant 0 : i32
    %c0_i32_1 = arith.constant 0 : i32
    return %c0_i32, %c0_i32_0 : i32, i32
  }
  func.func @transform_1(%arg0: i32) -> (i32, i32, i32) {
    %c0_i32 = arith.constant 0 : i32
    %c0_i32_0 = arith.constant 0 : i32
    %c0_i32_1 = arith.constant 0 : i32
    return %c0_i32, %c0_i32_0, %arg0 : i32, i32, i32
  }
  func.func @transform_2(%arg0: i32) -> (i32, i32) {
    %c0_i32 = arith.constant 0 : i32
    %c0_i32_0 = arith.constant 0 : i32
    return %c0_i32, %arg0 : i32, i32
  }
  func.func @transform_3(%arg0: i32) -> (i32, i32) {
    %c0_i32 = arith.constant 0 : i32
    %c0_i32_0 = arith.constant 0 : i32
    return %c0_i32, %arg0 : i32, i32
  }
  func.func @transform_4(%arg0: i32) -> (i32, i32) {
    %c0_i32 = arith.constant 0 : i32
    %c0_i32_0 = arith.constant 0 : i32
    %c0_i32_1 = arith.constant 0 : i32
    return %c0_i32, %c0_i32_0 : i32, i32
  }
  func.func @transform_5(%arg0: i32) -> (i32, i32) {
    %c0_i32 = arith.constant 0 : i32
    %c0_i32_0 = arith.constant 0 : i32
    return %c0_i32, %arg0 : i32, i32
  }
}

</mosaic_0001>

<llo_original>
// kernel: tile.8
$region0: #{tile.8}
  #allocation0 [shape = 's32[1]{0}', space=sflag, size = 0x4, scoped, tag = 'scoped memory for tile.8']
  %s0 = inlined_call_operand.vmem [shape: f32[20], index: 0, kind: input, shape index: {}]
  %s1 = inlined_call_operand.vmem [shape: f32[2,20], index: 1, kind: output, shape index: {}]
  // Predicated region
  $region2: #{tile.8} parent=0 // pred_check
    _
  $region3: #{tile.8} parent=0 // pred_check_branch
    %3 = sbr.rel (0) target = $region5
  $region4: #{tile.8} parent=0 // pred_region
    _
  $region5: #{tile.8} parent=0 // pred_fallthru
    _
  %v4 = vld [vmem:[%s0] ss:$0 sm:$0xff]
  %5 = vst [vmem:[%s1] sm:$0x3] %v4

// kernel: tile.0
$region0: #{tile.0}
  %s0 = inlined_call_operand.vmem [shape: f32[2,20], index: 0, kind: input, shape index: {}]
  %s1 = inlined_call_operand.vmem [shape: f32[40,1], index: 1, kind: output, shape index: {}]
  $region1: #{tile.0} parent=0
    #allocation0 [shape = 'u8[4096]{0}', space=vmem, size = 0x1000, scoped, tag = 'scoped mem for input reshape']
    %s3 = sshllo.u32 0, 2
    %v4 = vld [vmem:[%s0] sm:%s3]
    %5 = vst [vmem:[#allocation0] sm:%s3] %v4
    %v6 = vld [vmem:[#allocation0] sm:$0x3]
    %vm7 = vcmask 7168
    %8 = vst.msk [vmem:[%s1] ss:$20 sm:$0x3] %vm7, %v6
    %v9 = vld [vmem:[#allocation0] sm:$0x3]
    %10 = vrot.lane.b32.xlu0 %v9, 127
    %v11 = vpop.permute.xlu0 %10
    %vm12 = vcmask 7168
    %s13 = scalar_lea.vmem %s1, 1
    %14 = vst.msk [vmem:[%s13] ss:$20 sm:$0x3] %vm12, %v11
    %v15 = vld [vmem:[#allocation0] sm:$0x3]
    %16 = vrot.lane.b32.xlu0 %v15, 126
    %v17 = vpop.permute.xlu0 %16
    %vm18 = vcmask 7168
    %s19 = scalar_lea.vmem %s1, 2
    %20 = vst.msk [vmem:[%s19] ss:$20 sm:$0x3] %vm18, %v17
    %v21 = vld [vmem:[#allocation0] sm:$0x3]
    %22 = vrot.lane.b32.xlu0 %v21, 125
    %v23 = vpop.permute.xlu0 %22
    %vm24 = vcmask 7168
    %s25 = scalar_lea.vmem %s1, 3
    %26 = vst.msk [vmem:[%s25] ss:$20 sm:$0x3] %vm24, %v23
    %v27 = vld [vmem:[#allocation0] sm:$0x3]
    %28 = vrot.lane.b32.xlu0 %v27, 124
    %v29 = vpop.permute.xlu0 %28
    %vm30 = vcmask 7168
    %s31 = scalar_lea.vmem %s1, 4
    %32 = vst.msk [vmem:[%s31] ss:$20 sm:$0x3] %vm30, %v29
    %v33 = vld [vmem:[#allocation0] sm:$0x3]
    %34 = vrot.lane.b32.xlu0 %v33, 123
    %v35 = vpop.permute.xlu0 %34
    %vm36 = vcmask 7168
    %s37 = scalar_lea.vmem %s1, 5
    %38 = vst.msk [vmem:[%s37] ss:$20 sm:$0x3] %vm36, %v35
    %v39 = vld [vmem:[#allocation0] sm:$0x3]
    %40 = vrot.lane.b32.xlu0 %v39, 122
    %v41 = vpop.permute.xlu0 %40
    %vm42 = vcmask 7168
    %s43 = scalar_lea.vmem %s1, 6
    %44 = vst.msk [vmem:[%s43] ss:$20 sm:$0x3] %vm42, %v41
    %v45 = vld [vmem:[#allocation0] sm:$0x3]
    %46 = vrot.lane.b32.xlu0 %v45, 121
    %v47 = vpop.permute.xlu0 %46
    %vm48 = vcmask 7168
    %s49 = scalar_lea.vmem %s1, 7
    %50 = vst.msk [vmem:[%s49] ss:$20 sm:$0x3] %vm48, %v47
    %v51 = vld [vmem:[#allocation0] sm:$0x3]
    %52 = vrot.lane.b32.xlu0 %v51, 120
    %v53 = vpop.permute.xlu0 %52
    %vm54 = vcmask 7168
    %s55 = scalar_lea.vmem %s1, 8
    %56 = vst.msk [vmem:[%s55] ss:$20 sm:$0x3] %vm54, %v53
    %v57 = vld [vmem:[#allocation0] sm:$0x3]
    %58 = vrot.lane.b32.xlu0 %v57, 119
    %v59 = vpop.permute.xlu0 %58
    %vm60 = vcmask 7168
    %s61 = scalar_lea.vmem %s1, 9
    %62 = vst.msk [vmem:[%s61] ss:$20 sm:$0x3] %vm60, %v59
    %v63 = vld [vmem:[#allocation0] sm:$0x3]
    %64 = vrot.lane.b32.xlu0 %v63, 118
    %v65 = vpop.permute.xlu0 %64
    %vm66 = vcmask 7168
    %s67 = scalar_lea.vmem %s1, 10
    %68 = vst.msk [vmem:[%s67] ss:$20 sm:$0x3] %vm66, %v65
    %v69 = vld [vmem:[#allocation0] sm:$0x3]
    %70 = vrot.lane.b32.xlu0 %v69, 117
    %v71 = vpop.permute.xlu0 %70
    %vm72 = vcmask 7168
    %s73 = scalar_lea.vmem %s1, 11
    %74 = vst.msk [vmem:[%s73] ss:$20 sm:$0x3] %vm72, %v71
    %s75 = scalar_lea.vmem [#allocation0], 1
    %s76 = smov 3
    %v77 = vld [vmem:[%s75] ss:$-1 sm:%s76]
    %78 = vrot.lane.b32.xlu0 %v77, 116
    %v79 = vpop.permute.xlu0 %78
    %vm80 = vcmask 7168
    %s81 = scalar_lea.vmem %s1, 32
    %82 = vst.msk [vmem:[%s81] ss:$-20 sm:$0x3] %vm80, %v79
    %s83 = scalar_lea.vmem [#allocation0], 1
    %s84 = smov 3
    %v85 = vld [vmem:[%s83] ss:$-1 sm:%s84]
    %86 = vrot.lane.b32.xlu0 %v85, 115
    %v87 = vpop.permute.xlu0 %86
    %vm88 = vcmask 7168
    %s89 = scalar_lea.vmem %s1, 33
    %90 = vst.msk [vmem:[%s89] ss:$-20 sm:$0x3] %vm88, %v87
    %s91 = scalar_lea.vmem [#allocation0], 1
    %s92 = smov 3
    %v93 = vld [vmem:[%s91] ss:$-1 sm:%s92]
    %94 = vrot.lane.b32.xlu0 %v93, 114
    %v95 = vpop.permute.xlu0 %94
    %vm96 = vcmask 7168
    %s97 = scalar_lea.vmem %s1, 34
    %98 = vst.msk [vmem:[%s97] ss:$-20 sm:$0x3] %vm96, %v95
    %s99 = scalar_lea.vmem [#allocation0], 1
    %s100 = smov 3
    %v101 = vld [vmem:[%s99] ss:$-1 sm:%s100]
    %102 = vrot.lane.b32.xlu0 %v101, 113
    %v103 = vpop.permute.xlu0 %102
    %vm104 = vcmask 7168
    %s105 = scalar_lea.vmem %s1, 35
    %106 = vst.msk [vmem:[%s105] ss:$-20 sm:$0x3] %vm104, %v103
    %s107 = scalar_lea.vmem [#allocation0], 1
    %s108 = smov 3
    %v109 = vld [vmem:[%s107] ss:$-1 sm:%s108]
    %110 = vrot.lane.b32.xlu0 %v109, 112
    %v111 = vpop.permute.xlu0 %110
    %vm112 = vcmask 7168
    %s113 = scalar_lea.vmem %s1, 36
    %114 = vst.msk [vmem:[%s113] ss:$-20 sm:$0x3] %vm112, %v111
    %s115 = scalar_lea.vmem [#allocation0], 1
    %s116 = smov 3
    %v117 = vld [vmem:[%s115] ss:$-1 sm:%s116]
    %118 = vrot.lane.b32.xlu0 %v117, 111
    %v119 = vpop.permute.xlu0 %118
    %vm120 = vcmask 7168
    %s121 = scalar_lea.vmem %s1, 37
    %122 = vst.msk [vmem:[%s121] ss:$-20 sm:$0x3] %vm120, %v119
    %s123 = scalar_lea.vmem [#allocation0], 1
    %s124 = smov 3
    %v125 = vld [vmem:[%s123] ss:$-1 sm:%s124]
    %126 = vrot.lane.b32.xlu0 %v125, 110
    %v127 = vpop.permute.xlu0 %126
    %vm128 = vcmask 7168
    %s129 = scalar_lea.vmem %s1, 38
    %130 = vst.msk [vmem:[%s129] ss:$-20 sm:$0x3] %vm128, %v127
    %s131 = scalar_lea.vmem [#allocation0], 1
    %s132 = smov 3
    %v133 = vld [vmem:[%s131] ss:$-1 sm:%s132]
    %134 = vrot.lane.b32.xlu0 %v133, 109
    %v135 = vpop.permute.xlu0 %134
    %vm136 = vcmask 7168
    %s137 = scalar_lea.vmem %s1, 39
    %138 = vst.msk [vmem:[%s137] ss:$-20 sm:$0x3] %vm136, %v135

// kernel: _lambda_.5
$region0: #{_lambda_.5}
  #allocation0 [shape = 'u32[]', space=smem, size = 0x4, offset = 0x4, fixed_abs, tag = 'smem constant byte address 0x4 - core index']
  #allocation1 [shape = 'u32[144,128]{1,0:T(1,128)}', space=vmem, size = 0x12000, scoped, tag = 'internal scratch']
  %s0 = inlined_call_operand.vmem [shape: bf16[44,128], index: 0, kind: input, shape index: {}]
  %s1 = inlined_call_operand.vmem [shape: bf16[5,128,512], index: 1, kind: input, shape index: {}]
  %s2 = inlined_call_operand.vmem [shape: f32[1,512], index: 2, kind: input, shape index: {}]
  %s3 = inlined_call_operand.vmem [shape: f32[1,512], index: 3, kind: input, shape index: {}]
  %s4 = inlined_call_operand.vmem [shape: f32[40,1], index: 4, kind: input, shape index: {}]
  %s5 = inlined_call_operand.vmem [shape: bf16[44,512], index: 5, kind: output, shape index: {}]
  %s6 = sld [smem:[#allocation0]]
  $region125: #{_lambda_.5} parent=0
    _
  %s8 = ssub.s32 1, %s6
  %s9 = scalar_select 0, %s8, %s6
  $region1: #{_lambda_.5} parent=0
    #allocation2 [shape = 'u8[655360]{0}', space=vmem, size = 0xa0000, scoped, tag = 'input window, operand 1']
    #allocation3 [shape = 'u8[49152]{0}', space=vmem, size = 0xc000, scoped, tag = 'output window, operand 0']
    loop: start=0, step=1, limit=4
    $region2: #{_lambda_.5} parent=1 // loop_pre_header
      _
    $region3: #{_lambda_.5} parent=1 // loop_header
      %s11 = sphi 0, %s15
      %p12 = scmp.ge.s32.totalorder %s11, 4
      %s19 = sphi 0, %s19
      %s21 = sphi 0, %s19
      %s22 = sphi 0, %s21
      %s36 = sphi 0, %s22
      %s42 = sphi 0, %s44
      %s45 = sphi 0, %s42
      %s46 = sphi 0, %s45
      %s62 = sphi 0, %s46
      %s68 = sphi 0, %s70
      %s71 = sphi 0, %s68
      %s72 = sphi 0, %s71
      %s88 = sphi 0, %s72
      %s94 = sphi 0, %s96
      %s97 = sphi 0, %s94
      %s98 = sphi 0, %s97
      %s114 = sphi 0, %s98
      %s118 = sphi 0, %s118
      %s120 = sphi 0, %s118
      %s121 = sphi 0, %s120
      %s135 = sphi 0, %s121
      %s141 = sphi 0, %s143
      %s144 = sphi 0, %s141
      %s145 = sphi 0, %s144
      %s161 = sphi 0, %s145
    $region4: #{_lambda_.5} parent=1 // loop_header_branch
      %14 = sbr.rel (%p12) target = $region8
    $region5: #{_lambda_.5} parent=1 // loop_body
      %s16 = ssub.s32 %s11, 1
      %s17 = ssub.s32 %s11, 2
      %s18 = sadd.s32 %s11, 1
      %s20 = sadd.s32 %s19, 1
      %p23 = scmp.eq.s32.totalorder %s11, 1
      %p24 = scmp.ne.s32.totalorder %s19, %s21
      %p25 = scmp.eq.s32.totalorder %s11, 0
      %p26 = por %p24, %p25
      %p27 = scmp.ne.s32.totalorder %s19, %s21
      %p28 = scmp.eq.s32.totalorder %s16, 1
      %p29 = por %p27, %p28
      %p30 = scmp.ne.s32.totalorder %s21, %s22
      %p31 = scmp.eq.s32.totalorder %s16, 0
      %p32 = por %p30, %p31
      %p33 = scmp.ne.s32.totalorder %s21, %s22
      %p34 = scmp.eq.s32.totalorder %s17, 1
      %p35 = por %p33, %p34
      %p37 = scmp.ne.s32.totalorder %s22, %s36
      %p38 = scmp.eq.s32.totalorder %s17, 0
      %p39 = por %p37, %p38
      %s40 = ssub.s32 %s11, %s18
      %p41 = scmp.eq.s32.totalorder %s40, 0
      %s43 = sadd.s32 %s42, 1
      %s44 = scalar_select %p41, %s42, %s43
      %p47 = pneg %p41
      %p48 = scmp.eq.s32.totalorder %s11, 1
      %p49 = por %p47, %p48
      %p50 = scmp.ne.s32.totalorder %s42, %s45
      %p51 = scmp.eq.s32.totalorder %s11, 0
      %p52 = por %p50, %p51
      %p53 = scmp.ne.s32.totalorder %s42, %s45
      %p54 = scmp.eq.s32.totalorder %s16, 1
      %p55 = por %p53, %p54
      %p56 = scmp.ne.s32.totalorder %s45, %s46
      %p57 = scmp.eq.s32.totalorder %s16, 0
      %p58 = por %p56, %p57
      %p59 = scmp.ne.s32.totalorder %s45, %s46
      %p60 = scmp.eq.s32.totalorder %s17, 1
      %p61 = por %p59, %p60
      %p63 = scmp.ne.s32.totalorder %s46, %s62
      %p64 = scmp.eq.s32.totalorder %s17, 0
      %p65 = por %p63, %p64
      %s66 = ssub.s32 %s11, %s18
      %p67 = scmp.eq.s32.totalorder %s66, 0
      %s69 = sadd.s32 %s68, 1
      %s70 = scalar_select %p67, %s68, %s69
      %p73 = pneg %p67
      %p74 = scmp.eq.s32.totalorder %s11, 1
      %p75 = por %p73, %p74
      %p76 = scmp.ne.s32.totalorder %s68, %s71
      %p77 = scmp.eq.s32.totalorder %s11, 0
      %p78 = por %p76, %p77
      %p79 = scmp.ne.s32.totalorder %s68, %s71
      %p80 = scmp.eq.s32.totalorder %s16, 1
      %p81 = por %p79, %p80
      %p82 = scmp.ne.s32.totalorder %s71, %s72
      %p83 = scmp.eq.s32.totalorder %s16, 0
      %p84 = por %p82, %p83
      %p85 = scmp.ne.s32.totalorder %s71, %s72
      %p86 = scmp.eq.s32.totalorder %s17, 1
      %p87 = por %p85, %p86
      %p89 = scmp.ne.s32.totalorder %s72, %s88
      %p90 = scmp.eq.s32.totalorder %s17, 0
      %p91 = por %p89, %p90
      %s92 = ssub.s32 %s11, %s18
      %p93 = scmp.eq.s32.totalorder %s92, 0
      %s95 = sadd.s32 %s94, 1
      %s96 = scalar_select %p93, %s94, %s95
      %p99 = pneg %p93
      %p100 = scmp.eq.s32.totalorder %s11, 1
      %p101 = por %p99, %p100
      %p102 = scmp.ne.s32.totalorder %s94, %s97
      %p103 = scmp.eq.s32.totalorder %s11, 0
      %p104 = por %p102, %p103
      %p105 = scmp.ne.s32.totalorder %s94, %s97
      %p106 = scmp.eq.s32.totalorder %s16, 1
      %p107 = por %p105, %p106
      %p108 = scmp.ne.s32.totalorder %s97, %s98
      %p109 = scmp.eq.s32.totalorder %s16, 0
      %p110 = por %p108, %p109
      %p111 = scmp.ne.s32.totalorder %s97, %s98
      %p112 = scmp.eq.s32.totalorder %s17, 1
      %p113 = por %p111, %p112
      %p115 = scmp.ne.s32.totalorder %s98, %s114
      %p116 = scmp.eq.s32.totalorder %s17, 0
      %p117 = por %p115, %p116
      %s119 = sadd.s32 %s118, 1
      %p122 = scmp.eq.s32.totalorder %s11, 1
      %p123 = scmp.ne.s32.totalorder %s118, %s120
      %p124 = scmp.eq.s32.totalorder %s11, 0
      %p125 = por %p123, %p124
      %p126 = scmp.ne.s32.totalorder %s118, %s120
      %p127 = scmp.eq.s32.totalorder %s16, 1
      %p128 = por %p126, %p127
      %p129 = scmp.ne.s32.totalorder %s120, %s121
      %p130 = scmp.eq.s32.totalorder %s16, 0
      %p131 = por %p129, %p130
      %p132 = scmp.ne.s32.totalorder %s120, %s121
      %p133 = scmp.eq.s32.totalorder %s17, 1
      %p134 = por %p132, %p133
      %p136 = scmp.ne.s32.totalorder %s121, %s135
      %p137 = scmp.eq.s32.totalorder %s17, 0
      %p138 = por %p136, %p137
      %s139 = ssub.s32 %s11, %s18
      %p140 = scmp.eq.s32.totalorder %s139, 0
      %s142 = sadd.s32 %s141, 1
      %s143 = scalar_select %p140, %s141, %s142
      %p146 = pneg %p140
      %p147 = scmp.eq.s32.totalorder %s11, 1
      %p148 = por %p146, %p147
      %p149 = scmp.ne.s32.totalorder %s141, %s144
      %p150 = scmp.eq.s32.totalorder %s11, 0
      %p151 = por %p149, %p150
      %p152 = scmp.ne.s32.totalorder %s141, %s144
      %p153 = scmp.eq.s32.totalorder %s16, 1
      %p154 = por %p152, %p153
      %p155 = scmp.ne.s32.totalorder %s144, %s145
      %p156 = scmp.eq.s32.totalorder %s16, 0
      %p157 = por %p155, %p156
      %p158 = scmp.ne.s32.totalorder %s144, %s145
      %p159 = scmp.eq.s32.totalorder %s17, 1
      %p160 = por %p158, %p159
      %p162 = scmp.ne.s32.totalorder %s145, %s161
      %p163 = scmp.eq.s32.totalorder %s17, 0
      %p164 = por %p162, %p163
      %p165 = scmp.le.s32.totalorder 1, %s11
      %p166 = scmp.lt.s32.totalorder %s11, 3
      %p167 = pnand %p165, %p166
      %p168 = pneg %p167
      // Predicated region
      $region9: #{_lambda_.5} parent=5 // pred_check
        _
      $region10: #{_lambda_.5} parent=5 // pred_check_branch
        %170 = sbr.rel (%p167) target = $region12
      $region11: #{_lambda_.5} parent=5 // pred_region
        %s171 = ssub.s32 %s11, 1
        // Predicated region
        $region13: #{_lambda_.5} parent=11 // pred_check
          %p172 = pneg %p32
        $region14: #{_lambda_.5} parent=11 // pred_check_branch
          %174 = sbr.rel (%p172) target = $region16
        $region15: #{_lambda_.5} parent=11 // pred_region
          _
        $region16: #{_lambda_.5} parent=11 // pred_fallthru
          _
        // Predicated region
        $region17: #{_lambda_.5} parent=11 // pred_check
          %p175 = pneg %p131
        $region18: #{_lambda_.5} parent=11 // pred_check_branch
          %177 = sbr.rel (%p175) target = $region20
        $region19: #{_lambda_.5} parent=11 // pred_region
          _
        $region20: #{_lambda_.5} parent=11 // pred_fallthru
          _
      $region12: #{_lambda_.5} parent=5 // pred_fallthru
        _
      %p178 = scmp.lt.s32.totalorder %s11, 2
      // Predicated region
      $region21: #{_lambda_.5} parent=5 // pred_check
        %p179 = pneg %p178
      $region22: #{_lambda_.5} parent=5 // pred_check_branch
        %181 = sbr.rel (%p179) target = $region24
      $region23: #{_lambda_.5} parent=5 // pred_region
        // Predicated region
        $region25: #{_lambda_.5} parent=23 // pred_check
          %p182 = pneg %p52
        $region26: #{_lambda_.5} parent=23 // pred_check_branch
          %184 = sbr.rel (%p182) target = $region28
        $region27: #{_lambda_.5} parent=23 // pred_region
          %s185 = sand.u32 %s42, 1
          %s186 = sand.u32 %s42, 1
          %s187 = smul.addr %s186, 640
          %s188 = scalar_lea.vmem [#allocation2], %s187
          %s189 = smul.u32 2, %s11
          %s190 = smul.addr %s189, 4
          %s191 = scalar_lea.vmem %s1, %s190
          // Predicated region
          $region29: #{_lambda_.5} parent=27 // pred_check
            _
          $region30: #{_lambda_.5} parent=27 // pred_check_branch
            %193 = sbr.rel (0) target = $region32
          $region31: #{_lambda_.5} parent=27 // pred_region
            // Predicated region
            $region33: #{_lambda_.5} parent=31 // pred_check
              _
            $region34: #{_lambda_.5} parent=31 // pred_check_branch
              %195 = sbr.rel (0) target = $region36
            $region35: #{_lambda_.5} parent=31 // pred_region
              // Predicated region
              $region48: #{_lambda_.5} parent=35 // pred_check
                _
              $region49: #{_lambda_.5} parent=35 // pred_check_branch
                %368 = sbr.rel (0) target = $region51
              $region50: #{_lambda_.5} parent=35 // pred_region
                loop: start=0, step=1, limit=1
                $region52: #{_lambda_.5} parent=50 // loop_pre_header
                  _
                $region53: #{_lambda_.5} parent=50 // loop_header
                  %s370 = sphi 0, %s374
                  %p371 = scmp.ge.s32.totalorder %s370, 1
                  %s375 = sphi %s191, %s191
                  %s376 = sphi %s188, %s188
                $region54: #{_lambda_.5} parent=50 // loop_header_branch
                  %373 = sbr.rel (%p371) target = $region58
                $region55: #{_lambda_.5} parent=50 // loop_body
                  %v377 = vld [vmem:[%s375] sm:$0xff]
                  %378 = vst [vmem:[%s376] sm:$0xff] %v377
                  %v379 = vld [vmem:[%s375 + $0x10] sm:$0xff]
                  %380 = vst [vmem:[%s376 + $0x8] sm:$0xff] %v379
                  %v381 = vld [vmem:[%s375 + $0x20] sm:$0xff]
                  %382 = vst [vmem:[%s376 + $0x10] sm:$0xff] %v381
                  %v383 = vld [vmem:[%s375 + $0x30] sm:$0xff]
                  %384 = vst [vmem:[%s376 + $0x18] sm:$0xff] %v383
                  %v385 = vld [vmem:[%s375 + $0x40] sm:$0xff]
                  %386 = vst [vmem:[%s376 + $0x20] sm:$0xff] %v385
                  %v387 = vld [vmem:[%s375 + $0x50] sm:$0xff]
                  %388 = vst [vmem:[%s376 + $0x28] sm:$0xff] %v387
                  %v389 = vld [vmem:[%s375 + $0x60] sm:$0xff]
                  %390 = vst [vmem:[%s376 + $0x30] sm:$0xff] %v389
                  %v391 = vld [vmem:[%s375 + $0x70] sm:$0xff]
                  %392 = vst [vmem:[%s376 + $0x38] sm:$0xff] %v391
                  %v393 = vld [vmem:[%s375 + $0x80] sm:$0xff]
                  %394 = vst [vmem:[%s376 + $0x40] sm:$0xff] %v393
                  %v395 = vld [vmem:[%s375 + $0x90] sm:$0xff]
                  %396 = vst [vmem:[%s376 + $0x48] sm:$0xff] %v395
                  %v397 = vld [vmem:[%s375 + $0xa0] sm:$0xff]
                  %398 = vst [vmem:[%s376 + $0x50] sm:$0xff] %v397
                  %v399 = vld [vmem:[%s375 + $0xb0] sm:$0xff]
                  %400 = vst [vmem:[%s376 + $0x58] sm:$0xff] %v399
                  %v401 = vld [vmem:[%s375 + $0xc0] sm:$0xff]
                  %402 = vst [vmem:[%s376 + $0x60] sm:$0xff] %v401
                  %v403 = vld [vmem:[%s375 + $0xd0] sm:$0xff]
                  %404 = vst [vmem:[%s376 + $0x68] sm:$0xff] %v403
                  %v405 = vld [vmem:[%s375 + $0xe0] sm:$0xff]
                  %406 = vst [vmem:[%s376 + $0x70] sm:$0xff] %v405
                  %v407 = vld [vmem:[%s375 + $0xf0] sm:$0xff]
                  %408 = vst [vmem:[%s376 + $0x78] sm:$0xff] %v407
                  %v409 = vld [vmem:[%s375 + $0x100] sm:$0xff]
                  %410 = vst [vmem:[%s376 + $0x80] sm:$0xff] %v409
                  %v411 = vld [vmem:[%s375 + $0x110] sm:$0xff]
                  %412 = vst [vmem:[%s376 + $0x88] sm:$0xff] %v411
                  %v413 = vld [vmem:[%s375 + $0x120] sm:$0xff]
                  %414 = vst [vmem:[%s376 + $0x90] sm:$0xff] %v413
                  %v415 = vld [vmem:[%s375 + $0x130] sm:$0xff]
                  %416 = vst [vmem:[%s376 + $0x98] sm:$0xff] %v415
                  %v417 = vld [vmem:[%s375 + $0x140] sm:$0xff]
                  %418 = vst [vmem:[%s376 + $0xa0] sm:$0xff] %v417
                  %v419 = vld [vmem:[%s375 + $0x150] sm:$0xff]
                  %420 = vst [vmem:[%s376 + $0xa8] sm:$0xff] %v419
                  %v421 = vld [vmem:[%s375 + $0x160] sm:$0xff]
                  %422 = vst [vmem:[%s376 + $0xb0] sm:$0xff] %v421
                  %v423 = vld [vmem:[%s375 + $0x170] sm:$0xff]
                  %424 = vst [vmem:[%s376 + $0xb8] sm:$0xff] %v423
                  %v425 = vld [vmem:[%s375 + $0x180] sm:$0xff]
                  %426 = vst [vmem:[%s376 + $0xc0] sm:$0xff] %v425
                  %v427 = vld [vmem:[%s375 + $0x190] sm:$0xff]
                  %428 = vst [vmem:[%s376 + $0xc8] sm:$0xff] %v427
                  %v429 = vld [vmem:[%s375 + $0x1a0] sm:$0xff]
                  %430 = vst [vmem:[%s376 + $0xd0] sm:$0xff] %v429
                  %v431 = vld [vmem:[%s375 + $0x1b0] sm:$0xff]
                  %432 = vst [vmem:[%s376 + $0xd8] sm:$0xff] %v431
                  %v433 = vld [vmem:[%s375 + $0x1c0] sm:$0xff]
                  %434 = vst [vmem:[%s376 + $0xe0] sm:$0xff] %v433
                  %v435 = vld [vmem:[%s375 + $0x1d0] sm:$0xff]
                  %436 = vst [vmem:[%s376 + $0xe8] sm:$0xff] %v435
                  %v437 = vld [vmem:[%s375 + $0x1e0] sm:$0xff]
                  %438 = vst [vmem:[%s376 + $0xf0] sm:$0xff] %v437
                  %v439 = vld [vmem:[%s375 + $0x1f0] sm:$0xff]
                  %440 = vst [vmem:[%s376 + $0xf8] sm:$0xff] %v439
                  %v441 = vld [vmem:[%s375 + $0x200] sm:$0xff]
                  %442 = vst [vmem:[%s376 + $0x100] sm:$0xff] %v441
                  %v443 = vld [vmem:[%s375 + $0x210] sm:$0xff]
                  %444 = vst [vmem:[%s376 + $0x108] sm:$0xff] %v443
                  %v445 = vld [vmem:[%s375 + $0x220] sm:$0xff]
                  %446 = vst [vmem:[%s376 + $0x110] sm:$0xff] %v445
                  %v447 = vld [vmem:[%s375 + $0x230] sm:$0xff]
                  %448 = vst [vmem:[%s376 + $0x118] sm:$0xff] %v447
                  %v449 = vld [vmem:[%s375 + $0x240] sm:$0xff]
                  %450 = vst [vmem:[%s376 + $0x120] sm:$0xff] %v449
                  %v451 = vld [vmem:[%s375 + $0x250] sm:$0xff]
                  %452 = vst [vmem:[%s376 + $0x128] sm:$0xff] %v451
                  %v453 = vld [vmem:[%s375 + $0x260] sm:$0xff]
                  %454 = vst [vmem:[%s376 + $0x130] sm:$0xff] %v453
                  %v455 = vld [vmem:[%s375 + $0x270] sm:$0xff]
                  %456 = vst [vmem:[%s376 + $0x138] sm:$0xff] %v455
                  %v457 = vld [vmem:[%s375 + $0x280] sm:$0xff]
                  %458 = vst [vmem:[%s376 + $0x140] sm:$0xff] %v457
                  %v459 = vld [vmem:[%s375 + $0x290] sm:$0xff]
                  %460 = vst [vmem:[%s376 + $0x148] sm:$0xff] %v459
                  %v461 = vld [vmem:[%s375 + $0x2a0] sm:$0xff]
                  %462 = vst [vmem:[%s376 + $0x150] sm:$0xff] %v461
                  %v463 = vld [vmem:[%s375 + $0x2b0] sm:$0xff]
                  %464 = vst [vmem:[%s376 + $0x158] sm:$0xff] %v463
                  %v465 = vld [vmem:[%s375 + $0x2c0] sm:$0xff]
                  %466 = vst [vmem:[%s376 + $0x160] sm:$0xff] %v465
                  %v467 = vld [vmem:[%s375 + $0x2d0] sm:$0xff]
                  %468 = vst [vmem:[%s376 + $0x168] sm:$0xff] %v467
                  %v469 = vld [vmem:[%s375 + $0x2e0] sm:$0xff]
                  %470 = vst [vmem:[%s376 + $0x170] sm:$0xff] %v469
                  %v471 = vld [vmem:[%s375 + $0x2f0] sm:$0xff]
                  %472 = vst [vmem:[%s376 + $0x178] sm:$0xff] %v471
                  %v473 = vld [vmem:[%s375 + $0x300] sm:$0xff]
                  %474 = vst [vmem:[%s376 + $0x180] sm:$0xff] %v473
                  %v475 = vld [vmem:[%s375 + $0x310] sm:$0xff]
                  %476 = vst [vmem:[%s376 + $0x188] sm:$0xff] %v475
                  %v477 = vld [vmem:[%s375 + $0x320] sm:$0xff]
                  %478 = vst [vmem:[%s376 + $0x190] sm:$0xff] %v477
                  %v479 = vld [vmem:[%s375 + $0x330] sm:$0xff]
                  %480 = vst [vmem:[%s376 + $0x198] sm:$0xff] %v479
                  %v481 = vld [vmem:[%s375 + $0x340] sm:$0xff]
                  %482 = vst [vmem:[%s376 + $0x1a0] sm:$0xff] %v481
                  %v483 = vld [vmem:[%s375 + $0x350] sm:$0xff]
                  %484 = vst [vmem:[%s376 + $0x1a8] sm:$0xff] %v483
                  %v485 = vld [vmem:[%s375 + $0x360] sm:$0xff]
                  %486 = vst [vmem:[%s376 + $0x1b0] sm:$0xff] %v485
                  %v487 = vld [vmem:[%s375 + $0x370] sm:$0xff]
                  %488 = vst [vmem:[%s376 + $0x1b8] sm:$0xff] %v487
                  %v489 = vld [vmem:[%s375 + $0x380] sm:$0xff]
                  %490 = vst [vmem:[%s376 + $0x1c0] sm:$0xff] %v489
                  %v491 = vld [vmem:[%s375 + $0x390] sm:$0xff]
                  %492 = vst [vmem:[%s376 + $0x1c8] sm:$0xff] %v491
                  %v493 = vld [vmem:[%s375 + $0x3a0] sm:$0xff]
                  %494 = vst [vmem:[%s376 + $0x1d0] sm:$0xff] %v493
                  %v495 = vld [vmem:[%s375 + $0x3b0] sm:$0xff]
                  %496 = vst [vmem:[%s376 + $0x1d8] sm:$0xff] %v495
                  %v497 = vld [vmem:[%s375 + $0x3c0] sm:$0xff]
                  %498 = vst [vmem:[%s376 + $0x1e0] sm:$0xff] %v497
                  %v499 = vld [vmem:[%s375 + $0x3d0] sm:$0xff]
                  %500 = vst [vmem:[%s376 + $0x1e8] sm:$0xff] %v499
                  %v501 = vld [vmem:[%s375 + $0x3e0] sm:$0xff]
                  %502 = vst [vmem:[%s376 + $0x1f0] sm:$0xff] %v501
                  %v503 = vld [vmem:[%s375 + $0x3f0] sm:$0xff]
                  %504 = vst [vmem:[%s376 + $0x1f8] sm:$0xff] %v503
                  %v505 = vld [vmem:[%s375 + $0x400] sm:$0xff]
                  %506 = vst [vmem:[%s376 + $0x200] sm:$0xff] %v505
                  %v507 = vld [vmem:[%s375 + $0x410] sm:$0xff]
                  %508 = vst [vmem:[%s376 + $0x208] sm:$0xff] %v507
                  %v509 = vld [vmem:[%s375 + $0x420] sm:$0xff]
                  %510 = vst [vmem:[%s376 + $0x210] sm:$0xff] %v509
                  %v511 = vld [vmem:[%s375 + $0x430] sm:$0xff]
                  %512 = vst [vmem:[%s376 + $0x218] sm:$0xff] %v511
                  %v513 = vld [vmem:[%s375 + $0x440] sm:$0xff]
                  %514 = vst [vmem:[%s376 + $0x220] sm:$0xff] %v513
                  %v515 = vld [vmem:[%s375 + $0x450] sm:$0xff]
                  %516 = vst [vmem:[%s376 + $0x228] sm:$0xff] %v515
                  %v517 = vld [vmem:[%s375 + $0x460] sm:$0xff]
                  %518 = vst [vmem:[%s376 + $0x230] sm:$0xff] %v517
                  %v519 = vld [vmem:[%s375 + $0x470] sm:$0xff]
                  %520 = vst [vmem:[%s376 + $0x238] sm:$0xff] %v519
                  %v521 = vld [vmem:[%s375 + $0x480] sm:$0xff]
                  %522 = vst [vmem:[%s376 + $0x240] sm:$0xff] %v521
                  %v523 = vld [vmem:[%s375 + $0x490] sm:$0xff]
                  %524 = vst [vmem:[%s376 + $0x248] sm:$0xff] %v523
                  %v525 = vld [vmem:[%s375 + $0x4a0] sm:$0xff]
                  %526 = vst [vmem:[%s376 + $0x250] sm:$0xff] %v525
                  %v527 = vld [vmem:[%s375 + $0x4b0] sm:$0xff]
                  %528 = vst [vmem:[%s376 + $0x258] sm:$0xff] %v527
                  %v529 = vld [vmem:[%s375 + $0x4c0] sm:$0xff]
                  %530 = vst [vmem:[%s376 + $0x260] sm:$0xff] %v529
                  %v531 = vld [vmem:[%s375 + $0x4d0] sm:$0xff]
                  %532 = vst [vmem:[%s376 + $0x268] sm:$0xff] %v531
                  %v533 = vld [vmem:[%s375 + $0x4e0] sm:$0xff]
                  %534 = vst [vmem:[%s376 + $0x270] sm:$0xff] %v533
                  %v535 = vld [vmem:[%s375 + $0x4f0] sm:$0xff]
                  %536 = vst [vmem:[%s376 + $0x278] sm:$0xff] %v535
                $region56: #{_lambda_.5} parent=50 // loop_footer
                  %s374 = sadd.s32 1, %s370
                $region57: #{_lambda_.5} parent=50 // loop_footer_branch
                  %369 = sbr.rel target = $region53
                $region58: #{_lambda_.5} parent=50 // loop_exit
                  _
              $region51: #{_lambda_.5} parent=35 // pred_fallthru
                _
              // Predicated region
              $region59: #{_lambda_.5} parent=35 // pred_check
                _
              $region60: #{_lambda_.5} parent=35 // pred_check_branch
                %538 = sbr.rel target = $region62
              $region61: #{_lambda_.5} parent=35 // pred_region
                _
              $region62: #{_lambda_.5} parent=35 // pred_fallthru
                _
            $region36: #{_lambda_.5} parent=31 // pred_fallthru
              _
            // Predicated region
            $region37: #{_lambda_.5} parent=31 // pred_check
              _
            $region38: #{_lambda_.5} parent=31 // pred_check_branch
              %197 = sbr.rel target = $region40
            $region39: #{_lambda_.5} parent=31 // pred_region
              loop: start=0, step=1, limit=1
              $region41: #{_lambda_.5} parent=39 // loop_pre_header
                _
              $region42: #{_lambda_.5} parent=39 // loop_header
                %s200 = sphi 0, %s204
                %p201 = scmp.ge.s32.totalorder %s200, 1
                %s205 = sphi %s191, %s191
                %s206 = sphi %s188, %s188
              $region43: #{_lambda_.5} parent=39 // loop_header_branch
                %203 = sbr.rel (%p201) target = $region47
              $region44: #{_lambda_.5} parent=39 // loop_body
                %v207 = vld [vmem:[%s205] sm:$0xff]
                %208 = vst [vmem:[%s206] sm:$0xff] %v207
                %v209 = vld [vmem:[%s205 + $0x10] sm:$0xff]
                %210 = vst [vmem:[%s206 + $0x8] sm:$0xff] %v209
                %v211 = vld [vmem:[%s205 + $0x20] sm:$0xff]
                %212 = vst [vmem:[%s206 + $0x10] sm:$0xff] %v211
                %v213 = vld [vmem:[%s205 + $0x30] sm:$0xff]
                %214 = vst [vmem:[%s206 + $0x18] sm:$0xff] %v213
                %v215 = vld [vmem:[%s205 + $0x40] sm:$0xff]
                %216 = vst [vmem:[%s206 + $0x20] sm:$0xff] %v215
                %v217 = vld [vmem:[%s205 + $0x50] sm:$0xff]
                %218 = vst [vmem:[%s206 + $0x28] sm:$0xff] %v217
                %v219 = vld [vmem:[%s205 + $0x60] sm:$0xff]
                %220 = vst [vmem:[%s206 + $0x30] sm:$0xff] %v219
                %v221 = vld [vmem:[%s205 + $0x70] sm:$0xff]
                %222 = vst [vmem:[%s206 + $0x38] sm:$0xff] %v221
                %v223 = vld [vmem:[%s205 + $0x80] sm:$0xff]
                %224 = vst [vmem:[%s206 + $0x40] sm:$0xff] %v223
                %v225 = vld [vmem:[%s205 + $0x90] sm:$0xff]
                %226 = vst [vmem:[%s206 + $0x48] sm:$0xff] %v225
                %v227 = vld [vmem:[%s205 + $0xa0] sm:$0xff]
                %228 = vst [vmem:[%s206 + $0x50] sm:$0xff] %v227
                %v229 = vld [vmem:[%s205 + $0xb0] sm:$0xff]
                %230 = vst [vmem:[%s206 + $0x58] sm:$0xff] %v229
                %v231 = vld [vmem:[%s205 + $0xc0] sm:$0xff]
                %232 = vst [vmem:[%s206 + $0x60] sm:$0xff] %v231
                %v233 = vld [vmem:[%s205 + $0xd0] sm:$0xff]
                %234 = vst [vmem:[%s206 + $0x68] sm:$0xff] %v233
                %v235 = vld [vmem:[%s205 + $0xe0] sm:$0xff]
                %236 = vst [vmem:[%s206 + $0x70] sm:$0xff] %v235
                %v237 = vld [vmem:[%s205 + $0xf0] sm:$0xff]
                %238 = vst [vmem:[%s206 + $0x78] sm:$0xff] %v237
                %v239 = vld [vmem:[%s205 + $0x100] sm:$0xff]
                %240 = vst [vmem:[%s206 + $0x80] sm:$0xff] %v239
                %v241 = vld [vmem:[%s205 + $0x110] sm:$0xff]
                %242 = vst [vmem:[%s206 + $0x88] sm:$0xff] %v241
                %v243 = vld [vmem:[%s205 + $0x120] sm:$0xff]
                %244 = vst [vmem:[%s206 + $0x90] sm:$0xff] %v243
                %v245 = vld [vmem:[%s205 + $0x130] sm:$0xff]
                %246 = vst [vmem:[%s206 + $0x98] sm:$0xff] %v245
                %v247 = vld [vmem:[%s205 + $0x140] sm:$0xff]
                %248 = vst [vmem:[%s206 + $0xa0] sm:$0xff] %v247
                %v249 = vld [vmem:[%s205 + $0x150] sm:$0xff]
                %250 = vst [vmem:[%s206 + $0xa8] sm:$0xff] %v249
                %v251 = vld [vmem:[%s205 + $0x160] sm:$0xff]
                %252 = vst [vmem:[%s206 + $0xb0] sm:$0xff] %v251
                %v253 = vld [vmem:[%s205 + $0x170] sm:$0xff]
                %254 = vst [vmem:[%s206 + $0xb8] sm:$0xff] %v253
                %v255 = vld [vmem:[%s205 + $0x180] sm:$0xff]
                %256 = vst [vmem:[%s206 + $0xc0] sm:$0xff] %v255
                %v257 = vld [vmem:[%s205 + $0x190] sm:$0xff]
                %258 = vst [vmem:[%s206 + $0xc8] sm:$0xff] %v257
                %v259 = vld [vmem:[%s205 + $0x1a0] sm:$0xff]
                %260 = vst [vmem:[%s206 + $0xd0] sm:$0xff] %v259
                %v261 = vld [vmem:[%s205 + $0x1b0] sm:$0xff]
                %262 = vst [vmem:[%s206 + $0xd8] sm:$0xff] %v261
                %v263 = vld [vmem:[%s205 + $0x1c0] sm:$0xff]
                %264 = vst [vmem:[%s206 + $0xe0] sm:$0xff] %v263
                %v265 = vld [vmem:[%s205 + $0x1d0] sm:$0xff]
                %266 = vst [vmem:[%s206 + $0xe8] sm:$0xff] %v265
                %v267 = vld [vmem:[%s205 + $0x1e0] sm:$0xff]
                %268 = vst [vmem:[%s206 + $0xf0] sm:$0xff] %v267
                %v269 = vld [vmem:[%s205 + $0x1f0] sm:$0xff]
                %270 = vst [vmem:[%s206 + $0xf8] sm:$0xff] %v269
                %v271 = vld [vmem:[%s205 + $0x200] sm:$0xff]
                %272 = vst [vmem:[%s206 + $0x100] sm:$0xff] %v271
                %v273 = vld [vmem:[%s205 + $0x210] sm:$0xff]
                %274 = vst [vmem:[%s206 + $0x108] sm:$0xff] %v273
                %v275 = vld [vmem:[%s205 + $0x220] sm:$0xff]
                %276 = vst [vmem:[%s206 + $0x110] sm:$0xff] %v275
                %v277 = vld [vmem:[%s205 + $0x230] sm:$0xff]
                %278 = vst [vmem:[%s206 + $0x118] sm:$0xff] %v277
                %v279 = vld [vmem:[%s205 + $0x240] sm:$0xff]
                %280 = vst [vmem:[%s206 + $0x120] sm:$0xff] %v279
                %v281 = vld [vmem:[%s205 + $0x250] sm:$0xff]
                %282 = vst [vmem:[%s206 + $0x128] sm:$0xff] %v281
                %v283 = vld [vmem:[%s205 + $0x260] sm:$0xff]
                %284 = vst [vmem:[%s206 + $0x130] sm:$0xff] %v283
                %v285 = vld [vmem:[%s205 + $0x270] sm:$0xff]
                %286 = vst [vmem:[%s206 + $0x138] sm:$0xff] %v285
                %v287 = vld [vmem:[%s205 + $0x280] sm:$0xff]
                %288 = vst [vmem:[%s206 + $0x140] sm:$0xff] %v287
                %v289 = vld [vmem:[%s205 + $0x290] sm:$0xff]
                %290 = vst [vmem:[%s206 + $0x148] sm:$0xff] %v289
                %v291 = vld [vmem:[%s205 + $0x2a0] sm:$0xff]
                %292 = vst [vmem:[%s206 + $0x150] sm:$0xff] %v291
                %v293 = vld [vmem:[%s205 + $0x2b0] sm:$0xff]
                %294 = vst [vmem:[%s206 + $0x158] sm:$0xff] %v293
                %v295 = vld [vmem:[%s205 + $0x2c0] sm:$0xff]
                %296 = vst [vmem:[%s206 + $0x160] sm:$0xff] %v295
                %v297 = vld [vmem:[%s205 + $0x2d0] sm:$0xff]
                %298 = vst [vmem:[%s206 + $0x168] sm:$0xff] %v297
                %v299 = vld [vmem:[%s205 + $0x2e0] sm:$0xff]
                %300 = vst [vmem:[%s206 + $0x170] sm:$0xff] %v299
                %v301 = vld [vmem:[%s205 + $0x2f0] sm:$0xff]
                %302 = vst [vmem:[%s206 + $0x178] sm:$0xff] %v301
                %v303 = vld [vmem:[%s205 + $0x300] sm:$0xff]
                %304 = vst [vmem:[%s206 + $0x180] sm:$0xff] %v303
                %v305 = vld [vmem:[%s205 + $0x310] sm:$0xff]
                %306 = vst [vmem:[%s206 + $0x188] sm:$0xff] %v305
                %v307 = vld [vmem:[%s205 + $0x320] sm:$0xff]
                %308 = vst [vmem:[%s206 + $0x190] sm:$0xff] %v307
                %v309 = vld [vmem:[%s205 + $0x330] sm:$0xff]
                %310 = vst [vmem:[%s206 + $0x198] sm:$0xff] %v309
                %v311 = vld [vmem:[%s205 + $0x340] sm:$0xff]
                %312 = vst [vmem:[%s206 + $0x1a0] sm:$0xff] %v311
                %v313 = vld [vmem:[%s205 + $0x350] sm:$0xff]
                %314 = vst [vmem:[%s206 + $0x1a8] sm:$0xff] %v313
                %v315 = vld [vmem:[%s205 + $0x360] sm:$0xff]
                %316 = vst [vmem:[%s206 + $0x1b0] sm:$0xff] %v315
                %v317 = vld [vmem:[%s205 + $0x370] sm:$0xff]
                %318 = vst [vmem:[%s206 + $0x1b8] sm:$0xff] %v317
                %v319 = vld [vmem:[%s205 + $0x380] sm:$0xff]
                %320 = vst [vmem:[%s206 + $0x1c0] sm:$0xff] %v319
                %v321 = vld [vmem:[%s205 + $0x390] sm:$0xff]
                %322 = vst [vmem:[%s206 + $0x1c8] sm:$0xff] %v321
                %v323 = vld [vmem:[%s205 + $0x3a0] sm:$0xff]
                %324 = vst [vmem:[%s206 + $0x1d0] sm:$0xff] %v323
                %v325 = vld [vmem:[%s205 + $0x3b0] sm:$0xff]
                %326 = vst [vmem:[%s206 + $0x1d8] sm:$0xff] %v325
                %v327 = vld [vmem:[%s205 + $0x3c0] sm:$0xff]
                %328 = vst [vmem:[%s206 + $0x1e0] sm:$0xff] %v327
                %v329 = vld [vmem:[%s205 + $0x3d0] sm:$0xff]
                %330 = vst [vmem:[%s206 + $0x1e8] sm:$0xff] %v329
                %v331 = vld [vmem:[%s205 + $0x3e0] sm:$0xff]
                %332 = vst [vmem:[%s206 + $0x1f0] sm:$0xff] %v331
                %v333 = vld [vmem:[%s205 + $0x3f0] sm:$0xff]
                %334 = vst [vmem:[%s206 + $0x1f8] sm:$0xff] %v333
                %v335 = vld [vmem:[%s205 + $0x400] sm:$0xff]
                %336 = vst [vmem:[%s206 + $0x200] sm:$0xff] %v335
                %v337 = vld [vmem:[%s205 + $0x410] sm:$0xff]
                %338 = vst [vmem:[%s206 + $0x208] sm:$0xff] %v337
                %v339 = vld [vmem:[%s205 + $0x420] sm:$0xff]
                %340 = vst [vmem:[%s206 + $0x210] sm:$0xff] %v339
                %v341 = vld [vmem:[%s205 + $0x430] sm:$0xff]
                %342 = vst [vmem:[%s206 + $0x218] sm:$0xff] %v341
                %v343 = vld [vmem:[%s205 + $0x440] sm:$0xff]
                %344 = vst [vmem:[%s206 + $0x220] sm:$0xff] %v343
                %v345 = vld [vmem:[%s205 + $0x450] sm:$0xff]
                %346 = vst [vmem:[%s206 + $0x228] sm:$0xff] %v345
                %v347 = vld [vmem:[%s205 + $0x460] sm:$0xff]
                %348 = vst [vmem:[%s206 + $0x230] sm:$0xff] %v347
                %v349 = vld [vmem:[%s205 + $0x470] sm:$0xff]
                %350 = vst [vmem:[%s206 + $0x238] sm:$0xff] %v349
                %v351 = vld [vmem:[%s205 + $0x480] sm:$0xff]
                %352 = vst [vmem:[%s206 + $0x240] sm:$0xff] %v351
                %v353 = vld [vmem:[%s205 + $0x490] sm:$0xff]
                %354 = vst [vmem:[%s206 + $0x248] sm:$0xff] %v353
                %v355 = vld [vmem:[%s205 + $0x4a0] sm:$0xff]
                %356 = vst [vmem:[%s206 + $0x250] sm:$0xff] %v355
                %v357 = vld [vmem:[%s205 + $0x4b0] sm:$0xff]
                %358 = vst [vmem:[%s206 + $0x258] sm:$0xff] %v357
                %v359 = vld [vmem:[%s205 + $0x4c0] sm:$0xff]
                %360 = vst [vmem:[%s206 + $0x260] sm:$0xff] %v359
                %v361 = vld [vmem:[%s205 + $0x4d0] sm:$0xff]
                %362 = vst [vmem:[%s206 + $0x268] sm:$0xff] %v361
                %v363 = vld [vmem:[%s205 + $0x4e0] sm:$0xff]
                %364 = vst [vmem:[%s206 + $0x270] sm:$0xff] %v363
                %v365 = vld [vmem:[%s205 + $0x4f0] sm:$0xff]
                %366 = vst [vmem:[%s206 + $0x278] sm:$0xff] %v365
              $region45: #{_lambda_.5} parent=39 // loop_footer
                %s204 = sadd.s32 1, %s200
              $region46: #{_lambda_.5} parent=39 // loop_footer_branch
                %199 = sbr.rel target = $region42
              $region47: #{_lambda_.5} parent=39 // loop_exit
                _
            $region40: #{_lambda_.5} parent=31 // pred_fallthru
              _
          $region32: #{_lambda_.5} parent=27 // pred_fallthru
            _
          %539 = vnop
        $region28: #{_lambda_.5} parent=23 // pred_fallthru
          _
        // Predicated region
        $region63: #{_lambda_.5} parent=23 // pred_check
          %p540 = pneg %p78
        $region64: #{_lambda_.5} parent=23 // pred_check_branch
          %542 = sbr.rel (%p540) target = $region66
        $region65: #{_lambda_.5} parent=23 // pred_region
          %s543 = smul.u32 2, %s11
          %p544 = scmp.lt.s32.totalorder %s543, 3
          %s545 = scalar_select %p544, %s543, 3
          %s546 = scalar_lea.vmem %s2, %s545
          %s547 = smul.u32 2, %s11
        $region66: #{_lambda_.5} parent=23 // pred_fallthru
          _
        // Predicated region
        $region67: #{_lambda_.5} parent=23 // pred_check
          %p548 = pneg %p104
        $region68: #{_lambda_.5} parent=23 // pred_check_branch
          %550 = sbr.rel (%p548) target = $region70
        $region69: #{_lambda_.5} parent=23 // pred_region
          %s551 = smul.u32 2, %s11
          %p552 = scmp.lt.s32.totalorder %s551, 3
          %s553 = scalar_select %p552, %s551, 3
          %s554 = scalar_lea.vmem %s3, %s553
          %s555 = smul.u32 2, %s11
        $region70: #{_lambda_.5} parent=23 // pred_fallthru
          _
      $region24: #{_lambda_.5} parent=5 // pred_fallthru
        _
      %p556 = scmp.le.s32.totalorder 1, %s11
      %p557 = scmp.lt.s32.totalorder %s11, 3
      %p558 = pnand %p556, %p557
      %p559 = pneg %p558
      // Predicated region
      $region71: #{_lambda_.5} parent=5 // pred_check
        _
      $region72: #{_lambda_.5} parent=5 // pred_check_branch
        %561 = sbr.rel (%p558) target = $region74
      $region73: #{_lambda_.5} parent=5 // pred_region
        %s562 = ssub.s32 %s11, 1
        %s563 = sand.u32 %s45, 1
        %s564 = sand.u32 %s45, 1
        %s565 = smul.addr %s564, 640
        %s566 = scalar_lea.vmem [#allocation2], %s565
        // Predicated region
        $region75: #{_lambda_.5} parent=73 // pred_check
          %p567 = pneg %p58
        $region76: #{_lambda_.5} parent=73 // pred_check_branch
          %569 = sbr.rel (%p567) target = $region78
        $region77: #{_lambda_.5} parent=73 // pred_region
          _
        $region78: #{_lambda_.5} parent=73 // pred_fallthru
          _
        %p570 = pneg %p32
        %p571 = pneg %p29
        %s572 = sand.u32 %s45, 1
        %s573 = sand.u32 %s45, 1
        %s574 = smul.addr %s573, 640
        %s575 = scalar_lea.vmem [#allocation2], %s574
        %p576 = pneg %p58
        %p577 = pneg %p55
        %s578 = smul.u32 2, %s16
        %p579 = scmp.lt.s32.totalorder %s578, 3
        %s580 = scalar_select %p579, %s578, 3
        %s581 = scalar_lea.vmem %s2, %s580
        %p582 = pneg %p84
        %p583 = pneg %p81
        %s584 = smul.u32 2, %s16
        %p585 = scmp.lt.s32.totalorder %s584, 3
        %s586 = scalar_select %p585, %s584, 3
        %s587 = scalar_lea.vmem %s3, %s586
        %p588 = pneg %p110
        %p589 = pneg %p107
        %p590 = pneg %p131
        %p591 = pneg %p128
        %p592 = pneg %p157
        %p593 = pneg %p154
        %s594 = sand.u32 %s144, 1
        %s595 = sand.u32 %s144, 1
        %s596 = smul.addr %s595, 48
        %s597 = scalar_lea.vmem [#allocation3], %s596
        %s598 = smul.u32 2, %s16
        %s599 = smul.u32 2, %s16
        %p600 = scmp.lt.s32.totalorder %s599, 3
        %s601 = scalar_select %p600, %s599, 3
        %s602 = scalar_lea.vmem %s2, %s601
        %s603 = smul.u32 2, %s16
        %s604 = smul.u32 2, %s16
        %p605 = scmp.lt.s32.totalorder %s604, 3
        %s606 = scalar_select %p605, %s604, 3
        %s607 = scalar_lea.vmem %s3, %s606
        %s608 = smul.u32 2, %s16
        %s609 = smul.u32 2, %s16
        %v611 = vld [vmem:[%s0] sm:$0xf]
        %v612 = vld [vmem:[%s0 + $0x4] sm:$0xf]
        %v613 = vld [vmem:[%s0 + $0x8] sm:$0xf]
        %v614 = vld [vmem:[%s0 + $0xc] sm:$0xf]
        %v615 = vld [vmem:[%s0 + $0x10] sm:$0xf]
        %v616 = vld [vmem:[%s566] sm:$0xff]
        %v617 = vld [vmem:[%s566 + $0x8] sm:$0xff]
        %v618 = vld [vmem:[%s566 + $0x10] sm:$0xff]
        %v619 = vld [vmem:[%s566 + $0x18] sm:$0xff]
        %v620 = vld [vmem:[%s566 + $0x20] sm:$0xff]
        %v621 = vld [vmem:[%s566 + $0x28] sm:$0xff]
        %v622 = vld [vmem:[%s566 + $0x30] sm:$0xff]
        %v623 = vld [vmem:[%s566 + $0x38] sm:$0xff]
        %v624 = vld [vmem:[%s566 + $0x40] sm:$0xff]
        %v625 = vld [vmem:[%s566 + $0x48] sm:$0xff]
        %v626 = vld [vmem:[%s566 + $0x50] sm:$0xff]
        %v627 = vld [vmem:[%s566 + $0x58] sm:$0xff]
        %v628 = vld [vmem:[%s566 + $0x60] sm:$0xff]
        %v629 = vld [vmem:[%s566 + $0x68] sm:$0xff]
        %v630 = vld [vmem:[%s566 + $0x70] sm:$0xff]
        %v631 = vld [vmem:[%s566 + $0x78] sm:$0xff]
        %v632 = vld [vmem:[%s0 + $0x14] sm:$0x1]
        %s633 = scalar_lea.vmem %s566, 128 [#allocation2]
        %v634 = vld [vmem:[%s633] sm:$0xff]
        %v635 = vld [vmem:[%s633 + $0x8] sm:$0xff]
        %v636 = vld [vmem:[%s633 + $0x10] sm:$0xff]
        %v637 = vld [vmem:[%s633 + $0x18] sm:$0xff]
        %v638 = vld [vmem:[%s633 + $0x20] sm:$0xff]
        %v639 = vld [vmem:[%s633 + $0x28] sm:$0xff]
        %v640 = vld [vmem:[%s633 + $0x30] sm:$0xff]
        %v641 = vld [vmem:[%s633 + $0x38] sm:$0xff]
        %v642 = vld [vmem:[%s633 + $0x40] sm:$0xff]
        %v643 = vld [vmem:[%s633 + $0x48] sm:$0xff]
        %v644 = vld [vmem:[%s633 + $0x50] sm:$0xff]
        %v645 = vld [vmem:[%s633 + $0x58] sm:$0xff]
        %v646 = vld [vmem:[%s633 + $0x60] sm:$0xff]
        %v647 = vld [vmem:[%s633 + $0x68] sm:$0xff]
        %v648 = vld [vmem:[%s633 + $0x70] sm:$0xff]
        %v649 = vld [vmem:[%s633 + $0x78] sm:$0xff]
        %v656 = vunpack.c.l.b16 %v611
        %v657 = vunpack.c.l.b16 %v612
        %v658 = vunpack.c.l.b16 %v613
        %v659 = vunpack.c.l.b16 %v614
        %v660 = vunpack.c.l.b16 %v615
        %v661 = vunpack.c.l.b16 %v632
        %v662 = vpack.c.b16 %v657, %v656
        %v663 = vpack.c.b16 %v659, %v658
        %v664 = vpack.c.b16 %v661, %v660
        %vm665 = vsmask.f32 7424
        %v667 = vshrl.u32 %v662, 16
        %v669 = vshll.u32 %v662, 16
        %v671 = vrot.slane %v669, 1
        %v672 = vor.u32 %v667, %v671
        %v674 = vshll.u32 %v663, 16
        %v676 = vrot.slane %v674, 1
        %v677 = vsel %vm665, %v672, %v676
        %v678 = vshrl.u32 %v663, 16
        %v680 = vor.u32 %v678, %v676
        %v682 = vshll.u32 %v664, 16
        %v684 = vrot.slane %v682, 1
        %v685 = vsel %vm665, %v680, %v684
        %v686 = vshrl.u32 %v664, 16
        %v688 = vor.u32 %v686, %v684
        %v708 = vunpack.c.l.b16 %v634
        %v709 = vunpack.c.h.b16 %v634
        %v710 = vunpack.c.l.b16 %v635
        %v711 = vunpack.c.h.b16 %v635
        %v712 = vunpack.c.l.b16 %v636
        %v713 = vunpack.c.h.b16 %v636
        %v714 = vunpack.c.l.b16 %v637
        %v715 = vunpack.c.h.b16 %v637
        %v716 = vunpack.c.l.b16 %v638
        %v717 = vunpack.c.h.b16 %v638
        %v718 = vunpack.c.l.b16 %v639
        %v719 = vunpack.c.h.b16 %v639
        %v720 = vunpack.c.l.b16 %v640
        %v721 = vunpack.c.h.b16 %v640
        %v722 = vunpack.c.l.b16 %v641
        %v723 = vunpack.c.h.b16 %v641
        %v724 = vunpack.c.l.b16 %v642
        %v725 = vunpack.c.h.b16 %v642
        %v726 = vunpack.c.l.b16 %v643
        %v727 = vunpack.c.h.b16 %v643
        %v728 = vunpack.c.l.b16 %v644
        %v729 = vunpack.c.h.b16 %v644
        %v730 = vunpack.c.l.b16 %v645
        %v731 = vunpack.c.h.b16 %v645
        %v732 = vunpack.c.l.b16 %v646
        %v733 = vunpack.c.h.b16 %v646
        %v734 = vunpack.c.l.b16 %v647
        %v735 = vunpack.c.h.b16 %v647
        %v736 = vunpack.c.l.b16 %v648
        %v737 = vunpack.c.h.b16 %v648
        %v738 = vunpack.c.l.b16 %v649
        %v739 = vunpack.c.h.b16 %v649
        %v740 = vpack.c.b16 %v710, %v708
        %v741 = vpack.c.b16 %v711, %v709
        %v742 = vpack.c.b16 %v714, %v712
        %v743 = vpack.c.b16 %v715, %v713
        %v744 = vpack.c.b16 %v718, %v716
        %v745 = vpack.c.b16 %v719, %v717
        %v746 = vpack.c.b16 %v722, %v720
        %v747 = vpack.c.b16 %v723, %v721
        %v748 = vpack.c.b16 %v726, %v724
        %v749 = vpack.c.b16 %v727, %v725
        %v750 = vpack.c.b16 %v730, %v728
        %v751 = vpack.c.b16 %v731, %v729
        %v752 = vpack.c.b16 %v734, %v732
        %v753 = vpack.c.b16 %v735, %v733
        %v754 = vpack.c.b16 %v738, %v736
        %v755 = vpack.c.b16 %v739, %v737
        %772 = vmatprep.subr.bf16.mxu0 %v741
        %773 = vmatpush1.bf16.msra.mxu0 %v740
        %774 = vmatprep.subr.bf16.mxu0 %v743
        %775 = vmatpush1.bf16.msra.mxu0 %v742
        %776 = vmatprep.subr.bf16.mxu0 %v745
        %777 = vmatpush1.bf16.msra.mxu0 %v744
        %778 = vmatprep.subr.bf16.mxu0 %v747
        %779 = vmatpush1.bf16.msra.mxu0 %v746
        %780 = vmatprep.subr.bf16.mxu0 %v749
        %781 = vmatpush1.bf16.msra.mxu0 %v748
        %782 = vmatprep.subr.bf16.mxu0 %v751
        %783 = vmatpush1.bf16.msra.mxu0 %v750
        %784 = vmatprep.subr.bf16.mxu0 %v753
        %785 = vmatpush1.bf16.msra.mxu0 %v752
        %786 = vmatprep.subr.bf16.mxu0 %v755
        %787 = vmatpush1.bf16.msra.mxu0 %v754
        %788 = vmatprep.subr.bf16.mxu0 0
        %789 = vmatpush1.bf16.msra.mxu0 0
        %790 = vmatprep.subr.bf16.mxu0 0
        %791 = vmatpush1.bf16.msra.mxu0 0
        %792 = vmatprep.subr.bf16.mxu0 0
        %793 = vmatpush1.bf16.msra.mxu0 0
        %794 = vmatprep.subr.bf16.mxu0 0
        %795 = vmatpush1.bf16.msra.mxu0 0
        %796 = vmatprep.subr.bf16.mxu0 0
        %797 = vmatpush1.bf16.msra.mxu0 0
        %798 = vmatprep.subr.bf16.mxu0 0
        %799 = vmatpush1.bf16.msra.mxu0 0
        %800 = vmatprep.subr.bf16.mxu0 0
        %801 = vmatpush1.bf16.msra.mxu0 0
        %802 = vmatprep.subr.bf16.mxu0 0
        %803 = vmatpush1.bf16.msra.mxu0 0
        %804 = vmatprep.mubr.bf16.mxu0 0
        %805 = vmatmul.mubr.bf16.gmra.mrb[0].mxu0 %v677
        %v806 = vpop.f32.mrb[0].mxu0
        %v807 = vadd.f32 0.0, %v806
        %v808 = vpop.f32.mrb[0].mxu0
        %v809 = vadd.f32 0.0, %v808
        %v810 = vpop.f32.mrb[0].mxu0
        %v811 = vadd.f32 0.0, %v810
        %v812 = vpop.f32.mrb[0].mxu0
        %v813 = vadd.f32 0.0, %v812
        %814 = vmatprep.mubr.bf16.mxu0 0
        %815 = vmatmul.mubr.bf16.gmra.mrb[0].mxu0 %v685
        %v816 = vpop.f32.mrb[0].mxu0
        %v817 = vadd.f32 0.0, %v816
        %v818 = vpop.f32.mrb[0].mxu0
        %v819 = vadd.f32 0.0, %v818
        %v820 = vpop.f32.mrb[0].mxu0
        %v821 = vadd.f32 0.0, %v820
        %v822 = vpop.f32.mrb[0].mxu0
        %v823 = vadd.f32 0.0, %v822
        %824 = vmatprep.mubr.bf16.mxu0 0
        %825 = vmatmul.mubr.bf16.gmra.mrb[0].mxu0 %v688
        %v826 = vpop.f32.mrb[0].mxu0
        %v827 = vadd.f32 0.0, %v826
        %v828 = vpop.f32.mrb[0].mxu0
        %v829 = vadd.f32 0.0, %v828
        %v830 = vpop.f32.mrb[0].mxu0
        %v831 = vpop.f32.mrb[0].mxu0
        %832 = vdwg.mxu0
        %v833 = vpack.c.b16 %v660, %v660
        %v853 = vunpack.c.l.b16 %v616
        %v854 = vunpack.c.h.b16 %v616
        %v855 = vunpack.c.l.b16 %v617
        %v856 = vunpack.c.h.b16 %v617
        %v857 = vunpack.c.l.b16 %v618
        %v858 = vunpack.c.h.b16 %v618
        %v859 = vunpack.c.l.b16 %v619
        %v860 = vunpack.c.h.b16 %v619
        %v861 = vunpack.c.l.b16 %v620
        %v862 = vunpack.c.h.b16 %v620
        %v863 = vunpack.c.l.b16 %v621
        %v864 = vunpack.c.h.b16 %v621
        %v865 = vunpack.c.l.b16 %v622
        %v866 = vunpack.c.h.b16 %v622
        %v867 = vunpack.c.l.b16 %v623
        %v868 = vunpack.c.h.b16 %v623
        %v869 = vunpack.c.l.b16 %v624
        %v870 = vunpack.c.h.b16 %v624
        %v871 = vunpack.c.l.b16 %v625
        %v872 = vunpack.c.h.b16 %v625
        %v873 = vunpack.c.l.b16 %v626
        %v874 = vunpack.c.h.b16 %v626
        %v875 = vunpack.c.l.b16 %v627
        %v876 = vunpack.c.h.b16 %v627
        %v877 = vunpack.c.l.b16 %v628
        %v878 = vunpack.c.h.b16 %v628
        %v879 = vunpack.c.l.b16 %v629
        %v880 = vunpack.c.h.b16 %v629
        %v881 = vunpack.c.l.b16 %v630
        %v882 = vunpack.c.h.b16 %v630
        %v883 = vunpack.c.l.b16 %v631
        %v884 = vunpack.c.h.b16 %v631
        %v885 = vpack.c.b16 %v855, %v853
        %v886 = vpack.c.b16 %v856, %v854
        %v887 = vpack.c.b16 %v859, %v857
        %v888 = vpack.c.b16 %v860, %v858
        %v889 = vpack.c.b16 %v863, %v861
        %v890 = vpack.c.b16 %v864, %v862
        %v891 = vpack.c.b16 %v867, %v865
        %v892 = vpack.c.b16 %v868, %v866
        %v893 = vpack.c.b16 %v871, %v869
        %v894 = vpack.c.b16 %v872, %v870
        %v895 = vpack.c.b16 %v875, %v873
        %v896 = vpack.c.b16 %v876, %v874
        %v897 = vpack.c.b16 %v879, %v877
        %v898 = vpack.c.b16 %v880, %v878
        %v899 = vpack.c.b16 %v883, %v881
        %v900 = vpack.c.b16 %v884, %v882
        %917 = vmatprep.subr.bf16.mxu0 %v886
        %918 = vmatpush1.bf16.msra.mxu0 %v885
        %919 = vmatprep.subr.bf16.mxu0 %v888
        %920 = vmatpush1.bf16.msra.mxu0 %v887
        %921 = vmatprep.subr.bf16.mxu0 %v890
        %922 = vmatpush1.bf16.msra.mxu0 %v889
        %923 = vmatprep.subr.bf16.mxu0 %v892
        %924 = vmatpush1.bf16.msra.mxu0 %v891
        %925 = vmatprep.subr.bf16.mxu0 %v894
        %926 = vmatpush1.bf16.msra.mxu0 %v893
        %927 = vmatprep.subr.bf16.mxu0 %v896
        %928 = vmatpush1.bf16.msra.mxu0 %v895
        %929 = vmatprep.subr.bf16.mxu0 %v898
        %930 = vmatpush1.bf16.msra.mxu0 %v897
        %931 = vmatprep.subr.bf16.mxu0 %v900
        %932 = vmatpush1.bf16.msra.mxu0 %v899
        %933 = vmatprep.subr.bf16.mxu0 0
        %934 = vmatpush1.bf16.msra.mxu0 0
        %935 = vmatprep.subr.bf16.mxu0 0
        %936 = vmatpush1.bf16.msra.mxu0 0
        %937 = vmatprep.subr.bf16.mxu0 0
        %938 = vmatpush1.bf16.msra.mxu0 0
        %939 = vmatprep.subr.bf16.mxu0 0
        %940 = vmatpush1.bf16.msra.mxu0 0
        %941 = vmatprep.subr.bf16.mxu0 0
        %942 = vmatpush1.bf16.msra.mxu0 0
        %943 = vmatprep.subr.bf16.mxu0 0
        %944 = vmatpush1.bf16.msra.mxu0 0
        %945 = vmatprep.subr.bf16.mxu0 0
        %946 = vmatpush1.bf16.msra.mxu0 0
        %947 = vmatprep.subr.bf16.mxu0 0
        %948 = vmatpush1.bf16.msra.mxu0 0
        %949 = vmatprep.mubr.bf16.mxu0 0
        %950 = vmatmul.mubr.bf16.gmra.mrb[0].mxu0 %v662
        %v951 = vpop.f32.mrb[0].mxu0
        %v952 = vadd.f32 %v807, %v951
        %v953 = vpop.f32.mrb[0].mxu0
        %v954 = vadd.f32 %v809, %v953
        %v955 = vpop.f32.mrb[0].mxu0
        %v956 = vadd.f32 %v811, %v955
        %v957 = vpop.f32.mrb[0].mxu0
        %v958 = vadd.f32 %v813, %v957
        %959 = vmatprep.mubr.bf16.mxu0 0
        %960 = vmatmul.mubr.bf16.gmra.mrb[0].mxu0 %v663
        %v961 = vpop.f32.mrb[0].mxu0
        %v962 = vadd.f32 %v817, %v961
        %v963 = vpop.f32.mrb[0].mxu0
        %v964 = vadd.f32 %v819, %v963
        %v965 = vpop.f32.mrb[0].mxu0
        %v966 = vadd.f32 %v821, %v965
        %v967 = vpop.f32.mrb[0].mxu0
        %v968 = vadd.f32 %v823, %v967
        %969 = vmatprep.mubr.bf16.mxu0 0
        %970 = vmatmul.mubr.bf16.gmra.mrb[0].mxu0 %v833
        %v971 = vpop.f32.mrb[0].mxu0
        %v972 = vadd.f32 %v827, %v971
        %v973 = vpop.f32.mrb[0].mxu0
        %v974 = vadd.f32 %v829, %v973
        %v975 = vpop.f32.mrb[0].mxu0
        %v976 = vpop.f32.mrb[0].mxu0
        %977 = vdwg.mxu0
        %v978 = vld [vmem:[%s0] sm:$0xe]
        %s979 = scalar_lea.vmem %s566, 256 [#allocation2]
        %v980 = vld [vmem:[%s979] sm:$0xff]
        %v981 = vld [vmem:[%s979 + $0x8] sm:$0xff]
        %v982 = vld [vmem:[%s979 + $0x10] sm:$0xff]
        %v983 = vld [vmem:[%s979 + $0x18] sm:$0xff]
        %v984 = vld [vmem:[%s979 + $0x20] sm:$0xff]
        %v985 = vld [vmem:[%s979 + $0x28] sm:$0xff]
        %v986 = vld [vmem:[%s979 + $0x30] sm:$0xff]
        %v987 = vld [vmem:[%s979 + $0x38] sm:$0xff]
        %v988 = vld [vmem:[%s979 + $0x40] sm:$0xff]
        %v989 = vld [vmem:[%s979 + $0x48] sm:$0xff]
        %v990 = vld [vmem:[%s979 + $0x50] sm:$0xff]
        %v991 = vld [vmem:[%s979 + $0x58] sm:$0xff]
        %v992 = vld [vmem:[%s979 + $0x60] sm:$0xff]
        %v993 = vld [vmem:[%s979 + $0x68] sm:$0xff]
        %v994 = vld [vmem:[%s979 + $0x70] sm:$0xff]
        %v995 = vld [vmem:[%s979 + $0x78] sm:$0xff]
        %v997 = vunpack.c.l.b16 %v978
        %v998 = vpack.c.b16 %v657, %v997
        %vm999 = vcmask 1046528
        %v1000 = vrot.slane %v998, 1
        %v1001 = vrot.slane %v663, 1
        %v1002 = vsel %vm999, %v1000, %v1001
        %v1003 = vrot.slane %v664, 1
        %v1004 = vsel %vm999, %v1001, %v1003
        %v1024 = vunpack.c.l.b16 %v980
        %v1025 = vunpack.c.h.b16 %v980
        %v1026 = vunpack.c.l.b16 %v981
        %v1027 = vunpack.c.h.b16 %v981
        %v1028 = vunpack.c.l.b16 %v982
        %v1029 = vunpack.c.h.b16 %v982
        %v1030 = vunpack.c.l.b16 %v983
        %v1031 = vunpack.c.h.b16 %v983
        %v1032 = vunpack.c.l.b16 %v984
        %v1033 = vunpack.c.h.b16 %v984
        %v1034 = vunpack.c.l.b16 %v985
        %v1035 = vunpack.c.h.b16 %v985
        %v1036 = vunpack.c.l.b16 %v986
        %v1037 = vunpack.c.h.b16 %v986
        %v1038 = vunpack.c.l.b16 %v987
        %v1039 = vunpack.c.h.b16 %v987
        %v1040 = vunpack.c.l.b16 %v988
        %v1041 = vunpack.c.h.b16 %v988
        %v1042 = vunpack.c.l.b16 %v989
        %v1043 = vunpack.c.h.b16 %v989
        %v1044 = vunpack.c.l.b16 %v990
        %v1045 = vunpack.c.h.b16 %v990
        %v1046 = vunpack.c.l.b16 %v991
        %v1047 = vunpack.c.h.b16 %v991
        %v1048 = vunpack.c.l.b16 %v992
        %v1049 = vunpack.c.h.b16 %v992
        %v1050 = vunpack.c.l.b16 %v993
        %v1051 = vunpack.c.h.b16 %v993
        %v1052 = vunpack.c.l.b16 %v994
        %v1053 = vunpack.c.h.b16 %v994
        %v1054 = vunpack.c.l.b16 %v995
        %v1055 = vunpack.c.h.b16 %v995
        %v1056 = vpack.c.b16 %v1026, %v1024
        %v1057 = vpack.c.b16 %v1027, %v1025
        %v1058 = vpack.c.b16 %v1030, %v1028
        %v1059 = vpack.c.b16 %v1031, %v1029
        %v1060 = vpack.c.b16 %v1034, %v1032
        %v1061 = vpack.c.b16 %v1035, %v1033
        %v1062 = vpack.c.b16 %v1038, %v1036
        %v1063 = vpack.c.b16 %v1039, %v1037
        %v1064 = vpack.c.b16 %v1042, %v1040
        %v1065 = vpack.c.b16 %v1043, %v1041
        %v1066 = vpack.c.b16 %v1046, %v1044
        %v1067 = vpack.c.b16 %v1047, %v1045
        %v1068 = vpack.c.b16 %v1050, %v1048
        %v1069 = vpack.c.b16 %v1051, %v1049
        %v1070 = vpack.c.b16 %v1054, %v1052
        %v1071 = vpack.c.b16 %v1055, %v1053
        %1088 = vmatprep.subr.bf16.mxu0 %v1057
        %1089 = vmatpush1.bf16.msra.mxu0 %v1056
        %1090 = vmatprep.subr.bf16.mxu0 %v1059
        %1091 = vmatpush1.bf16.msra.mxu0 %v1058
        %1092 = vmatprep.subr.bf16.mxu0 %v1061
        %1093 = vmatpush1.bf16.msra.mxu0 %v1060
        %1094 = vmatprep.subr.bf16.mxu0 %v1063
        %1095 = vmatpush1.bf16.msra.mxu0 %v1062
        %1096 = vmatprep.subr.bf16.mxu0 %v1065
        %1097 = vmatpush1.bf16.msra.mxu0 %v1064
        %1098 = vmatprep.subr.bf16.mxu0 %v1067
        %1099 = vmatpush1.bf16.msra.mxu0 %v1066
        %1100 = vmatprep.subr.bf16.mxu0 %v1069
        %1101 = vmatpush1.bf16.msra.mxu0 %v1068
        %1102 = vmatprep.subr.bf16.mxu0 %v1071
        %1103 = vmatpush1.bf16.msra.mxu0 %v1070
        %1104 = vmatprep.subr.bf16.mxu0 0
        %1105 = vmatpush1.bf16.msra.mxu0 0
        %1106 = vmatprep.subr.bf16.mxu0 0
        %1107 = vmatpush1.bf16.msra.mxu0 0
        %1108 = vmatprep.subr.bf16.mxu0 0
        %1109 = vmatpush1.bf16.msra.mxu0 0
        %1110 = vmatprep.subr.bf16.mxu0 0
        %1111 = vmatpush1.bf16.msra.mxu0 0
        %1112 = vmatprep.subr.bf16.mxu0 0
        %1113 = vmatpush1.bf16.msra.mxu0 0
        %1114 = vmatprep.subr.bf16.mxu0 0
        %1115 = vmatpush1.bf16.msra.mxu0 0
        %1116 = vmatprep.subr.bf16.mxu0 0
        %1117 = vmatpush1.bf16.msra.mxu0 0
        %1118 = vmatprep.subr.bf16.mxu0 0
        %1119 = vmatpush1.bf16.msra.mxu0 0
        %1120 = vmatprep.mubr.bf16.mxu0 0
        %1121 = vmatmul.mubr.bf16.gmra.mrb[0].mxu0 %v1002
        %v1122 = vpop.f32.mrb[0].mxu0
        %v1123 = vadd.f32 0.0, %v1122
        %v1124 = vpop.f32.mrb[0].mxu0
        %v1125 = vadd.f32 0.0, %v1124
        %v1126 = vpop.f32.mrb[0].mxu0
        %v1127 = vadd.f32 0.0, %v1126
        %v1128 = vpop.f32.mrb[0].mxu0
        %v1129 = vadd.f32 0.0, %v1128
        %1130 = vmatprep.mubr.bf16.mxu0 0
        %1131 = vmatmul.mubr.bf16.gmra.mrb[0].mxu0 %v1004
        %v1132 = vpop.f32.mrb[0].mxu0
        %v1133 = vadd.f32 0.0, %v1132
        %v1134 = vpop.f32.mrb[0].mxu0
        %v1135 = vadd.f32 0.0, %v1134
        %v1136 = vpop.f32.mrb[0].mxu0
        %v1137 = vadd.f32 0.0, %v1136
        %v1138 = vpop.f32.mrb[0].mxu0
        %v1139 = vadd.f32 0.0, %v1138
        %1140 = vmatprep.mubr.bf16.mxu0 0
        %1141 = vmatmul.mubr.bf16.gmra.mrb[0].mxu0 %v1003
        %v1142 = vpop.f32.mrb[0].mxu0
        %v1143 = vadd.f32 0.0, %v1142
        %v1144 = vpop.f32.mrb[0].mxu0
        %v1145 = vadd.f32 0.0, %v1144
        %v1146 = vpop.f32.mrb[0].mxu0
        %v1147 = vpop.f32.mrb[0].mxu0
        %1148 = vdwg.mxu0
        %v1149 = vadd.f32 %v952, %v1123
        %v1150 = vadd.f32 %v954, %v1125
        %v1151 = vadd.f32 %v956, %v1127
        %v1152 = vadd.f32 %v958, %v1129
        %v1153 = vadd.f32 %v962, %v1133
        %v1154 = vadd.f32 %v964, %v1135
        %v1155 = vadd.f32 %v966, %v1137
        %v1156 = vadd.f32 %v968, %v1139
        %v1157 = vadd.f32 %v972, %v1143
        %v1158 = vadd.f32 %v974, %v1145
        %v1159 = vld [vmem:[%s0 + $0x14] sm:$0x3]
        %s1160 = scalar_lea.vmem %s566, 384 [#allocation2]
        %v1161 = vld [vmem:[%s1160] sm:$0xff]
        %v1162 = vld [vmem:[%s1160 + $0x8] sm:$0xff]
        %v1163 = vld [vmem:[%s1160 + $0x10] sm:$0xff]
        %v1164 = vld [vmem:[%s1160 + $0x18] sm:$0xff]
        %v1165 = vld [vmem:[%s1160 + $0x20] sm:$0xff]
        %v1166 = vld [vmem:[%s1160 + $0x28] sm:$0xff]
        %v1167 = vld [vmem:[%s1160 + $0x30] sm:$0xff]
        %v1168 = vld [vmem:[%s1160 + $0x38] sm:$0xff]
        %v1169 = vld [vmem:[%s1160 + $0x40] sm:$0xff]
        %v1170 = vld [vmem:[%s1160 + $0x48] sm:$0xff]
        %v1171 = vld [vmem:[%s1160 + $0x50] sm:$0xff]
        %v1172 = vld [vmem:[%s1160 + $0x58] sm:$0xff]
        %v1173 = vld [vmem:[%s1160 + $0x60] sm:$0xff]
        %v1174 = vld [vmem:[%s1160 + $0x68] sm:$0xff]
        %v1175 = vld [vmem:[%s1160 + $0x70] sm:$0xff]
        %v1176 = vld [vmem:[%s1160 + $0x78] sm:$0xff]
        %v1178 = vunpack.c.l.b16 %v1159
        %v1179 = vpack.c.b16 %v1178, %v660
        %vm1180 = vsmask.f32 6400
        %v1182 = vshrl.u32 %v998, 16
        %v1184 = vrot.slane %v1182, 1
        %v1185 = vshll.u32 %v998, 16
        %v1187 = vrot.slane %v1185, 2
        %v1188 = vor.u32 %v1184, %v1187
        %v1189 = vrot.slane %v678, 1
        %v1190 = vrot.slane %v674, 2
        %v1191 = vor.u32 %v1189, %v1190
        %v1192 = vsel %vm1180, %v1188, %v1191
        %v1194 = vshrl.u32 %v1179, 16
        %v1196 = vrot.slane %v1194, 1
        %v1197 = vshll.u32 %v1179, 16
        %v1199 = vrot.slane %v1197, 2
        %v1200 = vor.u32 %v1196, %v1199
        %v1201 = vsel %vm1180, %v1191, %v1200
        %v1221 = vunpack.c.l.b16 %v1161
        %v1222 = vunpack.c.h.b16 %v1161
        %v1223 = vunpack.c.l.b16 %v1162
        %v1224 = vunpack.c.h.b16 %v1162
        %v1225 = vunpack.c.l.b16 %v1163
        %v1226 = vunpack.c.h.b16 %v1163
        %v1227 = vunpack.c.l.b16 %v1164
        %v1228 = vunpack.c.h.b16 %v1164
        %v1229 = vunpack.c.l.b16 %v1165
        %v1230 = vunpack.c.h.b16 %v1165
        %v1231 = vunpack.c.l.b16 %v1166
        %v1232 = vunpack.c.h.b16 %v1166
        %v1233 = vunpack.c.l.b16 %v1167
        %v1234 = vunpack.c.h.b16 %v1167
        %v1235 = vunpack.c.l.b16 %v1168
        %v1236 = vunpack.c.h.b16 %v1168
        %v1237 = vunpack.c.l.b16 %v1169
        %v1238 = vunpack.c.h.b16 %v1169
        %v1239 = vunpack.c.l.b16 %v1170
        %v1240 = vunpack.c.h.b16 %v1170
        %v1241 = vunpack.c.l.b16 %v1171
        %v1242 = vunpack.c.h.b16 %v1171
        %v1243 = vunpack.c.l.b16 %v1172
        %v1244 = vunpack.c.h.b16 %v1172
        %v1245 = vunpack.c.l.b16 %v1173
        %v1246 = vunpack.c.h.b16 %v1173
        %v1247 = vunpack.c.l.b16 %v1174
        %v1248 = vunpack.c.h.b16 %v1174
        %v1249 = vunpack.c.l.b16 %v1175
        %v1250 = vunpack.c.h.b16 %v1175
        %v1251 = vunpack.c.l.b16 %v1176
        %v1252 = vunpack.c.h.b16 %v1176
        %v1253 = vpack.c.b16 %v1223, %v1221
        %v1254 = vpack.c.b16 %v1224, %v1222
        %v1255 = vpack.c.b16 %v1227, %v1225
        %v1256 = vpack.c.b16 %v1228, %v1226
        %v1257 = vpack.c.b16 %v1231, %v1229
        %v1258 = vpack.c.b16 %v1232, %v1230
        %v1259 = vpack.c.b16 %v1235, %v1233
        %v1260 = vpack.c.b16 %v1236, %v1234
        %v1261 = vpack.c.b16 %v1239, %v1237
        %v1262 = vpack.c.b16 %v1240, %v1238
        %v1263 = vpack.c.b16 %v1243, %v1241
        %v1264 = vpack.c.b16 %v1244, %v1242
        %v1265 = vpack.c.b16 %v1247, %v1245
        %v1266 = vpack.c.b16 %v1248, %v1246
        %v1267 = vpack.c.b16 %v1251, %v1249
        %v1268 = vpack.c.b16 %v1252, %v1250
        %1285 = vmatprep.subr.bf16.mxu0 %v1254
        %1286 = vmatpush1.bf16.msra.mxu0 %v1253
        %1287 = vmatprep.subr.bf16.mxu0 %v1256
        %1288 = vmatpush1.bf16.msra.mxu0 %v1255
        %1289 = vmatprep.subr.bf16.mxu0 %v1258
        %1290 = vmatpush1.bf16.msra.mxu0 %v1257
        %1291 = vmatprep.subr.bf16.mxu0 %v1260
        %1292 = vmatpush1.bf16.msra.mxu0 %v1259
        %1293 = vmatprep.subr.bf16.mxu0 %v1262
        %1294 = vmatpush1.bf16.msra.mxu0 %v1261
        %1295 = vmatprep.subr.bf16.mxu0 %v1264
        %1296 = vmatpush1.bf16.msra.mxu0 %v1263
        %1297 = vmatprep.subr.bf16.mxu0 %v1266
        %1298 = vmatpush1.bf16.msra.mxu0 %v1265
        %1299 = vmatprep.subr.bf16.mxu0 %v1268
        %1300 = vmatpush1.bf16.msra.mxu0 %v1267
        %1301 = vmatprep.subr.bf16.mxu0 0
        %1302 = vmatpush1.bf16.msra.mxu0 0
        %1303 = vmatprep.subr.bf16.mxu0 0
        %1304 = vmatpush1.bf16.msra.mxu0 0
        %1305 = vmatprep.subr.bf16.mxu0 0
        %1306 = vmatpush1.bf16.msra.mxu0 0
        %1307 = vmatprep.subr.bf16.mxu0 0
        %1308 = vmatpush1.bf16.msra.mxu0 0
        %1309 = vmatprep.subr.bf16.mxu0 0
        %1310 = vmatpush1.bf16.msra.mxu0 0
        %1311 = vmatprep.subr.bf16.mxu0 0
        %1312 = vmatpush1.bf16.msra.mxu0 0
        %1313 = vmatprep.subr.bf16.mxu0 0
        %1314 = vmatpush1.bf16.msra.mxu0 0
        %1315 = vmatprep.subr.bf16.mxu0 0
        %1316 = vmatpush1.bf16.msra.mxu0 0
        %1317 = vmatprep.mubr.bf16.mxu0 0
        %1318 = vmatmul.mubr.bf16.gmra.mrb[0].mxu0 %v1192
        %v1319 = vpop.f32.mrb[0].mxu0
        %v1320 = vadd.f32 0.0, %v1319
        %v1321 = vpop.f32.mrb[0].mxu0
        %v1322 = vadd.f32 0.0, %v1321
        %v1323 = vpop.f32.mrb[0].mxu0
        %v1324 = vadd.f32 0.0, %v1323
        %v1325 = vpop.f32.mrb[0].mxu0
        %v1326 = vadd.f32 0.0, %v1325
        %1327 = vmatprep.mubr.bf16.mxu0 0
        %1328 = vmatmul.mubr.bf16.gmra.mrb[0].mxu0 %v1201
        %v1329 = vpop.f32.mrb[0].mxu0
        %v1330 = vadd.f32 0.0, %v1329
        %v1331 = vpop.f32.mrb[0].mxu0
        %v1332 = vadd.f32 0.0, %v1331
        %v1333 = vpop.f32.mrb[0].mxu0
        %v1334 = vadd.f32 0.0, %v1333
        %v1335 = vpop.f32.mrb[0].mxu0
        %v1336 = vadd.f32 0.0, %v1335
        %1337 = vmatprep.mubr.bf16.mxu0 0
        %1338 = vmatmul.mubr.bf16.gmra.mrb[0].mxu0 %v1200
        %v1339 = vpop.f32.mrb[0].mxu0
        %v1340 = vadd.f32 0.0, %v1339
        %v1341 = vpop.f32.mrb[0].mxu0
        %v1342 = vadd.f32 0.0, %v1341
        %v1343 = vpop.f32.mrb[0].mxu0
        %v1344 = vpop.f32.mrb[0].mxu0
        %1345 = vdwg.mxu0
        %v1346 = vadd.f32 %v1149, %v1320
        %v1347 = vadd.f32 %v1150, %v1322
        %v1348 = vadd.f32 %v1151, %v1324
        %v1349 = vadd.f32 %v1152, %v1326
        %v1350 = vadd.f32 %v1153, %v1330
        %v1351 = vadd.f32 %v1154, %v1332
        %v1352 = vadd.f32 %v1155, %v1334
        %v1353 = vadd.f32 %v1156, %v1336
        %v1354 = vadd.f32 %v1157, %v1340
        %v1355 = vadd.f32 %v1158, %v1342
        %v1356 = vld [vmem:[%s0] sm:$0xc]
        %s1357 = scalar_lea.vmem %s566, 512 [#allocation2]
        %v1358 = vld [vmem:[%s1357] sm:$0xff]
        %v1359 = vld [vmem:[%s1357 + $0x8] sm:$0xff]
        %v1360 = vld [vmem:[%s1357 + $0x10] sm:$0xff]
        %v1361 = vld [vmem:[%s1357 + $0x18] sm:$0xff]
        %v1362 = vld [vmem:[%s1357 + $0x20] sm:$0xff]
        %v1363 = vld [vmem:[%s1357 + $0x28] sm:$0xff]
        %v1364 = vld [vmem:[%s1357 + $0x30] sm:$0xff]
        %v1365 = vld [vmem:[%s1357 + $0x38] sm:$0xff]
        %v1366 = vld [vmem:[%s1357 + $0x40] sm:$0xff]
        %v1367 = vld [vmem:[%s1357 + $0x48] sm:$0xff]
        %v1368 = vld [vmem:[%s1357 + $0x50] sm:$0xff]
        %v1369 = vld [vmem:[%s1357 + $0x58] sm:$0xff]
        %v1370 = vld [vmem:[%s1357 + $0x60] sm:$0xff]
        %v1371 = vld [vmem:[%s1357 + $0x68] sm:$0xff]
        %v1372 = vld [vmem:[%s1357 + $0x70] sm:$0xff]
        %v1373 = vld [vmem:[%s1357 + $0x78] sm:$0xff]
        %v1375 = vunpack.c.l.b16 %v1356
        %v1376 = vpack.c.b16 %v657, %v1375
        %vm1377 = vcmask 1045504
        %v1378 = vrot.slane %v1376, 2
        %v1379 = vrot.slane %v663, 2
        %v1380 = vsel %vm1377, %v1378, %v1379
        %v1381 = vrot.slane %v1179, 2
        %v1382 = vsel %vm1377, %v1379, %v1381
        %v1402 = vunpack.c.l.b16 %v1358
        %v1403 = vunpack.c.h.b16 %v1358
        %v1404 = vunpack.c.l.b16 %v1359
        %v1405 = vunpack.c.h.b16 %v1359
        %v1406 = vunpack.c.l.b16 %v1360
        %v1407 = vunpack.c.h.b16 %v1360
        %v1408 = vunpack.c.l.b16 %v1361
        %v1409 = vunpack.c.h.b16 %v1361
        %v1410 = vunpack.c.l.b16 %v1362
        %v1411 = vunpack.c.h.b16 %v1362
        %v1412 = vunpack.c.l.b16 %v1363
        %v1413 = vunpack.c.h.b16 %v1363
        %v1414 = vunpack.c.l.b16 %v1364
        %v1415 = vunpack.c.h.b16 %v1364
        %v1416 = vunpack.c.l.b16 %v1365
        %v1417 = vunpack.c.h.b16 %v1365
        %v1418 = vunpack.c.l.b16 %v1366
        %v1419 = vunpack.c.h.b16 %v1366
        %v1420 = vunpack.c.l.b16 %v1367
        %v1421 = vunpack.c.h.b16 %v1367
        %v1422 = vunpack.c.l.b16 %v1368
        %v1423 = vunpack.c.h.b16 %v1368
        %v1424 = vunpack.c.l.b16 %v1369
        %v1425 = vunpack.c.h.b16 %v1369
        %v1426 = vunpack.c.l.b16 %v1370
        %v1427 = vunpack.c.h.b16 %v1370
        %v1428 = vunpack.c.l.b16 %v1371
        %v1429 = vunpack.c.h.b16 %v1371
        %v1430 = vunpack.c.l.b16 %v1372
        %v1431 = vunpack.c.h.b16 %v1372
        %v1432 = vunpack.c.l.b16 %v1373
        %v1433 = vunpack.c.h.b16 %v1373
        %v1434 = vpack.c.b16 %v1404, %v1402
        %v1435 = vpack.c.b16 %v1405, %v1403
        %v1436 = vpack.c.b16 %v1408, %v1406
        %v1437 = vpack.c.b16 %v1409, %v1407
        %v1438 = vpack.c.b16 %v1412, %v1410
        %v1439 = vpack.c.b16 %v1413, %v1411
        %v1440 = vpack.c.b16 %v1416, %v1414
        %v1441 = vpack.c.b16 %v1417, %v1415
        %v1442 = vpack.c.b16 %v1420, %v1418
        %v1443 = vpack.c.b16 %v1421, %v1419
        %v1444 = vpack.c.b16 %v1424, %v1422
        %v1445 = vpack.c.b16 %v1425, %v1423
        %v1446 = vpack.c.b16 %v1428, %v1426
        %v1447 = vpack.c.b16 %v1429, %v1427
        %v1448 = vpack.c.b16 %v1432, %v1430
        %v1449 = vpack.c.b16 %v1433, %v1431
        %1466 = vmatprep.subr.bf16.mxu0 %v1435
        %1467 = vmatpush1.bf16.msra.mxu0 %v1434
        %1468 = vmatprep.subr.bf16.mxu0 %v1437
        %1469 = vmatpush1.bf16.msra.mxu0 %v1436
        %1470 = vmatprep.subr.bf16.mxu0 %v1439
        %1471 = vmatpush1.bf16.msra.mxu0 %v1438
        %1472 = vmatprep.subr.bf16.mxu0 %v1441
        %1473 = vmatpush1.bf16.msra.mxu0 %v1440
        %1474 = vmatprep.subr.bf16.mxu0 %v1443
        %1475 = vmatpush1.bf16.msra.mxu0 %v1442
        %1476 = vmatprep.subr.bf16.mxu0 %v1445
        %1477 = vmatpush1.bf16.msra.mxu0 %v1444
        %1478 = vmatprep.subr.bf16.mxu0 %v1447
        %1479 = vmatpush1.bf16.msra.mxu0 %v1446
        %1480 = vmatprep.subr.bf16.mxu0 %v1449
        %1481 = vmatpush1.bf16.msra.mxu0 %v1448
        %1482 = vmatprep.subr.bf16.mxu0 0
        %1483 = vmatpush1.bf16.msra.mxu0 0
        %1484 = vmatprep.subr.bf16.mxu0 0
        %1485 = vmatpush1.bf16.msra.mxu0 0
        %1486 = vmatprep.subr.bf16.mxu0 0
        %1487 = vmatpush1.bf16.msra.mxu0 0
        %1488 = vmatprep.subr.bf16.mxu0 0
        %1489 = vmatpush1.bf16.msra.mxu0 0
        %1490 = vmatprep.subr.bf16.mxu0 0
        %1491 = vmatpush1.bf16.msra.mxu0 0
        %1492 = vmatprep.subr.bf16.mxu0 0
        %1493 = vmatpush1.bf16.msra.mxu0 0
        %1494 = vmatprep.subr.bf16.mxu0 0
        %1495 = vmatpush1.bf16.msra.mxu0 0
        %1496 = vmatprep.subr.bf16.mxu0 0
        %1497 = vmatpush1.bf16.msra.mxu0 0
        %1498 = vmatprep.mubr.bf16.mxu0 0
        %1499 = vmatmul.mubr.bf16.gmra.mrb[0].mxu0 %v1380
        %v1500 = vpop.f32.mrb[0].mxu0
        %v1501 = vadd.f32 0.0, %v1500
        %v1502 = vpop.f32.mrb[0].mxu0
        %v1503 = vadd.f32 0.0, %v1502
        %v1504 = vpop.f32.mrb[0].mxu0
        %v1505 = vadd.f32 0.0, %v1504
        %v1506 = vpop.f32.mrb[0].mxu0
        %v1507 = vadd.f32 0.0, %v1506
        %1508 = vmatprep.mubr.bf16.mxu0 0
        %1509 = vmatmul.mubr.bf16.gmra.mrb[0].mxu0 %v1382
        %v1510 = vpop.f32.mrb[0].mxu0
        %v1511 = vadd.f32 0.0, %v1510
        %v1512 = vpop.f32.mrb[0].mxu0
        %v1513 = vadd.f32 0.0, %v1512
        %v1514 = vpop.f32.mrb[0].mxu0
        %v1515 = vadd.f32 0.0, %v1514
        %v1516 = vpop.f32.mrb[0].mxu0
        %v1517 = vadd.f32 0.0, %v1516
        %1518 = vmatprep.mubr.bf16.mxu0 0
        %1519 = vmatmul.mubr.bf16.gmra.mrb[0].mxu0 %v1381
        %v1520 = vpop.f32.mrb[0].mxu0
        %v1521 = vadd.f32 0.0, %v1520
        %v1522 = vpop.f32.mrb[0].mxu0
        %v1523 = vadd.f32 0.0, %v1522
        %v1524 = vpop.f32.mrb[0].mxu0
        %v1525 = vpop.f32.mrb[0].mxu0
        %1526 = vdwg.mxu0
        %v1527 = vadd.f32 %v1346, %v1501
        %v1528 = vadd.f32 %v1347, %v1503
        %v1529 = vadd.f32 %v1348, %v1505
        %v1530 = vadd.f32 %v1349, %v1507
        %v1531 = vadd.f32 %v1350, %v1511
        %v1532 = vadd.f32 %v1351, %v1513
        %v1533 = vadd.f32 %v1352, %v1515
        %v1534 = vadd.f32 %v1353, %v1517
        %v1535 = vadd.f32 %v1354, %v1521
        %v1536 = vadd.f32 %v1355, %v1523
        %v1537 = vld [vmem:[%s4] sm:$0xff]
        %v1538 = vld [vmem:[%s4 + $0x8] sm:$0xff]
        %v1539 = vld [vmem:[%s4 + $0x10] sm:$0xff]
        %v1540 = vld [vmem:[%s4 + $0x18] sm:$0xff]
        %v1541 = vld [vmem:[%s4 + $0x20] sm:$0xff]
        %1543 = vset.pattern.permute.xlu0 0
        %1544 = vperm.xlu0 %1543, %v1537
        %v1545 = vpop.permute.xlu0 %1544
        %1548 = vset.pattern.permute.xlu0 0
        %1549 = vperm.xlu0 %1548, %v1538
        %v1550 = vpop.permute.xlu0 %1549
        %1553 = vset.pattern.permute.xlu0 0
        %1554 = vperm.xlu0 %1553, %v1539
        %v1555 = vpop.permute.xlu0 %1554
        %1558 = vset.pattern.permute.xlu0 0
        %1559 = vperm.xlu0 %1558, %v1540
        %v1560 = vpop.permute.xlu0 %1559
        %1563 = vset.pattern.permute.xlu0 0
        %1564 = vperm.xlu0 %1563, %v1541
        %v1565 = vpop.permute.xlu0 %1564
        %v1567 = vmul.f32 %v1527, %v1545
        %v1568 = vmul.f32 %v1528, %v1545
        %v1569 = vmul.f32 %v1529, %v1550
        %v1570 = vmul.f32 %v1530, %v1550
        %v1571 = vmul.f32 %v1531, %v1555
        %v1572 = vmul.f32 %v1532, %v1555
        %v1573 = vmul.f32 %v1533, %v1560
        %v1574 = vmul.f32 %v1534, %v1560
        %v1575 = vmul.f32 %v1535, %v1565
        %v1576 = vmul.f32 %v1536, %v1565
        %v1577 = vadd.f32 %v1567, %v1569
        %v1578 = vadd.f32 %v1577, %v1571
        %v1579 = vadd.f32 %v1578, %v1573
        %v1580 = vadd.f32 %v1579, %v1575
        %v1581 = vrot.slane %v1580, 4
        %v1582 = vadd.f32 %v1580, %v1581
        %v1583 = vrot.slane %v1582, 2
        %v1584 = vadd.f32 %v1582, %v1583
        %v1585 = vrot.slane %v1584, 1
        %v1586 = vadd.f32 %v1584, %v1585
        %v1587 = vadd.f32 %v1568, %v1570
        %v1588 = vadd.f32 %v1587, %v1572
        %v1589 = vadd.f32 %v1588, %v1574
        %v1590 = vadd.f32 %v1589, %v1576
        %v1591 = vrot.slane %v1590, 4
        %v1592 = vadd.f32 %v1590, %v1591
        %v1593 = vrot.slane %v1592, 2
        %v1594 = vadd.f32 %v1592, %v1593
        %v1595 = vrot.slane %v1594, 1
        %v1596 = vadd.f32 %v1594, %v1595
        %v1597 = vmul.f32 %v1586, 0.03125
        %v1598 = vmul.f32 %v1596, 0.03125
        %v1599 = vmul.f32 %v1567, %v1567
        %v1600 = vmul.f32 %v1568, %v1568
        %v1601 = vmul.f32 %v1569, %v1569
        %v1602 = vmul.f32 %v1570, %v1570
        %v1603 = vmul.f32 %v1571, %v1571
        %v1604 = vmul.f32 %v1572, %v1572
        %v1605 = vmul.f32 %v1573, %v1573
        %v1606 = vmul.f32 %v1574, %v1574
        %v1607 = vmul.f32 %v1575, %v1575
        %v1608 = vmul.f32 %v1576, %v1576
        %v1609 = vadd.f32 %v1599, %v1601
        %v1610 = vadd.f32 %v1609, %v1603
        %v1611 = vadd.f32 %v1610, %v1605
        %v1612 = vadd.f32 %v1611, %v1607
        %v1613 = vrot.slane %v1612, 4
        %v1614 = vadd.f32 %v1612, %v1613
        %v1615 = vrot.slane %v1614, 2
        %v1616 = vadd.f32 %v1614, %v1615
        %v1617 = vrot.slane %v1616, 1
        %v1618 = vadd.f32 %v1616, %v1617
        %v1619 = vadd.f32 %v1600, %v1602
        %v1620 = vadd.f32 %v1619, %v1604
        %v1621 = vadd.f32 %v1620, %v1606
        %v1622 = vadd.f32 %v1621, %v1608
        %v1623 = vrot.slane %v1622, 4
        %v1624 = vadd.f32 %v1622, %v1623
        %v1625 = vrot.slane %v1624, 2
        %v1626 = vadd.f32 %v1624, %v1625
        %v1627 = vrot.slane %v1626, 1
        %v1628 = vadd.f32 %v1626, %v1627
        %v1629 = vmul.f32 %v1618, 0.03125
        %v1630 = vmul.f32 %v1628, 0.03125
        %v1631 = vmul.f32 %v1597, %v1597
        %v1632 = vmul.f32 %v1598, %v1598
        %v1633 = vsub.f32 %v1629, %v1631
        %v1634 = vsub.f32 %v1630, %v1632
        %v1635 = vld [vmem:[%s602] sm:$0x3]
        %v1636 = vadd.f32 %v1633, 1e-05
        %v1637 = vadd.f32 %v1634, 1e-05
        %v1638 = vrsqrt.pop %v1636
        %v1639 = vrsqrt.pop %v1637
        %v1642 = vcombine.low %v1638, %v1639
        %v1644 = vunpack.c.l.s4 1966171168
        %v1645 = vunpack.c.0.s8 %v1644
        %v1646 = vlaneseq
        %v1647 = vshrl.u32 %v1646, 7
        %v1648 = vsub.s32 %v1645, %v1647
        %v1649 = vrot.slane %v1642, %v1648
        %v1651 = vunpack.c.l.s4 1966171168
        %v1652 = vunpack.c.0.s8 %v1651
        %v1653 = vlaneseq
        %v1654 = vshrl.u32 %v1653, 7
        %v1655 = vsub.s32 %v1652, %v1654
        %v1656 = vrot.slane %v1649, %v1655
        %v1658 = vmul.f32 %v1635, %v1656
        %v1659 = vld [vmem:[%s607] sm:$0x3]
        %v1661 = vlaneseq
        %v1662 = vshrl.u32 %v1661, 7
        %v1663 = vsub.s32 0, %v1662
        %v1664 = vrot.slane %v1658, %v1663
        %v1665 = vlaneseq
        %v1666 = vshrl.u32 %v1665, 7
        %v1667 = vsub.s32 1, %v1666
        %v1668 = vrot.slane %v1658, %v1667
        %v1671 = vmul.f32 %v1597, %v1664
        %v1672 = vmul.f32 %v1598, %v1668
        %v1675 = vcombine.low %v1671, %v1672
        %v1677 = vunpack.c.l.s4 1966171168
        %v1678 = vunpack.c.0.s8 %v1677
        %v1679 = vlaneseq
        %v1680 = vshrl.u32 %v1679, 7
        %v1681 = vsub.s32 %v1678, %v1680
        %v1682 = vrot.slane %v1675, %v1681
        %v1684 = vunpack.c.l.s4 1966171168
        %v1685 = vunpack.c.0.s8 %v1684
        %v1686 = vlaneseq
        %v1687 = vshrl.u32 %v1686, 7
        %v1688 = vsub.s32 %v1685, %v1687
        %v1689 = vrot.slane %v1682, %v1688
        %v1691 = vsub.f32 %v1659, %v1689
        %v1692 = vmul.f32 %v1567, %v1664
        %v1693 = vmul.f32 %v1568, %v1668
        %v1694 = vmul.f32 %v1569, %v1664
        %v1695 = vmul.f32 %v1570, %v1668
        %v1696 = vmul.f32 %v1571, %v1664
        %v1697 = vmul.f32 %v1572, %v1668
        %v1698 = vmul.f32 %v1573, %v1664
        %v1699 = vmul.f32 %v1574, %v1668
        %v1700 = vmul.f32 %v1575, %v1664
        %v1701 = vmul.f32 %v1576, %v1668
        %v1703 = vlaneseq
        %v1704 = vshrl.u32 %v1703, 7
        %v1705 = vsub.s32 0, %v1704
        %v1706 = vrot.slane %v1691, %v1705
        %v1707 = vlaneseq
        %v1708 = vshrl.u32 %v1707, 7
        %v1709 = vsub.s32 1, %v1708
        %v1710 = vrot.slane %v1691, %v1709
        %v1713 = vadd.f32 %v1692, %v1706
        %v1714 = vadd.f32 %v1693, %v1710
        %v1715 = vadd.f32 %v1694, %v1706
        %v1716 = vadd.f32 %v1695, %v1710
        %v1717 = vadd.f32 %v1696, %v1706
        %v1718 = vadd.f32 %v1697, %v1710
        %v1719 = vadd.f32 %v1698, %v1706
        %v1720 = vadd.f32 %v1699, %v1710
        %v1721 = vadd.f32 %v1700, %v1706
        %v1722 = vadd.f32 %v1701, %v1710
        %v1723 = vtanh.pop %v1713
        %v1724 = vtanh.pop %v1714
        %v1725 = vtanh.pop %v1715
        %v1726 = vtanh.pop %v1716
        %v1727 = vtanh.pop %v1717
        %v1728 = vtanh.pop %v1718
        %v1729 = vtanh.pop %v1719
        %v1730 = vtanh.pop %v1720
        %v1731 = vtanh.pop %v1721
        %v1732 = vtanh.pop %v1722
        %v1733 = vmul.f32 %v1723, %v1545
        %v1734 = vmul.f32 %v1724, %v1545
        %v1735 = vmul.f32 %v1725, %v1550
        %v1736 = vmul.f32 %v1726, %v1550
        %v1737 = vmul.f32 %v1727, %v1555
        %v1738 = vmul.f32 %v1728, %v1555
        %v1739 = vmul.f32 %v1729, %v1560
        %v1740 = vmul.f32 %v1730, %v1560
        %v1741 = vmul.f32 %v1731, %v1565
        %v1742 = vmul.f32 %v1732, %v1565
        %1743 = vst [vmem:[%s597] sm:$0x11] 0
        %v1744 = vpack.c.bf16 %v1735, %v1733
        %v1745 = vpack.c.bf16 %v1736, %v1734
        %v1746 = vpack.c.bf16 %v1739, %v1737
        %v1747 = vpack.c.bf16 %v1740, %v1738
        %v1748 = vpack.c.bf16 %v1741, %v1741
        %v1749 = vpack.c.bf16 %v1742, %v1742
        %v1756 = vunpack.c.l.b16 %v1744
        %v1757 = vunpack.c.l.b16 %v1745
        %v1758 = vunpack.c.h.b16 %v1744
        %v1759 = vunpack.c.h.b16 %v1745
        %v1760 = vunpack.c.l.b16 %v1746
        %v1761 = vunpack.c.l.b16 %v1747
        %v1762 = vunpack.c.h.b16 %v1746
        %v1763 = vunpack.c.h.b16 %v1747
        %v1764 = vunpack.c.l.b16 %v1748
        %v1765 = vunpack.c.l.b16 %v1749
        %v1766 = vpack.c.b16 %v1757, %v1756
        %v1767 = vpack.c.b16 %v1759, %v1758
        %v1768 = vpack.c.b16 %v1761, %v1760
        %v1769 = vpack.c.b16 %v1763, %v1762
        %v1770 = vpack.c.b16 %v1765, %v1764
        %vm1771 = vcmask 1040384
        %vm1772 = vcmask 1044484
        %vm1773 = vmor %vm1771, %vm1772
        %v1774 = vrot.slane %v1766, 7
        %v1775 = vrot.slane %v1774, 4
        %v1776 = vrot.slane %v1767, 7
        %v1777 = vsel %vm1773, %v1775, %v1776
        %v1778 = vrot.slane %v1776, 4
        %v1779 = vrot.slane %v1768, 7
        %v1780 = vsel %vm1773, %v1778, %v1779
        %v1781 = vrot.slane %v1779, 4
        %v1782 = vrot.slane %v1769, 7
        %v1783 = vsel %vm1773, %v1781, %v1782
        %v1784 = vrot.slane %v1782, 4
        %v1785 = vrot.slane %v1770, 7
        %v1786 = vsel %vm1773, %v1784, %v1785
        %v1787 = vrot.slane %v1785, 4
        %1794 = vst [vmem:[%s597] sm:$0xee] %v1774
        %1795 = vst [vmem:[%s597 + $0x8] sm:$0xff] %v1777
        %1796 = vst [vmem:[%s597 + $0x10] sm:$0xff] %v1780
        %1797 = vst [vmem:[%s597 + $0x18] sm:$0xff] %v1783
        %1798 = vst [vmem:[%s597 + $0x20] sm:$0xff] %v1786
        %1799 = vst [vmem:[%s597 + $0x28] sm:$0x11] %v1787
        %1800 = vst [vmem:[%s597 + $0x28] sm:$0x22] 0
        %s1801 = sand.u32 %s144, 1
        %s1802 = sand.u32 %s144, 1
        %s1803 = smul.addr %s1802, 48
        %s1804 = scalar_lea.vmem [#allocation3], %s1803
        // Predicated region
        $region79: #{_lambda_.5} parent=73 // pred_check
          %p1805 = pneg %p154
        $region80: #{_lambda_.5} parent=73 // pred_check_branch
          %1807 = sbr.rel (%p1805) target = $region82
        $region81: #{_lambda_.5} parent=73 // pred_region
          %s1808 = smul.u32 2, %s16
          %s1809 = smul.addr %s1808, 4
          %s1810 = scalar_lea.vmem %s5, %s1809
          // Predicated region
          $region83: #{_lambda_.5} parent=81 // pred_check
            _
          $region84: #{_lambda_.5} parent=81 // pred_check_branch
            %1812 = sbr.rel (0) target = $region86
          $region85: #{_lambda_.5} parent=81 // pred_region
            // Predicated region
            $region87: #{_lambda_.5} parent=85 // pred_check
              _
            $region88: #{_lambda_.5} parent=85 // pred_check_branch
              %1814 = sbr.rel (0) target = $region90
            $region89: #{_lambda_.5} parent=85 // pred_region
              // Predicated region
              $region102: #{_lambda_.5} parent=89 // pred_check
                _
              $region103: #{_lambda_.5} parent=89 // pred_check_branch
                %1839 = sbr.rel (0) target = $region105
              $region104: #{_lambda_.5} parent=89 // pred_region
                loop: start=0, step=1, limit=1
                $region106: #{_lambda_.5} parent=104 // loop_pre_header
                  _
                $region107: #{_lambda_.5} parent=104 // loop_header
                  %s1841 = sphi 0, %s1845
                  %p1842 = scmp.ge.s32.totalorder %s1841, 1
                  %s1846 = sphi %s1804, %s1804
                  %s1847 = sphi %s1810, %s1810
                $region108: #{_lambda_.5} parent=104 // loop_header_branch
                  %1844 = sbr.rel (%p1842) target = $region112
                $region109: #{_lambda_.5} parent=104 // loop_body
                  %v1848 = vld [vmem:[%s1846] sm:$0xff]
                  %1849 = vst [vmem:[%s1847] sm:$0xff] %v1848
                  %v1850 = vld [vmem:[%s1846 + $0x8] sm:$0xff]
                  %1851 = vst [vmem:[%s1847 + $0x10] sm:$0xff] %v1850
                  %v1852 = vld [vmem:[%s1846 + $0x10] sm:$0xff]
                  %1853 = vst [vmem:[%s1847 + $0x20] sm:$0xff] %v1852
                  %v1854 = vld [vmem:[%s1846 + $0x18] sm:$0xff]
                  %1855 = vst [vmem:[%s1847 + $0x30] sm:$0xff] %v1854
                  %v1856 = vld [vmem:[%s1846 + $0x20] sm:$0xff]
                  %1857 = vst [vmem:[%s1847 + $0x40] sm:$0xff] %v1856
                  %v1858 = vld [vmem:[%s1846 + $0x28] sm:$0xff]
                  %1859 = vst [vmem:[%s1847 + $0x50] sm:$0xff] %v1858
                $region110: #{_lambda_.5} parent=104 // loop_footer
                  %s1845 = sadd.s32 1, %s1841
                $region111: #{_lambda_.5} parent=104 // loop_footer_branch
                  %1840 = sbr.rel target = $region107
                $region112: #{_lambda_.5} parent=104 // loop_exit
                  _
              $region105: #{_lambda_.5} parent=89 // pred_fallthru
                _
              // Predicated region
              $region113: #{_lambda_.5} parent=89 // pred_check
                _
              $region114: #{_lambda_.5} parent=89 // pred_check_branch
                %1861 = sbr.rel target = $region116
              $region115: #{_lambda_.5} parent=89 // pred_region
                _
              $region116: #{_lambda_.5} parent=89 // pred_fallthru
                _
            $region90: #{_lambda_.5} parent=85 // pred_fallthru
              _
            // Predicated region
            $region91: #{_lambda_.5} parent=85 // pred_check
              _
            $region92: #{_lambda_.5} parent=85 // pred_check_branch
              %1816 = sbr.rel target = $region94
            $region93: #{_lambda_.5} parent=85 // pred_region
              loop: start=0, step=1, limit=1
              $region95: #{_lambda_.5} parent=93 // loop_pre_header
                _
              $region96: #{_lambda_.5} parent=93 // loop_header
                %s1819 = sphi 0, %s1823
                %p1820 = scmp.ge.s32.totalorder %s1819, 1
                %s1824 = sphi %s1804, %s1804
                %s1825 = sphi %s1810, %s1810
              $region97: #{_lambda_.5} parent=93 // loop_header_branch
                %1822 = sbr.rel (%p1820) target = $region101
              $region98: #{_lambda_.5} parent=93 // loop_body
                %v1826 = vld [vmem:[%s1824] sm:$0xff]
                %1827 = vst [vmem:[%s1825] sm:$0xff] %v1826
                %v1828 = vld [vmem:[%s1824 + $0x8] sm:$0xff]
                %1829 = vst [vmem:[%s1825 + $0x10] sm:$0xff] %v1828
                %v1830 = vld [vmem:[%s1824 + $0x10] sm:$0xff]
                %1831 = vst [vmem:[%s1825 + $0x20] sm:$0xff] %v1830
                %v1832 = vld [vmem:[%s1824 + $0x18] sm:$0xff]
                %1833 = vst [vmem:[%s1825 + $0x30] sm:$0xff] %v1832
                %v1834 = vld [vmem:[%s1824 + $0x20] sm:$0xff]
                %1835 = vst [vmem:[%s1825 + $0x40] sm:$0xff] %v1834
                %v1836 = vld [vmem:[%s1824 + $0x28] sm:$0xff]
                %1837 = vst [vmem:[%s1825 + $0x50] sm:$0xff] %v1836
              $region99: #{_lambda_.5} parent=93 // loop_footer
                %s1823 = sadd.s32 1, %s1819
              $region100: #{_lambda_.5} parent=93 // loop_footer_branch
                %1818 = sbr.rel target = $region96
              $region101: #{_lambda_.5} parent=93 // loop_exit
                _
            $region94: #{_lambda_.5} parent=85 // pred_fallthru
              _
          $region86: #{_lambda_.5} parent=81 // pred_fallthru
            _
          %1862 = vnop
        $region82: #{_lambda_.5} parent=73 // pred_fallthru
          _
      $region74: #{_lambda_.5} parent=5 // pred_fallthru
        _
      %p1863 = scmp.le.s32.totalorder 2, %s11
      // Predicated region
      $region117: #{_lambda_.5} parent=5 // pred_check
        %p1864 = pneg %p1863
      $region118: #{_lambda_.5} parent=5 // pred_check_branch
        %1866 = sbr.rel (%p1864) target = $region120
      $region119: #{_lambda_.5} parent=5 // pred_region
        %s1867 = ssub.s32 %s11, 2
        // Predicated region
        $region121: #{_lambda_.5} parent=119 // pred_check
          %p1868 = pneg %p160
        $region122: #{_lambda_.5} parent=119 // pred_check_branch
          %1870 = sbr.rel (%p1868) target = $region124
        $region123: #{_lambda_.5} parent=119 // pred_region
          %s1871 = sand.u32 %s145, 1
          %s1872 = sand.u32 %s145, 1
          %s1873 = smul.addr %s1872, 48
          %s1874 = scalar_lea.vmem [#allocation3], %s1873
        $region124: #{_lambda_.5} parent=119 // pred_fallthru
          _
      $region120: #{_lambda_.5} parent=5 // pred_fallthru
        _
    $region6: #{_lambda_.5} parent=1 // loop_footer
      %s15 = sadd.s32 1, %s11
    $region7: #{_lambda_.5} parent=1 // loop_footer_branch
      %10 = sbr.rel target = $region3
    $region8: #{_lambda_.5} parent=1 // loop_exit
      _

// kernel: _lambda_.6
$region0: #{_lambda_.6}
  #allocation0 [shape = 'u32[]', space=smem, size = 0x4, offset = 0x4, fixed_abs, tag = 'smem constant byte address 0x4 - core index']
  #allocation1 [shape = 'u32[144,128]{1,0:T(1,128)}', space=vmem, size = 0x12000, scoped, tag = 'internal scratch']
  %s0 = inlined_call_operand.vmem [shape: bf16[44,512], index: 0, kind: input, shape index: {}]
  %s1 = inlined_call_operand.vmem [shape: bf16[5,512,512], index: 1, kind: input, shape index: {}]
  %s2 = inlined_call_operand.vmem [shape: f32[1,512], index: 2, kind: input, shape index: {}]
  %s3 = inlined_call_operand.vmem [shape: f32[1,512], index: 3, kind: input, shape index: {}]
  %s4 = inlined_call_operand.vmem [shape: f32[40,1], index: 4, kind: input, shape index: {}]
  %s5 = inlined_call_operand.vmem [shape: bf16[44,512], index: 5, kind: output, shape index: {}]
  %s6 = sld [smem:[#allocation0]]
  $region125: #{_lambda_.6} parent=0
    _
  %s8 = ssub.s32 1, %s6
  %s9 = scalar_select 0, %s8, %s6
  $region1: #{_lambda_.6} parent=0
    #allocation2 [shape = 'u8[2621440]{0}', space=vmem, size = 0x280000, scoped, tag = 'input window, operand 1']
    #allocation3 [shape = 'u8[49152]{0}', space=vmem, size = 0xc000, scoped, tag = 'output window, operand 0']
    loop: start=0, step=1, limit=4
    $region2: #{_lambda_.6} parent=1 // loop_pre_header
      _
    $region3: #{_lambda_.6} parent=1 // loop_header
      %s11 = sphi 0, %s15
      %p12 = scmp.ge.s32.totalorder %s11, 4
      %s19 = sphi 0, %s19
      %s21 = sphi 0, %s19
      %s22 = sphi 0, %s21
      %s36 = sphi 0, %s22
      %s42 = sphi 0, %s44
      %s45 = sphi 0, %s42
      %s46 = sphi 0, %s45
      %s62 = sphi 0, %s46
      %s68 = sphi 0, %s70
      %s71 = sphi 0, %s68
      %s72 = sphi 0, %s71
      %s88 = sphi 0, %s72
      %s94 = sphi 0, %s96
      %s97 = sphi 0, %s94
      %s98 = sphi 0, %s97
      %s114 = sphi 0, %s98
      %s118 = sphi 0, %s118
      %s120 = sphi 0, %s118
      %s121 = sphi 0, %s120
      %s135 = sphi 0, %s121
      %s141 = sphi 0, %s143
      %s144 = sphi 0, %s141
      %s145 = sphi 0, %s144
      %s161 = sphi 0, %s145
    $region4: #{_lambda_.6} parent=1 // loop_header_branch
      %14 = sbr.rel (%p12) target = $region8
    $region5: #{_lambda_.6} parent=1 // loop_body
      %s16 = ssub.s32 %s11, 1
      %s17 = ssub.s32 %s11, 2
      %s18 = sadd.s32 %s11, 1
      %s20 = sadd.s32 %s19, 1
      %p23 = scmp.eq.s32.totalorder %s11, 1
      %p24 = scmp.ne.s32.totalorder %s19, %s21
      %p25 = scmp.eq.s32.totalorder %s11, 0
      %p26 = por %p24, %p25
      %p27 = scmp.ne.s32.totalorder %s19, %s21
      %p28 = scmp.eq.s32.totalorder %s16, 1
      %p29 = por %p27, %p28
      %p30 = scmp.ne.s32.totalorder %s21, %s22
      %p31 = scmp.eq.s32.totalorder %s16, 0
      %p32 = por %p30, %p31
      %p33 = scmp.ne.s32.totalorder %s21, %s22
      %p34 = scmp.eq.s32.totalorder %s17, 1
      %p35 = por %p33, %p34
      %p37 = scmp.ne.s32.totalorder %s22, %s36
      %p38 = scmp.eq.s32.totalorder %s17, 0
      %p39 = por %p37, %p38
      %s40 = ssub.s32 %s11, %s18
      %p41 = scmp.eq.s32.totalorder %s40, 0
      %s43 = sadd.s32 %s42, 1
      %s44 = scalar_select %p41, %s42, %s43
      %p47 = pneg %p41
      %p48 = scmp.eq.s32.totalorder %s11, 1
      %p49 = por %p47, %p48
      %p50 = scmp.ne.s32.totalorder %s42, %s45
      %p51 = scmp.eq.s32.totalorder %s11, 0
      %p52 = por %p50, %p51
      %p53 = scmp.ne.s32.totalorder %s42, %s45
      %p54 = scmp.eq.s32.totalorder %s16, 1
      %p55 = por %p53, %p54
      %p56 = scmp.ne.s32.totalorder %s45, %s46
      %p57 = scmp.eq.s32.totalorder %s16, 0
      %p58 = por %p56, %p57
      %p59 = scmp.ne.s32.totalorder %s45, %s46
      %p60 = scmp.eq.s32.totalorder %s17, 1
      %p61 = por %p59, %p60
      %p63 = scmp.ne.s32.totalorder %s46, %s62
      %p64 = scmp.eq.s32.totalorder %s17, 0
      %p65 = por %p63, %p64
      %s66 = ssub.s32 %s11, %s18
      %p67 = scmp.eq.s32.totalorder %s66, 0
      %s69 = sadd.s32 %s68, 1
      %s70 = scalar_select %p67, %s68, %s69
      %p73 = pneg %p67
      %p74 = scmp.eq.s32.totalorder %s11, 1
      %p75 = por %p73, %p74
      %p76 = scmp.ne.s32.totalorder %s68, %s71
      %p77 = scmp.eq.s32.totalorder %s11, 0
      %p78 = por %p76, %p77
      %p79 = scmp.ne.s32.totalorder %s68, %s71
      %p80 = scmp.eq.s32.totalorder %s16, 1
      %p81 = por %p79, %p80
      %p82 = scmp.ne.s32.totalorder %s71, %s72
      %p83 = scmp.eq.s32.totalorder %s16, 0
      %p84 = por %p82, %p83
      %p85 = scmp.ne.s32.totalorder %s71, %s72
      %p86 = scmp.eq.s32.totalorder %s17, 1
      %p87 = por %p85, %p86
      %p89 = scmp.ne.s32.totalorder %s72, %s88
      %p90 = scmp.eq.s32.totalorder %s17, 0
      %p91 = por %p89, %p90
      %s92 = ssub.s32 %s11, %s18
      %p93 = scmp.eq.s32.totalorder %s92, 0
      %s95 = sadd.s32 %s94, 1
      %s96 = scalar_select %p93, %s94, %s95
      %p99 = pneg %p93
      %p100 = scmp.eq.s32.totalorder %s11, 1
      %p101 = por %p99, %p100
      %p102 = scmp.ne.s32.totalorder %s94, %s97
      %p103 = scmp.eq.s32.totalorder %s11, 0
      %p104 = por %p102, %p103
      %p105 = scmp.ne.s32.totalorder %s94, %s97
      %p106 = scmp.eq.s32.totalorder %s16, 1
      %p107 = por %p105, %p106
      %p108 = scmp.ne.s32.totalorder %s97, %s98
      %p109 = scmp.eq.s32.totalorder %s16, 0
      %p110 = por %p108, %p109
      %p111 = scmp.ne.s32.totalorder %s97, %s98
      %p112 = scmp.eq.s32.totalorder %s17, 1
      %p113 = por %p111, %p112
      %p115 = scmp.ne.s32.totalorder %s98, %s114
      %p116 = scmp.eq.s32.totalorder %s17, 0
      %p117 = por %p115, %p116
      %s119 = sadd.s32 %s118, 1
      %p122 = scmp.eq.s32.totalorder %s11, 1
      %p123 = scmp.ne.s32.totalorder %s118, %s120
      %p124 = scmp.eq.s32.totalorder %s11, 0
      %p125 = por %p123, %p124
      %p126 = scmp.ne.s32.totalorder %s118, %s120
      %p127 = scmp.eq.s32.totalorder %s16, 1
      %p128 = por %p126, %p127
      %p129 = scmp.ne.s32.totalorder %s120, %s121
      %p130 = scmp.eq.s32.totalorder %s16, 0
      %p131 = por %p129, %p130
      %p132 = scmp.ne.s32.totalorder %s120, %s121
      %p133 = scmp.eq.s32.totalorder %s17, 1
      %p134 = por %p132, %p133
      %p136 = scmp.ne.s32.totalorder %s121, %s135
      %p137 = scmp.eq.s32.totalorder %s17, 0
      %p138 = por %p136, %p137
      %s139 = ssub.s32 %s11, %s18
      %p140 = scmp.eq.s32.totalorder %s139, 0
      %s142 = sadd.s32 %s141, 1
      %s143 = scalar_select %p140, %s141, %s142
      %p146 = pneg %p140
      %p147 = scmp.eq.s32.totalorder %s11, 1
      %p148 = por %p146, %p147
      %p149 = scmp.ne.s32.totalorder %s141, %s144
      %p150 = scmp.eq.s32.totalorder %s11, 0
      %p151 = por %p149, %p150
      %p152 = scmp.ne.s32.totalorder %s141, %s144
      %p153 = scmp.eq.s32.totalorder %s16, 1
      %p154 = por %p152, %p153
      %p155 = scmp.ne.s32.totalorder %s144, %s145
      %p156 = scmp.eq.s32.totalorder %s16, 0
      %p157 = por %p155, %p156
      %p158 = scmp.ne.s32.totalorder %s144, %s145
      %p159 = scmp.eq.s32.totalorder %s17, 1
      %p160 = por %p158, %p159
      %p162 = scmp.ne.s32.totalorder %s145, %s161
      %p163 = scmp.eq.s32.totalorder %s17, 0
      %p164 = por %p162, %p163
      %p165 = scmp.le.s32.totalorder 1, %s11
      %p166 = scmp.lt.s32.totalorder %s11, 3
      %p167 = pnand %p165, %p166
      %p168 = pneg %p167
      // Predicated region
      $region9: #{_lambda_.6} parent=5 // pred_check
        _
      $region10: #{_lambda_.6} parent=5 // pred_check_branch
        %170 = sbr.rel (%p167) target = $region12
      $region11: #{_lambda_.6} parent=5 // pred_region
        %s171 = ssub.s32 %s11, 1
        // Predicated region
        $region13: #{_lambda_.6} parent=11 // pred_check
          %p172 = pneg %p32
        $region14: #{_lambda_.6} parent=11 // pred_check_branch
          %174 = sbr.rel (%p172) target = $region16
        $region15: #{_lambda_.6} parent=11 // pred_region
          _
        $region16: #{_lambda_.6} parent=11 // pred_fallthru
          _
        // Predicated region
        $region17: #{_lambda_.6} parent=11 // pred_check
          %p175 = pneg %p131
        $region18: #{_lambda_.6} parent=11 // pred_check_branch
          %177 = sbr.rel (%p175) target = $region20
        $region19: #{_lambda_.6} parent=11 // pred_region
          _
        $region20: #{_lambda_.6} parent=11 // pred_fallthru
          _
      $region12: #{_lambda_.6} parent=5 // pred_fallthru
        _
      %p178 = scmp.lt.s32.totalorder %s11, 2
      // Predicated region
      $region21: #{_lambda_.6} parent=5 // pred_check
        %p179 = pneg %p178
      $region22: #{_lambda_.6} parent=5 // pred_check_branch
        %181 = sbr.rel (%p179) target = $region24
      $region23: #{_lambda_.6} parent=5 // pred_region
        // Predicated region
        $region25: #{_lambda_.6} parent=23 // pred_check
          %p182 = pneg %p52
        $region26: #{_lambda_.6} parent=23 // pred_check_branch
          %184 = sbr.rel (%p182) target = $region28
        $region27: #{_lambda_.6} parent=23 // pred_region
          %s185 = sand.u32 %s42, 1
          %s186 = sand.u32 %s42, 1
          %s187 = smul.addr %s186, 2560
          %s188 = scalar_lea.vmem [#allocation2], %s187
          %s189 = smul.u32 2, %s11
          %s190 = smul.addr %s189, 4
          %s191 = scalar_lea.vmem %s1, %s190
          // Predicated region
          $region29: #{_lambda_.6} parent=27 // pred_check
            _
          $region30: #{_lambda_.6} parent=27 // pred_check_branch
            %193 = sbr.rel (0) target = $region32
          $region31: #{_lambda_.6} parent=27 // pred_region
            // Predicated region
            $region33: #{_lambda_.6} parent=31 // pred_check
              _
            $region34: #{_lambda_.6} parent=31 // pred_check_branch
              %195 = sbr.rel (0) target = $region36
            $region35: #{_lambda_.6} parent=31 // pred_region
              // Predicated region
              $region48: #{_lambda_.6} parent=35 // pred_check
                _
              $region49: #{_lambda_.6} parent=35 // pred_check_branch
                %848 = sbr.rel (0) target = $region51
              $region50: #{_lambda_.6} parent=35 // pred_region
                loop: start=0, step=1, limit=1
                $region52: #{_lambda_.6} parent=50 // loop_pre_header
                  _
                $region53: #{_lambda_.6} parent=50 // loop_header
                  %s850 = sphi 0, %s854
                  %p851 = scmp.ge.s32.totalorder %s850, 1
                  %s855 = sphi %s191, %s191
                  %s856 = sphi %s188, %s188
                $region54: #{_lambda_.6} parent=50 // loop_header_branch
                  %853 = sbr.rel (%p851) target = $region58
                $region55: #{_lambda_.6} parent=50 // loop_body
                  %v857 = vld [vmem:[%s855] sm:$0xff]
                  %858 = vst [vmem:[%s856] sm:$0xff] %v857
                  %v859 = vld [vmem:[%s855 + $0x10] sm:$0xff]
                  %860 = vst [vmem:[%s856 + $0x8] sm:$0xff] %v859
                  %v861 = vld [vmem:[%s855 + $0x20] sm:$0xff]
                  %862 = vst [vmem:[%s856 + $0x10] sm:$0xff] %v861
                  %v863 = vld [vmem:[%s855 + $0x30] sm:$0xff]
                  %864 = vst [vmem:[%s856 + $0x18] sm:$0xff] %v863
                  %v865 = vld [vmem:[%s855 + $0x40] sm:$0xff]
                  %866 = vst [vmem:[%s856 + $0x20] sm:$0xff] %v865
                  %v867 = vld [vmem:[%s855 + $0x50] sm:$0xff]
                  %868 = vst [vmem:[%s856 + $0x28] sm:$0xff] %v867
                  %v869 = vld [vmem:[%s855 + $0x60] sm:$0xff]
                  %870 = vst [vmem:[%s856 + $0x30] sm:$0xff] %v869
                  %v871 = vld [vmem:[%s855 + $0x70] sm:$0xff]
                  %872 = vst [vmem:[%s856 + $0x38] sm:$0xff] %v871
                  %v873 = vld [vmem:[%s855 + $0x80] sm:$0xff]
                  %874 = vst [vmem:[%s856 + $0x40] sm:$0xff] %v873
                  %v875 = vld [vmem:[%s855 + $0x90] sm:$0xff]
                  %876 = vst [vmem:[%s856 + $0x48] sm:$0xff] %v875
                  %v877 = vld [vmem:[%s855 + $0xa0] sm:$0xff]
                  %878 = vst [vmem:[%s856 + $0x50] sm:$0xff] %v877
                  %v879 = vld [vmem:[%s855 + $0xb0] sm:$0xff]
                  %880 = vst [vmem:[%s856 + $0x58] sm:$0xff] %v879
                  %v881 = vld [vmem:[%s855 + $0xc0] sm:$0xff]
                  %882 = vst [vmem:[%s856 + $0x60] sm:$0xff] %v881
                  %v883 = vld [vmem:[%s855 + $0xd0] sm:$0xff]
                  %884 = vst [vmem:[%s856 + $0x68] sm:$0xff] %v883
                  %v885 = vld [vmem:[%s855 + $0xe0] sm:$0xff]
                  %886 = vst [vmem:[%s856 + $0x70] sm:$0xff] %v885
                  %v887 = vld [vmem:[%s855 + $0xf0] sm:$0xff]
                  %888 = vst [vmem:[%s856 + $0x78] sm:$0xff] %v887
                  %v889 = vld [vmem:[%s855 + $0x100] sm:$0xff]
                  %890 = vst [vmem:[%s856 + $0x80] sm:$0xff] %v889
                  %v891 = vld [vmem:[%s855 + $0x110] sm:$0xff]
                  %892 = vst [vmem:[%s856 + $0x88] sm:$0xff] %v891
                  %v893 = vld [vmem:[%s855 + $0x120] sm:$0xff]
                  %894 = vst [vmem:[%s856 + $0x90] sm:$0xff] %v893
                  %v895 = vld [vmem:[%s855 + $0x130] sm:$0xff]
                  %896 = vst [vmem:[%s856 + $0x98] sm:$0xff] %v895
                  %v897 = vld [vmem:[%s855 + $0x140] sm:$0xff]
                  %898 = vst [vmem:[%s856 + $0xa0] sm:$0xff] %v897
                  %v899 = vld [vmem:[%s855 + $0x150] sm:$0xff]
                  %900 = vst [vmem:[%s856 + $0xa8] sm:$0xff] %v899
                  %v901 = vld [vmem:[%s855 + $0x160] sm:$0xff]
                  %902 = vst [vmem:[%s856 + $0xb0] sm:$0xff] %v901
                  %v903 = vld [vmem:[%s855 + $0x170] sm:$0xff]
                  %904 = vst [vmem:[%s856 + $0xb8] sm:$0xff] %v903
                  %v905 = vld [vmem:[%s855 + $0x180] sm:$0xff]
                  %906 = vst [vmem:[%s856 + $0xc0] sm:$0xff] %v905
                  %v907 = vld [vmem:[%s855 + $0x190] sm:$0xff]
                  %908 = vst [vmem:[%s856 + $0xc8] sm:$0xff] %v907
                  %v909 = vld [vmem:[%s855 + $0x1a0] sm:$0xff]
                  %910 = vst [vmem:[%s856 + $0xd0] sm:$0xff] %v909
                  %v911 = vld [vmem:[%s855 + $0x1b0] sm:$0xff]
                  %912 = vst [vmem:[%s856 + $0xd8] sm:$0xff] %v911
                  %v913 = vld [vmem:[%s855 + $0x1c0] sm:$0xff]
                  %914 = vst [vmem:[%s856 + $0xe0] sm:$0xff] %v913
                  %v915 = vld [vmem:[%s855 + $0x1d0] sm:$0xff]
                  %916 = vst [vmem:[%s856 + $0xe8] sm:$0xff] %v915
                  %v917 = vld [vmem:[%s855 + $0x1e0] sm:$0xff]
                  %918 = vst [vmem:[%s856 + $0xf0] sm:$0xff] %v917
                  %v919 = vld [vmem:[%s855 + $0x1f0] sm:$0xff]
                  %920 = vst [vmem:[%s856 + $0xf8] sm:$0xff] %v919
                  %v921 = vld [vmem:[%s855 + $0x200] sm:$0xff]
                  %922 = vst [vmem:[%s856 + $0x100] sm:$0xff] %v921
                  %v923 = vld [vmem:[%s855 + $0x210] sm:$0xff]
                  %924 = vst [vmem:[%s856 + $0x108] sm:$0xff] %v923
                  %v925 = vld [vmem:[%s855 + $0x220] sm:$0xff]
                  %926 = vst [vmem:[%s856 + $0x110] sm:$0xff] %v925
                  %v927 = vld [vmem:[%s855 + $0x230] sm:$0xff]
                  %928 = vst [vmem:[%s856 + $0x118] sm:$0xff] %v927
                  %v929 = vld [vmem:[%s855 + $0x240] sm:$0xff]
                  %930 = vst [vmem:[%s856 + $0x120] sm:$0xff] %v929
                  %v931 = vld [vmem:[%s855 + $0x250] sm:$0xff]
                  %932 = vst [vmem:[%s856 + $0x128] sm:$0xff] %v931
                  %v933 = vld [vmem:[%s855 + $0x260] sm:$0xff]
                  %934 = vst [vmem:[%s856 + $0x130] sm:$0xff] %v933
                  %v935 = vld [vmem:[%s855 + $0x270] sm:$0xff]
                  %936 = vst [vmem:[%s856 + $0x138] sm:$0xff] %v935
                  %v937 = vld [vmem:[%s855 + $0x280] sm:$0xff]
                  %938 = vst [vmem:[%s856 + $0x140] sm:$0xff] %v937
                  %v939 = vld [vmem:[%s855 + $0x290] sm:$0xff]
                  %940 = vst [vmem:[%s856 + $0x148] sm:$0xff] %v939
                  %v941 = vld [vmem:[%s855 + $0x2a0] sm:$0xff]
                  %942 = vst [vmem:[%s856 + $0x150] sm:$0xff] %v941
                  %v943 = vld [vmem:[%s855 + $0x2b0] sm:$0xff]
                  %944 = vst [vmem:[%s856 + $0x158] sm:$0xff] %v943
                  %v945 = vld [vmem:[%s855 + $0x2c0] sm:$0xff]
                  %946 = vst [vmem:[%s856 + $0x160] sm:$0xff] %v945
                  %v947 = vld [vmem:[%s855 + $0x2d0] sm:$0xff]
                  %948 = vst [vmem:[%s856 + $0x168] sm:$0xff] %v947
                  %v949 = vld [vmem:[%s855 + $0x2e0] sm:$0xff]
                  %950 = vst [vmem:[%s856 + $0x170] sm:$0xff] %v949
                  %v951 = vld [vmem:[%s855 + $0x2f0] sm:$0xff]
                  %952 = vst [vmem:[%s856 + $0x178] sm:$0xff] %v951
                  %v953 = vld [vmem:[%s855 + $0x300] sm:$0xff]
                  %954 = vst [vmem:[%s856 + $0x180] sm:$0xff] %v953
                  %v955 = vld [vmem:[%s855 + $0x310] sm:$0xff]
                  %956 = vst [vmem:[%s856 + $0x188] sm:$0xff] %v955
                  %v957 = vld [vmem:[%s855 + $0x320] sm:$0xff]
                  %958 = vst [vmem:[%s856 + $0x190] sm:$0xff] %v957
                  %v959 = vld [vmem:[%s855 + $0x330] sm:$0xff]
                  %960 = vst [vmem:[%s856 + $0x198] sm:$0xff] %v959
                  %v961 = vld [vmem:[%s855 + $0x340] sm:$0xff]
                  %962 = vst [vmem:[%s856 + $0x1a0] sm:$0xff] %v961
                  %v963 = vld [vmem:[%s855 + $0x350] sm:$0xff]
                  %964 = vst [vmem:[%s856 + $0x1a8] sm:$0xff] %v963
                  %v965 = vld [vmem:[%s855 + $0x360] sm:$0xff]
                  %966 = vst [vmem:[%s856 + $0x1b0] sm:$0xff] %v965
                  %v967 = vld [vmem:[%s855 + $0x370] sm:$0xff]
                  %968 = vst [vmem:[%s856 + $0x1b8] sm:$0xff] %v967
                  %v969 = vld [vmem:[%s855 + $0x380] sm:$0xff]
                  %970 = vst [vmem:[%s856 + $0x1c0] sm:$0xff] %v969
                  %v971 = vld [vmem:[%s855 + $0x390] sm:$0xff]
                  %972 = vst [vmem:[%s856 + $0x1c8] sm:$0xff] %v971
                  %v973 = vld [vmem:[%s855 + $0x3a0] sm:$0xff]
                  %974 = vst [vmem:[%s856 + $0x1d0] sm:$0xff] %v973
                  %v975 = vld [vmem:[%s855 + $0x3b0] sm:$0xff]
                  %976 = vst [vmem:[%s856 + $0x1d8] sm:$0xff] %v975
                  %v977 = vld [vmem:[%s855 + $0x3c0] sm:$0xff]
                  %978 = vst [vmem:[%s856 + $0x1e0] sm:$0xff] %v977
                  %v979 = vld [vmem:[%s855 + $0x3d0] sm:$0xff]
                  %980 = vst [vmem:[%s856 + $0x1e8] sm:$0xff] %v979
                  %v981 = vld [vmem:[%s855 + $0x3e0] sm:$0xff]
                  %982 = vst [vmem:[%s856 + $0x1f0] sm:$0xff] %v981
                  %v983 = vld [vmem:[%s855 + $0x3f0] sm:$0xff]
                  %984 = vst [vmem:[%s856 + $0x1f8] sm:$0xff] %v983
                  %v985 = vld [vmem:[%s855 + $0x400] sm:$0xff]
                  %986 = vst [vmem:[%s856 + $0x200] sm:$0xff] %v985
                  %v987 = vld [vmem:[%s855 + $0x410] sm:$0xff]
                  %988 = vst [vmem:[%s856 + $0x208] sm:$0xff] %v987
                  %v989 = vld [vmem:[%s855 + $0x420] sm:$0xff]
                  %990 = vst [vmem:[%s856 + $0x210] sm:$0xff] %v989
                  %v991 = vld [vmem:[%s855 + $0x430] sm:$0xff]
                  %992 = vst [vmem:[%s856 + $0x218] sm:$0xff] %v991
                  %v993 = vld [vmem:[%s855 + $0x440] sm:$0xff]
                  %994 = vst [vmem:[%s856 + $0x220] sm:$0xff] %v993
                  %v995 = vld [vmem:[%s855 + $0x450] sm:$0xff]
                  %996 = vst [vmem:[%s856 + $0x228] sm:$0xff] %v995
                  %v997 = vld [vmem:[%s855 + $0x460] sm:$0xff]
                  %998 = vst [vmem:[%s856 + $0x230] sm:$0xff] %v997
                  %v999 = vld [vmem:[%s855 + $0x470] sm:$0xff]
                  %1000 = vst [vmem:[%s856 + $0x238] sm:$0xff] %v999
                  %v1001 = vld [vmem:[%s855 + $0x480] sm:$0xff]
                  %1002 = vst [vmem:[%s856 + $0x240] sm:$0xff] %v1001
                  %v1003 = vld [vmem:[%s855 + $0x490] sm:$0xff]
                  %1004 = vst [vmem:[%s856 + $0x248] sm:$0xff] %v1003
                  %v1005 = vld [vmem:[%s855 + $0x4a0] sm:$0xff]
                  %1006 = vst [vmem:[%s856 + $0x250] sm:$0xff] %v1005
                  %v1007 = vld [vmem:[%s855 + $0x4b0] sm:$0xff]
                  %1008 = vst [vmem:[%s856 + $0x258] sm:$0xff] %v1007
                  %v1009 = vld [vmem:[%s855 + $0x4c0] sm:$0xff]
                  %1010 = vst [vmem:[%s856 + $0x260] sm:$0xff] %v1009
                  %v1011 = vld [vmem:[%s855 + $0x4d0] sm:$0xff]
                  %1012 = vst [vmem:[%s856 + $0x268] sm:$0xff] %v1011
                  %v1013 = vld [vmem:[%s855 + $0x4e0] sm:$0xff]
                  %1014 = vst [vmem:[%s856 + $0x270] sm:$0xff] %v1013
                  %v1015 = vld [vmem:[%s855 + $0x4f0] sm:$0xff]
                  %1016 = vst [vmem:[%s856 + $0x278] sm:$0xff] %v1015
                  %v1017 = vld [vmem:[%s855 + $0x500] sm:$0xff]
                  %1018 = vst [vmem:[%s856 + $0x280] sm:$0xff] %v1017
                  %v1019 = vld [vmem:[%s855 + $0x510] sm:$0xff]
                  %1020 = vst [vmem:[%s856 + $0x288] sm:$0xff] %v1019
                  %v1021 = vld [vmem:[%s855 + $0x520] sm:$0xff]
                  %1022 = vst [vmem:[%s856 + $0x290] sm:$0xff] %v1021
                  %v1023 = vld [vmem:[%s855 + $0x530] sm:$0xff]
                  %1024 = vst [vmem:[%s856 + $0x298] sm:$0xff] %v1023
                  %v1025 = vld [vmem:[%s855 + $0x540] sm:$0xff]
                  %1026 = vst [vmem:[%s856 + $0x2a0] sm:$0xff] %v1025
                  %v1027 = vld [vmem:[%s855 + $0x550] sm:$0xff]
                  %1028 = vst [vmem:[%s856 + $0x2a8] sm:$0xff] %v1027
                  %v1029 = vld [vmem:[%s855 + $0x560] sm:$0xff]
                  %1030 = vst [vmem:[%s856 + $0x2b0] sm:$0xff] %v1029
                  %v1031 = vld [vmem:[%s855 + $0x570] sm:$0xff]
                  %1032 = vst [vmem:[%s856 + $0x2b8] sm:$0xff] %v1031
                  %v1033 = vld [vmem:[%s855 + $0x580] sm:$0xff]
                  %1034 = vst [vmem:[%s856 + $0x2c0] sm:$0xff] %v1033
                  %v1035 = vld [vmem:[%s855 + $0x590] sm:$0xff]
                  %1036 = vst [vmem:[%s856 + $0x2c8] sm:$0xff] %v1035
                  %v1037 = vld [vmem:[%s855 + $0x5a0] sm:$0xff]
                  %1038 = vst [vmem:[%s856 + $0x2d0] sm:$0xff] %v1037
                  %v1039 = vld [vmem:[%s855 + $0x5b0] sm:$0xff]
                  %1040 = vst [vmem:[%s856 + $0x2d8] sm:$0xff] %v1039
                  %v1041 = vld [vmem:[%s855 + $0x5c0] sm:$0xff]
                  %1042 = vst [vmem:[%s856 + $0x2e0] sm:$0xff] %v1041
                  %v1043 = vld [vmem:[%s855 + $0x5d0] sm:$0xff]
                  %1044 = vst [vmem:[%s856 + $0x2e8] sm:$0xff] %v1043
                  %v1045 = vld [vmem:[%s855 + $0x5e0] sm:$0xff]
                  %1046 = vst [vmem:[%s856 + $0x2f0] sm:$0xff] %v1045
                  %v1047 = vld [vmem:[%s855 + $0x5f0] sm:$0xff]
                  %1048 = vst [vmem:[%s856 + $0x2f8] sm:$0xff] %v1047
                  %v1049 = vld [vmem:[%s855 + $0x600] sm:$0xff]
                  %1050 = vst [vmem:[%s856 + $0x300] sm:$0xff] %v1049
                  %v1051 = vld [vmem:[%s855 + $0x610] sm:$0xff]
                  %1052 = vst [vmem:[%s856 + $0x308] sm:$0xff] %v1051
                  %v1053 = vld [vmem:[%s855 + $0x620] sm:$0xff]
                  %1054 = vst [vmem:[%s856 + $0x310] sm:$0xff] %v1053
                  %v1055 = vld [vmem:[%s855 + $0x630] sm:$0xff]
                  %1056 = vst [vmem:[%s856 + $0x318] sm:$0xff] %v1055
                  %v1057 = vld [vmem:[%s855 + $0x640] sm:$0xff]
                  %1058 = vst [vmem:[%s856 + $0x320] sm:$0xff] %v1057
                  %v1059 = vld [vmem:[%s855 + $0x650] sm:$0xff]
                  %1060 = vst [vmem:[%s856 + $0x328] sm:$0xff] %v1059
                  %v1061 = vld [vmem:[%s855 + $0x660] sm:$0xff]
                  %1062 = vst [vmem:[%s856 + $0x330] sm:$0xff] %v1061
                  %v1063 = vld [vmem:[%s855 + $0x670] sm:$0xff]
                  %1064 = vst [vmem:[%s856 + $0x338] sm:$0xff] %v1063
                  %v1065 = vld [vmem:[%s855 + $0x680] sm:$0xff]
                  %1066 = vst [vmem:[%s856 + $0x340] sm:$0xff] %v1065
                  %v1067 = vld [vmem:[%s855 + $0x690] sm:$0xff]
                  %1068 = vst [vmem:[%s856 + $0x348] sm:$0xff] %v1067
                  %v1069 = vld [vmem:[%s855 + $0x6a0] sm:$0xff]
                  %1070 = vst [vmem:[%s856 + $0x350] sm:$0xff] %v1069
                  %v1071 = vld [vmem:[%s855 + $0x6b0] sm:$0xff]
                  %1072 = vst [vmem:[%s856 + $0x358] sm:$0xff] %v1071
                  %v1073 = vld [vmem:[%s855 + $0x6c0] sm:$0xff]
                  %1074 = vst [vmem:[%s856 + $0x360] sm:$0xff] %v1073
                  %v1075 = vld [vmem:[%s855 + $0x6d0] sm:$0xff]
                  %1076 = vst [vmem:[%s856 + $0x368] sm:$0xff] %v1075
                  %v1077 = vld [vmem:[%s855 + $0x6e0] sm:$0xff]
                  %1078 = vst [vmem:[%s856 + $0x370] sm:$0xff] %v1077
                  %v1079 = vld [vmem:[%s855 + $0x6f0] sm:$0xff]
                  %1080 = vst [vmem:[%s856 + $0x378] sm:$0xff] %v1079
                  %v1081 = vld [vmem:[%s855 + $0x700] sm:$0xff]
                  %1082 = vst [vmem:[%s856 + $0x380] sm:$0xff] %v1081
                  %v1083 = vld [vmem:[%s855 + $0x710] sm:$0xff]
                  %1084 = vst [vmem:[%s856 + $0x388] sm:$0xff] %v1083
                  %v1085 = vld [vmem:[%s855 + $0x720] sm:$0xff]
                  %1086 = vst [vmem:[%s856 + $0x390] sm:$0xff] %v1085
                  %v1087 = vld [vmem:[%s855 + $0x730] sm:$0xff]
                  %1088 = vst [vmem:[%s856 + $0x398] sm:$0xff] %v1087
                  %v1089 = vld [vmem:[%s855 + $0x740] sm:$0xff]
                  %1090 = vst [vmem:[%s856 + $0x3a0] sm:$0xff] %v1089
                  %v1091 = vld [vmem:[%s855 + $0x750] sm:$0xff]
                  %1092 = vst [vmem:[%s856 + $0x3a8] sm:$0xff] %v1091
                  %v1093 = vld [vmem:[%s855 + $0x760] sm:$0xff]
                  %1094 = vst [vmem:[%s856 + $0x3b0] sm:$0xff] %v1093
                  %v1095 = vld [vmem:[%s855 + $0x770] sm:$0xff]
                  %1096 = vst [vmem:[%s856 + $0x3b8] sm:$0xff] %v1095
                  %v1097 = vld [vmem:[%s855 + $0x780] sm:$0xff]
                  %1098 = vst [vmem:[%s856 + $0x3c0] sm:$0xff] %v1097
                  %v1099 = vld [vmem:[%s855 + $0x790] sm:$0xff]
                  %1100 = vst [vmem:[%s856 + $0x3c8] sm:$0xff] %v1099
                  %v1101 = vld [vmem:[%s855 + $0x7a0] sm:$0xff]
                  %1102 = vst [vmem:[%s856 + $0x3d0] sm:$0xff] %v1101
                  %v1103 = vld [vmem:[%s855 + $0x7b0] sm:$0xff]
                  %1104 = vst [vmem:[%s856 + $0x3d8] sm:$0xff] %v1103
                  %v1105 = vld [vmem:[%s855 + $0x7c0] sm:$0xff]
                  %1106 = vst [vmem:[%s856 + $0x3e0] sm:$0xff] %v1105
                  %v1107 = vld [vmem:[%s855 + $0x7d0] sm:$0xff]
                  %1108 = vst [vmem:[%s856 + $0x3e8] sm:$0xff] %v1107
                  %v1109 = vld [vmem:[%s855 + $0x7e0] sm:$0xff]
                  %1110 = vst [vmem:[%s856 + $0x3f0] sm:$0xff] %v1109
                  %v1111 = vld [vmem:[%s855 + $0x7f0] sm:$0xff]
                  %1112 = vst [vmem:[%s856 + $0x3f8] sm:$0xff] %v1111
                  %v1113 = vld [vmem:[%s855 + $0x800] sm:$0xff]
                  %1114 = vst [vmem:[%s856 + $0x400] sm:$0xff] %v1113
                  %v1115 = vld [vmem:[%s855 + $0x810] sm:$0xff]
                  %1116 = vst [vmem:[%s856 + $0x408] sm:$0xff] %v1115
                  %v1117 = vld [vmem:[%s855 + $0x820] sm:$0xff]
                  %1118 = vst [vmem:[%s856 + $0x410] sm:$0xff] %v1117
                  %v1119 = vld [vmem:[%s855 + $0x830] sm:$0xff]
                  %1120 = vst [vmem:[%s856 + $0x418] sm:$0xff] %v1119
                  %v1121 = vld [vmem:[%s855 + $0x840] sm:$0xff]
                  %1122 = vst [vmem:[%s856 + $0x420] sm:$0xff] %v1121
                  %v1123 = vld [vmem:[%s855 + $0x850] sm:$0xff]
                  %1124 = vst [vmem:[%s856 + $0x428] sm:$0xff] %v1123
                  %v1125 = vld [vmem:[%s855 + $0x860] sm:$0xff]
                  %1126 = vst [vmem:[%s856 + $0x430] sm:$0xff] %v1125
                  %v1127 = vld [vmem:[%s855 + $0x870] sm:$0xff]
                  %1128 = vst [vmem:[%s856 + $0x438] sm:$0xff] %v1127
                  %v1129 = vld [vmem:[%s855 + $0x880] sm:$0xff]
                  %1130 = vst [vmem:[%s856 + $0x440] sm:$0xff] %v1129
                  %v1131 = vld [vmem:[%s855 + $0x890] sm:$0xff]
                  %1132 = vst [vmem:[%s856 + $0x448] sm:$0xff] %v1131
                  %v1133 = vld [vmem:[%s855 + $0x8a0] sm:$0xff]
                  %1134 = vst [vmem:[%s856 + $0x450] sm:$0xff] %v1133
                  %v1135 = vld [vmem:[%s855 + $0x8b0] sm:$0xff]
                  %1136 = vst [vmem:[%s856 + $0x458] sm:$0xff] %v1135
                  %v1137 = vld [vmem:[%s855 + $0x8c0] sm:$0xff]
                  %1138 = vst [vmem:[%s856 + $0x460] sm:$0xff] %v1137
                  %v1139 = vld [vmem:[%s855 + $0x8d0] sm:$0xff]
                  %1140 = vst [vmem:[%s856 + $0x468] sm:$0xff] %v1139
                  %v1141 = vld [vmem:[%s855 + $0x8e0] sm:$0xff]
                  %1142 = vst [vmem:[%s856 + $0x470] sm:$0xff] %v1141
                  %v1143 = vld [vmem:[%s855 + $0x8f0] sm:$0xff]
                  %1144 = vst [vmem:[%s856 + $0x478] sm:$0xff] %v1143
                  %v1145 = vld [vmem:[%s855 + $0x900] sm:$0xff]
                  %1146 = vst [vmem:[%s856 + $0x480] sm:$0xff] %v1145
                  %v1147 = vld [vmem:[%s855 + $0x910] sm:$0xff]
                  %1148 = vst [vmem:[%s856 + $0x488] sm:$0xff] %v1147
                  %v1149 = vld [vmem:[%s855 + $0x920] sm:$0xff]
                  %1150 = vst [vmem:[%s856 + $0x490] sm:$0xff] %v1149
                  %v1151 = vld [vmem:[%s855 + $0x930] sm:$0xff]
                  %1152 = vst [vmem:[%s856 + $0x498] sm:$0xff] %v1151
                  %v1153 = vld [vmem:[%s855 + $0x940] sm:$0xff]
                  %1154 = vst [vmem:[%s856 + $0x4a0] sm:$0xff] %v1153
                  %v1155 = vld [vmem:[%s855 + $0x950] sm:$0xff]
                  %1156 = vst [vmem:[%s856 + $0x4a8] sm:$0xff] %v1155
                  %v1157 = vld [vmem:[%s855 + $0x960] sm:$0xff]
                  %1158 = vst [vmem:[%s856 + $0x4b0] sm:$0xff] %v1157
                  %v1159 = vld [vmem:[%s855 + $0x970] sm:$0xff]
                  %1160 = vst [vmem:[%s856 + $0x4b8] sm:$0xff] %v1159
                  %v1161 = vld [vmem:[%s855 + $0x980] sm:$0xff]
                  %1162 = vst [vmem:[%s856 + $0x4c0] sm:$0xff] %v1161
                  %v1163 = vld [vmem:[%s855 + $0x990] sm:$0xff]
                  %1164 = vst [vmem:[%s856 + $0x4c8] sm:$0xff] %v1163
                  %v1165 = vld [vmem:[%s855 + $0x9a0] sm:$0xff]
                  %1166 = vst [vmem:[%s856 + $0x4d0] sm:$0xff] %v1165
                  %v1167 = vld [vmem:[%s855 + $0x9b0] sm:$0xff]
                  %1168 = vst [vmem:[%s856 + $0x4d8] sm:$0xff] %v1167
                  %v1169 = vld [vmem:[%s855 + $0x9c0] sm:$0xff]
                  %1170 = vst [vmem:[%s856 + $0x4e0] sm:$0xff] %v1169
                  %v1171 = vld [vmem:[%s855 + $0x9d0] sm:$0xff]
                  %1172 = vst [vmem:[%s856 + $0x4e8] sm:$0xff] %v1171
                  %v1173 = vld [vmem:[%s855 + $0x9e0] sm:$0xff]
                  %1174 = vst [vmem:[%s856 + $0x4f0] sm:$0xff] %v1173
                  %v1175 = vld [vmem:[%s855 + $0x9f0] sm:$0xff]
                  %1176 = vst [vmem:[%s856 + $0x4f8] sm:$0xff] %v1175
                  %v1177 = vld [vmem:[%s855 + $0xa00] sm:$0xff]
                  %1178 = vst [vmem:[%s856 + $0x500] sm:$0xff] %v1177
                  %v1179 = vld [vmem:[%s855 + $0xa10] sm:$0xff]
                  %1180 = vst [vmem:[%s856 + $0x508] sm:$0xff] %v1179
                  %v1181 = vld [vmem:[%s855 + $0xa20] sm:$0xff]
                  %1182 = vst [vmem:[%s856 + $0x510] sm:$0xff] %v1181
                  %v1183 = vld [vmem:[%s855 + $0xa30] sm:$0xff]
                  %1184 = vst [vmem:[%s856 + $0x518] sm:$0xff] %v1183
                  %v1185 = vld [vmem:[%s855 + $0xa40] sm:$0xff]
                  %1186 = vst [vmem:[%s856 + $0x520] sm:$0xff] %v1185
                  %v1187 = vld [vmem:[%s855 + $0xa50] sm:$0xff]
                  %1188 = vst [vmem:[%s856 + $0x528] sm:$0xff] %v1187
                  %v1189 = vld [vmem:[%s855 + $0xa60] sm:$0xff]
                  %1190 = vst [vmem:[%s856 + $0x530] sm:$0xff] %v1189
                  %v1191 = vld [vmem:[%s855 + $0xa70] sm:$0xff]
                  %1192 = vst [vmem:[%s856 + $0x538] sm:$0xff] %v1191
                  %v1193 = vld [vmem:[%s855 + $0xa80] sm:$0xff]
                  %1194 = vst [vmem:[%s856 + $0x540] sm:$0xff] %v1193
                  %v1195 = vld [vmem:[%s855 + $0xa90] sm:$0xff]
                  %1196 = vst [vmem:[%s856 + $0x548] sm:$0xff] %v1195
                  %v1197 = vld [vmem:[%s855 + $0xaa0] sm:$0xff]
                  %1198 = vst [vmem:[%s856 + $0x550] sm:$0xff] %v1197
                  %v1199 = vld [vmem:[%s855 + $0xab0] sm:$0xff]
                  %1200 = vst [vmem:[%s856 + $0x558] sm:$0xff] %v1199
                  %v1201 = vld [vmem:[%s855 + $0xac0] sm:$0xff]
                  %1202 = vst [vmem:[%s856 + $0x560] sm:$0xff] %v1201
                  %v1203 = vld [vmem:[%s855 + $0xad0] sm:$0xff]
                  %1204 = vst [vmem:[%s856 + $0x568] sm:$0xff] %v1203
                  %v1205 = vld [vmem:[%s855 + $0xae0] sm:$0xff]
                  %1206 = vst [vmem:[%s856 + $0x570] sm:$0xff] %v1205
                  %v1207 = vld [vmem:[%s855 + $0xaf0] sm:$0xff]
                  %1208 = vst [vmem:[%s856 + $0x578] sm:$0xff] %v1207
                  %v1209 = vld [vmem:[%s855 + $0xb00] sm:$0xff]
                  %1210 = vst [vmem:[%s856 + $0x580] sm:$0xff] %v1209
                  %v1211 = vld [vmem:[%s855 + $0xb10] sm:$0xff]
                  %1212 = vst [vmem:[%s856 + $0x588] sm:$0xff] %v1211
                  %v1213 = vld [vmem:[%s855 + $0xb20] sm:$0xff]
                  %1214 = vst [vmem:[%s856 + $0x590] sm:$0xff] %v1213
                  %v1215 = vld [vmem:[%s855 + $0xb30] sm:$0xff]
                  %1216 = vst [vmem:[%s856 + $0x598] sm:$0xff] %v1215
                  %v1217 = vld [vmem:[%s855 + $0xb40] sm:$0xff]
                  %1218 = vst [vmem:[%s856 + $0x5a0] sm:$0xff] %v1217
                  %v1219 = vld [vmem:[%s855 + $0xb50] sm:$0xff]
                  %1220 = vst [vmem:[%s856 + $0x5a8] sm:$0xff] %v1219
                  %v1221 = vld [vmem:[%s855 + $0xb60] sm:$0xff]
                  %1222 = vst [vmem:[%s856 + $0x5b0] sm:$0xff] %v1221
                  %v1223 = vld [vmem:[%s855 + $0xb70] sm:$0xff]
                  %1224 = vst [vmem:[%s856 + $0x5b8] sm:$0xff] %v1223
                  %v1225 = vld [vmem:[%s855 + $0xb80] sm:$0xff]
                  %1226 = vst [vmem:[%s856 + $0x5c0] sm:$0xff] %v1225
                  %v1227 = vld [vmem:[%s855 + $0xb90] sm:$0xff]
                  %1228 = vst [vmem:[%s856 + $0x5c8] sm:$0xff] %v1227
                  %v1229 = vld [vmem:[%s855 + $0xba0] sm:$0xff]
                  %1230 = vst [vmem:[%s856 + $0x5d0] sm:$0xff] %v1229
                  %v1231 = vld [vmem:[%s855 + $0xbb0] sm:$0xff]
                  %1232 = vst [vmem:[%s856 + $0x5d8] sm:$0xff] %v1231
                  %v1233 = vld [vmem:[%s855 + $0xbc0] sm:$0xff]
                  %1234 = vst [vmem:[%s856 + $0x5e0] sm:$0xff] %v1233
                  %v1235 = vld [vmem:[%s855 + $0xbd0] sm:$0xff]
                  %1236 = vst [vmem:[%s856 + $0x5e8] sm:$0xff] %v1235
                  %v1237 = vld [vmem:[%s855 + $0xbe0] sm:$0xff]
                  %1238 = vst [vmem:[%s856 + $0x5f0] sm:$0xff] %v1237
                  %v1239 = vld [vmem:[%s855 + $0xbf0] sm:$0xff]
                  %1240 = vst [vmem:[%s856 + $0x5f8] sm:$0xff] %v1239
                  %v1241 = vld [vmem:[%s855 + $0xc00] sm:$0xff]
                  %1242 = vst [vmem:[%s856 + $0x600] sm:$0xff] %v1241
                  %v1243 = vld [vmem:[%s855 + $0xc10] sm:$0xff]
                  %1244 = vst [vmem:[%s856 + $0x608] sm:$0xff] %v1243
                  %v1245 = vld [vmem:[%s855 + $0xc20] sm:$0xff]
                  %1246 = vst [vmem:[%s856 + $0x610] sm:$0xff] %v1245
                  %v1247 = vld [vmem:[%s855 + $0xc30] sm:$0xff]
                  %1248 = vst [vmem:[%s856 + $0x618] sm:$0xff] %v1247
                  %v1249 = vld [vmem:[%s855 + $0xc40] sm:$0xff]
                  %1250 = vst [vmem:[%s856 + $0x620] sm:$0xff] %v1249
                  %v1251 = vld [vmem:[%s855 + $0xc50] sm:$0xff]
                  %1252 = vst [vmem:[%s856 + $0x628] sm:$0xff] %v1251
                  %v1253 = vld [vmem:[%s855 + $0xc60] sm:$0xff]
                  %1254 = vst [vmem:[%s856 + $0x630] sm:$0xff] %v1253
                  %v1255 = vld [vmem:[%s855 + $0xc70] sm:$0xff]
                  %1256 = vst [vmem:[%s856 + $0x638] sm:$0xff] %v1255
                  %v1257 = vld [vmem:[%s855 + $0xc80] sm:$0xff]
                  %1258 = vst [vmem:[%s856 + $0x640] sm:$0xff] %v1257
                  %v1259 = vld [vmem:[%s855 + $0xc90] sm:$0xff]
                  %1260 = vst [vmem:[%s856 + $0x648] sm:$0xff] %v1259
                  %v1261 = vld [vmem:[%s855 + $0xca0] sm:$0xff]
                  %1262 = vst [vmem:[%s856 + $0x650] sm:$0xff] %v1261
                  %v1263 = vld [vmem:[%s855 + $0xcb0] sm:$0xff]
                  %1264 = vst [vmem:[%s856 + $0x658] sm:$0xff] %v1263
                  %v1265 = vld [vmem:[%s855 + $0xcc0] sm:$0xff]
                  %1266 = vst [vmem:[%s856 + $0x660] sm:$0xff] %v1265
                  %v1267 = vld [vmem:[%s855 + $0xcd0] sm:$0xff]
                  %1268 = vst [vmem:[%s856 + $0x668] sm:$0xff] %v1267
                  %v1269 = vld [vmem:[%s855 + $0xce0] sm:$0xff]
                  %1270 = vst [vmem:[%s856 + $0x670] sm:$0xff] %v1269
                  %v1271 = vld [vmem:[%s855 + $0xcf0] sm:$0xff]
                  %1272 = vst [vmem:[%s856 + $0x678] sm:$0xff] %v1271
                  %v1273 = vld [vmem:[%s855 + $0xd00] sm:$0xff]
                  %1274 = vst [vmem:[%s856 + $0x680] sm:$0xff] %v1273
                  %v1275 = vld [vmem:[%s855 + $0xd10] sm:$0xff]
                  %1276 = vst [vmem:[%s856 + $0x688] sm:$0xff] %v1275
                  %v1277 = vld [vmem:[%s855 + $0xd20] sm:$0xff]
                  %1278 = vst [vmem:[%s856 + $0x690] sm:$0xff] %v1277
                  %v1279 = vld [vmem:[%s855 + $0xd30] sm:$0xff]
                  %1280 = vst [vmem:[%s856 + $0x698] sm:$0xff] %v1279
                  %v1281 = vld [vmem:[%s855 + $0xd40] sm:$0xff]
                  %1282 = vst [vmem:[%s856 + $0x6a0] sm:$0xff] %v1281
                  %v1283 = vld [vmem:[%s855 + $0xd50] sm:$0xff]
                  %1284 = vst [vmem:[%s856 + $0x6a8] sm:$0xff] %v1283
                  %v1285 = vld [vmem:[%s855 + $0xd60] sm:$0xff]
                  %1286 = vst [vmem:[%s856 + $0x6b0] sm:$0xff] %v1285
                  %v1287 = vld [vmem:[%s855 + $0xd70] sm:$0xff]
                  %1288 = vst [vmem:[%s856 + $0x6b8] sm:$0xff] %v1287
                  %v1289 = vld [vmem:[%s855 + $0xd80] sm:$0xff]
                  %1290 = vst [vmem:[%s856 + $0x6c0] sm:$0xff] %v1289
                  %v1291 = vld [vmem:[%s855 + $0xd90] sm:$0xff]
                  %1292 = vst [vmem:[%s856 + $0x6c8] sm:$0xff] %v1291
                  %v1293 = vld [vmem:[%s855 + $0xda0] sm:$0xff]
                  %1294 = vst [vmem:[%s856 + $0x6d0] sm:$0xff] %v1293
                  %v1295 = vld [vmem:[%s855 + $0xdb0] sm:$0xff]
                  %1296 = vst [vmem:[%s856 + $0x6d8] sm:$0xff] %v1295
                  %v1297 = vld [vmem:[%s855 + $0xdc0] sm:$0xff]
                  %1298 = vst [vmem:[%s856 + $0x6e0] sm:$0xff] %v1297
                  %v1299 = vld [vmem:[%s855 + $0xdd0] sm:$0xff]
                  %1300 = vst [vmem:[%s856 + $0x6e8] sm:$0xff] %v1299
                  %v1301 = vld [vmem:[%s855 + $0xde0] sm:$0xff]
                  %1302 = vst [vmem:[%s856 + $0x6f0] sm:$0xff] %v1301
                  %v1303 = vld [vmem:[%s855 + $0xdf0] sm:$0xff]
                  %1304 = vst [vmem:[%s856 + $0x6f8] sm:$0xff] %v1303
                  %v1305 = vld [vmem:[%s855 + $0xe00] sm:$0xff]
                  %1306 = vst [vmem:[%s856 + $0x700] sm:$0xff] %v1305
                  %v1307 = vld [vmem:[%s855 + $0xe10] sm:$0xff]
                  %1308 = vst [vmem:[%s856 + $0x708] sm:$0xff] %v1307
                  %v1309 = vld [vmem:[%s855 + $0xe20] sm:$0xff]
                  %1310 = vst [vmem:[%s856 + $0x710] sm:$0xff] %v1309
                  %v1311 = vld [vmem:[%s855 + $0xe30] sm:$0xff]
                  %1312 = vst [vmem:[%s856 + $0x718] sm:$0xff] %v1311
                  %v1313 = vld [vmem:[%s855 + $0xe40] sm:$0xff]
                  %1314 = vst [vmem:[%s856 + $0x720] sm:$0xff] %v1313
                  %v1315 = vld [vmem:[%s855 + $0xe50] sm:$0xff]
                  %1316 = vst [vmem:[%s856 + $0x728] sm:$0xff] %v1315
                  %v1317 = vld [vmem:[%s855 + $0xe60] sm:$0xff]
                  %1318 = vst [vmem:[%s856 + $0x730] sm:$0xff] %v1317
                  %v1319 = vld [vmem:[%s855 + $0xe70] sm:$0xff]
                  %1320 = vst [vmem:[%s856 + $0x738] sm:$0xff] %v1319
                  %v1321 = vld [vmem:[%s855 + $0xe80] sm:$0xff]
                  %1322 = vst [vmem:[%s856 + $0x740] sm:$0xff] %v1321
                  %v1323 = vld [vmem:[%s855 + $0xe90] sm:$0xff]
                  %1324 = vst [vmem:[%s856 + $0x748] sm:$0xff] %v1323
                  %v1325 = vld [vmem:[%s855 + $0xea0] sm:$0xff]
                  %1326 = vst [vmem:[%s856 + $0x750] sm:$0xff] %v1325
                  %v1327 = vld [vmem:[%s855 + $0xeb0] sm:$0xff]
                  %1328 = vst [vmem:[%s856 + $0x758] sm:$0xff] %v1327
                  %v1329 = vld [vmem:[%s855 + $0xec0] sm:$0xff]
                  %1330 = vst [vmem:[%s856 + $0x760] sm:$0xff] %v1329
                  %v1331 = vld [vmem:[%s855 + $0xed0] sm:$0xff]
                  %1332 = vst [vmem:[%s856 + $0x768] sm:$0xff] %v1331
                  %v1333 = vld [vmem:[%s855 + $0xee0] sm:$0xff]
                  %1334 = vst [vmem:[%s856 + $0x770] sm:$0xff] %v1333
                  %v1335 = vld [vmem:[%s855 + $0xef0] sm:$0xff]
                  %1336 = vst [vmem:[%s856 + $0x778] sm:$0xff] %v1335
                  %v1337 = vld [vmem:[%s855 + $0xf00] sm:$0xff]
                  %1338 = vst [vmem:[%s856 + $0x780] sm:$0xff] %v1337
                  %v1339 = vld [vmem:[%s855 + $0xf10] sm:$0xff]
                  %1340 = vst [vmem:[%s856 + $0x788] sm:$0xff] %v1339
                  %v1341 = vld [vmem:[%s855 + $0xf20] sm:$0xff]
                  %1342 = vst [vmem:[%s856 + $0x790] sm:$0xff] %v1341
                  %v1343 = vld [vmem:[%s855 + $0xf30] sm:$0xff]
                  %1344 = vst [vmem:[%s856 + $0x798] sm:$0xff] %v1343
                  %v1345 = vld [vmem:[%s855 + $0xf40] sm:$0xff]
                  %1346 = vst [vmem:[%s856 + $0x7a0] sm:$0xff] %v1345
                  %v1347 = vld [vmem:[%s855 + $0xf50] sm:$0xff]
                  %1348 = vst [vmem:[%s856 + $0x7a8] sm:$0xff] %v1347
                  %v1349 = vld [vmem:[%s855 + $0xf60] sm:$0xff]
                  %1350 = vst [vmem:[%s856 + $0x7b0] sm:$0xff] %v1349
                  %v1351 = vld [vmem:[%s855 + $0xf70] sm:$0xff]
                  %1352 = vst [vmem:[%s856 + $0x7b8] sm:$0xff] %v1351
                  %v1353 = vld [vmem:[%s855 + $0xf80] sm:$0xff]
                  %1354 = vst [vmem:[%s856 + $0x7c0] sm:$0xff] %v1353
                  %v1355 = vld [vmem:[%s855 + $0xf90] sm:$0xff]
                  %1356 = vst [vmem:[%s856 + $0x7c8] sm:$0xff] %v1355
                  %v1357 = vld [vmem:[%s855 + $0xfa0] sm:$0xff]
                  %1358 = vst [vmem:[%s856 + $0x7d0] sm:$0xff] %v1357
                  %v1359 = vld [vmem:[%s855 + $0xfb0] sm:$0xff]
                  %1360 = vst [vmem:[%s856 + $0x7d8] sm:$0xff] %v1359
                  %v1361 = vld [vmem:[%s855 + $0xfc0] sm:$0xff]
                  %1362 = vst [vmem:[%s856 + $0x7e0] sm:$0xff] %v1361
                  %v1363 = vld [vmem:[%s855 + $0xfd0] sm:$0xff]
                  %1364 = vst [vmem:[%s856 + $0x7e8] sm:$0xff] %v1363
                  %v1365 = vld [vmem:[%s855 + $0xfe0] sm:$0xff]
                  %1366 = vst [vmem:[%s856 + $0x7f0] sm:$0xff] %v1365
                  %v1367 = vld [vmem:[%s855 + $0xff0] sm:$0xff]
                  %1368 = vst [vmem:[%s856 + $0x7f8] sm:$0xff] %v1367
                  %v1369 = vld [vmem:[%s855 + $0x1000] sm:$0xff]
                  %1370 = vst [vmem:[%s856 + $0x800] sm:$0xff] %v1369
                  %v1371 = vld [vmem:[%s855 + $0x1010] sm:$0xff]
                  %1372 = vst [vmem:[%s856 + $0x808] sm:$0xff] %v1371
                  %v1373 = vld [vmem:[%s855 + $0x1020] sm:$0xff]
                  %1374 = vst [vmem:[%s856 + $0x810] sm:$0xff] %v1373
                  %v1375 = vld [vmem:[%s855 + $0x1030] sm:$0xff]
                  %1376 = vst [vmem:[%s856 + $0x818] sm:$0xff] %v1375
                  %v1377 = vld [vmem:[%s855 + $0x1040] sm:$0xff]
                  %1378 = vst [vmem:[%s856 + $0x820] sm:$0xff] %v1377
                  %v1379 = vld [vmem:[%s855 + $0x1050] sm:$0xff]
                  %1380 = vst [vmem:[%s856 + $0x828] sm:$0xff] %v1379
                  %v1381 = vld [vmem:[%s855 + $0x1060] sm:$0xff]
                  %1382 = vst [vmem:[%s856 + $0x830] sm:$0xff] %v1381
                  %v1383 = vld [vmem:[%s855 + $0x1070] sm:$0xff]
                  %1384 = vst [vmem:[%s856 + $0x838] sm:$0xff] %v1383
                  %v1385 = vld [vmem:[%s855 + $0x1080] sm:$0xff]
                  %1386 = vst [vmem:[%s856 + $0x840] sm:$0xff] %v1385
                  %v1387 = vld [vmem:[%s855 + $0x1090] sm:$0xff]
                  %1388 = vst [vmem:[%s856 + $0x848] sm:$0xff] %v1387
                  %v1389 = vld [vmem:[%s855 + $0x10a0] sm:$0xff]
                  %1390 = vst [vmem:[%s856 + $0x850] sm:$0xff] %v1389
                  %v1391 = vld [vmem:[%s855 + $0x10b0] sm:$0xff]
                  %1392 = vst [vmem:[%s856 + $0x858] sm:$0xff] %v1391
                  %v1393 = vld [vmem:[%s855 + $0x10c0] sm:$0xff]
                  %1394 = vst [vmem:[%s856 + $0x860] sm:$0xff] %v1393
                  %v1395 = vld [vmem:[%s855 + $0x10d0] sm:$0xff]
                  %1396 = vst [vmem:[%s856 + $0x868] sm:$0xff] %v1395
                  %v1397 = vld [vmem:[%s855 + $0x10e0] sm:$0xff]
                  %1398 = vst [vmem:[%s856 + $0x870] sm:$0xff] %v1397
                  %v1399 = vld [vmem:[%s855 + $0x10f0] sm:$0xff]
                  %1400 = vst [vmem:[%s856 + $0x878] sm:$0xff] %v1399
                  %v1401 = vld [vmem:[%s855 + $0x1100] sm:$0xff]
                  %1402 = vst [vmem:[%s856 + $0x880] sm:$0xff] %v1401
                  %v1403 = vld [vmem:[%s855 + $0x1110] sm:$0xff]
                  %1404 = vst [vmem:[%s856 + $0x888] sm:$0xff] %v1403
                  %v1405 = vld [vmem:[%s855 + $0x1120] sm:$0xff]
                  %1406 = vst [vmem:[%s856 + $0x890] sm:$0xff] %v1405
                  %v1407 = vld [vmem:[%s855 + $0x1130] sm:$0xff]
                  %1408 = vst [vmem:[%s856 + $0x898] sm:$0xff] %v1407
                  %v1409 = vld [vmem:[%s855 + $0x1140] sm:$0xff]
                  %1410 = vst [vmem:[%s856 + $0x8a0] sm:$0xff] %v1409
                  %v1411 = vld [vmem:[%s855 + $0x1150] sm:$0xff]
                  %1412 = vst [vmem:[%s856 + $0x8a8] sm:$0xff] %v1411
                  %v1413 = vld [vmem:[%s855 + $0x1160] sm:$0xff]
                  %1414 = vst [vmem:[%s856 + $0x8b0] sm:$0xff] %v1413
                  %v1415 = vld [vmem:[%s855 + $0x1170] sm:$0xff]
                  %1416 = vst [vmem:[%s856 + $0x8b8] sm:$0xff] %v1415
                  %v1417 = vld [vmem:[%s855 + $0x1180] sm:$0xff]
                  %1418 = vst [vmem:[%s856 + $0x8c0] sm:$0xff] %v1417
                  %v1419 = vld [vmem:[%s855 + $0x1190] sm:$0xff]
                  %1420 = vst [vmem:[%s856 + $0x8c8] sm:$0xff] %v1419
                  %v1421 = vld [vmem:[%s855 + $0x11a0] sm:$0xff]
                  %1422 = vst [vmem:[%s856 + $0x8d0] sm:$0xff] %v1421
                  %v1423 = vld [vmem:[%s855 + $0x11b0] sm:$0xff]
                  %1424 = vst [vmem:[%s856 + $0x8d8] sm:$0xff] %v1423
                  %v1425 = vld [vmem:[%s855 + $0x11c0] sm:$0xff]
                  %1426 = vst [vmem:[%s856 + $0x8e0] sm:$0xff] %v1425
                  %v1427 = vld [vmem:[%s855 + $0x11d0] sm:$0xff]
                  %1428 = vst [vmem:[%s856 + $0x8e8] sm:$0xff] %v1427
                  %v1429 = vld [vmem:[%s855 + $0x11e0] sm:$0xff]
                  %1430 = vst [vmem:[%s856 + $0x8f0] sm:$0xff] %v1429
                  %v1431 = vld [vmem:[%s855 + $0x11f0] sm:$0xff]
                  %1432 = vst [vmem:[%s856 + $0x8f8] sm:$0xff] %v1431
                  %v1433 = vld [vmem:[%s855 + $0x1200] sm:$0xff]
                  %1434 = vst [vmem:[%s856 + $0x900] sm:$0xff] %v1433
                  %v1435 = vld [vmem:[%s855 + $0x1210] sm:$0xff]
                  %1436 = vst [vmem:[%s856 + $0x908] sm:$0xff] %v1435
                  %v1437 = vld [vmem:[%s855 + $0x1220] sm:$0xff]
                  %1438 = vst [vmem:[%s856 + $0x910] sm:$0xff] %v1437
                  %v1439 = vld [vmem:[%s855 + $0x1230] sm:$0xff]
                  %1440 = vst [vmem:[%s856 + $0x918] sm:$0xff] %v1439
                  %v1441 = vld [vmem:[%s855 + $0x1240] sm:$0xff]
                  %1442 = vst [vmem:[%s856 + $0x920] sm:$0xff] %v1441
                  %v1443 = vld [vmem:[%s855 + $0x1250] sm:$0xff]
                  %1444 = vst [vmem:[%s856 + $0x928] sm:$0xff] %v1443
                  %v1445 = vld [vmem:[%s855 + $0x1260] sm:$0xff]
                  %1446 = vst [vmem:[%s856 + $0x930] sm:$0xff] %v1445
                  %v1447 = vld [vmem:[%s855 + $0x1270] sm:$0xff]
                  %1448 = vst [vmem:[%s856 + $0x938] sm:$0xff] %v1447
                  %v1449 = vld [vmem:[%s855 + $0x1280] sm:$0xff]
                  %1450 = vst [vmem:[%s856 + $0x940] sm:$0xff] %v1449
                  %v1451 = vld [vmem:[%s855 + $0x1290] sm:$0xff]
                  %1452 = vst [vmem:[%s856 + $0x948] sm:$0xff] %v1451
                  %v1453 = vld [vmem:[%s855 + $0x12a0] sm:$0xff]
                  %1454 = vst [vmem:[%s856 + $0x950] sm:$0xff] %v1453
                  %v1455 = vld [vmem:[%s855 + $0x12b0] sm:$0xff]
                  %1456 = vst [vmem:[%s856 + $0x958] sm:$0xff] %v1455
                  %v1457 = vld [vmem:[%s855 + $0x12c0] sm:$0xff]
                  %1458 = vst [vmem:[%s856 + $0x960] sm:$0xff] %v1457
                  %v1459 = vld [vmem:[%s855 + $0x12d0] sm:$0xff]
                  %1460 = vst [vmem:[%s856 + $0x968] sm:$0xff] %v1459
                  %v1461 = vld [vmem:[%s855 + $0x12e0] sm:$0xff]
                  %1462 = vst [vmem:[%s856 + $0x970] sm:$0xff] %v1461
                  %v1463 = vld [vmem:[%s855 + $0x12f0] sm:$0xff]
                  %1464 = vst [vmem:[%s856 + $0x978] sm:$0xff] %v1463
                  %v1465 = vld [vmem:[%s855 + $0x1300] sm:$0xff]
                  %1466 = vst [vmem:[%s856 + $0x980] sm:$0xff] %v1465
                  %v1467 = vld [vmem:[%s855 + $0x1310] sm:$0xff]
                  %1468 = vst [vmem:[%s856 + $0x988] sm:$0xff] %v1467
                  %v1469 = vld [vmem:[%s855 + $0x1320] sm:$0xff]
                  %1470 = vst [vmem:[%s856 + $0x990] sm:$0xff] %v1469
                  %v1471 = vld [vmem:[%s855 + $0x1330] sm:$0xff]
                  %1472 = vst [vmem:[%s856 + $0x998] sm:$0xff] %v1471
                  %v1473 = vld [vmem:[%s855 + $0x1340] sm:$0xff]
                  %1474 = vst [vmem:[%s856 + $0x9a0] sm:$0xff] %v1473
                  %v1475 = vld [vmem:[%s855 + $0x1350] sm:$0xff]
                  %1476 = vst [vmem:[%s856 + $0x9a8] sm:$0xff] %v1475
                  %v1477 = vld [vmem:[%s855 + $0x1360] sm:$0xff]
                  %1478 = vst [vmem:[%s856 + $0x9b0] sm:$0xff] %v1477
                  %v1479 = vld [vmem:[%s855 + $0x1370] sm:$0xff]
                  %1480 = vst [vmem:[%s856 + $0x9b8] sm:$0xff] %v1479
                  %v1481 = vld [vmem:[%s855 + $0x1380] sm:$0xff]
                  %1482 = vst [vmem:[%s856 + $0x9c0] sm:$0xff] %v1481
                  %v1483 = vld [vmem:[%s855 + $0x1390] sm:$0xff]
                  %1484 = vst [vmem:[%s856 + $0x9c8] sm:$0xff] %v1483
                  %v1485 = vld [vmem:[%s855 + $0x13a0] sm:$0xff]
                  %1486 = vst [vmem:[%s856 + $0x9d0] sm:$0xff] %v1485
                  %v1487 = vld [vmem:[%s855 + $0x13b0] sm:$0xff]
                  %1488 = vst [vmem:[%s856 + $0x9d8] sm:$0xff] %v1487
                  %v1489 = vld [vmem:[%s855 + $0x13c0] sm:$0xff]
                  %1490 = vst [vmem:[%s856 + $0x9e0] sm:$0xff] %v1489
                  %v1491 = vld [vmem:[%s855 + $0x13d0] sm:$0xff]
                  %1492 = vst [vmem:[%s856 + $0x9e8] sm:$0xff] %v1491
                  %v1493 = vld [vmem:[%s855 + $0x13e0] sm:$0xff]
                  %1494 = vst [vmem:[%s856 + $0x9f0] sm:$0xff] %v1493
                  %v1495 = vld [vmem:[%s855 + $0x13f0] sm:$0xff]
                  %1496 = vst [vmem:[%s856 + $0x9f8] sm:$0xff] %v1495
                $region56: #{_lambda_.6} parent=50 // loop_footer
                  %s854 = sadd.s32 1, %s850
                $region57: #{_lambda_.6} parent=50 // loop_footer_branch
                  %849 = sbr.rel target = $region53
                $region58: #{_lambda_.6} parent=50 // loop_exit
                  _
              $region51: #{_lambda_.6} parent=35 // pred_fallthru
                _
              // Predicated region
              $region59: #{_lambda_.6} parent=35 // pred_check
                _
              $region60: #{_lambda_.6} parent=35 // pred_check_branch
                %1498 = sbr.rel target = $region62
              $region61: #{_lambda_.6} parent=35 // pred_region
                _
              $region62: #{_lambda_.6} parent=35 // pred_fallthru
                _
            $region36: #{_lambda_.6} parent=31 // pred_fallthru
              _
            // Predicated region
            $region37: #{_lambda_.6} parent=31 // pred_check
              _
            $region38: #{_lambda_.6} parent=31 // pred_check_branch
              %197 = sbr.rel target = $region40
            $region39: #{_lambda_.6} parent=31 // pred_region
              loop: start=0, step=1, limit=1
              $region41: #{_lambda_.6} parent=39 // loop_pre_header
                _
              $region42: #{_lambda_.6} parent=39 // loop_header
                %s200 = sphi 0, %s204
                %p201 = scmp.ge.s32.totalorder %s200, 1
                %s205 = sphi %s191, %s191
                %s206 = sphi %s188, %s188
              $region43: #{_lambda_.6} parent=39 // loop_header_branch
                %203 = sbr.rel (%p201) target = $region47
              $region44: #{_lambda_.6} parent=39 // loop_body
                %v207 = vld [vmem:[%s205] sm:$0xff]
                %208 = vst [vmem:[%s206] sm:$0xff] %v207
                %v209 = vld [vmem:[%s205 + $0x10] sm:$0xff]
                %210 = vst [vmem:[%s206 + $0x8] sm:$0xff] %v209
                %v211 = vld [vmem:[%s205 + $0x20] sm:$0xff]
                %212 = vst [vmem:[%s206 + $0x10] sm:$0xff] %v211
                %v213 = vld [vmem:[%s205 + $0x30] sm:$0xff]
                %214 = vst [vmem:[%s206 + $0x18] sm:$0xff] %v213
                %v215 = vld [vmem:[%s205 + $0x40] sm:$0xff]
                %216 = vst [vmem:[%s206 + $0x20] sm:$0xff] %v215
                %v217 = vld [vmem:[%s205 + $0x50] sm:$0xff]
                %218 = vst [vmem:[%s206 + $0x28] sm:$0xff] %v217
                %v219 = vld [vmem:[%s205 + $0x60] sm:$0xff]
                %220 = vst [vmem:[%s206 + $0x30] sm:$0xff] %v219
                %v221 = vld [vmem:[%s205 + $0x70] sm:$0xff]
                %222 = vst [vmem:[%s206 + $0x38] sm:$0xff] %v221
                %v223 = vld [vmem:[%s205 + $0x80] sm:$0xff]
                %224 = vst [vmem:[%s206 + $0x40] sm:$0xff] %v223
                %v225 = vld [vmem:[%s205 + $0x90] sm:$0xff]
                %226 = vst [vmem:[%s206 + $0x48] sm:$0xff] %v225
                %v227 = vld [vmem:[%s205 + $0xa0] sm:$0xff]
                %228 = vst [vmem:[%s206 + $0x50] sm:$0xff] %v227
                %v229 = vld [vmem:[%s205 + $0xb0] sm:$0xff]
                %230 = vst [vmem:[%s206 + $0x58] sm:$0xff] %v229
                %v231 = vld [vmem:[%s205 + $0xc0] sm:$0xff]
                %232 = vst [vmem:[%s206 + $0x60] sm:$0xff] %v231
                %v233 = vld [vmem:[%s205 + $0xd0] sm:$0xff]
                %234 = vst [vmem:[%s206 + $0x68] sm:$0xff] %v233
                %v235 = vld [vmem:[%s205 + $0xe0] sm:$0xff]
                %236 = vst [vmem:[%s206 + $0x70] sm:$0xff] %v235
                %v237 = vld [vmem:[%s205 + $0xf0] sm:$0xff]
                %238 = vst [vmem:[%s206 + $0x78] sm:$0xff] %v237
                %v239 = vld [vmem:[%s205 + $0x100] sm:$0xff]
                %240 = vst [vmem:[%s206 + $0x80] sm:$0xff] %v239
                %v241 = vld [vmem:[%s205 + $0x110] sm:$0xff]
                %242 = vst [vmem:[%s206 + $0x88] sm:$0xff] %v241
                %v243 = vld [vmem:[%s205 + $0x120] sm:$0xff]
                %244 = vst [vmem:[%s206 + $0x90] sm:$0xff] %v243
                %v245 = vld [vmem:[%s205 + $0x130] sm:$0xff]
                %246 = vst [vmem:[%s206 + $0x98] sm:$0xff] %v245
                %v247 = vld [vmem:[%s205 + $0x140] sm:$0xff]
                %248 = vst [vmem:[%s206 + $0xa0] sm:$0xff] %v247
                %v249 = vld [vmem:[%s205 + $0x150] sm:$0xff]
                %250 = vst [vmem:[%s206 + $0xa8] sm:$0xff] %v249
                %v251 = vld [vmem:[%s205 + $0x160] sm:$0xff]
                %252 = vst [vmem:[%s206 + $0xb0] sm:$0xff] %v251
                %v253 = vld [vmem:[%s205 + $0x170] sm:$0xff]
                %254 = vst [vmem:[%s206 + $0xb8] sm:$0xff] %v253
                %v255 = vld [vmem:[%s205 + $0x180] sm:$0xff]
                %256 = vst [vmem:[%s206 + $0xc0] sm:$0xff] %v255
                %v257 = vld [vmem:[%s205 + $0x190] sm:$0xff]
                %258 = vst [vmem:[%s206 + $0xc8] sm:$0xff] %v257
                %v259 = vld [vmem:[%s205 + $0x1a0] sm:$0xff]
                %260 = vst [vmem:[%s206 + $0xd0] sm:$0xff] %v259
                %v261 = vld [vmem:[%s205 + $0x1b0] sm:$0xff]
                %262 = vst [vmem:[%s206 + $0xd8] sm:$0xff] %v261
                %v263 = vld [vmem:[%s205 + $0x1c0] sm:$0xff]
                %264 = vst [vmem:[%s206 + $0xe0] sm:$0xff] %v263
                %v265 = vld [vmem:[%s205 + $0x1d0] sm:$0xff]
                %266 = vst [vmem:[%s206 + $0xe8] sm:$0xff] %v265
                %v267 = vld [vmem:[%s205 + $0x1e0] sm:$0xff]
                %268 = vst [vmem:[%s206 + $0xf0] sm:$0xff] %v267
                %v269 = vld [vmem:[%s205 + $0x1f0] sm:$0xff]
                %270 = vst [vmem:[%s206 + $0xf8] sm:$0xff] %v269
                %v271 = vld [vmem:[%s205 + $0x200] sm:$0xff]
                %272 = vst [vmem:[%s206 + $0x100] sm:$0xff] %v271
                %v273 = vld [vmem:[%s205 + $0x210] sm:$0xff]
                %274 = vst [vmem:[%s206 + $0x108] sm:$0xff] %v273
                %v275 = vld [vmem:[%s205 + $0x220] sm:$0xff]
                %276 = vst [vmem:[%s206 + $0x110] sm:$0xff] %v275
                %v277 = vld [vmem:[%s205 + $0x230] sm:$0xff]
                %278 = vst [vmem:[%s206 + $0x118] sm:$0xff] %v277
                %v279 = vld [vmem:[%s205 + $0x240] sm:$0xff]
                %280 = vst [vmem:[%s206 + $0x120] sm:$0xff] %v279
                %v281 = vld [vmem:[%s205 + $0x250] sm:$0xff]
                %282 = vst [vmem:[%s206 + $0x128] sm:$0xff] %v281
                %v283 = vld [vmem:[%s205 + $0x260] sm:$0xff]
                %284 = vst [vmem:[%s206 + $0x130] sm:$0xff] %v283
                %v285 = vld [vmem:[%s205 + $0x270] sm:$0xff]
                %286 = vst [vmem:[%s206 + $0x138] sm:$0xff] %v285
                %v287 = vld [vmem:[%s205 + $0x280] sm:$0xff]
                %288 = vst [vmem:[%s206 + $0x140] sm:$0xff] %v287
                %v289 = vld [vmem:[%s205 + $0x290] sm:$0xff]
                %290 = vst [vmem:[%s206 + $0x148] sm:$0xff] %v289
                %v291 = vld [vmem:[%s205 + $0x2a0] sm:$0xff]
                %292 = vst [vmem:[%s206 + $0x150] sm:$0xff] %v291
                %v293 = vld [vmem:[%s205 + $0x2b0] sm:$0xff]
                %294 = vst [vmem:[%s206 + $0x158] sm:$0xff] %v293
                %v295 = vld [vmem:[%s205 + $0x2c0] sm:$0xff]
                %296 = vst [vmem:[%s206 + $0x160] sm:$0xff] %v295
                %v297 = vld [vmem:[%s205 + $0x2d0] sm:$0xff]
                %298 = vst [vmem:[%s206 + $0x168] sm:$0xff] %v297
                %v299 = vld [vmem:[%s205 + $0x2e0] sm:$0xff]
                %300 = vst [vmem:[%s206 + $0x170] sm:$0xff] %v299
                %v301 = vld [vmem:[%s205 + $0x2f0] sm:$0xff]
                %302 = vst [vmem:[%s206 + $0x178] sm:$0xff] %v301
                %v303 = vld [vmem:[%s205 + $0x300] sm:$0xff]
                %304 = vst [vmem:[%s206 + $0x180] sm:$0xff] %v303
                %v305 = vld [vmem:[%s205 + $0x310] sm:$0xff]
                %306 = vst [vmem:[%s206 + $0x188] sm:$0xff] %v305
                %v307 = vld [vmem:[%s205 + $0x320] sm:$0xff]
                %308 = vst [vmem:[%s206 + $0x190] sm:$0xff] %v307
                %v309 = vld [vmem:[%s205 + $0x330] sm:$0xff]
                %310 = vst [vmem:[%s206 + $0x198] sm:$0xff] %v309
                %v311 = vld [vmem:[%s205 + $0x340] sm:$0xff]
                %312 = vst [vmem:[%s206 + $0x1a0] sm:$0xff] %v311
                %v313 = vld [vmem:[%s205 + $0x350] sm:$0xff]
                %314 = vst [vmem:[%s206 + $0x1a8] sm:$0xff] %v313
                %v315 = vld [vmem:[%s205 + $0x360] sm:$0xff]
                %316 = vst [vmem:[%s206 + $0x1b0] sm:$0xff] %v315
                %v317 = vld [vmem:[%s205 + $0x370] sm:$0xff]
                %318 = vst [vmem:[%s206 + $0x1b8] sm:$0xff] %v317
                %v319 = vld [vmem:[%s205 + $0x380] sm:$0xff]
                %320 = vst [vmem:[%s206 + $0x1c0] sm:$0xff] %v319
                %v321 = vld [vmem:[%s205 + $0x390] sm:$0xff]
                %322 = vst [vmem:[%s206 + $0x1c8] sm:$0xff] %v321
                %v323 = vld [vmem:[%s205 + $0x3a0] sm:$0xff]
                %324 = vst [vmem:[%s206 + $0x1d0] sm:$0xff] %v323
                %v325 = vld [vmem:[%s205 + $0x3b0] sm:$0xff]
                %326 = vst [vmem:[%s206 + $0x1d8] sm:$0xff] %v325
                %v327 = vld [vmem:[%s205 + $0x3c0] sm:$0xff]
                %328 = vst [vmem:[%s206 + $0x1e0] sm:$0xff] %v327
                %v329 = vld [vmem:[%s205 + $0x3d0] sm:$0xff]
                %330 = vst [vmem:[%s206 + $0x1e8] sm:$0xff] %v329
                %v331 = vld [vmem:[%s205 + $0x3e0] sm:$0xff]
                %332 = vst [vmem:[%s206 + $0x1f0] sm:$0xff] %v331
                %v333 = vld [vmem:[%s205 + $0x3f0] sm:$0xff]
                %334 = vst [vmem:[%s206 + $0x1f8] sm:$0xff] %v333
                %v335 = vld [vmem:[%s205 + $0x400] sm:$0xff]
                %336 = vst [vmem:[%s206 + $0x200] sm:$0xff] %v335
                %v337 = vld [vmem:[%s205 + $0x410] sm:$0xff]
                %338 = vst [vmem:[%s206 + $0x208] sm:$0xff] %v337
                %v339 = vld [vmem:[%s205 + $0x420] sm:$0xff]
                %340 = vst [vmem:[%s206 + $0x210] sm:$0xff] %v339
                %v341 = vld [vmem:[%s205 + $0x430] sm:$0xff]
                %342 = vst [vmem:[%s206 + $0x218] sm:$0xff] %v341
                %v343 = vld [vmem:[%s205 + $0x440] sm:$0xff]
                %344 = vst [vmem:[%s206 + $0x220] sm:$0xff] %v343
                %v345 = vld [vmem:[%s205 + $0x450] sm:$0xff]
                %346 = vst [vmem:[%s206 + $0x228] sm:$0xff] %v345
                %v347 = vld [vmem:[%s205 + $0x460] sm:$0xff]
                %348 = vst [vmem:[%s206 + $0x230] sm:$0xff] %v347
                %v349 = vld [vmem:[%s205 + $0x470] sm:$0xff]
                %350 = vst [vmem:[%s206 + $0x238] sm:$0xff] %v349
                %v351 = vld [vmem:[%s205 + $0x480] sm:$0xff]
                %352 = vst [vmem:[%s206 + $0x240] sm:$0xff] %v351
                %v353 = vld [vmem:[%s205 + $0x490] sm:$0xff]
                %354 = vst [vmem:[%s206 + $0x248] sm:$0xff] %v353
                %v355 = vld [vmem:[%s205 + $0x4a0] sm:$0xff]
                %356 = vst [vmem:[%s206 + $0x250] sm:$0xff] %v355
                %v357 = vld [vmem:[%s205 + $0x4b0] sm:$0xff]
                %358 = vst [vmem:[%s206 + $0x258] sm:$0xff] %v357
                %v359 = vld [vmem:[%s205 + $0x4c0] sm:$0xff]
                %360 = vst [vmem:[%s206 + $0x260] sm:$0xff] %v359
                %v361 = vld [vmem:[%s205 + $0x4d0] sm:$0xff]
                %362 = vst [vmem:[%s206 + $0x268] sm:$0xff] %v361
                %v363 = vld [vmem:[%s205 + $0x4e0] sm:$0xff]
                %364 = vst [vmem:[%s206 + $0x270] sm:$0xff] %v363
                %v365 = vld [vmem:[%s205 + $0x4f0] sm:$0xff]
                %366 = vst [vmem:[%s206 + $0x278] sm:$0xff] %v365
                %v367 = vld [vmem:[%s205 + $0x500] sm:$0xff]
                %368 = vst [vmem:[%s206 + $0x280] sm:$0xff] %v367
                %v369 = vld [vmem:[%s205 + $0x510] sm:$0xff]
                %370 = vst [vmem:[%s206 + $0x288] sm:$0xff] %v369
                %v371 = vld [vmem:[%s205 + $0x520] sm:$0xff]
                %372 = vst [vmem:[%s206 + $0x290] sm:$0xff] %v371
                %v373 = vld [vmem:[%s205 + $0x530] sm:$0xff]
                %374 = vst [vmem:[%s206 + $0x298] sm:$0xff] %v373
                %v375 = vld [vmem:[%s205 + $0x540] sm:$0xff]
                %376 = vst [vmem:[%s206 + $0x2a0] sm:$0xff] %v375
                %v377 = vld [vmem:[%s205 + $0x550] sm:$0xff]
                %378 = vst [vmem:[%s206 + $0x2a8] sm:$0xff] %v377
                %v379 = vld [vmem:[%s205 + $0x560] sm:$0xff]
                %380 = vst [vmem:[%s206 + $0x2b0] sm:$0xff] %v379
                %v381 = vld [vmem:[%s205 + $0x570] sm:$0xff]
                %382 = vst [vmem:[%s206 + $0x2b8] sm:$0xff] %v381
                %v383 = vld [vmem:[%s205 + $0x580] sm:$0xff]
                %384 = vst [vmem:[%s206 + $0x2c0] sm:$0xff] %v383
                %v385 = vld [vmem:[%s205 + $0x590] sm:$0xff]
                %386 = vst [vmem:[%s206 + $0x2c8] sm:$0xff] %v385
                %v387 = vld [vmem:[%s205 + $0x5a0] sm:$0xff]
                %388 = vst [vmem:[%s206 + $0x2d0] sm:$0xff] %v387
                %v389 = vld [vmem:[%s205 + $0x5b0] sm:$0xff]
                %390 = vst [vmem:[%s206 + $0x2d8] sm:$0xff] %v389
                %v391 = vld [vmem:[%s205 + $0x5c0] sm:$0xff]
                %392 = vst [vmem:[%s206 + $0x2e0] sm:$0xff] %v391
                %v393 = vld [vmem:[%s205 + $0x5d0] sm:$0xff]
                %394 = vst [vmem:[%s206 + $0x2e8] sm:$0xff] %v393
                %v395 = vld [vmem:[%s205 + $0x5e0] sm:$0xff]
                %396 = vst [vmem:[%s206 + $0x2f0] sm:$0xff] %v395
                %v397 = vld [vmem:[%s205 + $0x5f0] sm:$0xff]
                %398 = vst [vmem:[%s206 + $0x2f8] sm:$0xff] %v397
                %v399 = vld [vmem:[%s205 + $0x600] sm:$0xff]
                %400 = vst [vmem:[%s206 + $0x300] sm:$0xff] %v399
                %v401 = vld [vmem:[%s205 + $0x610] sm:$0xff]
                %402 = vst [vmem:[%s206 + $0x308] sm:$0xff] %v401
                %v403 = vld [vmem:[%s205 + $0x620] sm:$0xff]
                %404 = vst [vmem:[%s206 + $0x310] sm:$0xff] %v403
                %v405 = vld [vmem:[%s205 + $0x630] sm:$0xff]
                %406 = vst [vmem:[%s206 + $0x318] sm:$0xff] %v405
                %v407 = vld [vmem:[%s205 + $0x640] sm:$0xff]
                %408 = vst [vmem:[%s206 + $0x320] sm:$0xff] %v407
                %v409 = vld [vmem:[%s205 + $0x650] sm:$0xff]
                %410 = vst [vmem:[%s206 + $0x328] sm:$0xff] %v409
                %v411 = vld [vmem:[%s205 + $0x660] sm:$0xff]
                %412 = vst [vmem:[%s206 + $0x330] sm:$0xff] %v411
                %v413 = vld [vmem:[%s205 + $0x670] sm:$0xff]
                %414 = vst [vmem:[%s206 + $0x338] sm:$0xff] %v413
                %v415 = vld [vmem:[%s205 + $0x680] sm:$0xff]
                %416 = vst [vmem:[%s206 + $0x340] sm:$0xff] %v415
                %v417 = vld [vmem:[%s205 + $0x690] sm:$0xff]
                %418 = vst [vmem:[%s206 + $0x348] sm:$0xff] %v417
                %v419 = vld [vmem:[%s205 + $0x6a0] sm:$0xff]
                %420 = vst [vmem:[%s206 + $0x350] sm:$0xff] %v419
                %v421 = vld [vmem:[%s205 + $0x6b0] sm:$0xff]
                %422 = vst [vmem:[%s206 + $0x358] sm:$0xff] %v421
                %v423 = vld [vmem:[%s205 + $0x6c0] sm:$0xff]
                %424 = vst [vmem:[%s206 + $0x360] sm:$0xff] %v423
                %v425 = vld [vmem:[%s205 + $0x6d0] sm:$0xff]
                %426 = vst [vmem:[%s206 + $0x368] sm:$0xff] %v425
                %v427 = vld [vmem:[%s205 + $0x6e0] sm:$0xff]
                %428 = vst [vmem:[%s206 + $0x370] sm:$0xff] %v427
                %v429 = vld [vmem:[%s205 + $0x6f0] sm:$0xff]
                %430 = vst [vmem:[%s206 + $0x378] sm:$0xff] %v429
                %v431 = vld [vmem:[%s205 + $0x700] sm:$0xff]
                %432 = vst [vmem:[%s206 + $0x380] sm:$0xff] %v431
                %v433 = vld [vmem:[%s205 + $0x710] sm:$0xff]
                %434 = vst [vmem:[%s206 + $0x388] sm:$0xff] %v433
                %v435 = vld [vmem:[%s205 + $0x720] sm:$0xff]
                %436 = vst [vmem:[%s206 + $0x390] sm:$0xff] %v435
                %v437 = vld [vmem:[%s205 + $0x730] sm:$0xff]
                %438 = vst [vmem:[%s206 + $0x398] sm:$0xff] %v437
                %v439 = vld [vmem:[%s205 + $0x740] sm:$0xff]
                %440 = vst [vmem:[%s206 + $0x3a0] sm:$0xff] %v439
                %v441 = vld [vmem:[%s205 + $0x750] sm:$0xff]
                %442 = vst [vmem:[%s206 + $0x3a8] sm:$0xff] %v441
                %v443 = vld [vmem:[%s205 + $0x760] sm:$0xff]
                %444 = vst [vmem:[%s206 + $0x3b0] sm:$0xff] %v443
                %v445 = vld [vmem:[%s205 + $0x770] sm:$0xff]
                %446 = vst [vmem:[%s206 + $0x3b8] sm:$0xff] %v445
                %v447 = vld [vmem:[%s205 + $0x780] sm:$0xff]
                %448 = vst [vmem:[%s206 + $0x3c0] sm:$0xff] %v447
                %v449 = vld [vmem:[%s205 + $0x790] sm:$0xff]
                %450 = vst [vmem:[%s206 + $0x3c8] sm:$0xff] %v449
                %v451 = vld [vmem:[%s205 + $0x7a0] sm:$0xff]
                %452 = vst [vmem:[%s206 + $0x3d0] sm:$0xff] %v451
                %v453 = vld [vmem:[%s205 + $0x7b0] sm:$0xff]
                %454 = vst [vmem:[%s206 + $0x3d8] sm:$0xff] %v453
                %v455 = vld [vmem:[%s205 + $0x7c0] sm:$0xff]
                %456 = vst [vmem:[%s206 + $0x3e0] sm:$0xff] %v455
                %v457 = vld [vmem:[%s205 + $0x7d0] sm:$0xff]
                %458 = vst [vmem:[%s206 + $0x3e8] sm:$0xff] %v457
                %v459 = vld [vmem:[%s205 + $0x7e0] sm:$0xff]
                %460 = vst [vmem:[%s206 + $0x3f0] sm:$0xff] %v459
                %v461 = vld [vmem:[%s205 + $0x7f0] sm:$0xff]
                %462 = vst [vmem:[%s206 + $0x3f8] sm:$0xff] %v461
                %v463 = vld [vmem:[%s205 + $0x800] sm:$0xff]
                %464 = vst [vmem:[%s206 + $0x400] sm:$0xff] %v463
                %v465 = vld [vmem:[%s205 + $0x810] sm:$0xff]
                %466 = vst [vmem:[%s206 + $0x408] sm:$0xff] %v465
                %v467 = vld [vmem:[%s205 + $0x820] sm:$0xff]
                %468 = vst [vmem:[%s206 + $0x410] sm:$0xff] %v467
                %v469 = vld [vmem:[%s205 + $0x830] sm:$0xff]
                %470 = vst [vmem:[%s206 + $0x418] sm:$0xff] %v469
                %v471 = vld [vmem:[%s205 + $0x840] sm:$0xff]
                %472 = vst [vmem:[%s206 + $0x420] sm:$0xff] %v471
                %v473 = vld [vmem:[%s205 + $0x850] sm:$0xff]
                %474 = vst [vmem:[%s206 + $0x428] sm:$0xff] %v473
                %v475 = vld [vmem:[%s205 + $0x860] sm:$0xff]
                %476 = vst [vmem:[%s206 + $0x430] sm:$0xff] %v475
                %v477 = vld [vmem:[%s205 + $0x870] sm:$0xff]
                %478 = vst [vmem:[%s206 + $0x438] sm:$0xff] %v477
                %v479 = vld [vmem:[%s205 + $0x880] sm:$0xff]
                %480 = vst [vmem:[%s206 + $0x440] sm:$0xff] %v479
                %v481 = vld [vmem:[%s205 + $0x890] sm:$0xff]
                %482 = vst [vmem:[%s206 + $0x448] sm:$0xff] %v481
                %v483 = vld [vmem:[%s205 + $0x8a0] sm:$0xff]
                %484 = vst [vmem:[%s206 + $0x450] sm:$0xff] %v483
                %v485 = vld [vmem:[%s205 + $0x8b0] sm:$0xff]
                %486 = vst [vmem:[%s206 + $0x458] sm:$0xff] %v485
                %v487 = vld [vmem:[%s205 + $0x8c0] sm:$0xff]
                %488 = vst [vmem:[%s206 + $0x460] sm:$0xff] %v487
                %v489 = vld [vmem:[%s205 + $0x8d0] sm:$0xff]
                %490 = vst [vmem:[%s206 + $0x468] sm:$0xff] %v489
                %v491 = vld [vmem:[%s205 + $0x8e0] sm:$0xff]
                %492 = vst [vmem:[%s206 + $0x470] sm:$0xff] %v491
                %v493 = vld [vmem:[%s205 + $0x8f0] sm:$0xff]
                %494 = vst [vmem:[%s206 + $0x478] sm:$0xff] %v493
                %v495 = vld [vmem:[%s205 + $0x900] sm:$0xff]
                %496 = vst [vmem:[%s206 + $0x480] sm:$0xff] %v495
                %v497 = vld [vmem:[%s205 + $0x910] sm:$0xff]
                %498 = vst [vmem:[%s206 + $0x488] sm:$0xff] %v497
                %v499 = vld [vmem:[%s205 + $0x920] sm:$0xff]
                %500 = vst [vmem:[%s206 + $0x490] sm:$0xff] %v499
                %v501 = vld [vmem:[%s205 + $0x930] sm:$0xff]
                %502 = vst [vmem:[%s206 + $0x498] sm:$0xff] %v501
                %v503 = vld [vmem:[%s205 + $0x940] sm:$0xff]
                %504 = vst [vmem:[%s206 + $0x4a0] sm:$0xff] %v503
                %v505 = vld [vmem:[%s205 + $0x950] sm:$0xff]
                %506 = vst [vmem:[%s206 + $0x4a8] sm:$0xff] %v505
                %v507 = vld [vmem:[%s205 + $0x960] sm:$0xff]
                %508 = vst [vmem:[%s206 + $0x4b0] sm:$0xff] %v507
                %v509 = vld [vmem:[%s205 + $0x970] sm:$0xff]
                %510 = vst [vmem:[%s206 + $0x4b8] sm:$0xff] %v509
                %v511 = vld [vmem:[%s205 + $0x980] sm:$0xff]
                %512 = vst [vmem:[%s206 + $0x4c0] sm:$0xff] %v511
                %v513 = vld [vmem:[%s205 + $0x990] sm:$0xff]
                %514 = vst [vmem:[%s206 + $0x4c8] sm:$0xff] %v513
                %v515 = vld [vmem:[%s205 + $0x9a0] sm:$0xff]
                %516 = vst [vmem:[%s206 + $0x4d0] sm:$0xff] %v515
                %v517 = vld [vmem:[%s205 + $0x9b0] sm:$0xff]
                %518 = vst [vmem:[%s206 + $0x4d8] sm:$0xff] %v517
                %v519 = vld [vmem:[%s205 + $0x9c0] sm:$0xff]
                %520 = vst [vmem:[%s206 + $0x4e0] sm:$0xff] %v519
                %v521 = vld [vmem:[%s205 + $0x9d0] sm:$0xff]
                %522 = vst [vmem:[%s206 + $0x4e8] sm:$0xff] %v521
                %v523 = vld [vmem:[%s205 + $0x9e0] sm:$0xff]
                %524 = vst [vmem:[%s206 + $0x4f0] sm:$0xff] %v523
                %v525 = vld [vmem:[%s205 + $0x9f0] sm:$0xff]
                %526 = vst [vmem:[%s206 + $0x4f8] sm:$0xff] %v525
                %v527 = vld [vmem:[%s205 + $0xa00] sm:$0xff]
                %528 = vst [vmem:[%s206 + $0x500] sm:$0xff] %v527
                %v529 = vld [vmem:[%s205 + $0xa10] sm:$0xff]
                %530 = vst [vmem:[%s206 + $0x508] sm:$0xff] %v529
                %v531 = vld [vmem:[%s205 + $0xa20] sm:$0xff]
                %532 = vst [vmem:[%s206 + $0x510] sm:$0xff] %v531
                %v533 = vld [vmem:[%s205 + $0xa30] sm:$0xff]
                %534 = vst [vmem:[%s206 + $0x518] sm:$0xff] %v533
                %v535 = vld [vmem:[%s205 + $0xa40] sm:$0xff]
                %536 = vst [vmem:[%s206 + $0x520] sm:$0xff] %v535
                %v537 = vld [vmem:[%s205 + $0xa50] sm:$0xff]
                %538 = vst [vmem:[%s206 + $0x528] sm:$0xff] %v537
                %v539 = vld [vmem:[%s205 + $0xa60] sm:$0xff]
                %540 = vst [vmem:[%s206 + $0x530] sm:$0xff] %v539
                %v541 = vld [vmem:[%s205 + $0xa70] sm:$0xff]
                %542 = vst [vmem:[%s206 + $0x538] sm:$0xff] %v541
                %v543 = vld [vmem:[%s205 + $0xa80] sm:$0xff]
                %544 = vst [vmem:[%s206 + $0x540] sm:$0xff] %v543
                %v545 = vld [vmem:[%s205 + $0xa90] sm:$0xff]
                %546 = vst [vmem:[%s206 + $0x548] sm:$0xff] %v545
                %v547 = vld [vmem:[%s205 + $0xaa0] sm:$0xff]
                %548 = vst [vmem:[%s206 + $0x550] sm:$0xff] %v547
                %v549 = vld [vmem:[%s205 + $0xab0] sm:$0xff]
                %550 = vst [vmem:[%s206 + $0x558] sm:$0xff] %v549
                %v551 = vld [vmem:[%s205 + $0xac0] sm:$0xff]
                %552 = vst [vmem:[%s206 + $0x560] sm:$0xff] %v551
                %v553 = vld [vmem:[%s205 + $0xad0] sm:$0xff]
                %554 = vst [vmem:[%s206 + $0x568] sm:$0xff] %v553
                %v555 = vld [vmem:[%s205 + $0xae0] sm:$0xff]
                %556 = vst [vmem:[%s206 + $0x570] sm:$0xff] %v555
                %v557 = vld [vmem:[%s205 + $0xaf0] sm:$0xff]
                %558 = vst [vmem:[%s206 + $0x578] sm:$0xff] %v557
                %v559 = vld [vmem:[%s205 + $0xb00] sm:$0xff]
                %560 = vst [vmem:[%s206 + $0x580] sm:$0xff] %v559
                %v561 = vld [vmem:[%s205 + $0xb10] sm:$0xff]
                %562 = vst [vmem:[%s206 + $0x588] sm:$0xff] %v561
                %v563 = vld [vmem:[%s205 + $0xb20] sm:$0xff]
                %564 = vst [vmem:[%s206 + $0x590] sm:$0xff] %v563
                %v565 = vld [vmem:[%s205 + $0xb30] sm:$0xff]
                %566 = vst [vmem:[%s206 + $0x598] sm:$0xff] %v565
                %v567 = vld [vmem:[%s205 + $0xb40] sm:$0xff]
                %568 = vst [vmem:[%s206 + $0x5a0] sm:$0xff] %v567
                %v569 = vld [vmem:[%s205 + $0xb50] sm:$0xff]
                %570 = vst [vmem:[%s206 + $0x5a8] sm:$0xff] %v569
                %v571 = vld [vmem:[%s205 + $0xb60] sm:$0xff]
                %572 = vst [vmem:[%s206 + $0x5b0] sm:$0xff] %v571
                %v573 = vld [vmem:[%s205 + $0xb70] sm:$0xff]
                %574 = vst [vmem:[%s206 + $0x5b8] sm:$0xff] %v573
                %v575 = vld [vmem:[%s205 + $0xb80] sm:$0xff]
                %576 = vst [vmem:[%s206 + $0x5c0] sm:$0xff] %v575
                %v577 = vld [vmem:[%s205 + $0xb90] sm:$0xff]
                %578 = vst [vmem:[%s206 + $0x5c8] sm:$0xff] %v577
                %v579 = vld [vmem:[%s205 + $0xba0] sm:$0xff]
                %580 = vst [vmem:[%s206 + $0x5d0] sm:$0xff] %v579
                %v581 = vld [vmem:[%s205 + $0xbb0] sm:$0xff]
                %582 = vst [vmem:[%s206 + $0x5d8] sm:$0xff] %v581
                %v583 = vld [vmem:[%s205 + $0xbc0] sm:$0xff]
                %584 = vst [vmem:[%s206 + $0x5e0] sm:$0xff] %v583
                %v585 = vld [vmem:[%s205 + $0xbd0] sm:$0xff]
                %586 = vst [vmem:[%s206 + $0x5e8] sm:$0xff] %v585
                %v587 = vld [vmem:[%s205 + $0xbe0] sm:$0xff]
                %588 = vst [vmem:[%s206 + $0x5f0] sm:$0xff] %v587
                %v589 = vld [vmem:[%s205 + $0xbf0] sm:$0xff]
                %590 = vst [vmem:[%s206 + $0x5f8] sm:$0xff] %v589
                %v591 = vld [vmem:[%s205 + $0xc00] sm:$0xff]
                %592 = vst [vmem:[%s206 + $0x600] sm:$0xff] %v591
                %v593 = vld [vmem:[%s205 + $0xc10] sm:$0xff]
                %594 = vst [vmem:[%s206 + $0x608] sm:$0xff] %v593
                %v595 = vld [vmem:[%s205 + $0xc20] sm:$0xff]
                %596 = vst [vmem:[%s206 + $0x610] sm:$0xff] %v595
                %v597 = vld [vmem:[%s205 + $0xc30] sm:$0xff]
                %598 = vst [vmem:[%s206 + $0x618] sm:$0xff] %v597
                %v599 = vld [vmem:[%s205 + $0xc40] sm:$0xff]
                %600 = vst [vmem:[%s206 + $0x620] sm:$0xff] %v599
                %v601 = vld [vmem:[%s205 + $0xc50] sm:$0xff]
                %602 = vst [vmem:[%s206 + $0x628] sm:$0xff] %v601
                %v603 = vld [vmem:[%s205 + $0xc60] sm:$0xff]
                %604 = vst [vmem:[%s206 + $0x630] sm:$0xff] %v603
                %v605 = vld [vmem:[%s205 + $0xc70] sm:$0xff]
                %606 = vst [vmem:[%s206 + $0x638] sm:$0xff] %v605
                %v607 = vld [vmem:[%s205 + $0xc80] sm:$0xff]
                %608 = vst [vmem:[%s206 + $0x640] sm:$0xff] %v607
                %v609 = vld [vmem:[%s205 + $0xc90] sm:$0xff]
                %610 = vst [vmem:[%s206 + $0x648] sm:$0xff] %v609
                %v611 = vld [vmem:[%s205 + $0xca0] sm:$0xff]
                %612 = vst [vmem:[%s206 + $0x650] sm:$0xff] %v611
                %v613 = vld [vmem:[%s205 + $0xcb0] sm:$0xff]
                %614 = vst [vmem:[%s206 + $0x658] sm:$0xff] %v613
                %v615 = vld [vmem:[%s205 + $0xcc0] sm:$0xff]
                %616 = vst [vmem:[%s206 + $0x660] sm:$0xff] %v615
                %v617 = vld [vmem:[%s205 + $0xcd0] sm:$0xff]
                %618 = vst [vmem:[%s206 + $0x668] sm:$0xff] %v617
                %v619 = vld [vmem:[%s205 + $0xce0] sm:$0xff]
                %620 = vst [vmem:[%s206 + $0x670] sm:$0xff] %v619
                %v621 = vld [vmem:[%s205 + $0xcf0] sm:$0xff]
                %622 = vst [vmem:[%s206 + $0x678] sm:$0xff] %v621
                %v623 = vld [vmem:[%s205 + $0xd00] sm:$0xff]
                %624 = vst [vmem:[%s206 + $0x680] sm:$0xff] %v623
                %v625 = vld [vmem:[%s205 + $0xd10] sm:$0xff]
                %626 = vst [vmem:[%s206 + $0x688] sm:$0xff] %v625
                %v627 = vld [vmem:[%s205 + $0xd20] sm:$0xff]
                %628 = vst [vmem:[%s206 + $0x690] sm:$0xff] %v627
                %v629 = vld [vmem:[%s205 + $0xd30] sm:$0xff]
                %630 = vst [vmem:[%s206 + $0x698] sm:$0xff] %v629
                %v631 = vld [vmem:[%s205 + $0xd40] sm:$0xff]
                %632 = vst [vmem:[%s206 + $0x6a0] sm:$0xff] %v631
                %v633 = vld [vmem:[%s205 + $0xd50] sm:$0xff]
                %634 = vst [vmem:[%s206 + $0x6a8] sm:$0xff] %v633
                %v635 = vld [vmem:[%s205 + $0xd60] sm:$0xff]
                %636 = vst [vmem:[%s206 + $0x6b0] sm:$0xff] %v635
                %v637 = vld [vmem:[%s205 + $0xd70] sm:$0xff]
                %638 = vst [vmem:[%s206 + $0x6b8] sm:$0xff] %v637
                %v639 = vld [vmem:[%s205 + $0xd80] sm:$0xff]
                %640 = vst [vmem:[%s206 + $0x6c0] sm:$0xff] %v639
                %v641 = vld [vmem:[%s205 + $0xd90] sm:$0xff]
                %642 = vst [vmem:[%s206 + $0x6c8] sm:$0xff] %v641
                %v643 = vld [vmem:[%s205 + $0xda0] sm:$0xff]
                %644 = vst [vmem:[%s206 + $0x6d0] sm:$0xff] %v643
                %v645 = vld [vmem:[%s205 + $0xdb0] sm:$0xff]
                %646 = vst [vmem:[%s206 + $0x6d8] sm:$0xff] %v645
                %v647 = vld [vmem:[%s205 + $0xdc0] sm:$0xff]
                %648 = vst [vmem:[%s206 + $0x6e0] sm:$0xff] %v647
                %v649 = vld [vmem:[%s205 + $0xdd0] sm:$0xff]
                %650 = vst [vmem:[%s206 + $0x6e8] sm:$0xff] %v649
                %v651 = vld [vmem:[%s205 + $0xde0] sm:$0xff]
                %652 = vst [vmem:[%s206 + $0x6f0] sm:$0xff] %v651
                %v653 = vld [vmem:[%s205 + $0xdf0] sm:$0xff]
                %654 = vst [vmem:[%s206 + $0x6f8] sm:$0xff] %v653
                %v655 = vld [vmem:[%s205 + $0xe00] sm:$0xff]
                %656 = vst [vmem:[%s206 + $0x700] sm:$0xff] %v655
                %v657 = vld [vmem:[%s205 + $0xe10] sm:$0xff]
                %658 = vst [vmem:[%s206 + $0x708] sm:$0xff] %v657
                %v659 = vld [vmem:[%s205 + $0xe20] sm:$0xff]
                %660 = vst [vmem:[%s206 + $0x710] sm:$0xff] %v659
                %v661 = vld [vmem:[%s205 + $0xe30] sm:$0xff]
                %662 = vst [vmem:[%s206 + $0x718] sm:$0xff] %v661
                %v663 = vld [vmem:[%s205 + $0xe40] sm:$0xff]
                %664 = vst [vmem:[%s206 + $0x720] sm:$0xff] %v663
                %v665 = vld [vmem:[%s205 + $0xe50] sm:$0xff]
                %666 = vst [vmem:[%s206 + $0x728] sm:$0xff] %v665
                %v667 = vld [vmem:[%s205 + $0xe60] sm:$0xff]
                %668 = vst [vmem:[%s206 + $0x730] sm:$0xff] %v667
                %v669 = vld [vmem:[%s205 + $0xe70] sm:$0xff]
                %670 = vst [vmem:[%s206 + $0x738] sm:$0xff] %v669
                %v671 = vld [vmem:[%s205 + $0xe80] sm:$0xff]
                %672 = vst [vmem:[%s206 + $0x740] sm:$0xff] %v671
                %v673 = vld [vmem:[%s205 + $0xe90] sm:$0xff]
                %674 = vst [vmem:[%s206 + $0x748] sm:$0xff] %v673
                %v675 = vld [vmem:[%s205 + $0xea0] sm:$0xff]
                %676 = vst [vmem:[%s206 + $0x750] sm:$0xff] %v675
                %v677 = vld [vmem:[%s205 + $0xeb0] sm:$0xff]
                %678 = vst [vmem:[%s206 + $0x758] sm:$0xff] %v677
                %v679 = vld [vmem:[%s205 + $0xec0] sm:$0xff]
                %680 = vst [vmem:[%s206 + $0x760] sm:$0xff] %v679
                %v681 = vld [vmem:[%s205 + $0xed0] sm:$0xff]
                %682 = vst [vmem:[%s206 + $0x768] sm:$0xff] %v681
                %v683 = vld [vmem:[%s205 + $0xee0] sm:$0xff]
                %684 = vst [vmem:[%s206 + $0x770] sm:$0xff] %v683
                %v685 = vld [vmem:[%s205 + $0xef0] sm:$0xff]
                %686 = vst [vmem:[%s206 + $0x778] sm:$0xff] %v685
                %v687 = vld [vmem:[%s205 + $0xf00] sm:$0xff]
                %688 = vst [vmem:[%s206 + $0x780] sm:$0xff] %v687
                %v689 = vld [vmem:[%s205 + $0xf10] sm:$0xff]
                %690 = vst [vmem:[%s206 + $0x788] sm:$0xff] %v689
                %v691 = vld [vmem:[%s205 + $0xf20] sm:$0xff]
                %692 = vst [vmem:[%s206 + $0x790] sm:$0xff] %v691
                %v693 = vld [vmem:[%s205 + $0xf30] sm:$0xff]
                %694 = vst [vmem:[%s206 + $0x798] sm:$0xff] %v693
                %v695 = vld [vmem:[%s205 + $0xf40] sm:$0xff]
                %696 = vst [vmem:[%s206 + $0x7a0] sm:$0xff] %v695
                %v697 = vld [vmem:[%s205 + $0xf50] sm:$0xff]
                %698 = vst [vmem:[%s206 + $0x7a8] sm:$0xff] %v697
                %v699 = vld [vmem:[%s205 + $0xf60] sm:$0xff]
                %700 = vst [vmem:[%s206 + $0x7b0] sm:$0xff] %v699
                %v701 = vld [vmem:[%s205 + $0xf70] sm:$0xff]
                %702 = vst [vmem:[%s206 + $0x7b8] sm:$0xff] %v701
                %v703 = vld [vmem:[%s205 + $0xf80] sm:$0xff]
                %704 = vst [vmem:[%s206 + $0x7c0] sm:$0xff] %v703
                %v705 = vld [vmem:[%s205 + $0xf90] sm:$0xff]
                %706 = vst [vmem:[%s206 + $0x7c8] sm:$0xff] %v705
                %v707 = vld [vmem:[%s205 + $0xfa0] sm:$0xff]
                %708 = vst [vmem:[%s206 + $0x7d0] sm:$0xff] %v707
                %v709 = vld [vmem:[%s205 + $0xfb0] sm:$0xff]
                %710 = vst [vmem:[%s206 + $0x7d8] sm:$0xff] %v709
                %v711 = vld [vmem:[%s205 + $0xfc0] sm:$0xff]
                %712 = vst [vmem:[%s206 + $0x7e0] sm:$0xff] %v711
                %v713 = vld [vmem:[%s205 + $0xfd0] sm:$0xff]
                %714 = vst [vmem:[%s206 + $0x7e8] sm:$0xff] %v713
                %v715 = vld [vmem:[%s205 + $0xfe0] sm:$0xff]
                %716 = vst [vmem:[%s206 + $0x7f0] sm:$0xff] %v715
                %v717 = vld [vmem:[%s205 + $0xff0] sm:$0xff]
                %718 = vst [vmem:[%s206 + $0x7f8] sm:$0xff] %v717
                %v719 = vld [vmem:[%s205 + $0x1000] sm:$0xff]
                %720 = vst [vmem:[%s206 + $0x800] sm:$0xff] %v719
                %v721 = vld [vmem:[%s205 + $0x1010] sm:$0xff]
                %722 = vst [vmem:[%s206 + $0x808] sm:$0xff] %v721
                %v723 = vld [vmem:[%s205 + $0x1020] sm:$0xff]
                %724 = vst [vmem:[%s206 + $0x810] sm:$0xff] %v723
                %v725 = vld [vmem:[%s205 + $0x1030] sm:$0xff]
                %726 = vst [vmem:[%s206 + $0x818] sm:$0xff] %v725
                %v727 = vld [vmem:[%s205 + $0x1040] sm:$0xff]
                %728 = vst [vmem:[%s206 + $0x820] sm:$0xff] %v727
                %v729 = vld [vmem:[%s205 + $0x1050] sm:$0xff]
                %730 = vst [vmem:[%s206 + $0x828] sm:$0xff] %v729
                %v731 = vld [vmem:[%s205 + $0x1060] sm:$0xff]
                %732 = vst [vmem:[%s206 + $0x830] sm:$0xff] %v731
                %v733 = vld [vmem:[%s205 + $0x1070] sm:$0xff]
                %734 = vst [vmem:[%s206 + $0x838] sm:$0xff] %v733
                %v735 = vld [vmem:[%s205 + $0x1080] sm:$0xff]
                %736 = vst [vmem:[%s206 + $0x840] sm:$0xff] %v735
                %v737 = vld [vmem:[%s205 + $0x1090] sm:$0xff]
                %738 = vst [vmem:[%s206 + $0x848] sm:$0xff] %v737
                %v739 = vld [vmem:[%s205 + $0x10a0] sm:$0xff]
                %740 = vst [vmem:[%s206 + $0x850] sm:$0xff] %v739
                %v741 = vld [vmem:[%s205 + $0x10b0] sm:$0xff]
                %742 = vst [vmem:[%s206 + $0x858] sm:$0xff] %v741
                %v743 = vld [vmem:[%s205 + $0x10c0] sm:$0xff]
                %744 = vst [vmem:[%s206 + $0x860] sm:$0xff] %v743
                %v745 = vld [vmem:[%s205 + $0x10d0] sm:$0xff]
                %746 = vst [vmem:[%s206 + $0x868] sm:$0xff] %v745
                %v747 = vld [vmem:[%s205 + $0x10e0] sm:$0xff]
                %748 = vst [vmem:[%s206 + $0x870] sm:$0xff] %v747
                %v749 = vld [vmem:[%s205 + $0x10f0] sm:$0xff]
                %750 = vst [vmem:[%s206 + $0x878] sm:$0xff] %v749
                %v751 = vld [vmem:[%s205 + $0x1100] sm:$0xff]
                %752 = vst [vmem:[%s206 + $0x880] sm:$0xff] %v751
                %v753 = vld [vmem:[%s205 + $0x1110] sm:$0xff]
                %754 = vst [vmem:[%s206 + $0x888] sm:$0xff] %v753
                %v755 = vld [vmem:[%s205 + $0x1120] sm:$0xff]
                %756 = vst [vmem:[%s206 + $0x890] sm:$0xff] %v755
                %v757 = vld [vmem:[%s205 + $0x1130] sm:$0xff]
                %758 = vst [vmem:[%s206 + $0x898] sm:$0xff] %v757
                %v759 = vld [vmem:[%s205 + $0x1140] sm:$0xff]
                %760 = vst [vmem:[%s206 + $0x8a0] sm:$0xff] %v759
                %v761 = vld [vmem:[%s205 + $0x1150] sm:$0xff]
                %762 = vst [vmem:[%s206 + $0x8a8] sm:$0xff] %v761
                %v763 = vld [vmem:[%s205 + $0x1160] sm:$0xff]
                %764 = vst [vmem:[%s206 + $0x8b0] sm:$0xff] %v763
                %v765 = vld [vmem:[%s205 + $0x1170] sm:$0xff]
                %766 = vst [vmem:[%s206 + $0x8b8] sm:$0xff] %v765
                %v767 = vld [vmem:[%s205 + $0x1180] sm:$0xff]
                %768 = vst [vmem:[%s206 + $0x8c0] sm:$0xff] %v767
                %v769 = vld [vmem:[%s205 + $0x1190] sm:$0xff]
                %770 = vst [vmem:[%s206 + $0x8c8] sm:$0xff] %v769
                %v771 = vld [vmem:[%s205 + $0x11a0] sm:$0xff]
                %772 = vst [vmem:[%s206 + $0x8d0] sm:$0xff] %v771
                %v773 = vld [vmem:[%s205 + $0x11b0] sm:$0xff]
                %774 = vst [vmem:[%s206 + $0x8d8] sm:$0xff] %v773
                %v775 = vld [vmem:[%s205 + $0x11c0] sm:$0xff]
                %776 = vst [vmem:[%s206 + $0x8e0] sm:$0xff] %v775
                %v777 = vld [vmem:[%s205 + $0x11d0] sm:$0xff]
                %778 = vst [vmem:[%s206 + $0x8e8] sm:$0xff] %v777
                %v779 = vld [vmem:[%s205 + $0x11e0] sm:$0xff]
                %780 = vst [vmem:[%s206 + $0x8f0] sm:$0xff] %v779
                %v781 = vld [vmem:[%s205 + $0x11f0] sm:$0xff]
                %782 = vst [vmem:[%s206 + $0x8f8] sm:$0xff] %v781
                %v783 = vld [vmem:[%s205 + $0x1200] sm:$0xff]
                %784 = vst [vmem:[%s206 + $0x900] sm:$0xff] %v783
                %v785 = vld [vmem:[%s205 + $0x1210] sm:$0xff]
                %786 = vst [vmem:[%s206 + $0x908] sm:$0xff] %v785
                %v787 = vld [vmem:[%s205 + $0x1220] sm:$0xff]
                %788 = vst [vmem:[%s206 + $0x910] sm:$0xff] %v787
                %v789 = vld [vmem:[%s205 + $0x1230] sm:$0xff]
                %790 = vst [vmem:[%s206 + $0x918] sm:$0xff] %v789
                %v791 = vld [vmem:[%s205 + $0x1240] sm:$0xff]
                %792 = vst [vmem:[%s206 + $0x920] sm:$0xff] %v791
                %v793 = vld [vmem:[%s205 + $0x1250] sm:$0xff]
                %794 = vst [vmem:[%s206 + $0x928] sm:$0xff] %v793
                %v795 = vld [vmem:[%s205 + $0x1260] sm:$0xff]
                %796 = vst [vmem:[%s206 + $0x930] sm:$0xff] %v795
                %v797 = vld [vmem:[%s205 + $0x1270] sm:$0xff]
                %798 = vst [vmem:[%s206 + $0x938] sm:$0xff] %v797
                %v799 = vld [vmem:[%s205 + $0x1280] sm:$0xff]
                %800 = vst [vmem:[%s206 + $0x940] sm:$0xff] %v799
                %v801 = vld [vmem:[%s205 + $0x1290] sm:$0xff]
                %802 = vst [vmem:[%s206 + $0x948] sm:$0xff] %v801
                %v803 = vld [vmem:[%s205 + $0x12a0] sm:$0xff]
                %804 = vst [vmem:[%s206 + $0x950] sm:$0xff] %v803
                %v805 = vld [vmem:[%s205 + $0x12b0] sm:$0xff]
                %806 = vst [vmem:[%s206 + $0x958] sm:$0xff] %v805
                %v807 = vld [vmem:[%s205 + $0x12c0] sm:$0xff]
                %808 = vst [vmem:[%s206 + $0x960] sm:$0xff] %v807
                %v809 = vld [vmem:[%s205 + $0x12d0] sm:$0xff]
                %810 = vst [vmem:[%s206 + $0x968] sm:$0xff] %v809
                %v811 = vld [vmem:[%s205 + $0x12e0] sm:$0xff]
                %812 = vst [vmem:[%s206 + $0x970] sm:$0xff] %v811
                %v813 = vld [vmem:[%s205 + $0x12f0] sm:$0xff]
                %814 = vst [vmem:[%s206 + $0x978] sm:$0xff] %v813
                %v815 = vld [vmem:[%s205 + $0x1300] sm:$0xff]
                %816 = vst [vmem:[%s206 + $0x980] sm:$0xff] %v815
                %v817 = vld [vmem:[%s205 + $0x1310] sm:$0xff]
                %818 = vst [vmem:[%s206 + $0x988] sm:$0xff] %v817
                %v819 = vld [vmem:[%s205 + $0x1320] sm:$0xff]
                %820 = vst [vmem:[%s206 + $0x990] sm:$0xff] %v819
                %v821 = vld [vmem:[%s205 + $0x1330] sm:$0xff]
                %822 = vst [vmem:[%s206 + $0x998] sm:$0xff] %v821
                %v823 = vld [vmem:[%s205 + $0x1340] sm:$0xff]
                %824 = vst [vmem:[%s206 + $0x9a0] sm:$0xff] %v823
                %v825 = vld [vmem:[%s205 + $0x1350] sm:$0xff]
                %826 = vst [vmem:[%s206 + $0x9a8] sm:$0xff] %v825
                %v827 = vld [vmem:[%s205 + $0x1360] sm:$0xff]
                %828 = vst [vmem:[%s206 + $0x9b0] sm:$0xff] %v827
                %v829 = vld [vmem:[%s205 + $0x1370] sm:$0xff]
                %830 = vst [vmem:[%s206 + $0x9b8] sm:$0xff] %v829
                %v831 = vld [vmem:[%s205 + $0x1380] sm:$0xff]
                %832 = vst [vmem:[%s206 + $0x9c0] sm:$0xff] %v831
                %v833 = vld [vmem:[%s205 + $0x1390] sm:$0xff]
                %834 = vst [vmem:[%s206 + $0x9c8] sm:$0xff] %v833
                %v835 = vld [vmem:[%s205 + $0x13a0] sm:$0xff]
                %836 = vst [vmem:[%s206 + $0x9d0] sm:$0xff] %v835
                %v837 = vld [vmem:[%s205 + $0x13b0] sm:$0xff]
                %838 = vst [vmem:[%s206 + $0x9d8] sm:$0xff] %v837
                %v839 = vld [vmem:[%s205 + $0x13c0] sm:$0xff]
                %840 = vst [vmem:[%s206 + $0x9e0] sm:$0xff] %v839
                %v841 = vld [vmem:[%s205 + $0x13d0] sm:$0xff]
                %842 = vst [vmem:[%s206 + $0x9e8] sm:$0xff] %v841
                %v843 = vld [vmem:[%s205 + $0x13e0] sm:$0xff]
                %844 = vst [vmem:[%s206 + $0x9f0] sm:$0xff] %v843
                %v845 = vld [vmem:[%s205 + $0x13f0] sm:$0xff]
                %846 = vst [vmem:[%s206 + $0x9f8] sm:$0xff] %v845
              $region45: #{_lambda_.6} parent=39 // loop_footer
                %s204 = sadd.s32 1, %s200
              $region46: #{_lambda_.6} parent=39 // loop_footer_branch
                %199 = sbr.rel target = $region42
              $region47: #{_lambda_.6} parent=39 // loop_exit
                _
            $region40: #{_lambda_.6} parent=31 // pred_fallthru
              _
          $region32: #{_lambda_.6} parent=27 // pred_fallthru
            _
          %1499 = vnop
        $region28: #{_lambda_.6} parent=23 // pred_fallthru
          _
        // Predicated region
        $region63: #{_lambda_.6} parent=23 // pred_check
          %p1500 = pneg %p78
        $region64: #{_lambda_.6} parent=23 // pred_check_branch
          %1502 = sbr.rel (%p1500) target = $region66
        $region65: #{_lambda_.6} parent=23 // pred_region
          %s1503 = smul.u32 2, %s11
          %p1504 = scmp.lt.s32.totalorder %s1503, 3
          %s1505 = scalar_select %p1504, %s1503, 3
          %s1506 = scalar_lea.vmem %s2, %s1505
          %s1507 = smul.u32 2, %s11
        $region66: #{_lambda_.6} parent=23 // pred_fallthru
          _
        // Predicated region
        $region67: #{_lambda_.6} parent=23 // pred_check
          %p1508 = pneg %p104
        $region68: #{_lambda_.6} parent=23 // pred_check_branch
          %1510 = sbr.rel (%p1508) target = $region70
        $region69: #{_lambda_.6} parent=23 // pred_region
          %s1511 = smul.u32 2, %s11
          %p1512 = scmp.lt.s32.totalorder %s1511, 3
          %s1513 = scalar_select %p1512, %s1511, 3
          %s1514 = scalar_lea.vmem %s3, %s1513
          %s1515 = smul.u32 2, %s11
        $region70: #{_lambda_.6} parent=23 // pred_fallthru
          _
      $region24: #{_lambda_.6} parent=5 // pred_fallthru
        _
      %p1516 = scmp.le.s32.totalorder 1, %s11
      %p1517 = scmp.lt.s32.totalorder %s11, 3
      %p1518 = pnand %p1516, %p1517
      %p1519 = pneg %p1518
      // Predicated region
      $region71: #{_lambda_.6} parent=5 // pred_check
        _
      $region72: #{_lambda_.6} parent=5 // pred_check_branch
        %1521 = sbr.rel (%p1518) target = $region74
      $region73: #{_lambda_.6} parent=5 // pred_region
        %s1522 = ssub.s32 %s11, 1
        %s1523 = sand.u32 %s45, 1
        %s1524 = sand.u32 %s45, 1
        %s1525 = smul.addr %s1524, 2560
        %s1526 = scalar_lea.vmem [#allocation2], %s1525
        // Predicated region
        $region75: #{_lambda_.6} parent=73 // pred_check
          %p1527 = pneg %p58
        $region76: #{_lambda_.6} parent=73 // pred_check_branch
          %1529 = sbr.rel (%p1527) target = $region78
        $region77: #{_lambda_.6} parent=73 // pred_region
          _
        $region78: #{_lambda_.6} parent=73 // pred_fallthru
          _
        %p1530 = pneg %p32
        %p1531 = pneg %p29
        %s1532 = sand.u32 %s45, 1
        %s1533 = sand.u32 %s45, 1
        %s1534 = smul.addr %s1533, 2560
        %s1535 = scalar_lea.vmem [#allocation2], %s1534
        %p1536 = pneg %p58
        %p1537 = pneg %p55
        %s1538 = smul.u32 2, %s16
        %p1539 = scmp.lt.s32.totalorder %s1538, 3
        %s1540 = scalar_select %p1539, %s1538, 3
        %s1541 = scalar_lea.vmem %s2, %s1540
        %p1542 = pneg %p84
        %p1543 = pneg %p81
        %s1544 = smul.u32 2, %s16
        %p1545 = scmp.lt.s32.totalorder %s1544, 3
        %s1546 = scalar_select %p1545, %s1544, 3
        %s1547 = scalar_lea.vmem %s3, %s1546
        %p1548 = pneg %p110
        %p1549 = pneg %p107
        %p1550 = pneg %p131
        %p1551 = pneg %p128
        %p1552 = pneg %p157
        %p1553 = pneg %p154
        %s1554 = sand.u32 %s144, 1
        %s1555 = sand.u32 %s144, 1
        %s1556 = smul.addr %s1555, 48
        %s1557 = scalar_lea.vmem [#allocation3], %s1556
        %s1558 = smul.u32 2, %s16
        %s1559 = smul.u32 2, %s16
        %p1560 = scmp.lt.s32.totalorder %s1559, 3
        %s1561 = scalar_select %p1560, %s1559, 3
        %s1562 = scalar_lea.vmem %s2, %s1561
        %s1563 = smul.u32 2, %s16
        %s1564 = smul.u32 2, %s16
        %p1565 = scmp.lt.s32.totalorder %s1564, 3
        %s1566 = scalar_select %p1565, %s1564, 3
        %s1567 = scalar_lea.vmem %s3, %s1566
        %s1568 = smul.u32 2, %s16
        %s1569 = smul.u32 2, %s16
        %v1571 = vld [vmem:[%s0] sm:$0xff]
        %v1572 = vld [vmem:[%s0 + $0x8] sm:$0xff]
        %v1573 = vld [vmem:[%s0 + $0x10] sm:$0xff]
        %v1574 = vld [vmem:[%s0 + $0x18] sm:$0xff]
        %v1575 = vld [vmem:[%s0 + $0x20] sm:$0xff]
        %v1576 = vld [vmem:[%s0 + $0x28] sm:$0xff]
        %v1577 = vld [vmem:[%s0 + $0x30] sm:$0xff]
        %v1578 = vld [vmem:[%s0 + $0x38] sm:$0xff]
        %v1579 = vld [vmem:[%s0 + $0x40] sm:$0xff]
        %v1580 = vld [vmem:[%s0 + $0x48] sm:$0xff]
        %v1581 = vld [vmem:[%s1526] sm:$0xff]
        %v1582 = vld [vmem:[%s1526 + $0x8] sm:$0xff]
        %v1583 = vld [vmem:[%s1526 + $0x10] sm:$0xff]
        %v1584 = vld [vmem:[%s1526 + $0x18] sm:$0xff]
        %v1585 = vld [vmem:[%s1526 + $0x20] sm:$0xff]
        %v1586 = vld [vmem:[%s1526 + $0x28] sm:$0xff]
        %v1587 = vld [vmem:[%s1526 + $0x30] sm:$0xff]
        %v1588 = vld [vmem:[%s1526 + $0x38] sm:$0xff]
        %v1589 = vld [vmem:[%s1526 + $0x40] sm:$0xff]
        %v1590 = vld [vmem:[%s1526 + $0x48] sm:$0xff]
        %v1591 = vld [vmem:[%s1526 + $0x50] sm:$0xff]
        %v1592 = vld [vmem:[%s1526 + $0x58] sm:$0xff]
        %v1593 = vld [vmem:[%s1526 + $0x60] sm:$0xff]
        %v1594 = vld [vmem:[%s1526 + $0x68] sm:$0xff]
        %v1595 = vld [vmem:[%s1526 + $0x70] sm:$0xff]
        %v1596 = vld [vmem:[%s1526 + $0x78] sm:$0xff]
        %v1597 = vld [vmem:[%s1526 + $0x80] sm:$0xff]
        %v1598 = vld [vmem:[%s1526 + $0x88] sm:$0xff]
        %v1599 = vld [vmem:[%s1526 + $0x90] sm:$0xff]
        %v1600 = vld [vmem:[%s1526 + $0x98] sm:$0xff]
        %v1601 = vld [vmem:[%s1526 + $0xa0] sm:$0xff]
        %v1602 = vld [vmem:[%s1526 + $0xa8] sm:$0xff]
        %v1603 = vld [vmem:[%s1526 + $0xb0] sm:$0xff]
        %v1604 = vld [vmem:[%s1526 + $0xb8] sm:$0xff]
        %v1605 = vld [vmem:[%s1526 + $0xc0] sm:$0xff]
        %v1606 = vld [vmem:[%s1526 + $0xc8] sm:$0xff]
        %v1607 = vld [vmem:[%s1526 + $0xd0] sm:$0xff]
        %v1608 = vld [vmem:[%s1526 + $0xd8] sm:$0xff]
        %v1609 = vld [vmem:[%s1526 + $0xe0] sm:$0xff]
        %v1610 = vld [vmem:[%s1526 + $0xe8] sm:$0xff]
        %v1611 = vld [vmem:[%s1526 + $0xf0] sm:$0xff]
        %v1612 = vld [vmem:[%s1526 + $0xf8] sm:$0xff]
        %v1613 = vld [vmem:[%s1526 + $0x100] sm:$0xff]
        %v1614 = vld [vmem:[%s1526 + $0x108] sm:$0xff]
        %v1615 = vld [vmem:[%s1526 + $0x110] sm:$0xff]
        %v1616 = vld [vmem:[%s1526 + $0x118] sm:$0xff]
        %v1617 = vld [vmem:[%s1526 + $0x120] sm:$0xff]
        %v1618 = vld [vmem:[%s1526 + $0x128] sm:$0xff]
        %v1619 = vld [vmem:[%s1526 + $0x130] sm:$0xff]
        %v1620 = vld [vmem:[%s1526 + $0x138] sm:$0xff]
        %v1621 = vld [vmem:[%s1526 + $0x140] sm:$0xff]
        %v1622 = vld [vmem:[%s1526 + $0x148] sm:$0xff]
        %v1623 = vld [vmem:[%s1526 + $0x150] sm:$0xff]
        %v1624 = vld [vmem:[%s1526 + $0x158] sm:$0xff]
        %v1625 = vld [vmem:[%s1526 + $0x160] sm:$0xff]
        %v1626 = vld [vmem:[%s1526 + $0x168] sm:$0xff]
        %v1627 = vld [vmem:[%s1526 + $0x170] sm:$0xff]
        %v1628 = vld [vmem:[%s1526 + $0x178] sm:$0xff]
        %v1629 = vld [vmem:[%s1526 + $0x180] sm:$0xff]
        %v1630 = vld [vmem:[%s1526 + $0x188] sm:$0xff]
        %v1631 = vld [vmem:[%s1526 + $0x190] sm:$0xff]
        %v1632 = vld [vmem:[%s1526 + $0x198] sm:$0xff]
        %v1633 = vld [vmem:[%s1526 + $0x1a0] sm:$0xff]
        %v1634 = vld [vmem:[%s1526 + $0x1a8] sm:$0xff]
        %v1635 = vld [vmem:[%s1526 + $0x1b0] sm:$0xff]
        %v1636 = vld [vmem:[%s1526 + $0x1b8] sm:$0xff]
        %v1637 = vld [vmem:[%s1526 + $0x1c0] sm:$0xff]
        %v1638 = vld [vmem:[%s1526 + $0x1c8] sm:$0xff]
        %v1639 = vld [vmem:[%s1526 + $0x1d0] sm:$0xff]
        %v1640 = vld [vmem:[%s1526 + $0x1d8] sm:$0xff]
        %v1641 = vld [vmem:[%s1526 + $0x1e0] sm:$0xff]
        %v1642 = vld [vmem:[%s1526 + $0x1e8] sm:$0xff]
        %v1643 = vld [vmem:[%s1526 + $0x1f0] sm:$0xff]
        %v1644 = vld [vmem:[%s1526 + $0x1f8] sm:$0xff]
        %v1645 = vld [vmem:[%s0 + $0x50] sm:$0x11]
        %v1646 = vld [vmem:[%s0 + $0x58] sm:$0x11]
        %s1647 = scalar_lea.vmem %s1526, 512 [#allocation2]
        %v1648 = vld [vmem:[%s1647] sm:$0xff]
        %v1649 = vld [vmem:[%s1647 + $0x8] sm:$0xff]
        %v1650 = vld [vmem:[%s1647 + $0x10] sm:$0xff]
        %v1651 = vld [vmem:[%s1647 + $0x18] sm:$0xff]
        %v1652 = vld [vmem:[%s1647 + $0x20] sm:$0xff]
        %v1653 = vld [vmem:[%s1647 + $0x28] sm:$0xff]
        %v1654 = vld [vmem:[%s1647 + $0x30] sm:$0xff]
        %v1655 = vld [vmem:[%s1647 + $0x38] sm:$0xff]
        %v1656 = vld [vmem:[%s1647 + $0x40] sm:$0xff]
        %v1657 = vld [vmem:[%s1647 + $0x48] sm:$0xff]
        %v1658 = vld [vmem:[%s1647 + $0x50] sm:$0xff]
        %v1659 = vld [vmem:[%s1647 + $0x58] sm:$0xff]
        %v1660 = vld [vmem:[%s1647 + $0x60] sm:$0xff]
        %v1661 = vld [vmem:[%s1647 + $0x68] sm:$0xff]
        %v1662 = vld [vmem:[%s1647 + $0x70] sm:$0xff]
        %v1663 = vld [vmem:[%s1647 + $0x78] sm:$0xff]
        %v1664 = vld [vmem:[%s1647 + $0x80] sm:$0xff]
        %v1665 = vld [vmem:[%s1647 + $0x88] sm:$0xff]
        %v1666 = vld [vmem:[%s1647 + $0x90] sm:$0xff]
        %v1667 = vld [vmem:[%s1647 + $0x98] sm:$0xff]
        %v1668 = vld [vmem:[%s1647 + $0xa0] sm:$0xff]
        %v1669 = vld [vmem:[%s1647 + $0xa8] sm:$0xff]
        %v1670 = vld [vmem:[%s1647 + $0xb0] sm:$0xff]
        %v1671 = vld [vmem:[%s1647 + $0xb8] sm:$0xff]
        %v1672 = vld [vmem:[%s1647 + $0xc0] sm:$0xff]
        %v1673 = vld [vmem:[%s1647 + $0xc8] sm:$0xff]
        %v1674 = vld [vmem:[%s1647 + $0xd0] sm:$0xff]
        %v1675 = vld [vmem:[%s1647 + $0xd8] sm:$0xff]
        %v1676 = vld [vmem:[%s1647 + $0xe0] sm:$0xff]
        %v1677 = vld [vmem:[%s1647 + $0xe8] sm:$0xff]
        %v1678 = vld [vmem:[%s1647 + $0xf0] sm:$0xff]
        %v1679 = vld [vmem:[%s1647 + $0xf8] sm:$0xff]
        %v1680 = vld [vmem:[%s1647 + $0x100] sm:$0xff]
        %v1681 = vld [vmem:[%s1647 + $0x108] sm:$0xff]
        %v1682 = vld [vmem:[%s1647 + $0x110] sm:$0xff]
        %v1683 = vld [vmem:[%s1647 + $0x118] sm:$0xff]
        %v1684 = vld [vmem:[%s1647 + $0x120] sm:$0xff]
        %v1685 = vld [vmem:[%s1647 + $0x128] sm:$0xff]
        %v1686 = vld [vmem:[%s1647 + $0x130] sm:$0xff]
        %v1687 = vld [vmem:[%s1647 + $0x138] sm:$0xff]
        %v1688 = vld [vmem:[%s1647 + $0x140] sm:$0xff]
        %v1689 = vld [vmem:[%s1647 + $0x148] sm:$0xff]
        %v1690 = vld [vmem:[%s1647 + $0x150] sm:$0xff]
        %v1691 = vld [vmem:[%s1647 + $0x158] sm:$0xff]
        %v1692 = vld [vmem:[%s1647 + $0x160] sm:$0xff]
        %v1693 = vld [vmem:[%s1647 + $0x168] sm:$0xff]
        %v1694 = vld [vmem:[%s1647 + $0x170] sm:$0xff]
        %v1695 = vld [vmem:[%s1647 + $0x178] sm:$0xff]
        %v1696 = vld [vmem:[%s1647 + $0x180] sm:$0xff]
        %v1697 = vld [vmem:[%s1647 + $0x188] sm:$0xff]
        %v1698 = vld [vmem:[%s1647 + $0x190] sm:$0xff]
        %v1699 = vld [vmem:[%s1647 + $0x198] sm:$0xff]
        %v1700 = vld [vmem:[%s1647 + $0x1a0] sm:$0xff]
        %v1701 = vld [vmem:[%s1647 + $0x1a8] sm:$0xff]
        %v1702 = vld [vmem:[%s1647 + $0x1b0] sm:$0xff]
        %v1703 = vld [vmem:[%s1647 + $0x1b8] sm:$0xff]
        %v1704 = vld [vmem:[%s1647 + $0x1c0] sm:$0xff]
        %v1705 = vld [vmem:[%s1647 + $0x1c8] sm:$0xff]
        %v1706 = vld [vmem:[%s1647 + $0x1d0] sm:$0xff]
        %v1707 = vld [vmem:[%s1647 + $0x1d8] sm:$0xff]
        %v1708 = vld [vmem:[%s1647 + $0x1e0] sm:$0xff]
        %v1709 = vld [vmem:[%s1647 + $0x1e8] sm:$0xff]
        %v1710 = vld [vmem:[%s1647 + $0x1f0] sm:$0xff]
        %v1711 = vld [vmem:[%s1647 + $0x1f8] sm:$0xff]
        %v1724 = vunpack.c.l.b16 %v1571
        %v1725 = vunpack.c.h.b16 %v1571
        %v1726 = vunpack.c.l.b16 %v1572
        %v1727 = vunpack.c.h.b16 %v1572
        %v1728 = vunpack.c.l.b16 %v1573
        %v1729 = vunpack.c.h.b16 %v1573
        %v1730 = vunpack.c.l.b16 %v1574
        %v1731 = vunpack.c.h.b16 %v1574
        %v1732 = vunpack.c.l.b16 %v1575
        %v1733 = vunpack.c.h.b16 %v1575
        %v1734 = vunpack.c.l.b16 %v1576
        %v1735 = vunpack.c.h.b16 %v1576
        %v1736 = vunpack.c.l.b16 %v1577
        %v1737 = vunpack.c.h.b16 %v1577
        %v1738 = vunpack.c.l.b16 %v1578
        %v1739 = vunpack.c.h.b16 %v1578
        %v1740 = vunpack.c.l.b16 %v1579
        %v1741 = vunpack.c.h.b16 %v1579
        %v1742 = vunpack.c.l.b16 %v1580
        %v1743 = vunpack.c.h.b16 %v1580
        %v1744 = vunpack.c.l.b16 %v1645
        %v1745 = vunpack.c.h.b16 %v1645
        %v1746 = vunpack.c.l.b16 %v1646
        %v1747 = vunpack.c.h.b16 %v1646
        %v1748 = vpack.c.b16 %v1728, %v1724
        %v1749 = vpack.c.b16 %v1729, %v1725
        %v1750 = vpack.c.b16 %v1730, %v1726
        %v1751 = vpack.c.b16 %v1731, %v1727
        %v1752 = vpack.c.b16 %v1736, %v1732
        %v1753 = vpack.c.b16 %v1737, %v1733
        %v1754 = vpack.c.b16 %v1738, %v1734
        %v1755 = vpack.c.b16 %v1739, %v1735
        %v1756 = vpack.c.b16 %v1744, %v1740
        %v1757 = vpack.c.b16 %v1745, %v1741
        %v1758 = vpack.c.b16 %v1746, %v1742
        %v1759 = vpack.c.b16 %v1747, %v1743
        %vm1760 = vsmask.f32 7424
        %v1762 = vshrl.u32 %v1748, 16
        %v1764 = vshll.u32 %v1748, 16
        %v1766 = vrot.slane %v1764, 1
        %v1767 = vor.u32 %v1762, %v1766
        %v1769 = vshll.u32 %v1752, 16
        %v1771 = vrot.slane %v1769, 1
        %v1772 = vsel %vm1760, %v1767, %v1771
        %v1774 = vshrl.u32 %v1749, 16
        %v1776 = vshll.u32 %v1749, 16
        %v1778 = vrot.slane %v1776, 1
        %v1779 = vor.u32 %v1774, %v1778
        %v1781 = vshll.u32 %v1753, 16
        %v1783 = vrot.slane %v1781, 1
        %v1784 = vsel %vm1760, %v1779, %v1783
        %v1786 = vshrl.u32 %v1750, 16
        %v1788 = vshll.u32 %v1750, 16
        %v1790 = vrot.slane %v1788, 1
        %v1791 = vor.u32 %v1786, %v1790
        %v1793 = vshll.u32 %v1754, 16
        %v1795 = vrot.slane %v1793, 1
        %v1796 = vsel %vm1760, %v1791, %v1795
        %v1798 = vshrl.u32 %v1751, 16
        %v1800 = vshll.u32 %v1751, 16
        %v1802 = vrot.slane %v1800, 1
        %v1803 = vor.u32 %v1798, %v1802
        %v1805 = vshll.u32 %v1755, 16
        %v1807 = vrot.slane %v1805, 1
        %v1808 = vsel %vm1760, %v1803, %v1807
        %v1809 = vshrl.u32 %v1752, 16
        %v1811 = vor.u32 %v1809, %v1771
        %v1813 = vshll.u32 %v1756, 16
        %v1815 = vrot.slane %v1813, 1
        %v1816 = vsel %vm1760, %v1811, %v1815
        %v1817 = vshrl.u32 %v1753, 16
        %v1819 = vor.u32 %v1817, %v1783
        %v1821 = vshll.u32 %v1757, 16
        %v1823 = vrot.slane %v1821, 1
        %v1824 = vsel %vm1760, %v1819, %v1823
        %v1825 = vshrl.u32 %v1754, 16
        %v1827 = vor.u32 %v1825, %v1795
        %v1829 = vshll.u32 %v1758, 16
        %v1831 = vrot.slane %v1829, 1
        %v1832 = vsel %vm1760, %v1827, %v1831
        %v1833 = vshrl.u32 %v1755, 16
        %v1835 = vor.u32 %v1833, %v1807
        %v1837 = vshll.u32 %v1759, 16
        %v1839 = vrot.slane %v1837, 1
        %v1840 = vsel %vm1760, %v1835, %v1839
        %v1841 = vshrl.u32 %v1756, 16
        %v1843 = vor.u32 %v1841, %v1815
        %v1844 = vshrl.u32 %v1757, 16
        %v1846 = vor.u32 %v1844, %v1823
        %v1847 = vshrl.u32 %v1758, 16
        %v1849 = vor.u32 %v1847, %v1831
        %v1850 = vshrl.u32 %v1759, 16
        %v1852 = vor.u32 %v1850, %v1839
        %v1929 = vunpack.c.l.b16 %v1648
        %v1930 = vunpack.c.h.b16 %v1648
        %v1931 = vunpack.c.l.b16 %v1649
        %v1932 = vunpack.c.h.b16 %v1649
        %v1933 = vunpack.c.l.b16 %v1650
        %v1934 = vunpack.c.h.b16 %v1650
        %v1935 = vunpack.c.l.b16 %v1651
        %v1936 = vunpack.c.h.b16 %v1651
        %v1937 = vunpack.c.l.b16 %v1652
        %v1938 = vunpack.c.h.b16 %v1652
        %v1939 = vunpack.c.l.b16 %v1653
        %v1940 = vunpack.c.h.b16 %v1653
        %v1941 = vunpack.c.l.b16 %v1654
        %v1942 = vunpack.c.h.b16 %v1654
        %v1943 = vunpack.c.l.b16 %v1655
        %v1944 = vunpack.c.h.b16 %v1655
        %v1945 = vunpack.c.l.b16 %v1656
        %v1946 = vunpack.c.h.b16 %v1656
        %v1947 = vunpack.c.l.b16 %v1657
        %v1948 = vunpack.c.h.b16 %v1657
        %v1949 = vunpack.c.l.b16 %v1658
        %v1950 = vunpack.c.h.b16 %v1658
        %v1951 = vunpack.c.l.b16 %v1659
        %v1952 = vunpack.c.h.b16 %v1659
        %v1953 = vunpack.c.l.b16 %v1660
        %v1954 = vunpack.c.h.b16 %v1660
        %v1955 = vunpack.c.l.b16 %v1661
        %v1956 = vunpack.c.h.b16 %v1661
        %v1957 = vunpack.c.l.b16 %v1662
        %v1958 = vunpack.c.h.b16 %v1662
        %v1959 = vunpack.c.l.b16 %v1663
        %v1960 = vunpack.c.h.b16 %v1663
        %v1961 = vunpack.c.l.b16 %v1664
        %v1962 = vunpack.c.h.b16 %v1664
        %v1963 = vunpack.c.l.b16 %v1665
        %v1964 = vunpack.c.h.b16 %v1665
        %v1965 = vunpack.c.l.b16 %v1666
        %v1966 = vunpack.c.h.b16 %v1666
        %v1967 = vunpack.c.l.b16 %v1667
        %v1968 = vunpack.c.h.b16 %v1667
        %v1969 = vunpack.c.l.b16 %v1668
        %v1970 = vunpack.c.h.b16 %v1668
        %v1971 = vunpack.c.l.b16 %v1669
        %v1972 = vunpack.c.h.b16 %v1669
        %v1973 = vunpack.c.l.b16 %v1670
        %v1974 = vunpack.c.h.b16 %v1670
        %v1975 = vunpack.c.l.b16 %v1671
        %v1976 = vunpack.c.h.b16 %v1671
        %v1977 = vunpack.c.l.b16 %v1672
        %v1978 = vunpack.c.h.b16 %v1672
        %v1979 = vunpack.c.l.b16 %v1673
        %v1980 = vunpack.c.h.b16 %v1673
        %v1981 = vunpack.c.l.b16 %v1674
        %v1982 = vunpack.c.h.b16 %v1674
        %v1983 = vunpack.c.l.b16 %v1675
        %v1984 = vunpack.c.h.b16 %v1675
        %v1985 = vunpack.c.l.b16 %v1676
        %v1986 = vunpack.c.h.b16 %v1676
        %v1987 = vunpack.c.l.b16 %v1677
        %v1988 = vunpack.c.h.b16 %v1677
        %v1989 = vunpack.c.l.b16 %v1678
        %v1990 = vunpack.c.h.b16 %v1678
        %v1991 = vunpack.c.l.b16 %v1679
        %v1992 = vunpack.c.h.b16 %v1679
        %v1993 = vunpack.c.l.b16 %v1680
        %v1994 = vunpack.c.h.b16 %v1680
        %v1995 = vunpack.c.l.b16 %v1681
        %v1996 = vunpack.c.h.b16 %v1681
        %v1997 = vunpack.c.l.b16 %v1682
        %v1998 = vunpack.c.h.b16 %v1682
        %v1999 = vunpack.c.l.b16 %v1683
        %v2000 = vunpack.c.h.b16 %v1683
        %v2001 = vunpack.c.l.b16 %v1684
        %v2002 = vunpack.c.h.b16 %v1684
        %v2003 = vunpack.c.l.b16 %v1685
        %v2004 = vunpack.c.h.b16 %v1685
        %v2005 = vunpack.c.l.b16 %v1686
        %v2006 = vunpack.c.h.b16 %v1686
        %v2007 = vunpack.c.l.b16 %v1687
        %v2008 = vunpack.c.h.b16 %v1687
        %v2009 = vunpack.c.l.b16 %v1688
        %v2010 = vunpack.c.h.b16 %v1688
        %v2011 = vunpack.c.l.b16 %v1689
        %v2012 = vunpack.c.h.b16 %v1689
        %v2013 = vunpack.c.l.b16 %v1690
        %v2014 = vunpack.c.h.b16 %v1690
        %v2015 = vunpack.c.l.b16 %v1691
        %v2016 = vunpack.c.h.b16 %v1691
        %v2017 = vunpack.c.l.b16 %v1692
        %v2018 = vunpack.c.h.b16 %v1692
        %v2019 = vunpack.c.l.b16 %v1693
        %v2020 = vunpack.c.h.b16 %v1693
        %v2021 = vunpack.c.l.b16 %v1694
        %v2022 = vunpack.c.h.b16 %v1694
        %v2023 = vunpack.c.l.b16 %v1695
        %v2024 = vunpack.c.h.b16 %v1695
        %v2025 = vunpack.c.l.b16 %v1696
        %v2026 = vunpack.c.h.b16 %v1696
        %v2027 = vunpack.c.l.b16 %v1697
        %v2028 = vunpack.c.h.b16 %v1697
        %v2029 = vunpack.c.l.b16 %v1698
        %v2030 = vunpack.c.h.b16 %v1698
        %v2031 = vunpack.c.l.b16 %v1699
        %v2032 = vunpack.c.h.b16 %v1699
        %v2033 = vunpack.c.l.b16 %v1700
        %v2034 = vunpack.c.h.b16 %v1700
        %v2035 = vunpack.c.l.b16 %v1701
        %v2036 = vunpack.c.h.b16 %v1701
        %v2037 = vunpack.c.l.b16 %v1702
        %v2038 = vunpack.c.h.b16 %v1702
        %v2039 = vunpack.c.l.b16 %v1703
        %v2040 = vunpack.c.h.b16 %v1703
        %v2041 = vunpack.c.l.b16 %v1704
        %v2042 = vunpack.c.h.b16 %v1704
        %v2043 = vunpack.c.l.b16 %v1705
        %v2044 = vunpack.c.h.b16 %v1705
        %v2045 = vunpack.c.l.b16 %v1706
        %v2046 = vunpack.c.h.b16 %v1706
        %v2047 = vunpack.c.l.b16 %v1707
        %v2048 = vunpack.c.h.b16 %v1707
        %v2049 = vunpack.c.l.b16 %v1708
        %v2050 = vunpack.c.h.b16 %v1708
        %v2051 = vunpack.c.l.b16 %v1709
        %v2052 = vunpack.c.h.b16 %v1709
        %v2053 = vunpack.c.l.b16 %v1710
        %v2054 = vunpack.c.h.b16 %v1710
        %v2055 = vunpack.c.l.b16 %v1711
        %v2056 = vunpack.c.h.b16 %v1711
        %v2057 = vpack.c.b16 %v1931, %v1929
        %v2058 = vpack.c.b16 %v1932, %v1930
        %v2059 = vpack.c.b16 %v1935, %v1933
        %v2060 = vpack.c.b16 %v1936, %v1934
        %v2061 = vpack.c.b16 %v1939, %v1937
        %v2062 = vpack.c.b16 %v1940, %v1938
        %v2063 = vpack.c.b16 %v1943, %v1941
        %v2064 = vpack.c.b16 %v1944, %v1942
        %v2065 = vpack.c.b16 %v1947, %v1945
        %v2066 = vpack.c.b16 %v1948, %v1946
        %v2067 = vpack.c.b16 %v1951, %v1949
        %v2068 = vpack.c.b16 %v1952, %v1950
        %v2069 = vpack.c.b16 %v1955, %v1953
        %v2070 = vpack.c.b16 %v1956, %v1954
        %v2071 = vpack.c.b16 %v1959, %v1957
        %v2072 = vpack.c.b16 %v1960, %v1958
        %v2073 = vpack.c.b16 %v1963, %v1961
        %v2074 = vpack.c.b16 %v1964, %v1962
        %v2075 = vpack.c.b16 %v1967, %v1965
        %v2076 = vpack.c.b16 %v1968, %v1966
        %v2077 = vpack.c.b16 %v1971, %v1969
        %v2078 = vpack.c.b16 %v1972, %v1970
        %v2079 = vpack.c.b16 %v1975, %v1973
        %v2080 = vpack.c.b16 %v1976, %v1974
        %v2081 = vpack.c.b16 %v1979, %v1977
        %v2082 = vpack.c.b16 %v1980, %v1978
        %v2083 = vpack.c.b16 %v1983, %v1981
        %v2084 = vpack.c.b16 %v1984, %v1982
        %v2085 = vpack.c.b16 %v1987, %v1985
        %v2086 = vpack.c.b16 %v1988, %v1986
        %v2087 = vpack.c.b16 %v1991, %v1989
        %v2088 = vpack.c.b16 %v1992, %v1990
        %v2089 = vpack.c.b16 %v1995, %v1993
        %v2090 = vpack.c.b16 %v1996, %v1994
        %v2091 = vpack.c.b16 %v1999, %v1997
        %v2092 = vpack.c.b16 %v2000, %v1998
        %v2093 = vpack.c.b16 %v2003, %v2001
        %v2094 = vpack.c.b16 %v2004, %v2002
        %v2095 = vpack.c.b16 %v2007, %v2005
        %v2096 = vpack.c.b16 %v2008, %v2006
        %v2097 = vpack.c.b16 %v2011, %v2009
        %v2098 = vpack.c.b16 %v2012, %v2010
        %v2099 = vpack.c.b16 %v2015, %v2013
        %v2100 = vpack.c.b16 %v2016, %v2014
        %v2101 = vpack.c.b16 %v2019, %v2017
        %v2102 = vpack.c.b16 %v2020, %v2018
        %v2103 = vpack.c.b16 %v2023, %v2021
        %v2104 = vpack.c.b16 %v2024, %v2022
        %v2105 = vpack.c.b16 %v2027, %v2025
        %v2106 = vpack.c.b16 %v2028, %v2026
        %v2107 = vpack.c.b16 %v2031, %v2029
        %v2108 = vpack.c.b16 %v2032, %v2030
        %v2109 = vpack.c.b16 %v2035, %v2033
        %v2110 = vpack.c.b16 %v2036, %v2034
        %v2111 = vpack.c.b16 %v2039, %v2037
        %v2112 = vpack.c.b16 %v2040, %v2038
        %v2113 = vpack.c.b16 %v2043, %v2041
        %v2114 = vpack.c.b16 %v2044, %v2042
        %v2115 = vpack.c.b16 %v2047, %v2045
        %v2116 = vpack.c.b16 %v2048, %v2046
        %v2117 = vpack.c.b16 %v2051, %v2049
        %v2118 = vpack.c.b16 %v2052, %v2050
        %v2119 = vpack.c.b16 %v2055, %v2053
        %v2120 = vpack.c.b16 %v2056, %v2054
        %2185 = vmatprep.subr.bf16.mxu0 %v2058
        %2186 = vmatpush1.bf16.msra.mxu0 %v2057
        %2187 = vmatprep.subr.bf16.mxu0 %v2060
        %2188 = vmatpush1.bf16.msra.mxu0 %v2059
        %2189 = vmatprep.subr.bf16.mxu0 %v2062
        %2190 = vmatpush1.bf16.msra.mxu0 %v2061
        %2191 = vmatprep.subr.bf16.mxu0 %v2064
        %2192 = vmatpush1.bf16.msra.mxu0 %v2063
        %2193 = vmatprep.subr.bf16.mxu0 %v2066
        %2194 = vmatpush1.bf16.msra.mxu0 %v2065
        %2195 = vmatprep.subr.bf16.mxu0 %v2068
        %2196 = vmatpush1.bf16.msra.mxu0 %v2067
        %2197 = vmatprep.subr.bf16.mxu0 %v2070
        %2198 = vmatpush1.bf16.msra.mxu0 %v2069
        %2199 = vmatprep.subr.bf16.mxu0 %v2072
        %2200 = vmatpush1.bf16.msra.mxu0 %v2071
        %2201 = vmatprep.subr.bf16.mxu0 %v2074
        %2202 = vmatpush1.bf16.msra.mxu0 %v2073
        %2203 = vmatprep.subr.bf16.mxu0 %v2076
        %2204 = vmatpush1.bf16.msra.mxu0 %v2075
        %2205 = vmatprep.subr.bf16.mxu0 %v2078
        %2206 = vmatpush1.bf16.msra.mxu0 %v2077
        %2207 = vmatprep.subr.bf16.mxu0 %v2080
        %2208 = vmatpush1.bf16.msra.mxu0 %v2079
        %2209 = vmatprep.subr.bf16.mxu0 %v2082
        %2210 = vmatpush1.bf16.msra.mxu0 %v2081
        %2211 = vmatprep.subr.bf16.mxu0 %v2084
        %2212 = vmatpush1.bf16.msra.mxu0 %v2083
        %2213 = vmatprep.subr.bf16.mxu0 %v2086
        %2214 = vmatpush1.bf16.msra.mxu0 %v2085
        %2215 = vmatprep.subr.bf16.mxu0 %v2088
        %2216 = vmatpush1.bf16.msra.mxu0 %v2087
        %2217 = vmatprep.mubr.bf16.mxu0 %v1784
        %2218 = vmatmul.mubr.bf16.gmra.mrb[0].mxu0 %v1772
        %v2219 = vpop.f32.mrb[0].mxu0
        %v2220 = vadd.f32 0.0, %v2219
        %v2221 = vpop.f32.mrb[0].mxu0
        %v2222 = vadd.f32 0.0, %v2221
        %v2223 = vpop.f32.mrb[0].mxu0
        %v2224 = vadd.f32 0.0, %v2223
        %v2225 = vpop.f32.mrb[0].mxu0
        %v2226 = vadd.f32 0.0, %v2225
        %2227 = vmatprep.mubr.bf16.mxu0 %v1824
        %2228 = vmatmul.mubr.bf16.gmra.mrb[0].mxu0 %v1816
        %v2229 = vpop.f32.mrb[0].mxu0
        %v2230 = vadd.f32 0.0, %v2229
        %v2231 = vpop.f32.mrb[0].mxu0
        %v2232 = vadd.f32 0.0, %v2231
        %v2233 = vpop.f32.mrb[0].mxu0
        %v2234 = vadd.f32 0.0, %v2233
        %v2235 = vpop.f32.mrb[0].mxu0
        %v2236 = vadd.f32 0.0, %v2235
        %2237 = vmatprep.mubr.bf16.mxu0 %v1846
        %2238 = vmatmul.mubr.bf16.gmra.mrb[0].mxu0 %v1843
        %v2239 = vpop.f32.mrb[0].mxu0
        %v2240 = vadd.f32 0.0, %v2239
        %v2241 = vpop.f32.mrb[0].mxu0
        %v2242 = vadd.f32 0.0, %v2241
        %v2243 = vpop.f32.mrb[0].mxu0
        %v2244 = vpop.f32.mrb[0].mxu0
        %2245 = vdwg.mxu0
        %2246 = vmatprep.subr.bf16.mxu0 %v2090
        %2247 = vmatpush1.bf16.msra.mxu0 %v2089
        %2248 = vmatprep.subr.bf16.mxu0 %v2092
        %2249 = vmatpush1.bf16.msra.mxu0 %v2091
        %2250 = vmatprep.subr.bf16.mxu0 %v2094
        %2251 = vmatpush1.bf16.msra.mxu0 %v2093
        %2252 = vmatprep.subr.bf16.mxu0 %v2096
        %2253 = vmatpush1.bf16.msra.mxu0 %v2095
        %2254 = vmatprep.subr.bf16.mxu0 %v2098
        %2255 = vmatpush1.bf16.msra.mxu0 %v2097
        %2256 = vmatprep.subr.bf16.mxu0 %v2100
        %2257 = vmatpush1.bf16.msra.mxu0 %v2099
        %2258 = vmatprep.subr.bf16.mxu0 %v2102
        %2259 = vmatpush1.bf16.msra.mxu0 %v2101
        %2260 = vmatprep.subr.bf16.mxu0 %v2104
        %2261 = vmatpush1.bf16.msra.mxu0 %v2103
        %2262 = vmatprep.subr.bf16.mxu0 %v2106
        %2263 = vmatpush1.bf16.msra.mxu0 %v2105
        %2264 = vmatprep.subr.bf16.mxu0 %v2108
        %2265 = vmatpush1.bf16.msra.mxu0 %v2107
        %2266 = vmatprep.subr.bf16.mxu0 %v2110
        %2267 = vmatpush1.bf16.msra.mxu0 %v2109
        %2268 = vmatprep.subr.bf16.mxu0 %v2112
        %2269 = vmatpush1.bf16.msra.mxu0 %v2111
        %2270 = vmatprep.subr.bf16.mxu0 %v2114
        %2271 = vmatpush1.bf16.msra.mxu0 %v2113
        %2272 = vmatprep.subr.bf16.mxu0 %v2116
        %2273 = vmatpush1.bf16.msra.mxu0 %v2115
        %2274 = vmatprep.subr.bf16.mxu0 %v2118
        %2275 = vmatpush1.bf16.msra.mxu0 %v2117
        %2276 = vmatprep.subr.bf16.mxu0 %v2120
        %2277 = vmatpush1.bf16.msra.mxu0 %v2119
        %2278 = vmatprep.mubr.bf16.mxu0 %v1808
        %2279 = vmatmul.mubr.bf16.gmra.mrb[0].mxu0 %v1796
        %v2280 = vpop.f32.mrb[0].mxu0
        %v2281 = vadd.f32 %v2220, %v2280
        %v2282 = vpop.f32.mrb[0].mxu0
        %v2283 = vadd.f32 %v2222, %v2282
        %v2284 = vpop.f32.mrb[0].mxu0
        %v2285 = vadd.f32 %v2224, %v2284
        %v2286 = vpop.f32.mrb[0].mxu0
        %v2287 = vadd.f32 %v2226, %v2286
        %2288 = vmatprep.mubr.bf16.mxu0 %v1840
        %2289 = vmatmul.mubr.bf16.gmra.mrb[0].mxu0 %v1832
        %v2290 = vpop.f32.mrb[0].mxu0
        %v2291 = vadd.f32 %v2230, %v2290
        %v2292 = vpop.f32.mrb[0].mxu0
        %v2293 = vadd.f32 %v2232, %v2292
        %v2294 = vpop.f32.mrb[0].mxu0
        %v2295 = vadd.f32 %v2234, %v2294
        %v2296 = vpop.f32.mrb[0].mxu0
        %v2297 = vadd.f32 %v2236, %v2296
        %2298 = vmatprep.mubr.bf16.mxu0 %v1852
        %2299 = vmatmul.mubr.bf16.gmra.mrb[0].mxu0 %v1849
        %v2300 = vpop.f32.mrb[0].mxu0
        %v2301 = vadd.f32 %v2240, %v2300
        %v2302 = vpop.f32.mrb[0].mxu0
        %v2303 = vadd.f32 %v2242, %v2302
        %v2304 = vpop.f32.mrb[0].mxu0
        %v2305 = vpop.f32.mrb[0].mxu0
        %2306 = vdwg.mxu0
        %v2307 = vpack.c.b16 %v1740, %v1740
        %v2308 = vpack.c.b16 %v1741, %v1741
        %v2309 = vpack.c.b16 %v1742, %v1742
        %v2310 = vpack.c.b16 %v1743, %v1743
        %v2387 = vunpack.c.l.b16 %v1581
        %v2388 = vunpack.c.h.b16 %v1581
        %v2389 = vunpack.c.l.b16 %v1582
        %v2390 = vunpack.c.h.b16 %v1582
        %v2391 = vunpack.c.l.b16 %v1583
        %v2392 = vunpack.c.h.b16 %v1583
        %v2393 = vunpack.c.l.b16 %v1584
        %v2394 = vunpack.c.h.b16 %v1584
        %v2395 = vunpack.c.l.b16 %v1585
        %v2396 = vunpack.c.h.b16 %v1585
        %v2397 = vunpack.c.l.b16 %v1586
        %v2398 = vunpack.c.h.b16 %v1586
        %v2399 = vunpack.c.l.b16 %v1587
        %v2400 = vunpack.c.h.b16 %v1587
        %v2401 = vunpack.c.l.b16 %v1588
        %v2402 = vunpack.c.h.b16 %v1588
        %v2403 = vunpack.c.l.b16 %v1589
        %v2404 = vunpack.c.h.b16 %v1589
        %v2405 = vunpack.c.l.b16 %v1590
        %v2406 = vunpack.c.h.b16 %v1590
        %v2407 = vunpack.c.l.b16 %v1591
        %v2408 = vunpack.c.h.b16 %v1591
        %v2409 = vunpack.c.l.b16 %v1592
        %v2410 = vunpack.c.h.b16 %v1592
        %v2411 = vunpack.c.l.b16 %v1593
        %v2412 = vunpack.c.h.b16 %v1593
        %v2413 = vunpack.c.l.b16 %v1594
        %v2414 = vunpack.c.h.b16 %v1594
        %v2415 = vunpack.c.l.b16 %v1595
        %v2416 = vunpack.c.h.b16 %v1595
        %v2417 = vunpack.c.l.b16 %v1596
        %v2418 = vunpack.c.h.b16 %v1596
        %v2419 = vunpack.c.l.b16 %v1597
        %v2420 = vunpack.c.h.b16 %v1597
        %v2421 = vunpack.c.l.b16 %v1598
        %v2422 = vunpack.c.h.b16 %v1598
        %v2423 = vunpack.c.l.b16 %v1599
        %v2424 = vunpack.c.h.b16 %v1599
        %v2425 = vunpack.c.l.b16 %v1600
        %v2426 = vunpack.c.h.b16 %v1600
        %v2427 = vunpack.c.l.b16 %v1601
        %v2428 = vunpack.c.h.b16 %v1601
        %v2429 = vunpack.c.l.b16 %v1602
        %v2430 = vunpack.c.h.b16 %v1602
        %v2431 = vunpack.c.l.b16 %v1603
        %v2432 = vunpack.c.h.b16 %v1603
        %v2433 = vunpack.c.l.b16 %v1604
        %v2434 = vunpack.c.h.b16 %v1604
        %v2435 = vunpack.c.l.b16 %v1605
        %v2436 = vunpack.c.h.b16 %v1605
        %v2437 = vunpack.c.l.b16 %v1606
        %v2438 = vunpack.c.h.b16 %v1606
        %v2439 = vunpack.c.l.b16 %v1607
        %v2440 = vunpack.c.h.b16 %v1607
        %v2441 = vunpack.c.l.b16 %v1608
        %v2442 = vunpack.c.h.b16 %v1608
        %v2443 = vunpack.c.l.b16 %v1609
        %v2444 = vunpack.c.h.b16 %v1609
        %v2445 = vunpack.c.l.b16 %v1610
        %v2446 = vunpack.c.h.b16 %v1610
        %v2447 = vunpack.c.l.b16 %v1611
        %v2448 = vunpack.c.h.b16 %v1611
        %v2449 = vunpack.c.l.b16 %v1612
        %v2450 = vunpack.c.h.b16 %v1612
        %v2451 = vunpack.c.l.b16 %v1613
        %v2452 = vunpack.c.h.b16 %v1613
        %v2453 = vunpack.c.l.b16 %v1614
        %v2454 = vunpack.c.h.b16 %v1614
        %v2455 = vunpack.c.l.b16 %v1615
        %v2456 = vunpack.c.h.b16 %v1615
        %v2457 = vunpack.c.l.b16 %v1616
        %v2458 = vunpack.c.h.b16 %v1616
        %v2459 = vunpack.c.l.b16 %v1617
        %v2460 = vunpack.c.h.b16 %v1617
        %v2461 = vunpack.c.l.b16 %v1618
        %v2462 = vunpack.c.h.b16 %v1618
        %v2463 = vunpack.c.l.b16 %v1619
        %v2464 = vunpack.c.h.b16 %v1619
        %v2465 = vunpack.c.l.b16 %v1620
        %v2466 = vunpack.c.h.b16 %v1620
        %v2467 = vunpack.c.l.b16 %v1621
        %v2468 = vunpack.c.h.b16 %v1621
        %v2469 = vunpack.c.l.b16 %v1622
        %v2470 = vunpack.c.h.b16 %v1622
        %v2471 = vunpack.c.l.b16 %v1623
        %v2472 = vunpack.c.h.b16 %v1623
        %v2473 = vunpack.c.l.b16 %v1624
        %v2474 = vunpack.c.h.b16 %v1624
        %v2475 = vunpack.c.l.b16 %v1625
        %v2476 = vunpack.c.h.b16 %v1625
        %v2477 = vunpack.c.l.b16 %v1626
        %v2478 = vunpack.c.h.b16 %v1626
        %v2479 = vunpack.c.l.b16 %v1627
        %v2480 = vunpack.c.h.b16 %v1627
        %v2481 = vunpack.c.l.b16 %v1628
        %v2482 = vunpack.c.h.b16 %v1628
        %v2483 = vunpack.c.l.b16 %v1629
        %v2484 = vunpack.c.h.b16 %v1629
        %v2485 = vunpack.c.l.b16 %v1630
        %v2486 = vunpack.c.h.b16 %v1630
        %v2487 = vunpack.c.l.b16 %v1631
        %v2488 = vunpack.c.h.b16 %v1631
        %v2489 = vunpack.c.l.b16 %v1632
        %v2490 = vunpack.c.h.b16 %v1632
        %v2491 = vunpack.c.l.b16 %v1633
        %v2492 = vunpack.c.h.b16 %v1633
        %v2493 = vunpack.c.l.b16 %v1634
        %v2494 = vunpack.c.h.b16 %v1634
        %v2495 = vunpack.c.l.b16 %v1635
        %v2496 = vunpack.c.h.b16 %v1635
        %v2497 = vunpack.c.l.b16 %v1636
        %v2498 = vunpack.c.h.b16 %v1636
        %v2499 = vunpack.c.l.b16 %v1637
        %v2500 = vunpack.c.h.b16 %v1637
        %v2501 = vunpack.c.l.b16 %v1638
        %v2502 = vunpack.c.h.b16 %v1638
        %v2503 = vunpack.c.l.b16 %v1639
        %v2504 = vunpack.c.h.b16 %v1639
        %v2505 = vunpack.c.l.b16 %v1640
        %v2506 = vunpack.c.h.b16 %v1640
        %v2507 = vunpack.c.l.b16 %v1641
        %v2508 = vunpack.c.h.b16 %v1641
        %v2509 = vunpack.c.l.b16 %v1642
        %v2510 = vunpack.c.h.b16 %v1642
        %v2511 = vunpack.c.l.b16 %v1643
        %v2512 = vunpack.c.h.b16 %v1643
        %v2513 = vunpack.c.l.b16 %v1644
        %v2514 = vunpack.c.h.b16 %v1644
        %v2515 = vpack.c.b16 %v2389, %v2387
        %v2516 = vpack.c.b16 %v2390, %v2388
        %v2517 = vpack.c.b16 %v2393, %v2391
        %v2518 = vpack.c.b16 %v2394, %v2392
        %v2519 = vpack.c.b16 %v2397, %v2395
        %v2520 = vpack.c.b16 %v2398, %v2396
        %v2521 = vpack.c.b16 %v2401, %v2399
        %v2522 = vpack.c.b16 %v2402, %v2400
        %v2523 = vpack.c.b16 %v2405, %v2403
        %v2524 = vpack.c.b16 %v2406, %v2404
        %v2525 = vpack.c.b16 %v2409, %v2407
        %v2526 = vpack.c.b16 %v2410, %v2408
        %v2527 = vpack.c.b16 %v2413, %v2411
        %v2528 = vpack.c.b16 %v2414, %v2412
        %v2529 = vpack.c.b16 %v2417, %v2415
        %v2530 = vpack.c.b16 %v2418, %v2416
        %v2531 = vpack.c.b16 %v2421, %v2419
        %v2532 = vpack.c.b16 %v2422, %v2420
        %v2533 = vpack.c.b16 %v2425, %v2423
        %v2534 = vpack.c.b16 %v2426, %v2424
        %v2535 = vpack.c.b16 %v2429, %v2427
        %v2536 = vpack.c.b16 %v2430, %v2428
        %v2537 = vpack.c.b16 %v2433, %v2431
        %v2538 = vpack.c.b16 %v2434, %v2432
        %v2539 = vpack.c.b16 %v2437, %v2435
        %v2540 = vpack.c.b16 %v2438, %v2436
        %v2541 = vpack.c.b16 %v2441, %v2439
        %v2542 = vpack.c.b16 %v2442, %v2440
        %v2543 = vpack.c.b16 %v2445, %v2443
        %v2544 = vpack.c.b16 %v2446, %v2444
        %v2545 = vpack.c.b16 %v2449, %v2447
        %v2546 = vpack.c.b16 %v2450, %v2448
        %v2547 = vpack.c.b16 %v2453, %v2451
        %v2548 = vpack.c.b16 %v2454, %v2452
        %v2549 = vpack.c.b16 %v2457, %v2455
        %v2550 = vpack.c.b16 %v2458, %v2456
        %v2551 = vpack.c.b16 %v2461, %v2459
        %v2552 = vpack.c.b16 %v2462, %v2460
        %v2553 = vpack.c.b16 %v2465, %v2463
        %v2554 = vpack.c.b16 %v2466, %v2464
        %v2555 = vpack.c.b16 %v2469, %v2467
        %v2556 = vpack.c.b16 %v2470, %v2468
        %v2557 = vpack.c.b16 %v2473, %v2471
        %v2558 = vpack.c.b16 %v2474, %v2472
        %v2559 = vpack.c.b16 %v2477, %v2475
        %v2560 = vpack.c.b16 %v2478, %v2476
        %v2561 = vpack.c.b16 %v2481, %v2479
        %v2562 = vpack.c.b16 %v2482, %v2480
        %v2563 = vpack.c.b16 %v2485, %v2483
        %v2564 = vpack.c.b16 %v2486, %v2484
        %v2565 = vpack.c.b16 %v2489, %v2487
        %v2566 = vpack.c.b16 %v2490, %v2488
        %v2567 = vpack.c.b16 %v2493, %v2491
        %v2568 = vpack.c.b16 %v2494, %v2492
        %v2569 = vpack.c.b16 %v2497, %v2495
        %v2570 = vpack.c.b16 %v2498, %v2496
        %v2571 = vpack.c.b16 %v2501, %v2499
        %v2572 = vpack.c.b16 %v2502, %v2500
        %v2573 = vpack.c.b16 %v2505, %v2503
        %v2574 = vpack.c.b16 %v2506, %v2504
        %v2575 = vpack.c.b16 %v2509, %v2507
        %v2576 = vpack.c.b16 %v2510, %v2508
        %v2577 = vpack.c.b16 %v2513, %v2511
        %v2578 = vpack.c.b16 %v2514, %v2512
        %2643 = vmatprep.subr.bf16.mxu0 %v2516
        %2644 = vmatpush1.bf16.msra.mxu0 %v2515
        %2645 = vmatprep.subr.bf16.mxu0 %v2518
        %2646 = vmatpush1.bf16.msra.mxu0 %v2517
        %2647 = vmatprep.subr.bf16.mxu0 %v2520
        %2648 = vmatpush1.bf16.msra.mxu0 %v2519
        %2649 = vmatprep.subr.bf16.mxu0 %v2522
        %2650 = vmatpush1.bf16.msra.mxu0 %v2521
        %2651 = vmatprep.subr.bf16.mxu0 %v2524
        %2652 = vmatpush1.bf16.msra.mxu0 %v2523
        %2653 = vmatprep.subr.bf16.mxu0 %v2526
        %2654 = vmatpush1.bf16.msra.mxu0 %v2525
        %2655 = vmatprep.subr.bf16.mxu0 %v2528
        %2656 = vmatpush1.bf16.msra.mxu0 %v2527
        %2657 = vmatprep.subr.bf16.mxu0 %v2530
        %2658 = vmatpush1.bf16.msra.mxu0 %v2529
        %2659 = vmatprep.subr.bf16.mxu0 %v2532
        %2660 = vmatpush1.bf16.msra.mxu0 %v2531
        %2661 = vmatprep.subr.bf16.mxu0 %v2534
        %2662 = vmatpush1.bf16.msra.mxu0 %v2533
        %2663 = vmatprep.subr.bf16.mxu0 %v2536
        %2664 = vmatpush1.bf16.msra.mxu0 %v2535
        %2665 = vmatprep.subr.bf16.mxu0 %v2538
        %2666 = vmatpush1.bf16.msra.mxu0 %v2537
        %2667 = vmatprep.subr.bf16.mxu0 %v2540
        %2668 = vmatpush1.bf16.msra.mxu0 %v2539
        %2669 = vmatprep.subr.bf16.mxu0 %v2542
        %2670 = vmatpush1.bf16.msra.mxu0 %v2541
        %2671 = vmatprep.subr.bf16.mxu0 %v2544
        %2672 = vmatpush1.bf16.msra.mxu0 %v2543
        %2673 = vmatprep.subr.bf16.mxu0 %v2546
        %2674 = vmatpush1.bf16.msra.mxu0 %v2545
        %2675 = vmatprep.mubr.bf16.mxu0 %v1749
        %2676 = vmatmul.mubr.bf16.gmra.mrb[0].mxu0 %v1748
        %v2677 = vpop.f32.mrb[0].mxu0
        %v2678 = vadd.f32 %v2281, %v2677
        %v2679 = vpop.f32.mrb[0].mxu0
        %v2680 = vadd.f32 %v2283, %v2679
        %v2681 = vpop.f32.mrb[0].mxu0
        %v2682 = vadd.f32 %v2285, %v2681
        %v2683 = vpop.f32.mrb[0].mxu0
        %v2684 = vadd.f32 %v2287, %v2683
        %2685 = vmatprep.mubr.bf16.mxu0 %v1753
        %2686 = vmatmul.mubr.bf16.gmra.mrb[0].mxu0 %v1752
        %v2687 = vpop.f32.mrb[0].mxu0
        %v2688 = vadd.f32 %v2291, %v2687
        %v2689 = vpop.f32.mrb[0].mxu0
        %v2690 = vadd.f32 %v2293, %v2689
        %v2691 = vpop.f32.mrb[0].mxu0
        %v2692 = vadd.f32 %v2295, %v2691
        %v2693 = vpop.f32.mrb[0].mxu0
        %v2694 = vadd.f32 %v2297, %v2693
        %2695 = vmatprep.mubr.bf16.mxu0 %v2308
        %2696 = vmatmul.mubr.bf16.gmra.mrb[0].mxu0 %v2307
        %v2697 = vpop.f32.mrb[0].mxu0
        %v2698 = vadd.f32 %v2301, %v2697
        %v2699 = vpop.f32.mrb[0].mxu0
        %v2700 = vadd.f32 %v2303, %v2699
        %v2701 = vpop.f32.mrb[0].mxu0
        %v2702 = vpop.f32.mrb[0].mxu0
        %2703 = vdwg.mxu0
        %2704 = vmatprep.subr.bf16.mxu0 %v2548
        %2705 = vmatpush1.bf16.msra.mxu0 %v2547
        %2706 = vmatprep.subr.bf16.mxu0 %v2550
        %2707 = vmatpush1.bf16.msra.mxu0 %v2549
        %2708 = vmatprep.subr.bf16.mxu0 %v2552
        %2709 = vmatpush1.bf16.msra.mxu0 %v2551
        %2710 = vmatprep.subr.bf16.mxu0 %v2554
        %2711 = vmatpush1.bf16.msra.mxu0 %v2553
        %2712 = vmatprep.subr.bf16.mxu0 %v2556
        %2713 = vmatpush1.bf16.msra.mxu0 %v2555
        %2714 = vmatprep.subr.bf16.mxu0 %v2558
        %2715 = vmatpush1.bf16.msra.mxu0 %v2557
        %2716 = vmatprep.subr.bf16.mxu0 %v2560
        %2717 = vmatpush1.bf16.msra.mxu0 %v2559
        %2718 = vmatprep.subr.bf16.mxu0 %v2562
        %2719 = vmatpush1.bf16.msra.mxu0 %v2561
        %2720 = vmatprep.subr.bf16.mxu0 %v2564
        %2721 = vmatpush1.bf16.msra.mxu0 %v2563
        %2722 = vmatprep.subr.bf16.mxu0 %v2566
        %2723 = vmatpush1.bf16.msra.mxu0 %v2565
        %2724 = vmatprep.subr.bf16.mxu0 %v2568
        %2725 = vmatpush1.bf16.msra.mxu0 %v2567
        %2726 = vmatprep.subr.bf16.mxu0 %v2570
        %2727 = vmatpush1.bf16.msra.mxu0 %v2569
        %2728 = vmatprep.subr.bf16.mxu0 %v2572
        %2729 = vmatpush1.bf16.msra.mxu0 %v2571
        %2730 = vmatprep.subr.bf16.mxu0 %v2574
        %2731 = vmatpush1.bf16.msra.mxu0 %v2573
        %2732 = vmatprep.subr.bf16.mxu0 %v2576
        %2733 = vmatpush1.bf16.msra.mxu0 %v2575
        %2734 = vmatprep.subr.bf16.mxu0 %v2578
        %2735 = vmatpush1.bf16.msra.mxu0 %v2577
        %2736 = vmatprep.mubr.bf16.mxu0 %v1751
        %2737 = vmatmul.mubr.bf16.gmra.mrb[0].mxu0 %v1750
        %v2738 = vpop.f32.mrb[0].mxu0
        %v2739 = vadd.f32 %v2678, %v2738
        %v2740 = vpop.f32.mrb[0].mxu0
        %v2741 = vadd.f32 %v2680, %v2740
        %v2742 = vpop.f32.mrb[0].mxu0
        %v2743 = vadd.f32 %v2682, %v2742
        %v2744 = vpop.f32.mrb[0].mxu0
        %v2745 = vadd.f32 %v2684, %v2744
        %2746 = vmatprep.mubr.bf16.mxu0 %v1755
        %2747 = vmatmul.mubr.bf16.gmra.mrb[0].mxu0 %v1754
        %v2748 = vpop.f32.mrb[0].mxu0
        %v2749 = vadd.f32 %v2688, %v2748
        %v2750 = vpop.f32.mrb[0].mxu0
        %v2751 = vadd.f32 %v2690, %v2750
        %v2752 = vpop.f32.mrb[0].mxu0
        %v2753 = vadd.f32 %v2692, %v2752
        %v2754 = vpop.f32.mrb[0].mxu0
        %v2755 = vadd.f32 %v2694, %v2754
        %2756 = vmatprep.mubr.bf16.mxu0 %v2310
        %2757 = vmatmul.mubr.bf16.gmra.mrb[0].mxu0 %v2309
        %v2758 = vpop.f32.mrb[0].mxu0
        %v2759 = vadd.f32 %v2698, %v2758
        %v2760 = vpop.f32.mrb[0].mxu0
        %v2761 = vadd.f32 %v2700, %v2760
        %v2762 = vpop.f32.mrb[0].mxu0
        %v2763 = vpop.f32.mrb[0].mxu0
        %2764 = vdwg.mxu0
        %v2765 = vld [vmem:[%s0] sm:$0xee]
        %v2766 = vld [vmem:[%s0 + $0x8] sm:$0xee]
        %s2767 = scalar_lea.vmem %s1526, 1024 [#allocation2]
        %v2768 = vld [vmem:[%s2767] sm:$0xff]
        %v2769 = vld [vmem:[%s2767 + $0x8] sm:$0xff]
        %v2770 = vld [vmem:[%s2767 + $0x10] sm:$0xff]
        %v2771 = vld [vmem:[%s2767 + $0x18] sm:$0xff]
        %v2772 = vld [vmem:[%s2767 + $0x20] sm:$0xff]
        %v2773 = vld [vmem:[%s2767 + $0x28] sm:$0xff]
        %v2774 = vld [vmem:[%s2767 + $0x30] sm:$0xff]
        %v2775 = vld [vmem:[%s2767 + $0x38] sm:$0xff]
        %v2776 = vld [vmem:[%s2767 + $0x40] sm:$0xff]
        %v2777 = vld [vmem:[%s2767 + $0x48] sm:$0xff]
        %v2778 = vld [vmem:[%s2767 + $0x50] sm:$0xff]
        %v2779 = vld [vmem:[%s2767 + $0x58] sm:$0xff]
        %v2780 = vld [vmem:[%s2767 + $0x60] sm:$0xff]
        %v2781 = vld [vmem:[%s2767 + $0x68] sm:$0xff]
        %v2782 = vld [vmem:[%s2767 + $0x70] sm:$0xff]
        %v2783 = vld [vmem:[%s2767 + $0x78] sm:$0xff]
        %v2784 = vld [vmem:[%s2767 + $0x80] sm:$0xff]
        %v2785 = vld [vmem:[%s2767 + $0x88] sm:$0xff]
        %v2786 = vld [vmem:[%s2767 + $0x90] sm:$0xff]
        %v2787 = vld [vmem:[%s2767 + $0x98] sm:$0xff]
        %v2788 = vld [vmem:[%s2767 + $0xa0] sm:$0xff]
        %v2789 = vld [vmem:[%s2767 + $0xa8] sm:$0xff]
        %v2790 = vld [vmem:[%s2767 + $0xb0] sm:$0xff]
        %v2791 = vld [vmem:[%s2767 + $0xb8] sm:$0xff]
        %v2792 = vld [vmem:[%s2767 + $0xc0] sm:$0xff]
        %v2793 = vld [vmem:[%s2767 + $0xc8] sm:$0xff]
        %v2794 = vld [vmem:[%s2767 + $0xd0] sm:$0xff]
        %v2795 = vld [vmem:[%s2767 + $0xd8] sm:$0xff]
        %v2796 = vld [vmem:[%s2767 + $0xe0] sm:$0xff]
        %v2797 = vld [vmem:[%s2767 + $0xe8] sm:$0xff]
        %v2798 = vld [vmem:[%s2767 + $0xf0] sm:$0xff]
        %v2799 = vld [vmem:[%s2767 + $0xf8] sm:$0xff]
        %v2800 = vld [vmem:[%s2767 + $0x100] sm:$0xff]
        %v2801 = vld [vmem:[%s2767 + $0x108] sm:$0xff]
        %v2802 = vld [vmem:[%s2767 + $0x110] sm:$0xff]
        %v2803 = vld [vmem:[%s2767 + $0x118] sm:$0xff]
        %v2804 = vld [vmem:[%s2767 + $0x120] sm:$0xff]
        %v2805 = vld [vmem:[%s2767 + $0x128] sm:$0xff]
        %v2806 = vld [vmem:[%s2767 + $0x130] sm:$0xff]
        %v2807 = vld [vmem:[%s2767 + $0x138] sm:$0xff]
        %v2808 = vld [vmem:[%s2767 + $0x140] sm:$0xff]
        %v2809 = vld [vmem:[%s2767 + $0x148] sm:$0xff]
        %v2810 = vld [vmem:[%s2767 + $0x150] sm:$0xff]
        %v2811 = vld [vmem:[%s2767 + $0x158] sm:$0xff]
        %v2812 = vld [vmem:[%s2767 + $0x160] sm:$0xff]
        %v2813 = vld [vmem:[%s2767 + $0x168] sm:$0xff]
        %v2814 = vld [vmem:[%s2767 + $0x170] sm:$0xff]
        %v2815 = vld [vmem:[%s2767 + $0x178] sm:$0xff]
        %v2816 = vld [vmem:[%s2767 + $0x180] sm:$0xff]
        %v2817 = vld [vmem:[%s2767 + $0x188] sm:$0xff]
        %v2818 = vld [vmem:[%s2767 + $0x190] sm:$0xff]
        %v2819 = vld [vmem:[%s2767 + $0x198] sm:$0xff]
        %v2820 = vld [vmem:[%s2767 + $0x1a0] sm:$0xff]
        %v2821 = vld [vmem:[%s2767 + $0x1a8] sm:$0xff]
        %v2822 = vld [vmem:[%s2767 + $0x1b0] sm:$0xff]
        %v2823 = vld [vmem:[%s2767 + $0x1b8] sm:$0xff]
        %v2824 = vld [vmem:[%s2767 + $0x1c0] sm:$0xff]
        %v2825 = vld [vmem:[%s2767 + $0x1c8] sm:$0xff]
        %v2826 = vld [vmem:[%s2767 + $0x1d0] sm:$0xff]
        %v2827 = vld [vmem:[%s2767 + $0x1d8] sm:$0xff]
        %v2828 = vld [vmem:[%s2767 + $0x1e0] sm:$0xff]
        %v2829 = vld [vmem:[%s2767 + $0x1e8] sm:$0xff]
        %v2830 = vld [vmem:[%s2767 + $0x1f0] sm:$0xff]
        %v2831 = vld [vmem:[%s2767 + $0x1f8] sm:$0xff]
        %v2834 = vunpack.c.l.b16 %v2765
        %v2835 = vunpack.c.h.b16 %v2765
        %v2836 = vunpack.c.l.b16 %v2766
        %v2837 = vunpack.c.h.b16 %v2766
        %v2838 = vpack.c.b16 %v1728, %v2834
        %v2839 = vpack.c.b16 %v1729, %v2835
        %v2840 = vpack.c.b16 %v1730, %v2836
        %v2841 = vpack.c.b16 %v1731, %v2837
        %vm2842 = vcmask 1046528
        %v2843 = vrot.slane %v2838, 1
        %v2844 = vrot.slane %v1752, 1
        %v2845 = vsel %vm2842, %v2843, %v2844
        %v2846 = vrot.slane %v2839, 1
        %v2847 = vrot.slane %v1753, 1
        %v2848 = vsel %vm2842, %v2846, %v2847
        %v2849 = vrot.slane %v2840, 1
        %v2850 = vrot.slane %v1754, 1
        %v2851 = vsel %vm2842, %v2849, %v2850
        %v2852 = vrot.slane %v2841, 1
        %v2853 = vrot.slane %v1755, 1
        %v2854 = vsel %vm2842, %v2852, %v2853
        %v2855 = vrot.slane %v1756, 1
        %v2856 = vsel %vm2842, %v2844, %v2855
        %v2857 = vrot.slane %v1757, 1
        %v2858 = vsel %vm2842, %v2847, %v2857
        %v2859 = vrot.slane %v1758, 1
        %v2860 = vsel %vm2842, %v2850, %v2859
        %v2861 = vrot.slane %v1759, 1
        %v2862 = vsel %vm2842, %v2853, %v2861
        %v2939 = vunpack.c.l.b16 %v2768
        %v2940 = vunpack.c.h.b16 %v2768
        %v2941 = vunpack.c.l.b16 %v2769
        %v2942 = vunpack.c.h.b16 %v2769
        %v2943 = vunpack.c.l.b16 %v2770
        %v2944 = vunpack.c.h.b16 %v2770
        %v2945 = vunpack.c.l.b16 %v2771
        %v2946 = vunpack.c.h.b16 %v2771
        %v2947 = vunpack.c.l.b16 %v2772
        %v2948 = vunpack.c.h.b16 %v2772
        %v2949 = vunpack.c.l.b16 %v2773
        %v2950 = vunpack.c.h.b16 %v2773
        %v2951 = vunpack.c.l.b16 %v2774
        %v2952 = vunpack.c.h.b16 %v2774
        %v2953 = vunpack.c.l.b16 %v2775
        %v2954 = vunpack.c.h.b16 %v2775
        %v2955 = vunpack.c.l.b16 %v2776
        %v2956 = vunpack.c.h.b16 %v2776
        %v2957 = vunpack.c.l.b16 %v2777
        %v2958 = vunpack.c.h.b16 %v2777
        %v2959 = vunpack.c.l.b16 %v2778
        %v2960 = vunpack.c.h.b16 %v2778
        %v2961 = vunpack.c.l.b16 %v2779
        %v2962 = vunpack.c.h.b16 %v2779
        %v2963 = vunpack.c.l.b16 %v2780
        %v2964 = vunpack.c.h.b16 %v2780
        %v2965 = vunpack.c.l.b16 %v2781
        %v2966 = vunpack.c.h.b16 %v2781
        %v2967 = vunpack.c.l.b16 %v2782
        %v2968 = vunpack.c.h.b16 %v2782
        %v2969 = vunpack.c.l.b16 %v2783
        %v2970 = vunpack.c.h.b16 %v2783
        %v2971 = vunpack.c.l.b16 %v2784
        %v2972 = vunpack.c.h.b16 %v2784
        %v2973 = vunpack.c.l.b16 %v2785
        %v2974 = vunpack.c.h.b16 %v2785
        %v2975 = vunpack.c.l.b16 %v2786
        %v2976 = vunpack.c.h.b16 %v2786
        %v2977 = vunpack.c.l.b16 %v2787
        %v2978 = vunpack.c.h.b16 %v2787
        %v2979 = vunpack.c.l.b16 %v2788
        %v2980 = vunpack.c.h.b16 %v2788
        %v2981 = vunpack.c.l.b16 %v2789
        %v2982 = vunpack.c.h.b16 %v2789
        %v2983 = vunpack.c.l.b16 %v2790
        %v2984 = vunpack.c.h.b16 %v2790
        %v2985 = vunpack.c.l.b16 %v2791
        %v2986 = vunpack.c.h.b16 %v2791
        %v2987 = vunpack.c.l.b16 %v2792
        %v2988 = vunpack.c.h.b16 %v2792
        %v2989 = vunpack.c.l.b16 %v2793
        %v2990 = vunpack.c.h.b16 %v2793
        %v2991 = vunpack.c.l.b16 %v2794
        %v2992 = vunpack.c.h.b16 %v2794
        %v2993 = vunpack.c.l.b16 %v2795
        %v2994 = vunpack.c.h.b16 %v2795
        %v2995 = vunpack.c.l.b16 %v2796
        %v2996 = vunpack.c.h.b16 %v2796
        %v2997 = vunpack.c.l.b16 %v2797
        %v2998 = vunpack.c.h.b16 %v2797
        %v2999 = vunpack.c.l.b16 %v2798
        %v3000 = vunpack.c.h.b16 %v2798
        %v3001 = vunpack.c.l.b16 %v2799
        %v3002 = vunpack.c.h.b16 %v2799
        %v3003 = vunpack.c.l.b16 %v2800
        %v3004 = vunpack.c.h.b16 %v2800
        %v3005 = vunpack.c.l.b16 %v2801
        %v3006 = vunpack.c.h.b16 %v2801
        %v3007 = vunpack.c.l.b16 %v2802
        %v3008 = vunpack.c.h.b16 %v2802
        %v3009 = vunpack.c.l.b16 %v2803
        %v3010 = vunpack.c.h.b16 %v2803
        %v3011 = vunpack.c.l.b16 %v2804
        %v3012 = vunpack.c.h.b16 %v2804
        %v3013 = vunpack.c.l.b16 %v2805
        %v3014 = vunpack.c.h.b16 %v2805
        %v3015 = vunpack.c.l.b16 %v2806
        %v3016 = vunpack.c.h.b16 %v2806
        %v3017 = vunpack.c.l.b16 %v2807
        %v3018 = vunpack.c.h.b16 %v2807
        %v3019 = vunpack.c.l.b16 %v2808
        %v3020 = vunpack.c.h.b16 %v2808
        %v3021 = vunpack.c.l.b16 %v2809
        %v3022 = vunpack.c.h.b16 %v2809
        %v3023 = vunpack.c.l.b16 %v2810
        %v3024 = vunpack.c.h.b16 %v2810
        %v3025 = vunpack.c.l.b16 %v2811
        %v3026 = vunpack.c.h.b16 %v2811
        %v3027 = vunpack.c.l.b16 %v2812
        %v3028 = vunpack.c.h.b16 %v2812
        %v3029 = vunpack.c.l.b16 %v2813
        %v3030 = vunpack.c.h.b16 %v2813
        %v3031 = vunpack.c.l.b16 %v2814
        %v3032 = vunpack.c.h.b16 %v2814
        %v3033 = vunpack.c.l.b16 %v2815
        %v3034 = vunpack.c.h.b16 %v2815
        %v3035 = vunpack.c.l.b16 %v2816
        %v3036 = vunpack.c.h.b16 %v2816
        %v3037 = vunpack.c.l.b16 %v2817
        %v3038 = vunpack.c.h.b16 %v2817
        %v3039 = vunpack.c.l.b16 %v2818
        %v3040 = vunpack.c.h.b16 %v2818
        %v3041 = vunpack.c.l.b16 %v2819
        %v3042 = vunpack.c.h.b16 %v2819
        %v3043 = vunpack.c.l.b16 %v2820
        %v3044 = vunpack.c.h.b16 %v2820
        %v3045 = vunpack.c.l.b16 %v2821
        %v3046 = vunpack.c.h.b16 %v2821
        %v3047 = vunpack.c.l.b16 %v2822
        %v3048 = vunpack.c.h.b16 %v2822
        %v3049 = vunpack.c.l.b16 %v2823
        %v3050 = vunpack.c.h.b16 %v2823
        %v3051 = vunpack.c.l.b16 %v2824
        %v3052 = vunpack.c.h.b16 %v2824
        %v3053 = vunpack.c.l.b16 %v2825
        %v3054 = vunpack.c.h.b16 %v2825
        %v3055 = vunpack.c.l.b16 %v2826
        %v3056 = vunpack.c.h.b16 %v2826
        %v3057 = vunpack.c.l.b16 %v2827
        %v3058 = vunpack.c.h.b16 %v2827
        %v3059 = vunpack.c.l.b16 %v2828
        %v3060 = vunpack.c.h.b16 %v2828
        %v3061 = vunpack.c.l.b16 %v2829
        %v3062 = vunpack.c.h.b16 %v2829
        %v3063 = vunpack.c.l.b16 %v2830
        %v3064 = vunpack.c.h.b16 %v2830
        %v3065 = vunpack.c.l.b16 %v2831
        %v3066 = vunpack.c.h.b16 %v2831
        %v3067 = vpack.c.b16 %v2941, %v2939
        %v3068 = vpack.c.b16 %v2942, %v2940
        %v3069 = vpack.c.b16 %v2945, %v2943
        %v3070 = vpack.c.b16 %v2946, %v2944
        %v3071 = vpack.c.b16 %v2949, %v2947
        %v3072 = vpack.c.b16 %v2950, %v2948
        %v3073 = vpack.c.b16 %v2953, %v2951
        %v3074 = vpack.c.b16 %v2954, %v2952
        %v3075 = vpack.c.b16 %v2957, %v2955
        %v3076 = vpack.c.b16 %v2958, %v2956
        %v3077 = vpack.c.b16 %v2961, %v2959
        %v3078 = vpack.c.b16 %v2962, %v2960
        %v3079 = vpack.c.b16 %v2965, %v2963
        %v3080 = vpack.c.b16 %v2966, %v2964
        %v3081 = vpack.c.b16 %v2969, %v2967
        %v3082 = vpack.c.b16 %v2970, %v2968
        %v3083 = vpack.c.b16 %v2973, %v2971
        %v3084 = vpack.c.b16 %v2974, %v2972
        %v3085 = vpack.c.b16 %v2977, %v2975
        %v3086 = vpack.c.b16 %v2978, %v2976
        %v3087 = vpack.c.b16 %v2981, %v2979
        %v3088 = vpack.c.b16 %v2982, %v2980
        %v3089 = vpack.c.b16 %v2985, %v2983
        %v3090 = vpack.c.b16 %v2986, %v2984
        %v3091 = vpack.c.b16 %v2989, %v2987
        %v3092 = vpack.c.b16 %v2990, %v2988
        %v3093 = vpack.c.b16 %v2993, %v2991
        %v3094 = vpack.c.b16 %v2994, %v2992
        %v3095 = vpack.c.b16 %v2997, %v2995
        %v3096 = vpack.c.b16 %v2998, %v2996
        %v3097 = vpack.c.b16 %v3001, %v2999
        %v3098 = vpack.c.b16 %v3002, %v3000
        %v3099 = vpack.c.b16 %v3005, %v3003
        %v3100 = vpack.c.b16 %v3006, %v3004
        %v3101 = vpack.c.b16 %v3009, %v3007
        %v3102 = vpack.c.b16 %v3010, %v3008
        %v3103 = vpack.c.b16 %v3013, %v3011
        %v3104 = vpack.c.b16 %v3014, %v3012
        %v3105 = vpack.c.b16 %v3017, %v3015
        %v3106 = vpack.c.b16 %v3018, %v3016
        %v3107 = vpack.c.b16 %v3021, %v3019
        %v3108 = vpack.c.b16 %v3022, %v3020
        %v3109 = vpack.c.b16 %v3025, %v3023
        %v3110 = vpack.c.b16 %v3026, %v3024
        %v3111 = vpack.c.b16 %v3029, %v3027
        %v3112 = vpack.c.b16 %v3030, %v3028
        %v3113 = vpack.c.b16 %v3033, %v3031
        %v3114 = vpack.c.b16 %v3034, %v3032
        %v3115 = vpack.c.b16 %v3037, %v3035
        %v3116 = vpack.c.b16 %v3038, %v3036
        %v3117 = vpack.c.b16 %v3041, %v3039
        %v3118 = vpack.c.b16 %v3042, %v3040
        %v3119 = vpack.c.b16 %v3045, %v3043
        %v3120 = vpack.c.b16 %v3046, %v3044
        %v3121 = vpack.c.b16 %v3049, %v3047
        %v3122 = vpack.c.b16 %v3050, %v3048
        %v3123 = vpack.c.b16 %v3053, %v3051
        %v3124 = vpack.c.b16 %v3054, %v3052
        %v3125 = vpack.c.b16 %v3057, %v3055
        %v3126 = vpack.c.b16 %v3058, %v3056
        %v3127 = vpack.c.b16 %v3061, %v3059
        %v3128 = vpack.c.b16 %v3062, %v3060
        %v3129 = vpack.c.b16 %v3065, %v3063
        %v3130 = vpack.c.b16 %v3066, %v3064
        %3195 = vmatprep.subr.bf16.mxu0 %v3068
        %3196 = vmatpush1.bf16.msra.mxu0 %v3067
        %3197 = vmatprep.subr.bf16.mxu0 %v3070
        %3198 = vmatpush1.bf16.msra.mxu0 %v3069
        %3199 = vmatprep.subr.bf16.mxu0 %v3072
        %3200 = vmatpush1.bf16.msra.mxu0 %v3071
        %3201 = vmatprep.subr.bf16.mxu0 %v3074
        %3202 = vmatpush1.bf16.msra.mxu0 %v3073
        %3203 = vmatprep.subr.bf16.mxu0 %v3076
        %3204 = vmatpush1.bf16.msra.mxu0 %v3075
        %3205 = vmatprep.subr.bf16.mxu0 %v3078
        %3206 = vmatpush1.bf16.msra.mxu0 %v3077
        %3207 = vmatprep.subr.bf16.mxu0 %v3080
        %3208 = vmatpush1.bf16.msra.mxu0 %v3079
        %3209 = vmatprep.subr.bf16.mxu0 %v3082
        %3210 = vmatpush1.bf16.msra.mxu0 %v3081
        %3211 = vmatprep.subr.bf16.mxu0 %v3084
        %3212 = vmatpush1.bf16.msra.mxu0 %v3083
        %3213 = vmatprep.subr.bf16.mxu0 %v3086
        %3214 = vmatpush1.bf16.msra.mxu0 %v3085
        %3215 = vmatprep.subr.bf16.mxu0 %v3088
        %3216 = vmatpush1.bf16.msra.mxu0 %v3087
        %3217 = vmatprep.subr.bf16.mxu0 %v3090
        %3218 = vmatpush1.bf16.msra.mxu0 %v3089
        %3219 = vmatprep.subr.bf16.mxu0 %v3092
        %3220 = vmatpush1.bf16.msra.mxu0 %v3091
        %3221 = vmatprep.subr.bf16.mxu0 %v3094
        %3222 = vmatpush1.bf16.msra.mxu0 %v3093
        %3223 = vmatprep.subr.bf16.mxu0 %v3096
        %3224 = vmatpush1.bf16.msra.mxu0 %v3095
        %3225 = vmatprep.subr.bf16.mxu0 %v3098
        %3226 = vmatpush1.bf16.msra.mxu0 %v3097
        %3227 = vmatprep.mubr.bf16.mxu0 %v2848
        %3228 = vmatmul.mubr.bf16.gmra.mrb[0].mxu0 %v2845
        %v3229 = vpop.f32.mrb[0].mxu0
        %v3230 = vadd.f32 0.0, %v3229
        %v3231 = vpop.f32.mrb[0].mxu0
        %v3232 = vadd.f32 0.0, %v3231
        %v3233 = vpop.f32.mrb[0].mxu0
        %v3234 = vadd.f32 0.0, %v3233
        %v3235 = vpop.f32.mrb[0].mxu0
        %v3236 = vadd.f32 0.0, %v3235
        %3237 = vmatprep.mubr.bf16.mxu0 %v2858
        %3238 = vmatmul.mubr.bf16.gmra.mrb[0].mxu0 %v2856
        %v3239 = vpop.f32.mrb[0].mxu0
        %v3240 = vadd.f32 0.0, %v3239
        %v3241 = vpop.f32.mrb[0].mxu0
        %v3242 = vadd.f32 0.0, %v3241
        %v3243 = vpop.f32.mrb[0].mxu0
        %v3244 = vadd.f32 0.0, %v3243
        %v3245 = vpop.f32.mrb[0].mxu0
        %v3246 = vadd.f32 0.0, %v3245
        %3247 = vmatprep.mubr.bf16.mxu0 %v2857
        %3248 = vmatmul.mubr.bf16.gmra.mrb[0].mxu0 %v2855
        %v3249 = vpop.f32.mrb[0].mxu0
        %v3250 = vadd.f32 0.0, %v3249
        %v3251 = vpop.f32.mrb[0].mxu0
        %v3252 = vadd.f32 0.0, %v3251
        %v3253 = vpop.f32.mrb[0].mxu0
        %v3254 = vpop.f32.mrb[0].mxu0
        %3255 = vdwg.mxu0
        %3256 = vmatprep.subr.bf16.mxu0 %v3100
        %3257 = vmatpush1.bf16.msra.mxu0 %v3099
        %3258 = vmatprep.subr.bf16.mxu0 %v3102
        %3259 = vmatpush1.bf16.msra.mxu0 %v3101
        %3260 = vmatprep.subr.bf16.mxu0 %v3104
        %3261 = vmatpush1.bf16.msra.mxu0 %v3103
        %3262 = vmatprep.subr.bf16.mxu0 %v3106
        %3263 = vmatpush1.bf16.msra.mxu0 %v3105
        %3264 = vmatprep.subr.bf16.mxu0 %v3108
        %3265 = vmatpush1.bf16.msra.mxu0 %v3107
        %3266 = vmatprep.subr.bf16.mxu0 %v3110
        %3267 = vmatpush1.bf16.msra.mxu0 %v3109
        %3268 = vmatprep.subr.bf16.mxu0 %v3112
        %3269 = vmatpush1.bf16.msra.mxu0 %v3111
        %3270 = vmatprep.subr.bf16.mxu0 %v3114
        %3271 = vmatpush1.bf16.msra.mxu0 %v3113
        %3272 = vmatprep.subr.bf16.mxu0 %v3116
        %3273 = vmatpush1.bf16.msra.mxu0 %v3115
        %3274 = vmatprep.subr.bf16.mxu0 %v3118
        %3275 = vmatpush1.bf16.msra.mxu0 %v3117
        %3276 = vmatprep.subr.bf16.mxu0 %v3120
        %3277 = vmatpush1.bf16.msra.mxu0 %v3119
        %3278 = vmatprep.subr.bf16.mxu0 %v3122
        %3279 = vmatpush1.bf16.msra.mxu0 %v3121
        %3280 = vmatprep.subr.bf16.mxu0 %v3124
        %3281 = vmatpush1.bf16.msra.mxu0 %v3123
        %3282 = vmatprep.subr.bf16.mxu0 %v3126
        %3283 = vmatpush1.bf16.msra.mxu0 %v3125
        %3284 = vmatprep.subr.bf16.mxu0 %v3128
        %3285 = vmatpush1.bf16.msra.mxu0 %v3127
        %3286 = vmatprep.subr.bf16.mxu0 %v3130
        %3287 = vmatpush1.bf16.msra.mxu0 %v3129
        %3288 = vmatprep.mubr.bf16.mxu0 %v2854
        %3289 = vmatmul.mubr.bf16.gmra.mrb[0].mxu0 %v2851
        %v3290 = vpop.f32.mrb[0].mxu0
        %v3291 = vadd.f32 %v3230, %v3290
        %v3292 = vpop.f32.mrb[0].mxu0
        %v3293 = vadd.f32 %v3232, %v3292
        %v3294 = vpop.f32.mrb[0].mxu0
        %v3295 = vadd.f32 %v3234, %v3294
        %v3296 = vpop.f32.mrb[0].mxu0
        %v3297 = vadd.f32 %v3236, %v3296
        %3298 = vmatprep.mubr.bf16.mxu0 %v2862
        %3299 = vmatmul.mubr.bf16.gmra.mrb[0].mxu0 %v2860
        %v3300 = vpop.f32.mrb[0].mxu0
        %v3301 = vadd.f32 %v3240, %v3300
        %v3302 = vpop.f32.mrb[0].mxu0
        %v3303 = vadd.f32 %v3242, %v3302
        %v3304 = vpop.f32.mrb[0].mxu0
        %v3305 = vadd.f32 %v3244, %v3304
        %v3306 = vpop.f32.mrb[0].mxu0
        %v3307 = vadd.f32 %v3246, %v3306
        %3308 = vmatprep.mubr.bf16.mxu0 %v2861
        %3309 = vmatmul.mubr.bf16.gmra.mrb[0].mxu0 %v2859
        %v3310 = vpop.f32.mrb[0].mxu0
        %v3311 = vadd.f32 %v3250, %v3310
        %v3312 = vpop.f32.mrb[0].mxu0
        %v3313 = vadd.f32 %v3252, %v3312
        %v3314 = vpop.f32.mrb[0].mxu0
        %v3315 = vpop.f32.mrb[0].mxu0
        %3316 = vdwg.mxu0
        %v3317 = vadd.f32 %v2739, %v3291
        %v3318 = vadd.f32 %v2741, %v3293
        %v3319 = vadd.f32 %v2743, %v3295
        %v3320 = vadd.f32 %v2745, %v3297
        %v3321 = vadd.f32 %v2749, %v3301
        %v3322 = vadd.f32 %v2751, %v3303
        %v3323 = vadd.f32 %v2753, %v3305
        %v3324 = vadd.f32 %v2755, %v3307
        %v3325 = vadd.f32 %v2759, %v3311
        %v3326 = vadd.f32 %v2761, %v3313
        %v3327 = vld [vmem:[%s0 + $0x50] sm:$0x33]
        %v3328 = vld [vmem:[%s0 + $0x58] sm:$0x33]
        %s3329 = scalar_lea.vmem %s1526, 1536 [#allocation2]
        %v3330 = vld [vmem:[%s3329] sm:$0xff]
        %v3331 = vld [vmem:[%s3329 + $0x8] sm:$0xff]
        %v3332 = vld [vmem:[%s3329 + $0x10] sm:$0xff]
        %v3333 = vld [vmem:[%s3329 + $0x18] sm:$0xff]
        %v3334 = vld [vmem:[%s3329 + $0x20] sm:$0xff]
        %v3335 = vld [vmem:[%s3329 + $0x28] sm:$0xff]
        %v3336 = vld [vmem:[%s3329 + $0x30] sm:$0xff]
        %v3337 = vld [vmem:[%s3329 + $0x38] sm:$0xff]
        %v3338 = vld [vmem:[%s3329 + $0x40] sm:$0xff]
        %v3339 = vld [vmem:[%s3329 + $0x48] sm:$0xff]
        %v3340 = vld [vmem:[%s3329 + $0x50] sm:$0xff]
        %v3341 = vld [vmem:[%s3329 + $0x58] sm:$0xff]
        %v3342 = vld [vmem:[%s3329 + $0x60] sm:$0xff]
        %v3343 = vld [vmem:[%s3329 + $0x68] sm:$0xff]
        %v3344 = vld [vmem:[%s3329 + $0x70] sm:$0xff]
        %v3345 = vld [vmem:[%s3329 + $0x78] sm:$0xff]
        %v3346 = vld [vmem:[%s3329 + $0x80] sm:$0xff]
        %v3347 = vld [vmem:[%s3329 + $0x88] sm:$0xff]
        %v3348 = vld [vmem:[%s3329 + $0x90] sm:$0xff]
        %v3349 = vld [vmem:[%s3329 + $0x98] sm:$0xff]
        %v3350 = vld [vmem:[%s3329 + $0xa0] sm:$0xff]
        %v3351 = vld [vmem:[%s3329 + $0xa8] sm:$0xff]
        %v3352 = vld [vmem:[%s3329 + $0xb0] sm:$0xff]
        %v3353 = vld [vmem:[%s3329 + $0xb8] sm:$0xff]
        %v3354 = vld [vmem:[%s3329 + $0xc0] sm:$0xff]
        %v3355 = vld [vmem:[%s3329 + $0xc8] sm:$0xff]
        %v3356 = vld [vmem:[%s3329 + $0xd0] sm:$0xff]
        %v3357 = vld [vmem:[%s3329 + $0xd8] sm:$0xff]
        %v3358 = vld [vmem:[%s3329 + $0xe0] sm:$0xff]
        %v3359 = vld [vmem:[%s3329 + $0xe8] sm:$0xff]
        %v3360 = vld [vmem:[%s3329 + $0xf0] sm:$0xff]
        %v3361 = vld [vmem:[%s3329 + $0xf8] sm:$0xff]
        %v3362 = vld [vmem:[%s3329 + $0x100] sm:$0xff]
        %v3363 = vld [vmem:[%s3329 + $0x108] sm:$0xff]
        %v3364 = vld [vmem:[%s3329 + $0x110] sm:$0xff]
        %v3365 = vld [vmem:[%s3329 + $0x118] sm:$0xff]
        %v3366 = vld [vmem:[%s3329 + $0x120] sm:$0xff]
        %v3367 = vld [vmem:[%s3329 + $0x128] sm:$0xff]
        %v3368 = vld [vmem:[%s3329 + $0x130] sm:$0xff]
        %v3369 = vld [vmem:[%s3329 + $0x138] sm:$0xff]
        %v3370 = vld [vmem:[%s3329 + $0x140] sm:$0xff]
        %v3371 = vld [vmem:[%s3329 + $0x148] sm:$0xff]
        %v3372 = vld [vmem:[%s3329 + $0x150] sm:$0xff]
        %v3373 = vld [vmem:[%s3329 + $0x158] sm:$0xff]
        %v3374 = vld [vmem:[%s3329 + $0x160] sm:$0xff]
        %v3375 = vld [vmem:[%s3329 + $0x168] sm:$0xff]
        %v3376 = vld [vmem:[%s3329 + $0x170] sm:$0xff]
        %v3377 = vld [vmem:[%s3329 + $0x178] sm:$0xff]
        %v3378 = vld [vmem:[%s3329 + $0x180] sm:$0xff]
        %v3379 = vld [vmem:[%s3329 + $0x188] sm:$0xff]
        %v3380 = vld [vmem:[%s3329 + $0x190] sm:$0xff]
        %v3381 = vld [vmem:[%s3329 + $0x198] sm:$0xff]
        %v3382 = vld [vmem:[%s3329 + $0x1a0] sm:$0xff]
        %v3383 = vld [vmem:[%s3329 + $0x1a8] sm:$0xff]
        %v3384 = vld [vmem:[%s3329 + $0x1b0] sm:$0xff]
        %v3385 = vld [vmem:[%s3329 + $0x1b8] sm:$0xff]
        %v3386 = vld [vmem:[%s3329 + $0x1c0] sm:$0xff]
        %v3387 = vld [vmem:[%s3329 + $0x1c8] sm:$0xff]
        %v3388 = vld [vmem:[%s3329 + $0x1d0] sm:$0xff]
        %v3389 = vld [vmem:[%s3329 + $0x1d8] sm:$0xff]
        %v3390 = vld [vmem:[%s3329 + $0x1e0] sm:$0xff]
        %v3391 = vld [vmem:[%s3329 + $0x1e8] sm:$0xff]
        %v3392 = vld [vmem:[%s3329 + $0x1f0] sm:$0xff]
        %v3393 = vld [vmem:[%s3329 + $0x1f8] sm:$0xff]
        %v3396 = vunpack.c.l.b16 %v3327
        %v3397 = vunpack.c.h.b16 %v3327
        %v3398 = vunpack.c.l.b16 %v3328
        %v3399 = vunpack.c.h.b16 %v3328
        %v3400 = vpack.c.b16 %v3396, %v1740
        %v3401 = vpack.c.b16 %v3397, %v1741
        %v3402 = vpack.c.b16 %v3398, %v1742
        %v3403 = vpack.c.b16 %v3399, %v1743
        %vm3404 = vsmask.f32 6400
        %v3406 = vshrl.u32 %v2838, 16
        %v3408 = vrot.slane %v3406, 1
        %v3409 = vshll.u32 %v2838, 16
        %v3411 = vrot.slane %v3409, 2
        %v3412 = vor.u32 %v3408, %v3411
        %v3413 = vrot.slane %v1809, 1
        %v3414 = vrot.slane %v1769, 2
        %v3415 = vor.u32 %v3413, %v3414
        %v3416 = vsel %vm3404, %v3412, %v3415
        %v3418 = vshrl.u32 %v2839, 16
        %v3420 = vrot.slane %v3418, 1
        %v3421 = vshll.u32 %v2839, 16
        %v3423 = vrot.slane %v3421, 2
        %v3424 = vor.u32 %v3420, %v3423
        %v3425 = vrot.slane %v1817, 1
        %v3426 = vrot.slane %v1781, 2
        %v3427 = vor.u32 %v3425, %v3426
        %v3428 = vsel %vm3404, %v3424, %v3427
        %v3430 = vshrl.u32 %v2840, 16
        %v3432 = vrot.slane %v3430, 1
        %v3433 = vshll.u32 %v2840, 16
        %v3435 = vrot.slane %v3433, 2
        %v3436 = vor.u32 %v3432, %v3435
        %v3437 = vrot.slane %v1825, 1
        %v3438 = vrot.slane %v1793, 2
        %v3439 = vor.u32 %v3437, %v3438
        %v3440 = vsel %vm3404, %v3436, %v3439
        %v3442 = vshrl.u32 %v2841, 16
        %v3444 = vrot.slane %v3442, 1
        %v3445 = vshll.u32 %v2841, 16
        %v3447 = vrot.slane %v3445, 2
        %v3448 = vor.u32 %v3444, %v3447
        %v3449 = vrot.slane %v1833, 1
        %v3450 = vrot.slane %v1805, 2
        %v3451 = vor.u32 %v3449, %v3450
        %v3452 = vsel %vm3404, %v3448, %v3451
        %v3454 = vshrl.u32 %v3400, 16
        %v3456 = vrot.slane %v3454, 1
        %v3457 = vshll.u32 %v3400, 16
        %v3459 = vrot.slane %v3457, 2
        %v3460 = vor.u32 %v3456, %v3459
        %v3461 = vsel %vm3404, %v3415, %v3460
        %v3463 = vshrl.u32 %v3401, 16
        %v3465 = vrot.slane %v3463, 1
        %v3466 = vshll.u32 %v3401, 16
        %v3468 = vrot.slane %v3466, 2
        %v3469 = vor.u32 %v3465, %v3468
        %v3470 = vsel %vm3404, %v3427, %v3469
        %v3472 = vshrl.u32 %v3402, 16
        %v3474 = vrot.slane %v3472, 1
        %v3475 = vshll.u32 %v3402, 16
        %v3477 = vrot.slane %v3475, 2
        %v3478 = vor.u32 %v3474, %v3477
        %v3479 = vsel %vm3404, %v3439, %v3478
        %v3481 = vshrl.u32 %v3403, 16
        %v3483 = vrot.slane %v3481, 1
        %v3484 = vshll.u32 %v3403, 16
        %v3486 = vrot.slane %v3484, 2
        %v3487 = vor.u32 %v3483, %v3486
        %v3488 = vsel %vm3404, %v3451, %v3487
        %v3565 = vunpack.c.l.b16 %v3330
        %v3566 = vunpack.c.h.b16 %v3330
        %v3567 = vunpack.c.l.b16 %v3331
        %v3568 = vunpack.c.h.b16 %v3331
        %v3569 = vunpack.c.l.b16 %v3332
        %v3570 = vunpack.c.h.b16 %v3332
        %v3571 = vunpack.c.l.b16 %v3333
        %v3572 = vunpack.c.h.b16 %v3333
        %v3573 = vunpack.c.l.b16 %v3334
        %v3574 = vunpack.c.h.b16 %v3334
        %v3575 = vunpack.c.l.b16 %v3335
        %v3576 = vunpack.c.h.b16 %v3335
        %v3577 = vunpack.c.l.b16 %v3336
        %v3578 = vunpack.c.h.b16 %v3336
        %v3579 = vunpack.c.l.b16 %v3337
        %v3580 = vunpack.c.h.b16 %v3337
        %v3581 = vunpack.c.l.b16 %v3338
        %v3582 = vunpack.c.h.b16 %v3338
        %v3583 = vunpack.c.l.b16 %v3339
        %v3584 = vunpack.c.h.b16 %v3339
        %v3585 = vunpack.c.l.b16 %v3340
        %v3586 = vunpack.c.h.b16 %v3340
        %v3587 = vunpack.c.l.b16 %v3341
        %v3588 = vunpack.c.h.b16 %v3341
        %v3589 = vunpack.c.l.b16 %v3342
        %v3590 = vunpack.c.h.b16 %v3342
        %v3591 = vunpack.c.l.b16 %v3343
        %v3592 = vunpack.c.h.b16 %v3343
        %v3593 = vunpack.c.l.b16 %v3344
        %v3594 = vunpack.c.h.b16 %v3344
        %v3595 = vunpack.c.l.b16 %v3345
        %v3596 = vunpack.c.h.b16 %v3345
        %v3597 = vunpack.c.l.b16 %v3346
        %v3598 = vunpack.c.h.b16 %v3346
        %v3599 = vunpack.c.l.b16 %v3347
        %v3600 = vunpack.c.h.b16 %v3347
        %v3601 = vunpack.c.l.b16 %v3348
        %v3602 = vunpack.c.h.b16 %v3348
        %v3603 = vunpack.c.l.b16 %v3349
        %v3604 = vunpack.c.h.b16 %v3349
        %v3605 = vunpack.c.l.b16 %v3350
        %v3606 = vunpack.c.h.b16 %v3350
        %v3607 = vunpack.c.l.b16 %v3351
        %v3608 = vunpack.c.h.b16 %v3351
        %v3609 = vunpack.c.l.b16 %v3352
        %v3610 = vunpack.c.h.b16 %v3352
        %v3611 = vunpack.c.l.b16 %v3353
        %v3612 = vunpack.c.h.b16 %v3353
        %v3613 = vunpack.c.l.b16 %v3354
        %v3614 = vunpack.c.h.b16 %v3354
        %v3615 = vunpack.c.l.b16 %v3355
        %v3616 = vunpack.c.h.b16 %v3355
        %v3617 = vunpack.c.l.b16 %v3356
        %v3618 = vunpack.c.h.b16 %v3356
        %v3619 = vunpack.c.l.b16 %v3357
        %v3620 = vunpack.c.h.b16 %v3357
        %v3621 = vunpack.c.l.b16 %v3358
        %v3622 = vunpack.c.h.b16 %v3358
        %v3623 = vunpack.c.l.b16 %v3359
        %v3624 = vunpack.c.h.b16 %v3359
        %v3625 = vunpack.c.l.b16 %v3360
        %v3626 = vunpack.c.h.b16 %v3360
        %v3627 = vunpack.c.l.b16 %v3361
        %v3628 = vunpack.c.h.b16 %v3361
        %v3629 = vunpack.c.l.b16 %v3362
        %v3630 = vunpack.c.h.b16 %v3362
        %v3631 = vunpack.c.l.b16 %v3363
        %v3632 = vunpack.c.h.b16 %v3363
        %v3633 = vunpack.c.l.b16 %v3364
        %v3634 = vunpack.c.h.b16 %v3364
        %v3635 = vunpack.c.l.b16 %v3365
        %v3636 = vunpack.c.h.b16 %v3365
        %v3637 = vunpack.c.l.b16 %v3366
        %v3638 = vunpack.c.h.b16 %v3366
        %v3639 = vunpack.c.l.b16 %v3367
        %v3640 = vunpack.c.h.b16 %v3367
        %v3641 = vunpack.c.l.b16 %v3368
        %v3642 = vunpack.c.h.b16 %v3368
        %v3643 = vunpack.c.l.b16 %v3369
        %v3644 = vunpack.c.h.b16 %v3369
        %v3645 = vunpack.c.l.b16 %v3370
        %v3646 = vunpack.c.h.b16 %v3370
        %v3647 = vunpack.c.l.b16 %v3371
        %v3648 = vunpack.c.h.b16 %v3371
        %v3649 = vunpack.c.l.b16 %v3372
        %v3650 = vunpack.c.h.b16 %v3372
        %v3651 = vunpack.c.l.b16 %v3373
        %v3652 = vunpack.c.h.b16 %v3373
        %v3653 = vunpack.c.l.b16 %v3374
        %v3654 = vunpack.c.h.b16 %v3374
        %v3655 = vunpack.c.l.b16 %v3375
        %v3656 = vunpack.c.h.b16 %v3375
        %v3657 = vunpack.c.l.b16 %v3376
        %v3658 = vunpack.c.h.b16 %v3376
        %v3659 = vunpack.c.l.b16 %v3377
        %v3660 = vunpack.c.h.b16 %v3377
        %v3661 = vunpack.c.l.b16 %v3378
        %v3662 = vunpack.c.h.b16 %v3378
        %v3663 = vunpack.c.l.b16 %v3379
        %v3664 = vunpack.c.h.b16 %v3379
        %v3665 = vunpack.c.l.b16 %v3380
        %v3666 = vunpack.c.h.b16 %v3380
        %v3667 = vunpack.c.l.b16 %v3381
        %v3668 = vunpack.c.h.b16 %v3381
        %v3669 = vunpack.c.l.b16 %v3382
        %v3670 = vunpack.c.h.b16 %v3382
        %v3671 = vunpack.c.l.b16 %v3383
        %v3672 = vunpack.c.h.b16 %v3383
        %v3673 = vunpack.c.l.b16 %v3384
        %v3674 = vunpack.c.h.b16 %v3384
        %v3675 = vunpack.c.l.b16 %v3385
        %v3676 = vunpack.c.h.b16 %v3385
        %v3677 = vunpack.c.l.b16 %v3386
        %v3678 = vunpack.c.h.b16 %v3386
        %v3679 = vunpack.c.l.b16 %v3387
        %v3680 = vunpack.c.h.b16 %v3387
        %v3681 = vunpack.c.l.b16 %v3388
        %v3682 = vunpack.c.h.b16 %v3388
        %v3683 = vunpack.c.l.b16 %v3389
        %v3684 = vunpack.c.h.b16 %v3389
        %v3685 = vunpack.c.l.b16 %v3390
        %v3686 = vunpack.c.h.b16 %v3390
        %v3687 = vunpack.c.l.b16 %v3391
        %v3688 = vunpack.c.h.b16 %v3391
        %v3689 = vunpack.c.l.b16 %v3392
        %v3690 = vunpack.c.h.b16 %v3392
        %v3691 = vunpack.c.l.b16 %v3393
        %v3692 = vunpack.c.h.b16 %v3393
        %v3693 = vpack.c.b16 %v3567, %v3565
        %v3694 = vpack.c.b16 %v3568, %v3566
        %v3695 = vpack.c.b16 %v3571, %v3569
        %v3696 = vpack.c.b16 %v3572, %v3570
        %v3697 = vpack.c.b16 %v3575, %v3573
        %v3698 = vpack.c.b16 %v3576, %v3574
        %v3699 = vpack.c.b16 %v3579, %v3577
        %v3700 = vpack.c.b16 %v3580, %v3578
        %v3701 = vpack.c.b16 %v3583, %v3581
        %v3702 = vpack.c.b16 %v3584, %v3582
        %v3703 = vpack.c.b16 %v3587, %v3585
        %v3704 = vpack.c.b16 %v3588, %v3586
        %v3705 = vpack.c.b16 %v3591, %v3589
        %v3706 = vpack.c.b16 %v3592, %v3590
        %v3707 = vpack.c.b16 %v3595, %v3593
        %v3708 = vpack.c.b16 %v3596, %v3594
        %v3709 = vpack.c.b16 %v3599, %v3597
        %v3710 = vpack.c.b16 %v3600, %v3598
        %v3711 = vpack.c.b16 %v3603, %v3601
        %v3712 = vpack.c.b16 %v3604, %v3602
        %v3713 = vpack.c.b16 %v3607, %v3605
        %v3714 = vpack.c.b16 %v3608, %v3606
        %v3715 = vpack.c.b16 %v3611, %v3609
        %v3716 = vpack.c.b16 %v3612, %v3610
        %v3717 = vpack.c.b16 %v3615, %v3613
        %v3718 = vpack.c.b16 %v3616, %v3614
        %v3719 = vpack.c.b16 %v3619, %v3617
        %v3720 = vpack.c.b16 %v3620, %v3618
        %v3721 = vpack.c.b16 %v3623, %v3621
        %v3722 = vpack.c.b16 %v3624, %v3622
        %v3723 = vpack.c.b16 %v3627, %v3625
        %v3724 = vpack.c.b16 %v3628, %v3626
        %v3725 = vpack.c.b16 %v3631, %v3629
        %v3726 = vpack.c.b16 %v3632, %v3630
        %v3727 = vpack.c.b16 %v3635, %v3633
        %v3728 = vpack.c.b16 %v3636, %v3634
        %v3729 = vpack.c.b16 %v3639, %v3637
        %v3730 = vpack.c.b16 %v3640, %v3638
        %v3731 = vpack.c.b16 %v3643, %v3641
        %v3732 = vpack.c.b16 %v3644, %v3642
        %v3733 = vpack.c.b16 %v3647, %v3645
        %v3734 = vpack.c.b16 %v3648, %v3646
        %v3735 = vpack.c.b16 %v3651, %v3649
        %v3736 = vpack.c.b16 %v3652, %v3650
        %v3737 = vpack.c.b16 %v3655, %v3653
        %v3738 = vpack.c.b16 %v3656, %v3654
        %v3739 = vpack.c.b16 %v3659, %v3657
        %v3740 = vpack.c.b16 %v3660, %v3658
        %v3741 = vpack.c.b16 %v3663, %v3661
        %v3742 = vpack.c.b16 %v3664, %v3662
        %v3743 = vpack.c.b16 %v3667, %v3665
        %v3744 = vpack.c.b16 %v3668, %v3666
        %v3745 = vpack.c.b16 %v3671, %v3669
        %v3746 = vpack.c.b16 %v3672, %v3670
        %v3747 = vpack.c.b16 %v3675, %v3673
        %v3748 = vpack.c.b16 %v3676, %v3674
        %v3749 = vpack.c.b16 %v3679, %v3677
        %v3750 = vpack.c.b16 %v3680, %v3678
        %v3751 = vpack.c.b16 %v3683, %v3681
        %v3752 = vpack.c.b16 %v3684, %v3682
        %v3753 = vpack.c.b16 %v3687, %v3685
        %v3754 = vpack.c.b16 %v3688, %v3686
        %v3755 = vpack.c.b16 %v3691, %v3689
        %v3756 = vpack.c.b16 %v3692, %v3690
        %3821 = vmatprep.subr.bf16.mxu0 %v3694
        %3822 = vmatpush1.bf16.msra.mxu0 %v3693
        %3823 = vmatprep.subr.bf16.mxu0 %v3696
        %3824 = vmatpush1.bf16.msra.mxu0 %v3695
        %3825 = vmatprep.subr.bf16.mxu0 %v3698
        %3826 = vmatpush1.bf16.msra.mxu0 %v3697
        %3827 = vmatprep.subr.bf16.mxu0 %v3700
        %3828 = vmatpush1.bf16.msra.mxu0 %v3699
        %3829 = vmatprep.subr.bf16.mxu0 %v3702
        %3830 = vmatpush1.bf16.msra.mxu0 %v3701
        %3831 = vmatprep.subr.bf16.mxu0 %v3704
        %3832 = vmatpush1.bf16.msra.mxu0 %v3703
        %3833 = vmatprep.subr.bf16.mxu0 %v3706
        %3834 = vmatpush1.bf16.msra.mxu0 %v3705
        %3835 = vmatprep.subr.bf16.mxu0 %v3708
        %3836 = vmatpush1.bf16.msra.mxu0 %v3707
        %3837 = vmatprep.subr.bf16.mxu0 %v3710
        %3838 = vmatpush1.bf16.msra.mxu0 %v3709
        %3839 = vmatprep.subr.bf16.mxu0 %v3712
        %3840 = vmatpush1.bf16.msra.mxu0 %v3711
        %3841 = vmatprep.subr.bf16.mxu0 %v3714
        %3842 = vmatpush1.bf16.msra.mxu0 %v3713
        %3843 = vmatprep.subr.bf16.mxu0 %v3716
        %3844 = vmatpush1.bf16.msra.mxu0 %v3715
        %3845 = vmatprep.subr.bf16.mxu0 %v3718
        %3846 = vmatpush1.bf16.msra.mxu0 %v3717
        %3847 = vmatprep.subr.bf16.mxu0 %v3720
        %3848 = vmatpush1.bf16.msra.mxu0 %v3719
        %3849 = vmatprep.subr.bf16.mxu0 %v3722
        %3850 = vmatpush1.bf16.msra.mxu0 %v3721
        %3851 = vmatprep.subr.bf16.mxu0 %v3724
        %3852 = vmatpush1.bf16.msra.mxu0 %v3723
        %3853 = vmatprep.mubr.bf16.mxu0 %v3428
        %3854 = vmatmul.mubr.bf16.gmra.mrb[0].mxu0 %v3416
        %v3855 = vpop.f32.mrb[0].mxu0
        %v3856 = vadd.f32 0.0, %v3855
        %v3857 = vpop.f32.mrb[0].mxu0
        %v3858 = vadd.f32 0.0, %v3857
        %v3859 = vpop.f32.mrb[0].mxu0
        %v3860 = vadd.f32 0.0, %v3859
        %v3861 = vpop.f32.mrb[0].mxu0
        %v3862 = vadd.f32 0.0, %v3861
        %3863 = vmatprep.mubr.bf16.mxu0 %v3470
        %3864 = vmatmul.mubr.bf16.gmra.mrb[0].mxu0 %v3461
        %v3865 = vpop.f32.mrb[0].mxu0
        %v3866 = vadd.f32 0.0, %v3865
        %v3867 = vpop.f32.mrb[0].mxu0
        %v3868 = vadd.f32 0.0, %v3867
        %v3869 = vpop.f32.mrb[0].mxu0
        %v3870 = vadd.f32 0.0, %v3869
        %v3871 = vpop.f32.mrb[0].mxu0
        %v3872 = vadd.f32 0.0, %v3871
        %3873 = vmatprep.mubr.bf16.mxu0 %v3469
        %3874 = vmatmul.mubr.bf16.gmra.mrb[0].mxu0 %v3460
        %v3875 = vpop.f32.mrb[0].mxu0
        %v3876 = vadd.f32 0.0, %v3875
        %v3877 = vpop.f32.mrb[0].mxu0
        %v3878 = vadd.f32 0.0, %v3877
        %v3879 = vpop.f32.mrb[0].mxu0
        %v3880 = vpop.f32.mrb[0].mxu0
        %3881 = vdwg.mxu0
        %3882 = vmatprep.subr.bf16.mxu0 %v3726
        %3883 = vmatpush1.bf16.msra.mxu0 %v3725
        %3884 = vmatprep.subr.bf16.mxu0 %v3728
        %3885 = vmatpush1.bf16.msra.mxu0 %v3727
        %3886 = vmatprep.subr.bf16.mxu0 %v3730
        %3887 = vmatpush1.bf16.msra.mxu0 %v3729
        %3888 = vmatprep.subr.bf16.mxu0 %v3732
        %3889 = vmatpush1.bf16.msra.mxu0 %v3731
        %3890 = vmatprep.subr.bf16.mxu0 %v3734
        %3891 = vmatpush1.bf16.msra.mxu0 %v3733
        %3892 = vmatprep.subr.bf16.mxu0 %v3736
        %3893 = vmatpush1.bf16.msra.mxu0 %v3735
        %3894 = vmatprep.subr.bf16.mxu0 %v3738
        %3895 = vmatpush1.bf16.msra.mxu0 %v3737
        %3896 = vmatprep.subr.bf16.mxu0 %v3740
        %3897 = vmatpush1.bf16.msra.mxu0 %v3739
        %3898 = vmatprep.subr.bf16.mxu0 %v3742
        %3899 = vmatpush1.bf16.msra.mxu0 %v3741
        %3900 = vmatprep.subr.bf16.mxu0 %v3744
        %3901 = vmatpush1.bf16.msra.mxu0 %v3743
        %3902 = vmatprep.subr.bf16.mxu0 %v3746
        %3903 = vmatpush1.bf16.msra.mxu0 %v3745
        %3904 = vmatprep.subr.bf16.mxu0 %v3748
        %3905 = vmatpush1.bf16.msra.mxu0 %v3747
        %3906 = vmatprep.subr.bf16.mxu0 %v3750
        %3907 = vmatpush1.bf16.msra.mxu0 %v3749
        %3908 = vmatprep.subr.bf16.mxu0 %v3752
        %3909 = vmatpush1.bf16.msra.mxu0 %v3751
        %3910 = vmatprep.subr.bf16.mxu0 %v3754
        %3911 = vmatpush1.bf16.msra.mxu0 %v3753
        %3912 = vmatprep.subr.bf16.mxu0 %v3756
        %3913 = vmatpush1.bf16.msra.mxu0 %v3755
        %3914 = vmatprep.mubr.bf16.mxu0 %v3452
        %3915 = vmatmul.mubr.bf16.gmra.mrb[0].mxu0 %v3440
        %v3916 = vpop.f32.mrb[0].mxu0
        %v3917 = vadd.f32 %v3856, %v3916
        %v3918 = vpop.f32.mrb[0].mxu0
        %v3919 = vadd.f32 %v3858, %v3918
        %v3920 = vpop.f32.mrb[0].mxu0
        %v3921 = vadd.f32 %v3860, %v3920
        %v3922 = vpop.f32.mrb[0].mxu0
        %v3923 = vadd.f32 %v3862, %v3922
        %3924 = vmatprep.mubr.bf16.mxu0 %v3488
        %3925 = vmatmul.mubr.bf16.gmra.mrb[0].mxu0 %v3479
        %v3926 = vpop.f32.mrb[0].mxu0
        %v3927 = vadd.f32 %v3866, %v3926
        %v3928 = vpop.f32.mrb[0].mxu0
        %v3929 = vadd.f32 %v3868, %v3928
        %v3930 = vpop.f32.mrb[0].mxu0
        %v3931 = vadd.f32 %v3870, %v3930
        %v3932 = vpop.f32.mrb[0].mxu0
        %v3933 = vadd.f32 %v3872, %v3932
        %3934 = vmatprep.mubr.bf16.mxu0 %v3487
        %3935 = vmatmul.mubr.bf16.gmra.mrb[0].mxu0 %v3478
        %v3936 = vpop.f32.mrb[0].mxu0
        %v3937 = vadd.f32 %v3876, %v3936
        %v3938 = vpop.f32.mrb[0].mxu0
        %v3939 = vadd.f32 %v3878, %v3938
        %v3940 = vpop.f32.mrb[0].mxu0
        %v3941 = vpop.f32.mrb[0].mxu0
        %3942 = vdwg.mxu0
        %v3943 = vadd.f32 %v3317, %v3917
        %v3944 = vadd.f32 %v3318, %v3919
        %v3945 = vadd.f32 %v3319, %v3921
        %v3946 = vadd.f32 %v3320, %v3923
        %v3947 = vadd.f32 %v3321, %v3927
        %v3948 = vadd.f32 %v3322, %v3929
        %v3949 = vadd.f32 %v3323, %v3931
        %v3950 = vadd.f32 %v3324, %v3933
        %v3951 = vadd.f32 %v3325, %v3937
        %v3952 = vadd.f32 %v3326, %v3939
        %v3953 = vld [vmem:[%s0] sm:$0xcc]
        %v3954 = vld [vmem:[%s0 + $0x8] sm:$0xcc]
        %s3955 = scalar_lea.vmem %s1526, 2048 [#allocation2]
        %v3956 = vld [vmem:[%s3955] sm:$0xff]
        %v3957 = vld [vmem:[%s3955 + $0x8] sm:$0xff]
        %v3958 = vld [vmem:[%s3955 + $0x10] sm:$0xff]
        %v3959 = vld [vmem:[%s3955 + $0x18] sm:$0xff]
        %v3960 = vld [vmem:[%s3955 + $0x20] sm:$0xff]
        %v3961 = vld [vmem:[%s3955 + $0x28] sm:$0xff]
        %v3962 = vld [vmem:[%s3955 + $0x30] sm:$0xff]
        %v3963 = vld [vmem:[%s3955 + $0x38] sm:$0xff]
        %v3964 = vld [vmem:[%s3955 + $0x40] sm:$0xff]
        %v3965 = vld [vmem:[%s3955 + $0x48] sm:$0xff]
        %v3966 = vld [vmem:[%s3955 + $0x50] sm:$0xff]
        %v3967 = vld [vmem:[%s3955 + $0x58] sm:$0xff]
        %v3968 = vld [vmem:[%s3955 + $0x60] sm:$0xff]
        %v3969 = vld [vmem:[%s3955 + $0x68] sm:$0xff]
        %v3970 = vld [vmem:[%s3955 + $0x70] sm:$0xff]
        %v3971 = vld [vmem:[%s3955 + $0x78] sm:$0xff]
        %v3972 = vld [vmem:[%s3955 + $0x80] sm:$0xff]
        %v3973 = vld [vmem:[%s3955 + $0x88] sm:$0xff]
        %v3974 = vld [vmem:[%s3955 + $0x90] sm:$0xff]
        %v3975 = vld [vmem:[%s3955 + $0x98] sm:$0xff]
        %v3976 = vld [vmem:[%s3955 + $0xa0] sm:$0xff]
        %v3977 = vld [vmem:[%s3955 + $0xa8] sm:$0xff]
        %v3978 = vld [vmem:[%s3955 + $0xb0] sm:$0xff]
        %v3979 = vld [vmem:[%s3955 + $0xb8] sm:$0xff]
        %v3980 = vld [vmem:[%s3955 + $0xc0] sm:$0xff]
        %v3981 = vld [vmem:[%s3955 + $0xc8] sm:$0xff]
        %v3982 = vld [vmem:[%s3955 + $0xd0] sm:$0xff]
        %v3983 = vld [vmem:[%s3955 + $0xd8] sm:$0xff]
        %v3984 = vld [vmem:[%s3955 + $0xe0] sm:$0xff]
        %v3985 = vld [vmem:[%s3955 + $0xe8] sm:$0xff]
        %v3986 = vld [vmem:[%s3955 + $0xf0] sm:$0xff]
        %v3987 = vld [vmem:[%s3955 + $0xf8] sm:$0xff]
        %v3988 = vld [vmem:[%s3955 + $0x100] sm:$0xff]
        %v3989 = vld [vmem:[%s3955 + $0x108] sm:$0xff]
        %v3990 = vld [vmem:[%s3955 + $0x110] sm:$0xff]
        %v3991 = vld [vmem:[%s3955 + $0x118] sm:$0xff]
        %v3992 = vld [vmem:[%s3955 + $0x120] sm:$0xff]
        %v3993 = vld [vmem:[%s3955 + $0x128] sm:$0xff]
        %v3994 = vld [vmem:[%s3955 + $0x130] sm:$0xff]
        %v3995 = vld [vmem:[%s3955 + $0x138] sm:$0xff]
        %v3996 = vld [vmem:[%s3955 + $0x140] sm:$0xff]
        %v3997 = vld [vmem:[%s3955 + $0x148] sm:$0xff]
        %v3998 = vld [vmem:[%s3955 + $0x150] sm:$0xff]
        %v3999 = vld [vmem:[%s3955 + $0x158] sm:$0xff]
        %v4000 = vld [vmem:[%s3955 + $0x160] sm:$0xff]
        %v4001 = vld [vmem:[%s3955 + $0x168] sm:$0xff]
        %v4002 = vld [vmem:[%s3955 + $0x170] sm:$0xff]
        %v4003 = vld [vmem:[%s3955 + $0x178] sm:$0xff]
        %v4004 = vld [vmem:[%s3955 + $0x180] sm:$0xff]
        %v4005 = vld [vmem:[%s3955 + $0x188] sm:$0xff]
        %v4006 = vld [vmem:[%s3955 + $0x190] sm:$0xff]
        %v4007 = vld [vmem:[%s3955 + $0x198] sm:$0xff]
        %v4008 = vld [vmem:[%s3955 + $0x1a0] sm:$0xff]
        %v4009 = vld [vmem:[%s3955 + $0x1a8] sm:$0xff]
        %v4010 = vld [vmem:[%s3955 + $0x1b0] sm:$0xff]
        %v4011 = vld [vmem:[%s3955 + $0x1b8] sm:$0xff]
        %v4012 = vld [vmem:[%s3955 + $0x1c0] sm:$0xff]
        %v4013 = vld [vmem:[%s3955 + $0x1c8] sm:$0xff]
        %v4014 = vld [vmem:[%s3955 + $0x1d0] sm:$0xff]
        %v4015 = vld [vmem:[%s3955 + $0x1d8] sm:$0xff]
        %v4016 = vld [vmem:[%s3955 + $0x1e0] sm:$0xff]
        %v4017 = vld [vmem:[%s3955 + $0x1e8] sm:$0xff]
        %v4018 = vld [vmem:[%s3955 + $0x1f0] sm:$0xff]
        %v4019 = vld [vmem:[%s3955 + $0x1f8] sm:$0xff]
        %v4022 = vunpack.c.l.b16 %v3953
        %v4023 = vunpack.c.h.b16 %v3953
        %v4024 = vunpack.c.l.b16 %v3954
        %v4025 = vunpack.c.h.b16 %v3954
        %v4026 = vpack.c.b16 %v1728, %v4022
        %v4027 = vpack.c.b16 %v1729, %v4023
        %v4028 = vpack.c.b16 %v1730, %v4024
        %v4029 = vpack.c.b16 %v1731, %v4025
        %vm4030 = vcmask 1045504
        %v4031 = vrot.slane %v4026, 2
        %v4032 = vrot.slane %v1752, 2
        %v4033 = vsel %vm4030, %v4031, %v4032
        %v4034 = vrot.slane %v4027, 2
        %v4035 = vrot.slane %v1753, 2
        %v4036 = vsel %vm4030, %v4034, %v4035
        %v4037 = vrot.slane %v4028, 2
        %v4038 = vrot.slane %v1754, 2
        %v4039 = vsel %vm4030, %v4037, %v4038
        %v4040 = vrot.slane %v4029, 2
        %v4041 = vrot.slane %v1755, 2
        %v4042 = vsel %vm4030, %v4040, %v4041
        %v4043 = vrot.slane %v3400, 2
        %v4044 = vsel %vm4030, %v4032, %v4043
        %v4045 = vrot.slane %v3401, 2
        %v4046 = vsel %vm4030, %v4035, %v4045
        %v4047 = vrot.slane %v3402, 2
        %v4048 = vsel %vm4030, %v4038, %v4047
        %v4049 = vrot.slane %v3403, 2
        %v4050 = vsel %vm4030, %v4041, %v4049
        %v4127 = vunpack.c.l.b16 %v3956
        %v4128 = vunpack.c.h.b16 %v3956
        %v4129 = vunpack.c.l.b16 %v3957
        %v4130 = vunpack.c.h.b16 %v3957
        %v4131 = vunpack.c.l.b16 %v3958
        %v4132 = vunpack.c.h.b16 %v3958
        %v4133 = vunpack.c.l.b16 %v3959
        %v4134 = vunpack.c.h.b16 %v3959
        %v4135 = vunpack.c.l.b16 %v3960
        %v4136 = vunpack.c.h.b16 %v3960
        %v4137 = vunpack.c.l.b16 %v3961
        %v4138 = vunpack.c.h.b16 %v3961
        %v4139 = vunpack.c.l.b16 %v3962
        %v4140 = vunpack.c.h.b16 %v3962
        %v4141 = vunpack.c.l.b16 %v3963
        %v4142 = vunpack.c.h.b16 %v3963
        %v4143 = vunpack.c.l.b16 %v3964
        %v4144 = vunpack.c.h.b16 %v3964
        %v4145 = vunpack.c.l.b16 %v3965
        %v4146 = vunpack.c.h.b16 %v3965
        %v4147 = vunpack.c.l.b16 %v3966
        %v4148 = vunpack.c.h.b16 %v3966
        %v4149 = vunpack.c.l.b16 %v3967
        %v4150 = vunpack.c.h.b16 %v3967
        %v4151 = vunpack.c.l.b16 %v3968
        %v4152 = vunpack.c.h.b16 %v3968
        %v4153 = vunpack.c.l.b16 %v3969
        %v4154 = vunpack.c.h.b16 %v3969
        %v4155 = vunpack.c.l.b16 %v3970
        %v4156 = vunpack.c.h.b16 %v3970
        %v4157 = vunpack.c.l.b16 %v3971
        %v4158 = vunpack.c.h.b16 %v3971
        %v4159 = vunpack.c.l.b16 %v3972
        %v4160 = vunpack.c.h.b16 %v3972
        %v4161 = vunpack.c.l.b16 %v3973
        %v4162 = vunpack.c.h.b16 %v3973
        %v4163 = vunpack.c.l.b16 %v3974
        %v4164 = vunpack.c.h.b16 %v3974
        %v4165 = vunpack.c.l.b16 %v3975
        %v4166 = vunpack.c.h.b16 %v3975
        %v4167 = vunpack.c.l.b16 %v3976
        %v4168 = vunpack.c.h.b16 %v3976
        %v4169 = vunpack.c.l.b16 %v3977
        %v4170 = vunpack.c.h.b16 %v3977
        %v4171 = vunpack.c.l.b16 %v3978
        %v4172 = vunpack.c.h.b16 %v3978
        %v4173 = vunpack.c.l.b16 %v3979
        %v4174 = vunpack.c.h.b16 %v3979
        %v4175 = vunpack.c.l.b16 %v3980
        %v4176 = vunpack.c.h.b16 %v3980
        %v4177 = vunpack.c.l.b16 %v3981
        %v4178 = vunpack.c.h.b16 %v3981
        %v4179 = vunpack.c.l.b16 %v3982
        %v4180 = vunpack.c.h.b16 %v3982
        %v4181 = vunpack.c.l.b16 %v3983
        %v4182 = vunpack.c.h.b16 %v3983
        %v4183 = vunpack.c.l.b16 %v3984
        %v4184 = vunpack.c.h.b16 %v3984
        %v4185 = vunpack.c.l.b16 %v3985
        %v4186 = vunpack.c.h.b16 %v3985
        %v4187 = vunpack.c.l.b16 %v3986
        %v4188 = vunpack.c.h.b16 %v3986
        %v4189 = vunpack.c.l.b16 %v3987
        %v4190 = vunpack.c.h.b16 %v3987
        %v4191 = vunpack.c.l.b16 %v3988
        %v4192 = vunpack.c.h.b16 %v3988
        %v4193 = vunpack.c.l.b16 %v3989
        %v4194 = vunpack.c.h.b16 %v3989
        %v4195 = vunpack.c.l.b16 %v3990
        %v4196 = vunpack.c.h.b16 %v3990
        %v4197 = vunpack.c.l.b16 %v3991
        %v4198 = vunpack.c.h.b16 %v3991
        %v4199 = vunpack.c.l.b16 %v3992
        %v4200 = vunpack.c.h.b16 %v3992
        %v4201 = vunpack.c.l.b16 %v3993
        %v4202 = vunpack.c.h.b16 %v3993
        %v4203 = vunpack.c.l.b16 %v3994
        %v4204 = vunpack.c.h.b16 %v3994
        %v4205 = vunpack.c.l.b16 %v3995
        %v4206 = vunpack.c.h.b16 %v3995
        %v4207 = vunpack.c.l.b16 %v3996
        %v4208 = vunpack.c.h.b16 %v3996
        %v4209 = vunpack.c.l.b16 %v3997
        %v4210 = vunpack.c.h.b16 %v3997
        %v4211 = vunpack.c.l.b16 %v3998
        %v4212 = vunpack.c.h.b16 %v3998
        %v4213 = vunpack.c.l.b16 %v3999
        %v4214 = vunpack.c.h.b16 %v3999
        %v4215 = vunpack.c.l.b16 %v4000
        %v4216 = vunpack.c.h.b16 %v4000
        %v4217 = vunpack.c.l.b16 %v4001
        %v4218 = vunpack.c.h.b16 %v4001
        %v4219 = vunpack.c.l.b16 %v4002
        %v4220 = vunpack.c.h.b16 %v4002
        %v4221 = vunpack.c.l.b16 %v4003
        %v4222 = vunpack.c.h.b16 %v4003
        %v4223 = vunpack.c.l.b16 %v4004
        %v4224 = vunpack.c.h.b16 %v4004
        %v4225 = vunpack.c.l.b16 %v4005
        %v4226 = vunpack.c.h.b16 %v4005
        %v4227 = vunpack.c.l.b16 %v4006
        %v4228 = vunpack.c.h.b16 %v4006
        %v4229 = vunpack.c.l.b16 %v4007
        %v4230 = vunpack.c.h.b16 %v4007
        %v4231 = vunpack.c.l.b16 %v4008
        %v4232 = vunpack.c.h.b16 %v4008
        %v4233 = vunpack.c.l.b16 %v4009
        %v4234 = vunpack.c.h.b16 %v4009
        %v4235 = vunpack.c.l.b16 %v4010
        %v4236 = vunpack.c.h.b16 %v4010
        %v4237 = vunpack.c.l.b16 %v4011
        %v4238 = vunpack.c.h.b16 %v4011
        %v4239 = vunpack.c.l.b16 %v4012
        %v4240 = vunpack.c.h.b16 %v4012
        %v4241 = vunpack.c.l.b16 %v4013
        %v4242 = vunpack.c.h.b16 %v4013
        %v4243 = vunpack.c.l.b16 %v4014
        %v4244 = vunpack.c.h.b16 %v4014
        %v4245 = vunpack.c.l.b16 %v4015
        %v4246 = vunpack.c.h.b16 %v4015
        %v4247 = vunpack.c.l.b16 %v4016
        %v4248 = vunpack.c.h.b16 %v4016
        %v4249 = vunpack.c.l.b16 %v4017
        %v4250 = vunpack.c.h.b16 %v4017
        %v4251 = vunpack.c.l.b16 %v4018
        %v4252 = vunpack.c.h.b16 %v4018
        %v4253 = vunpack.c.l.b16 %v4019
        %v4254 = vunpack.c.h.b16 %v4019
        %v4255 = vpack.c.b16 %v4129, %v4127
        %v4256 = vpack.c.b16 %v4130, %v4128
        %v4257 = vpack.c.b16 %v4133, %v4131
        %v4258 = vpack.c.b16 %v4134, %v4132
        %v4259 = vpack.c.b16 %v4137, %v4135
        %v4260 = vpack.c.b16 %v4138, %v4136
        %v4261 = vpack.c.b16 %v4141, %v4139
        %v4262 = vpack.c.b16 %v4142, %v4140
        %v4263 = vpack.c.b16 %v4145, %v4143
        %v4264 = vpack.c.b16 %v4146, %v4144
        %v4265 = vpack.c.b16 %v4149, %v4147
        %v4266 = vpack.c.b16 %v4150, %v4148
        %v4267 = vpack.c.b16 %v4153, %v4151
        %v4268 = vpack.c.b16 %v4154, %v4152
        %v4269 = vpack.c.b16 %v4157, %v4155
        %v4270 = vpack.c.b16 %v4158, %v4156
        %v4271 = vpack.c.b16 %v4161, %v4159
        %v4272 = vpack.c.b16 %v4162, %v4160
        %v4273 = vpack.c.b16 %v4165, %v4163
        %v4274 = vpack.c.b16 %v4166, %v4164
        %v4275 = vpack.c.b16 %v4169, %v4167
        %v4276 = vpack.c.b16 %v4170, %v4168
        %v4277 = vpack.c.b16 %v4173, %v4171
        %v4278 = vpack.c.b16 %v4174, %v4172
        %v4279 = vpack.c.b16 %v4177, %v4175
        %v4280 = vpack.c.b16 %v4178, %v4176
        %v4281 = vpack.c.b16 %v4181, %v4179
        %v4282 = vpack.c.b16 %v4182, %v4180
        %v4283 = vpack.c.b16 %v4185, %v4183
        %v4284 = vpack.c.b16 %v4186, %v4184
        %v4285 = vpack.c.b16 %v4189, %v4187
        %v4286 = vpack.c.b16 %v4190, %v4188
        %v4287 = vpack.c.b16 %v4193, %v4191
        %v4288 = vpack.c.b16 %v4194, %v4192
        %v4289 = vpack.c.b16 %v4197, %v4195
        %v4290 = vpack.c.b16 %v4198, %v4196
        %v4291 = vpack.c.b16 %v4201, %v4199
        %v4292 = vpack.c.b16 %v4202, %v4200
        %v4293 = vpack.c.b16 %v4205, %v4203
        %v4294 = vpack.c.b16 %v4206, %v4204
        %v4295 = vpack.c.b16 %v4209, %v4207
        %v4296 = vpack.c.b16 %v4210, %v4208
        %v4297 = vpack.c.b16 %v4213, %v4211
        %v4298 = vpack.c.b16 %v4214, %v4212
        %v4299 = vpack.c.b16 %v4217, %v4215
        %v4300 = vpack.c.b16 %v4218, %v4216
        %v4301 = vpack.c.b16 %v4221, %v4219
        %v4302 = vpack.c.b16 %v4222, %v4220
        %v4303 = vpack.c.b16 %v4225, %v4223
        %v4304 = vpack.c.b16 %v4226, %v4224
        %v4305 = vpack.c.b16 %v4229, %v4227
        %v4306 = vpack.c.b16 %v4230, %v4228
        %v4307 = vpack.c.b16 %v4233, %v4231
        %v4308 = vpack.c.b16 %v4234, %v4232
        %v4309 = vpack.c.b16 %v4237, %v4235
        %v4310 = vpack.c.b16 %v4238, %v4236
        %v4311 = vpack.c.b16 %v4241, %v4239
        %v4312 = vpack.c.b16 %v4242, %v4240
        %v4313 = vpack.c.b16 %v4245, %v4243
        %v4314 = vpack.c.b16 %v4246, %v4244
        %v4315 = vpack.c.b16 %v4249, %v4247
        %v4316 = vpack.c.b16 %v4250, %v4248
        %v4317 = vpack.c.b16 %v4253, %v4251
        %v4318 = vpack.c.b16 %v4254, %v4252
        %4383 = vmatprep.subr.bf16.mxu0 %v4256
        %4384 = vmatpush1.bf16.msra.mxu0 %v4255
        %4385 = vmatprep.subr.bf16.mxu0 %v4258
        %4386 = vmatpush1.bf16.msra.mxu0 %v4257
        %4387 = vmatprep.subr.bf16.mxu0 %v4260
        %4388 = vmatpush1.bf16.msra.mxu0 %v4259
        %4389 = vmatprep.subr.bf16.mxu0 %v4262
        %4390 = vmatpush1.bf16.msra.mxu0 %v4261
        %4391 = vmatprep.subr.bf16.mxu0 %v4264
        %4392 = vmatpush1.bf16.msra.mxu0 %v4263
        %4393 = vmatprep.subr.bf16.mxu0 %v4266
        %4394 = vmatpush1.bf16.msra.mxu0 %v4265
        %4395 = vmatprep.subr.bf16.mxu0 %v4268
        %4396 = vmatpush1.bf16.msra.mxu0 %v4267
        %4397 = vmatprep.subr.bf16.mxu0 %v4270
        %4398 = vmatpush1.bf16.msra.mxu0 %v4269
        %4399 = vmatprep.subr.bf16.mxu0 %v4272
        %4400 = vmatpush1.bf16.msra.mxu0 %v4271
        %4401 = vmatprep.subr.bf16.mxu0 %v4274
        %4402 = vmatpush1.bf16.msra.mxu0 %v4273
        %4403 = vmatprep.subr.bf16.mxu0 %v4276
        %4404 = vmatpush1.bf16.msra.mxu0 %v4275
        %4405 = vmatprep.subr.bf16.mxu0 %v4278
        %4406 = vmatpush1.bf16.msra.mxu0 %v4277
        %4407 = vmatprep.subr.bf16.mxu0 %v4280
        %4408 = vmatpush1.bf16.msra.mxu0 %v4279
        %4409 = vmatprep.subr.bf16.mxu0 %v4282
        %4410 = vmatpush1.bf16.msra.mxu0 %v4281
        %4411 = vmatprep.subr.bf16.mxu0 %v4284
        %4412 = vmatpush1.bf16.msra.mxu0 %v4283
        %4413 = vmatprep.subr.bf16.mxu0 %v4286
        %4414 = vmatpush1.bf16.msra.mxu0 %v4285
        %4415 = vmatprep.mubr.bf16.mxu0 %v4036
        %4416 = vmatmul.mubr.bf16.gmra.mrb[0].mxu0 %v4033
        %v4417 = vpop.f32.mrb[0].mxu0
        %v4418 = vadd.f32 0.0, %v4417
        %v4419 = vpop.f32.mrb[0].mxu0
        %v4420 = vadd.f32 0.0, %v4419
        %v4421 = vpop.f32.mrb[0].mxu0
        %v4422 = vadd.f32 0.0, %v4421
        %v4423 = vpop.f32.mrb[0].mxu0
        %v4424 = vadd.f32 0.0, %v4423
        %4425 = vmatprep.mubr.bf16.mxu0 %v4046
        %4426 = vmatmul.mubr.bf16.gmra.mrb[0].mxu0 %v4044
        %v4427 = vpop.f32.mrb[0].mxu0
        %v4428 = vadd.f32 0.0, %v4427
        %v4429 = vpop.f32.mrb[0].mxu0
        %v4430 = vadd.f32 0.0, %v4429
        %v4431 = vpop.f32.mrb[0].mxu0
        %v4432 = vadd.f32 0.0, %v4431
        %v4433 = vpop.f32.mrb[0].mxu0
        %v4434 = vadd.f32 0.0, %v4433
        %4435 = vmatprep.mubr.bf16.mxu0 %v4045
        %4436 = vmatmul.mubr.bf16.gmra.mrb[0].mxu0 %v4043
        %v4437 = vpop.f32.mrb[0].mxu0
        %v4438 = vadd.f32 0.0, %v4437
        %v4439 = vpop.f32.mrb[0].mxu0
        %v4440 = vadd.f32 0.0, %v4439
        %v4441 = vpop.f32.mrb[0].mxu0
        %v4442 = vpop.f32.mrb[0].mxu0
        %4443 = vdwg.mxu0
        %4444 = vmatprep.subr.bf16.mxu0 %v4288
        %4445 = vmatpush1.bf16.msra.mxu0 %v4287
        %4446 = vmatprep.subr.bf16.mxu0 %v4290
        %4447 = vmatpush1.bf16.msra.mxu0 %v4289
        %4448 = vmatprep.subr.bf16.mxu0 %v4292
        %4449 = vmatpush1.bf16.msra.mxu0 %v4291
        %4450 = vmatprep.subr.bf16.mxu0 %v4294
        %4451 = vmatpush1.bf16.msra.mxu0 %v4293
        %4452 = vmatprep.subr.bf16.mxu0 %v4296
        %4453 = vmatpush1.bf16.msra.mxu0 %v4295
        %4454 = vmatprep.subr.bf16.mxu0 %v4298
        %4455 = vmatpush1.bf16.msra.mxu0 %v4297
        %4456 = vmatprep.subr.bf16.mxu0 %v4300
        %4457 = vmatpush1.bf16.msra.mxu0 %v4299
        %4458 = vmatprep.subr.bf16.mxu0 %v4302
        %4459 = vmatpush1.bf16.msra.mxu0 %v4301
        %4460 = vmatprep.subr.bf16.mxu0 %v4304
        %4461 = vmatpush1.bf16.msra.mxu0 %v4303
        %4462 = vmatprep.subr.bf16.mxu0 %v4306
        %4463 = vmatpush1.bf16.msra.mxu0 %v4305
        %4464 = vmatprep.subr.bf16.mxu0 %v4308
        %4465 = vmatpush1.bf16.msra.mxu0 %v4307
        %4466 = vmatprep.subr.bf16.mxu0 %v4310
        %4467 = vmatpush1.bf16.msra.mxu0 %v4309
        %4468 = vmatprep.subr.bf16.mxu0 %v4312
        %4469 = vmatpush1.bf16.msra.mxu0 %v4311
        %4470 = vmatprep.subr.bf16.mxu0 %v4314
        %4471 = vmatpush1.bf16.msra.mxu0 %v4313
        %4472 = vmatprep.subr.bf16.mxu0 %v4316
        %4473 = vmatpush1.bf16.msra.mxu0 %v4315
        %4474 = vmatprep.subr.bf16.mxu0 %v4318
        %4475 = vmatpush1.bf16.msra.mxu0 %v4317
        %4476 = vmatprep.mubr.bf16.mxu0 %v4042
        %4477 = vmatmul.mubr.bf16.gmra.mrb[0].mxu0 %v4039
        %v4478 = vpop.f32.mrb[0].mxu0
        %v4479 = vadd.f32 %v4418, %v4478
        %v4480 = vpop.f32.mrb[0].mxu0
        %v4481 = vadd.f32 %v4420, %v4480
        %v4482 = vpop.f32.mrb[0].mxu0
        %v4483 = vadd.f32 %v4422, %v4482
        %v4484 = vpop.f32.mrb[0].mxu0
        %v4485 = vadd.f32 %v4424, %v4484
        %4486 = vmatprep.mubr.bf16.mxu0 %v4050
        %4487 = vmatmul.mubr.bf16.gmra.mrb[0].mxu0 %v4048
        %v4488 = vpop.f32.mrb[0].mxu0
        %v4489 = vadd.f32 %v4428, %v4488
        %v4490 = vpop.f32.mrb[0].mxu0
        %v4491 = vadd.f32 %v4430, %v4490
        %v4492 = vpop.f32.mrb[0].mxu0
        %v4493 = vadd.f32 %v4432, %v4492
        %v4494 = vpop.f32.mrb[0].mxu0
        %v4495 = vadd.f32 %v4434, %v4494
        %4496 = vmatprep.mubr.bf16.mxu0 %v4049
        %4497 = vmatmul.mubr.bf16.gmra.mrb[0].mxu0 %v4047
        %v4498 = vpop.f32.mrb[0].mxu0
        %v4499 = vadd.f32 %v4438, %v4498
        %v4500 = vpop.f32.mrb[0].mxu0
        %v4501 = vadd.f32 %v4440, %v4500
        %v4502 = vpop.f32.mrb[0].mxu0
        %v4503 = vpop.f32.mrb[0].mxu0
        %4504 = vdwg.mxu0
        %v4505 = vadd.f32 %v3943, %v4479
        %v4506 = vadd.f32 %v3944, %v4481
        %v4507 = vadd.f32 %v3945, %v4483
        %v4508 = vadd.f32 %v3946, %v4485
        %v4509 = vadd.f32 %v3947, %v4489
        %v4510 = vadd.f32 %v3948, %v4491
        %v4511 = vadd.f32 %v3949, %v4493
        %v4512 = vadd.f32 %v3950, %v4495
        %v4513 = vadd.f32 %v3951, %v4499
        %v4514 = vadd.f32 %v3952, %v4501
        %v4515 = vld [vmem:[%s4] sm:$0xff]
        %v4516 = vld [vmem:[%s4 + $0x8] sm:$0xff]
        %v4517 = vld [vmem:[%s4 + $0x10] sm:$0xff]
        %v4518 = vld [vmem:[%s4 + $0x18] sm:$0xff]
        %v4519 = vld [vmem:[%s4 + $0x20] sm:$0xff]
        %4521 = vset.pattern.permute.xlu0 0
        %4522 = vperm.xlu0 %4521, %v4515
        %v4523 = vpop.permute.xlu0 %4522
        %4526 = vset.pattern.permute.xlu0 0
        %4527 = vperm.xlu0 %4526, %v4516
        %v4528 = vpop.permute.xlu0 %4527
        %4531 = vset.pattern.permute.xlu0 0
        %4532 = vperm.xlu0 %4531, %v4517
        %v4533 = vpop.permute.xlu0 %4532
        %4536 = vset.pattern.permute.xlu0 0
        %4537 = vperm.xlu0 %4536, %v4518
        %v4538 = vpop.permute.xlu0 %4537
        %4541 = vset.pattern.permute.xlu0 0
        %4542 = vperm.xlu0 %4541, %v4519
        %v4543 = vpop.permute.xlu0 %4542
        %v4545 = vmul.f32 %v4505, %v4523
        %v4546 = vmul.f32 %v4506, %v4523
        %v4547 = vmul.f32 %v4507, %v4528
        %v4548 = vmul.f32 %v4508, %v4528
        %v4549 = vmul.f32 %v4509, %v4533
        %v4550 = vmul.f32 %v4510, %v4533
        %v4551 = vmul.f32 %v4511, %v4538
        %v4552 = vmul.f32 %v4512, %v4538
        %v4553 = vmul.f32 %v4513, %v4543
        %v4554 = vmul.f32 %v4514, %v4543
        %v4555 = vadd.f32 %v4545, %v4547
        %v4556 = vadd.f32 %v4555, %v4549
        %v4557 = vadd.f32 %v4556, %v4551
        %v4558 = vadd.f32 %v4557, %v4553
        %v4559 = vrot.slane %v4558, 4
        %v4560 = vadd.f32 %v4558, %v4559
        %v4561 = vrot.slane %v4560, 2
        %v4562 = vadd.f32 %v4560, %v4561
        %v4563 = vrot.slane %v4562, 1
        %v4564 = vadd.f32 %v4562, %v4563
        %v4565 = vadd.f32 %v4546, %v4548
        %v4566 = vadd.f32 %v4565, %v4550
        %v4567 = vadd.f32 %v4566, %v4552
        %v4568 = vadd.f32 %v4567, %v4554
        %v4569 = vrot.slane %v4568, 4
        %v4570 = vadd.f32 %v4568, %v4569
        %v4571 = vrot.slane %v4570, 2
        %v4572 = vadd.f32 %v4570, %v4571
        %v4573 = vrot.slane %v4572, 1
        %v4574 = vadd.f32 %v4572, %v4573
        %v4575 = vmul.f32 %v4564, 0.03125
        %v4576 = vmul.f32 %v4574, 0.03125
        %v4577 = vmul.f32 %v4545, %v4545
        %v4578 = vmul.f32 %v4546, %v4546
        %v4579 = vmul.f32 %v4547, %v4547
        %v4580 = vmul.f32 %v4548, %v4548
        %v4581 = vmul.f32 %v4549, %v4549
        %v4582 = vmul.f32 %v4550, %v4550
        %v4583 = vmul.f32 %v4551, %v4551
        %v4584 = vmul.f32 %v4552, %v4552
        %v4585 = vmul.f32 %v4553, %v4553
        %v4586 = vmul.f32 %v4554, %v4554
        %v4587 = vadd.f32 %v4577, %v4579
        %v4588 = vadd.f32 %v4587, %v4581
        %v4589 = vadd.f32 %v4588, %v4583
        %v4590 = vadd.f32 %v4589, %v4585
        %v4591 = vrot.slane %v4590, 4
        %v4592 = vadd.f32 %v4590, %v4591
        %v4593 = vrot.slane %v4592, 2
        %v4594 = vadd.f32 %v4592, %v4593
        %v4595 = vrot.slane %v4594, 1
        %v4596 = vadd.f32 %v4594, %v4595
        %v4597 = vadd.f32 %v4578, %v4580
        %v4598 = vadd.f32 %v4597, %v4582
        %v4599 = vadd.f32 %v4598, %v4584
        %v4600 = vadd.f32 %v4599, %v4586
        %v4601 = vrot.slane %v4600, 4
        %v4602 = vadd.f32 %v4600, %v4601
        %v4603 = vrot.slane %v4602, 2
        %v4604 = vadd.f32 %v4602, %v4603
        %v4605 = vrot.slane %v4604, 1
        %v4606 = vadd.f32 %v4604, %v4605
        %v4607 = vmul.f32 %v4596, 0.03125
        %v4608 = vmul.f32 %v4606, 0.03125
        %v4609 = vmul.f32 %v4575, %v4575
        %v4610 = vmul.f32 %v4576, %v4576
        %v4611 = vsub.f32 %v4607, %v4609
        %v4612 = vsub.f32 %v4608, %v4610
        %v4613 = vld [vmem:[%s1562] sm:$0x3]
        %v4614 = vadd.f32 %v4611, 1e-05
        %v4615 = vadd.f32 %v4612, 1e-05
        %v4616 = vrsqrt.pop %v4614
        %v4617 = vrsqrt.pop %v4615
        %v4620 = vcombine.low %v4616, %v4617
        %v4622 = vunpack.c.l.s4 1966171168
        %v4623 = vunpack.c.0.s8 %v4622
        %v4624 = vlaneseq
        %v4625 = vshrl.u32 %v4624, 7
        %v4626 = vsub.s32 %v4623, %v4625
        %v4627 = vrot.slane %v4620, %v4626
        %v4629 = vunpack.c.l.s4 1966171168
        %v4630 = vunpack.c.0.s8 %v4629
        %v4631 = vlaneseq
        %v4632 = vshrl.u32 %v4631, 7
        %v4633 = vsub.s32 %v4630, %v4632
        %v4634 = vrot.slane %v4627, %v4633
        %v4636 = vmul.f32 %v4613, %v4634
        %v4637 = vld [vmem:[%s1567] sm:$0x3]
        %v4639 = vlaneseq
        %v4640 = vshrl.u32 %v4639, 7
        %v4641 = vsub.s32 0, %v4640
        %v4642 = vrot.slane %v4636, %v4641
        %v4643 = vlaneseq
        %v4644 = vshrl.u32 %v4643, 7
        %v4645 = vsub.s32 1, %v4644
        %v4646 = vrot.slane %v4636, %v4645
        %v4649 = vmul.f32 %v4575, %v4642
        %v4650 = vmul.f32 %v4576, %v4646
        %v4653 = vcombine.low %v4649, %v4650
        %v4655 = vunpack.c.l.s4 1966171168
        %v4656 = vunpack.c.0.s8 %v4655
        %v4657 = vlaneseq
        %v4658 = vshrl.u32 %v4657, 7
        %v4659 = vsub.s32 %v4656, %v4658
        %v4660 = vrot.slane %v4653, %v4659
        %v4662 = vunpack.c.l.s4 1966171168
        %v4663 = vunpack.c.0.s8 %v4662
        %v4664 = vlaneseq
        %v4665 = vshrl.u32 %v4664, 7
        %v4666 = vsub.s32 %v4663, %v4665
        %v4667 = vrot.slane %v4660, %v4666
        %v4669 = vsub.f32 %v4637, %v4667
        %v4670 = vmul.f32 %v4545, %v4642
        %v4671 = vmul.f32 %v4546, %v4646
        %v4672 = vmul.f32 %v4547, %v4642
        %v4673 = vmul.f32 %v4548, %v4646
        %v4674 = vmul.f32 %v4549, %v4642
        %v4675 = vmul.f32 %v4550, %v4646
        %v4676 = vmul.f32 %v4551, %v4642
        %v4677 = vmul.f32 %v4552, %v4646
        %v4678 = vmul.f32 %v4553, %v4642
        %v4679 = vmul.f32 %v4554, %v4646
        %v4681 = vlaneseq
        %v4682 = vshrl.u32 %v4681, 7
        %v4683 = vsub.s32 0, %v4682
        %v4684 = vrot.slane %v4669, %v4683
        %v4685 = vlaneseq
        %v4686 = vshrl.u32 %v4685, 7
        %v4687 = vsub.s32 1, %v4686
        %v4688 = vrot.slane %v4669, %v4687
        %v4691 = vadd.f32 %v4670, %v4684
        %v4692 = vadd.f32 %v4671, %v4688
        %v4693 = vadd.f32 %v4672, %v4684
        %v4694 = vadd.f32 %v4673, %v4688
        %v4695 = vadd.f32 %v4674, %v4684
        %v4696 = vadd.f32 %v4675, %v4688
        %v4697 = vadd.f32 %v4676, %v4684
        %v4698 = vadd.f32 %v4677, %v4688
        %v4699 = vadd.f32 %v4678, %v4684
        %v4700 = vadd.f32 %v4679, %v4688
        %v4701 = vtanh.pop %v4691
        %v4702 = vtanh.pop %v4692
        %v4703 = vtanh.pop %v4693
        %v4704 = vtanh.pop %v4694
        %v4705 = vtanh.pop %v4695
        %v4706 = vtanh.pop %v4696
        %v4707 = vtanh.pop %v4697
        %v4708 = vtanh.pop %v4698
        %v4709 = vtanh.pop %v4699
        %v4710 = vtanh.pop %v4700
        %v4711 = vmul.f32 %v4701, %v4523
        %v4712 = vmul.f32 %v4702, %v4523
        %v4713 = vmul.f32 %v4703, %v4528
        %v4714 = vmul.f32 %v4704, %v4528
        %v4715 = vmul.f32 %v4705, %v4533
        %v4716 = vmul.f32 %v4706, %v4533
        %v4717 = vmul.f32 %v4707, %v4538
        %v4718 = vmul.f32 %v4708, %v4538
        %v4719 = vmul.f32 %v4709, %v4543
        %v4720 = vmul.f32 %v4710, %v4543
        %4721 = vst [vmem:[%s1557] sm:$0x11] 0
        %v4722 = vpack.c.bf16 %v4713, %v4711
        %v4723 = vpack.c.bf16 %v4714, %v4712
        %v4724 = vpack.c.bf16 %v4717, %v4715
        %v4725 = vpack.c.bf16 %v4718, %v4716
        %v4726 = vpack.c.bf16 %v4719, %v4719
        %v4727 = vpack.c.bf16 %v4720, %v4720
        %v4734 = vunpack.c.l.b16 %v4722
        %v4735 = vunpack.c.l.b16 %v4723
        %v4736 = vunpack.c.h.b16 %v4722
        %v4737 = vunpack.c.h.b16 %v4723
        %v4738 = vunpack.c.l.b16 %v4724
        %v4739 = vunpack.c.l.b16 %v4725
        %v4740 = vunpack.c.h.b16 %v4724
        %v4741 = vunpack.c.h.b16 %v4725
        %v4742 = vunpack.c.l.b16 %v4726
        %v4743 = vunpack.c.l.b16 %v4727
        %v4744 = vpack.c.b16 %v4735, %v4734
        %v4745 = vpack.c.b16 %v4737, %v4736
        %v4746 = vpack.c.b16 %v4739, %v4738
        %v4747 = vpack.c.b16 %v4741, %v4740
        %v4748 = vpack.c.b16 %v4743, %v4742
        %vm4749 = vcmask 1040384
        %vm4750 = vcmask 1044484
        %vm4751 = vmor %vm4749, %vm4750
        %v4752 = vrot.slane %v4744, 7
        %v4753 = vrot.slane %v4752, 4
        %v4754 = vrot.slane %v4745, 7
        %v4755 = vsel %vm4751, %v4753, %v4754
        %v4756 = vrot.slane %v4754, 4
        %v4757 = vrot.slane %v4746, 7
        %v4758 = vsel %vm4751, %v4756, %v4757
        %v4759 = vrot.slane %v4757, 4
        %v4760 = vrot.slane %v4747, 7
        %v4761 = vsel %vm4751, %v4759, %v4760
        %v4762 = vrot.slane %v4760, 4
        %v4763 = vrot.slane %v4748, 7
        %v4764 = vsel %vm4751, %v4762, %v4763
        %v4765 = vrot.slane %v4763, 4
        %4772 = vst [vmem:[%s1557] sm:$0xee] %v4752
        %4773 = vst [vmem:[%s1557 + $0x8] sm:$0xff] %v4755
        %4774 = vst [vmem:[%s1557 + $0x10] sm:$0xff] %v4758
        %4775 = vst [vmem:[%s1557 + $0x18] sm:$0xff] %v4761
        %4776 = vst [vmem:[%s1557 + $0x20] sm:$0xff] %v4764
        %4777 = vst [vmem:[%s1557 + $0x28] sm:$0x11] %v4765
        %4778 = vst [vmem:[%s1557 + $0x28] sm:$0x22] 0
        %s4779 = sand.u32 %s144, 1
        %s4780 = sand.u32 %s144, 1
        %s4781 = smul.addr %s4780, 48
        %s4782 = scalar_lea.vmem [#allocation3], %s4781
        // Predicated region
        $region79: #{_lambda_.6} parent=73 // pred_check
          %p4783 = pneg %p154
        $region80: #{_lambda_.6} parent=73 // pred_check_branch
          %4785 = sbr.rel (%p4783) target = $region82
        $region81: #{_lambda_.6} parent=73 // pred_region
          %s4786 = smul.u32 2, %s16
          %s4787 = smul.addr %s4786, 4
          %s4788 = scalar_lea.vmem %s5, %s4787
          // Predicated region
          $region83: #{_lambda_.6} parent=81 // pred_check
            _
          $region84: #{_lambda_.6} parent=81 // pred_check_branch
            %4790 = sbr.rel (0) target = $region86
          $region85: #{_lambda_.6} parent=81 // pred_region
            // Predicated region
            $region87: #{_lambda_.6} parent=85 // pred_check
              _
            $region88: #{_lambda_.6} parent=85 // pred_check_branch
              %4792 = sbr.rel (0) target = $region90
            $region89: #{_lambda_.6} parent=85 // pred_region
              // Predicated region
              $region102: #{_lambda_.6} parent=89 // pred_check
                _
              $region103: #{_lambda_.6} parent=89 // pred_check_branch
                %4817 = sbr.rel (0) target = $region105
              $region104: #{_lambda_.6} parent=89 // pred_region
                loop: start=0, step=1, limit=1
                $region106: #{_lambda_.6} parent=104 // loop_pre_header
                  _
                $region107: #{_lambda_.6} parent=104 // loop_header
                  %s4819 = sphi 0, %s4823
                  %p4820 = scmp.ge.s32.totalorder %s4819, 1
                  %s4824 = sphi %s4782, %s4782
                  %s4825 = sphi %s4788, %s4788
                $region108: #{_lambda_.6} parent=104 // loop_header_branch
                  %4822 = sbr.rel (%p4820) target = $region112
                $region109: #{_lambda_.6} parent=104 // loop_body
                  %v4826 = vld [vmem:[%s4824] sm:$0xff]
                  %4827 = vst [vmem:[%s4825] sm:$0xff] %v4826
                  %v4828 = vld [vmem:[%s4824 + $0x8] sm:$0xff]
                  %4829 = vst [vmem:[%s4825 + $0x10] sm:$0xff] %v4828
                  %v4830 = vld [vmem:[%s4824 + $0x10] sm:$0xff]
                  %4831 = vst [vmem:[%s4825 + $0x20] sm:$0xff] %v4830
                  %v4832 = vld [vmem:[%s4824 + $0x18] sm:$0xff]
                  %4833 = vst [vmem:[%s4825 + $0x30] sm:$0xff] %v4832
                  %v4834 = vld [vmem:[%s4824 + $0x20] sm:$0xff]
                  %4835 = vst [vmem:[%s4825 + $0x40] sm:$0xff] %v4834
                  %v4836 = vld [vmem:[%s4824 + $0x28] sm:$0xff]
                  %4837 = vst [vmem:[%s4825 + $0x50] sm:$0xff] %v4836
                $region110: #{_lambda_.6} parent=104 // loop_footer
                  %s4823 = sadd.s32 1, %s4819
                $region111: #{_lambda_.6} parent=104 // loop_footer_branch
                  %4818 = sbr.rel target = $region107
                $region112: #{_lambda_.6} parent=104 // loop_exit
                  _
              $region105: #{_lambda_.6} parent=89 // pred_fallthru
                _
              // Predicated region
              $region113: #{_lambda_.6} parent=89 // pred_check
                _
              $region114: #{_lambda_.6} parent=89 // pred_check_branch
                %4839 = sbr.rel target = $region116
              $region115: #{_lambda_.6} parent=89 // pred_region
                _
              $region116: #{_lambda_.6} parent=89 // pred_fallthru
                _
            $region90: #{_lambda_.6} parent=85 // pred_fallthru
              _
            // Predicated region
            $region91: #{_lambda_.6} parent=85 // pred_check
              _
            $region92: #{_lambda_.6} parent=85 // pred_check_branch
              %4794 = sbr.rel target = $region94
            $region93: #{_lambda_.6} parent=85 // pred_region
              loop: start=0, step=1, limit=1
              $region95: #{_lambda_.6} parent=93 // loop_pre_header
                _
              $region96: #{_lambda_.6} parent=93 // loop_header
                %s4797 = sphi 0, %s4801
                %p4798 = scmp.ge.s32.totalorder %s4797, 1
                %s4802 = sphi %s4782, %s4782
                %s4803 = sphi %s4788, %s4788
              $region97: #{_lambda_.6} parent=93 // loop_header_branch
                %4800 = sbr.rel (%p4798) target = $region101
              $region98: #{_lambda_.6} parent=93 // loop_body
                %v4804 = vld [vmem:[%s4802] sm:$0xff]
                %4805 = vst [vmem:[%s4803] sm:$0xff] %v4804
                %v4806 = vld [vmem:[%s4802 + $0x8] sm:$0xff]
                %4807 = vst [vmem:[%s4803 + $0x10] sm:$0xff] %v4806
                %v4808 = vld [vmem:[%s4802 + $0x10] sm:$0xff]
                %4809 = vst [vmem:[%s4803 + $0x20] sm:$0xff] %v4808
                %v4810 = vld [vmem:[%s4802 + $0x18] sm:$0xff]
                %4811 = vst [vmem:[%s4803 + $0x30] sm:$0xff] %v4810
                %v4812 = vld [vmem:[%s4802 + $0x20] sm:$0xff]
                %4813 = vst [vmem:[%s4803 + $0x40] sm:$0xff] %v4812
                %v4814 = vld [vmem:[%s4802 + $0x28] sm:$0xff]
                %4815 = vst [vmem:[%s4803 + $0x50] sm:$0xff] %v4814
              $region99: #{_lambda_.6} parent=93 // loop_footer
                %s4801 = sadd.s32 1, %s4797
              $region100: #{_lambda_.6} parent=93 // loop_footer_branch
                %4796 = sbr.rel target = $region96
              $region101: #{_lambda_.6} parent=93 // loop_exit
                _
            $region94: #{_lambda_.6} parent=85 // pred_fallthru
              _
          $region86: #{_lambda_.6} parent=81 // pred_fallthru
            _
          %4840 = vnop
        $region82: #{_lambda_.6} parent=73 // pred_fallthru
          _
      $region74: #{_lambda_.6} parent=5 // pred_fallthru
        _
      %p4841 = scmp.le.s32.totalorder 2, %s11
      // Predicated region
      $region117: #{_lambda_.6} parent=5 // pred_check
        %p4842 = pneg %p4841
      $region118: #{_lambda_.6} parent=5 // pred_check_branch
        %4844 = sbr.rel (%p4842) target = $region120
      $region119: #{_lambda_.6} parent=5 // pred_region
        %s4845 = ssub.s32 %s11, 2
        // Predicated region
        $region121: #{_lambda_.6} parent=119 // pred_check
          %p4846 = pneg %p160
        $region122: #{_lambda_.6} parent=119 // pred_check_branch
          %4848 = sbr.rel (%p4846) target = $region124
        $region123: #{_lambda_.6} parent=119 // pred_region
          %s4849 = sand.u32 %s145, 1
          %s4850 = sand.u32 %s145, 1
          %s4851 = smul.addr %s4850, 48
          %s4852 = scalar_lea.vmem [#allocation3], %s4851
        $region124: #{_lambda_.6} parent=119 // pred_fallthru
          _
      $region120: #{_lambda_.6} parent=5 // pred_fallthru
        _
    $region6: #{_lambda_.6} parent=1 // loop_footer
      %s15 = sadd.s32 1, %s11
    $region7: #{_lambda_.6} parent=1 // loop_footer_branch
      %10 = sbr.rel target = $region3
    $region8: #{_lambda_.6} parent=1 // loop_exit
      _

// kernel: _lambda_.9
$region0: #{_lambda_.9}
  #allocation0 [shape = 'u32[]', space=smem, size = 0x4, offset = 0x4, fixed_abs, tag = 'smem constant byte address 0x4 - core index']
  #allocation1 [shape = 'u32[144,128]{1,0:T(1,128)}', space=vmem, size = 0x12000, scoped, tag = 'internal scratch']
  %s0 = inlined_call_operand.vmem [shape: bf16[44,512], index: 0, kind: input, shape index: {}]
  %s1 = inlined_call_operand.vmem [shape: bf16[5,512,128], index: 1, kind: input, shape index: {}]
  %s2 = inlined_call_operand.vmem [shape: f32[1,128], index: 2, kind: input, shape index: {}]
  %s3 = inlined_call_operand.vmem [shape: f32[1,128], index: 3, kind: input, shape index: {}]
  %s4 = inlined_call_operand.vmem [shape: f32[40,1], index: 4, kind: input, shape index: {}]
  %s5 = inlined_call_operand.vmem [shape: f32[44,128], index: 5, kind: output, shape index: {}]
  %s6 = sld [smem:[#allocation0]]
  $region30: #{_lambda_.9} parent=0
    _
  %s8 = ssub.s32 1, %s6
  %s9 = scalar_select 0, %s8, %s6
  // Predicated region
  $region2: #{_lambda_.9} parent=0 // pred_check
    _
  $region3: #{_lambda_.9} parent=0 // pred_check_branch
    %11 = sbr.rel (0) target = $region5
  $region4: #{_lambda_.9} parent=0 // pred_region
    _
  $region5: #{_lambda_.9} parent=0 // pred_fallthru
    _
  // Predicated region
  $region6: #{_lambda_.9} parent=0 // pred_check
    _
  $region7: #{_lambda_.9} parent=0 // pred_check_branch
    %13 = sbr.rel (0) target = $region9
  $region8: #{_lambda_.9} parent=0 // pred_region
    _
  $region9: #{_lambda_.9} parent=0 // pred_fallthru
    _
  // Predicated region
  $region10: #{_lambda_.9} parent=0 // pred_check
    _
  $region11: #{_lambda_.9} parent=0 // pred_check_branch
    %15 = sbr.rel (0) target = $region13
  $region12: #{_lambda_.9} parent=0 // pred_region
    _
  $region13: #{_lambda_.9} parent=0 // pred_fallthru
    _
  // Predicated region
  $region14: #{_lambda_.9} parent=0 // pred_check
    _
  $region15: #{_lambda_.9} parent=0 // pred_check_branch
    %17 = sbr.rel (0) target = $region17
  $region16: #{_lambda_.9} parent=0 // pred_region
    _
  $region17: #{_lambda_.9} parent=0 // pred_fallthru
    _
  // Predicated region
  $region18: #{_lambda_.9} parent=0 // pred_check
    _
  $region19: #{_lambda_.9} parent=0 // pred_check_branch
    %19 = sbr.rel (0) target = $region21
  $region20: #{_lambda_.9} parent=0 // pred_region
    _
  $region21: #{_lambda_.9} parent=0 // pred_fallthru
    _
  %v21 = vld [vmem:[%s0] sm:$0xff]
  %v22 = vld [vmem:[%s0 + $0x8] sm:$0xff]
  %v23 = vld [vmem:[%s0 + $0x10] sm:$0xff]
  %v24 = vld [vmem:[%s0 + $0x18] sm:$0xff]
  %v25 = vld [vmem:[%s0 + $0x20] sm:$0xff]
  %v26 = vld [vmem:[%s0 + $0x28] sm:$0xff]
  %v27 = vld [vmem:[%s0 + $0x30] sm:$0xff]
  %v28 = vld [vmem:[%s0 + $0x38] sm:$0xff]
  %v29 = vld [vmem:[%s0 + $0x40] sm:$0xff]
  %v30 = vld [vmem:[%s0 + $0x48] sm:$0xff]
  %v31 = vld [vmem:[%s1] sm:$0xf]
  %v32 = vld [vmem:[%s1 + $0x4] sm:$0xf]
  %v33 = vld [vmem:[%s1 + $0x8] sm:$0xf]
  %v34 = vld [vmem:[%s1 + $0xc] sm:$0xf]
  %v35 = vld [vmem:[%s1 + $0x10] sm:$0xf]
  %v36 = vld [vmem:[%s1 + $0x14] sm:$0xf]
  %v37 = vld [vmem:[%s1 + $0x18] sm:$0xf]
  %v38 = vld [vmem:[%s1 + $0x1c] sm:$0xf]
  %v39 = vld [vmem:[%s1 + $0x20] sm:$0xf]
  %v40 = vld [vmem:[%s1 + $0x24] sm:$0xf]
  %v41 = vld [vmem:[%s1 + $0x28] sm:$0xf]
  %v42 = vld [vmem:[%s1 + $0x2c] sm:$0xf]
  %v43 = vld [vmem:[%s1 + $0x30] sm:$0xf]
  %v44 = vld [vmem:[%s1 + $0x34] sm:$0xf]
  %v45 = vld [vmem:[%s1 + $0x38] sm:$0xf]
  %v46 = vld [vmem:[%s1 + $0x3c] sm:$0xf]
  %v47 = vld [vmem:[%s1 + $0x40] sm:$0xf]
  %v48 = vld [vmem:[%s1 + $0x44] sm:$0xf]
  %v49 = vld [vmem:[%s1 + $0x48] sm:$0xf]
  %v50 = vld [vmem:[%s1 + $0x4c] sm:$0xf]
  %v51 = vld [vmem:[%s1 + $0x50] sm:$0xf]
  %v52 = vld [vmem:[%s1 + $0x54] sm:$0xf]
  %v53 = vld [vmem:[%s1 + $0x58] sm:$0xf]
  %v54 = vld [vmem:[%s1 + $0x5c] sm:$0xf]
  %v55 = vld [vmem:[%s1 + $0x60] sm:$0xf]
  %v56 = vld [vmem:[%s1 + $0x64] sm:$0xf]
  %v57 = vld [vmem:[%s1 + $0x68] sm:$0xf]
  %v58 = vld [vmem:[%s1 + $0x6c] sm:$0xf]
  %v59 = vld [vmem:[%s1 + $0x70] sm:$0xf]
  %v60 = vld [vmem:[%s1 + $0x74] sm:$0xf]
  %v61 = vld [vmem:[%s1 + $0x78] sm:$0xf]
  %v62 = vld [vmem:[%s1 + $0x7c] sm:$0xf]
  %v63 = vld [vmem:[%s1 + $0x80] sm:$0xf]
  %v64 = vld [vmem:[%s1 + $0x84] sm:$0xf]
  %v65 = vld [vmem:[%s1 + $0x88] sm:$0xf]
  %v66 = vld [vmem:[%s1 + $0x8c] sm:$0xf]
  %v67 = vld [vmem:[%s1 + $0x90] sm:$0xf]
  %v68 = vld [vmem:[%s1 + $0x94] sm:$0xf]
  %v69 = vld [vmem:[%s1 + $0x98] sm:$0xf]
  %v70 = vld [vmem:[%s1 + $0x9c] sm:$0xf]
  %v71 = vld [vmem:[%s1 + $0xa0] sm:$0xf]
  %v72 = vld [vmem:[%s1 + $0xa4] sm:$0xf]
  %v73 = vld [vmem:[%s1 + $0xa8] sm:$0xf]
  %v74 = vld [vmem:[%s1 + $0xac] sm:$0xf]
  %v75 = vld [vmem:[%s1 + $0xb0] sm:$0xf]
  %v76 = vld [vmem:[%s1 + $0xb4] sm:$0xf]
  %v77 = vld [vmem:[%s1 + $0xb8] sm:$0xf]
  %v78 = vld [vmem:[%s1 + $0xbc] sm:$0xf]
  %v79 = vld [vmem:[%s1 + $0xc0] sm:$0xf]
  %v80 = vld [vmem:[%s1 + $0xc4] sm:$0xf]
  %v81 = vld [vmem:[%s1 + $0xc8] sm:$0xf]
  %v82 = vld [vmem:[%s1 + $0xcc] sm:$0xf]
  %v83 = vld [vmem:[%s1 + $0xd0] sm:$0xf]
  %v84 = vld [vmem:[%s1 + $0xd4] sm:$0xf]
  %v85 = vld [vmem:[%s1 + $0xd8] sm:$0xf]
  %v86 = vld [vmem:[%s1 + $0xdc] sm:$0xf]
  %v87 = vld [vmem:[%s1 + $0xe0] sm:$0xf]
  %v88 = vld [vmem:[%s1 + $0xe4] sm:$0xf]
  %v89 = vld [vmem:[%s1 + $0xe8] sm:$0xf]
  %v90 = vld [vmem:[%s1 + $0xec] sm:$0xf]
  %v91 = vld [vmem:[%s1 + $0xf0] sm:$0xf]
  %v92 = vld [vmem:[%s1 + $0xf4] sm:$0xf]
  %v93 = vld [vmem:[%s1 + $0xf8] sm:$0xf]
  %v94 = vld [vmem:[%s1 + $0xfc] sm:$0xf]
  %v95 = vld [vmem:[%s0 + $0x50] sm:$0x11]
  %v96 = vld [vmem:[%s0 + $0x58] sm:$0x11]
  %s97 = scalar_lea.vmem %s1, 256
  %v98 = vld [vmem:[%s97] sm:$0xf]
  %v99 = vld [vmem:[%s97 + $0x4] sm:$0xf]
  %v100 = vld [vmem:[%s97 + $0x8] sm:$0xf]
  %v101 = vld [vmem:[%s97 + $0xc] sm:$0xf]
  %v102 = vld [vmem:[%s97 + $0x10] sm:$0xf]
  %v103 = vld [vmem:[%s97 + $0x14] sm:$0xf]
  %v104 = vld [vmem:[%s97 + $0x18] sm:$0xf]
  %v105 = vld [vmem:[%s97 + $0x1c] sm:$0xf]
  %v106 = vld [vmem:[%s97 + $0x20] sm:$0xf]
  %v107 = vld [vmem:[%s97 + $0x24] sm:$0xf]
  %v108 = vld [vmem:[%s97 + $0x28] sm:$0xf]
  %v109 = vld [vmem:[%s97 + $0x2c] sm:$0xf]
  %v110 = vld [vmem:[%s97 + $0x30] sm:$0xf]
  %v111 = vld [vmem:[%s97 + $0x34] sm:$0xf]
  %v112 = vld [vmem:[%s97 + $0x38] sm:$0xf]
  %v113 = vld [vmem:[%s97 + $0x3c] sm:$0xf]
  %v114 = vld [vmem:[%s97 + $0x40] sm:$0xf]
  %v115 = vld [vmem:[%s97 + $0x44] sm:$0xf]
  %v116 = vld [vmem:[%s97 + $0x48] sm:$0xf]
  %v117 = vld [vmem:[%s97 + $0x4c] sm:$0xf]
  %v118 = vld [vmem:[%s97 + $0x50] sm:$0xf]
  %v119 = vld [vmem:[%s97 + $0x54] sm:$0xf]
  %v120 = vld [vmem:[%s97 + $0x58] sm:$0xf]
  %v121 = vld [vmem:[%s97 + $0x5c] sm:$0xf]
  %v122 = vld [vmem:[%s97 + $0x60] sm:$0xf]
  %v123 = vld [vmem:[%s97 + $0x64] sm:$0xf]
  %v124 = vld [vmem:[%s97 + $0x68] sm:$0xf]
  %v125 = vld [vmem:[%s97 + $0x6c] sm:$0xf]
  %v126 = vld [vmem:[%s97 + $0x70] sm:$0xf]
  %v127 = vld [vmem:[%s97 + $0x74] sm:$0xf]
  %v128 = vld [vmem:[%s97 + $0x78] sm:$0xf]
  %v129 = vld [vmem:[%s97 + $0x7c] sm:$0xf]
  %v130 = vld [vmem:[%s97 + $0x80] sm:$0xf]
  %v131 = vld [vmem:[%s97 + $0x84] sm:$0xf]
  %v132 = vld [vmem:[%s97 + $0x88] sm:$0xf]
  %v133 = vld [vmem:[%s97 + $0x8c] sm:$0xf]
  %v134 = vld [vmem:[%s97 + $0x90] sm:$0xf]
  %v135 = vld [vmem:[%s97 + $0x94] sm:$0xf]
  %v136 = vld [vmem:[%s97 + $0x98] sm:$0xf]
  %v137 = vld [vmem:[%s97 + $0x9c] sm:$0xf]
  %v138 = vld [vmem:[%s97 + $0xa0] sm:$0xf]
  %v139 = vld [vmem:[%s97 + $0xa4] sm:$0xf]
  %v140 = vld [vmem:[%s97 + $0xa8] sm:$0xf]
  %v141 = vld [vmem:[%s97 + $0xac] sm:$0xf]
  %v142 = vld [vmem:[%s97 + $0xb0] sm:$0xf]
  %v143 = vld [vmem:[%s97 + $0xb4] sm:$0xf]
  %v144 = vld [vmem:[%s97 + $0xb8] sm:$0xf]
  %v145 = vld [vmem:[%s97 + $0xbc] sm:$0xf]
  %v146 = vld [vmem:[%s97 + $0xc0] sm:$0xf]
  %v147 = vld [vmem:[%s97 + $0xc4] sm:$0xf]
  %v148 = vld [vmem:[%s97 + $0xc8] sm:$0xf]
  %v149 = vld [vmem:[%s97 + $0xcc] sm:$0xf]
  %v150 = vld [vmem:[%s97 + $0xd0] sm:$0xf]
  %v151 = vld [vmem:[%s97 + $0xd4] sm:$0xf]
  %v152 = vld [vmem:[%s97 + $0xd8] sm:$0xf]
  %v153 = vld [vmem:[%s97 + $0xdc] sm:$0xf]
  %v154 = vld [vmem:[%s97 + $0xe0] sm:$0xf]
  %v155 = vld [vmem:[%s97 + $0xe4] sm:$0xf]
  %v156 = vld [vmem:[%s97 + $0xe8] sm:$0xf]
  %v157 = vld [vmem:[%s97 + $0xec] sm:$0xf]
  %v158 = vld [vmem:[%s97 + $0xf0] sm:$0xf]
  %v159 = vld [vmem:[%s97 + $0xf4] sm:$0xf]
  %v160 = vld [vmem:[%s97 + $0xf8] sm:$0xf]
  %v161 = vld [vmem:[%s97 + $0xfc] sm:$0xf]
  %v174 = vunpack.c.l.b16 %v21
  %v175 = vunpack.c.h.b16 %v21
  %v176 = vunpack.c.l.b16 %v22
  %v177 = vunpack.c.h.b16 %v22
  %v178 = vunpack.c.l.b16 %v23
  %v179 = vunpack.c.h.b16 %v23
  %v180 = vunpack.c.l.b16 %v24
  %v181 = vunpack.c.h.b16 %v24
  %v182 = vunpack.c.l.b16 %v25
  %v183 = vunpack.c.h.b16 %v25
  %v184 = vunpack.c.l.b16 %v26
  %v185 = vunpack.c.h.b16 %v26
  %v186 = vunpack.c.l.b16 %v27
  %v187 = vunpack.c.h.b16 %v27
  %v188 = vunpack.c.l.b16 %v28
  %v189 = vunpack.c.h.b16 %v28
  %v190 = vunpack.c.l.b16 %v29
  %v191 = vunpack.c.h.b16 %v29
  %v192 = vunpack.c.l.b16 %v30
  %v193 = vunpack.c.h.b16 %v30
  %v194 = vunpack.c.l.b16 %v95
  %v195 = vunpack.c.h.b16 %v95
  %v196 = vunpack.c.l.b16 %v96
  %v197 = vunpack.c.h.b16 %v96
  %v198 = vpack.c.b16 %v178, %v174
  %v199 = vpack.c.b16 %v179, %v175
  %v200 = vpack.c.b16 %v180, %v176
  %v201 = vpack.c.b16 %v181, %v177
  %v202 = vpack.c.b16 %v186, %v182
  %v203 = vpack.c.b16 %v187, %v183
  %v204 = vpack.c.b16 %v188, %v184
  %v205 = vpack.c.b16 %v189, %v185
  %v206 = vpack.c.b16 %v194, %v190
  %v207 = vpack.c.b16 %v195, %v191
  %v208 = vpack.c.b16 %v196, %v192
  %v209 = vpack.c.b16 %v197, %v193
  %vm210 = vsmask.f32 7424
  %v212 = vshrl.u32 %v198, 16
  %v214 = vshll.u32 %v198, 16
  %v216 = vrot.slane %v214, 1
  %v217 = vor.u32 %v212, %v216
  %v219 = vshll.u32 %v202, 16
  %v221 = vrot.slane %v219, 1
  %v222 = vsel %vm210, %v217, %v221
  %v224 = vshrl.u32 %v199, 16
  %v226 = vshll.u32 %v199, 16
  %v228 = vrot.slane %v226, 1
  %v229 = vor.u32 %v224, %v228
  %v231 = vshll.u32 %v203, 16
  %v233 = vrot.slane %v231, 1
  %v234 = vsel %vm210, %v229, %v233
  %v236 = vshrl.u32 %v200, 16
  %v238 = vshll.u32 %v200, 16
  %v240 = vrot.slane %v238, 1
  %v241 = vor.u32 %v236, %v240
  %v243 = vshll.u32 %v204, 16
  %v245 = vrot.slane %v243, 1
  %v246 = vsel %vm210, %v241, %v245
  %v248 = vshrl.u32 %v201, 16
  %v250 = vshll.u32 %v201, 16
  %v252 = vrot.slane %v250, 1
  %v253 = vor.u32 %v248, %v252
  %v255 = vshll.u32 %v205, 16
  %v257 = vrot.slane %v255, 1
  %v258 = vsel %vm210, %v253, %v257
  %v259 = vshrl.u32 %v202, 16
  %v261 = vor.u32 %v259, %v221
  %v263 = vshll.u32 %v206, 16
  %v265 = vrot.slane %v263, 1
  %v266 = vsel %vm210, %v261, %v265
  %v267 = vshrl.u32 %v203, 16
  %v269 = vor.u32 %v267, %v233
  %v271 = vshll.u32 %v207, 16
  %v273 = vrot.slane %v271, 1
  %v274 = vsel %vm210, %v269, %v273
  %v275 = vshrl.u32 %v204, 16
  %v277 = vor.u32 %v275, %v245
  %v279 = vshll.u32 %v208, 16
  %v281 = vrot.slane %v279, 1
  %v282 = vsel %vm210, %v277, %v281
  %v283 = vshrl.u32 %v205, 16
  %v285 = vor.u32 %v283, %v257
  %v287 = vshll.u32 %v209, 16
  %v289 = vrot.slane %v287, 1
  %v290 = vsel %vm210, %v285, %v289
  %v291 = vshrl.u32 %v206, 16
  %v293 = vor.u32 %v291, %v265
  %v294 = vshrl.u32 %v207, 16
  %v296 = vor.u32 %v294, %v273
  %v297 = vshrl.u32 %v208, 16
  %v299 = vor.u32 %v297, %v281
  %v300 = vshrl.u32 %v209, 16
  %v302 = vor.u32 %v300, %v289
  %v379 = vunpack.c.l.b16 %v98
  %v380 = vunpack.c.l.b16 %v99
  %v381 = vunpack.c.l.b16 %v100
  %v382 = vunpack.c.l.b16 %v101
  %v383 = vunpack.c.l.b16 %v102
  %v384 = vunpack.c.l.b16 %v103
  %v385 = vunpack.c.l.b16 %v104
  %v386 = vunpack.c.l.b16 %v105
  %v387 = vunpack.c.l.b16 %v106
  %v388 = vunpack.c.l.b16 %v107
  %v389 = vunpack.c.l.b16 %v108
  %v390 = vunpack.c.l.b16 %v109
  %v391 = vunpack.c.l.b16 %v110
  %v392 = vunpack.c.l.b16 %v111
  %v393 = vunpack.c.l.b16 %v112
  %v394 = vunpack.c.l.b16 %v113
  %v395 = vunpack.c.l.b16 %v114
  %v396 = vunpack.c.l.b16 %v115
  %v397 = vunpack.c.l.b16 %v116
  %v398 = vunpack.c.l.b16 %v117
  %v399 = vunpack.c.l.b16 %v118
  %v400 = vunpack.c.l.b16 %v119
  %v401 = vunpack.c.l.b16 %v120
  %v402 = vunpack.c.l.b16 %v121
  %v403 = vunpack.c.l.b16 %v122
  %v404 = vunpack.c.l.b16 %v123
  %v405 = vunpack.c.l.b16 %v124
  %v406 = vunpack.c.l.b16 %v125
  %v407 = vunpack.c.l.b16 %v126
  %v408 = vunpack.c.l.b16 %v127
  %v409 = vunpack.c.l.b16 %v128
  %v410 = vunpack.c.l.b16 %v129
  %v411 = vunpack.c.l.b16 %v130
  %v412 = vunpack.c.l.b16 %v131
  %v413 = vunpack.c.l.b16 %v132
  %v414 = vunpack.c.l.b16 %v133
  %v415 = vunpack.c.l.b16 %v134
  %v416 = vunpack.c.l.b16 %v135
  %v417 = vunpack.c.l.b16 %v136
  %v418 = vunpack.c.l.b16 %v137
  %v419 = vunpack.c.l.b16 %v138
  %v420 = vunpack.c.l.b16 %v139
  %v421 = vunpack.c.l.b16 %v140
  %v422 = vunpack.c.l.b16 %v141
  %v423 = vunpack.c.l.b16 %v142
  %v424 = vunpack.c.l.b16 %v143
  %v425 = vunpack.c.l.b16 %v144
  %v426 = vunpack.c.l.b16 %v145
  %v427 = vunpack.c.l.b16 %v146
  %v428 = vunpack.c.l.b16 %v147
  %v429 = vunpack.c.l.b16 %v148
  %v430 = vunpack.c.l.b16 %v149
  %v431 = vunpack.c.l.b16 %v150
  %v432 = vunpack.c.l.b16 %v151
  %v433 = vunpack.c.l.b16 %v152
  %v434 = vunpack.c.l.b16 %v153
  %v435 = vunpack.c.l.b16 %v154
  %v436 = vunpack.c.l.b16 %v155
  %v437 = vunpack.c.l.b16 %v156
  %v438 = vunpack.c.l.b16 %v157
  %v439 = vunpack.c.l.b16 %v158
  %v440 = vunpack.c.l.b16 %v159
  %v441 = vunpack.c.l.b16 %v160
  %v442 = vunpack.c.l.b16 %v161
  %v443 = vpack.c.b16 %v380, %v379
  %v444 = vpack.c.b16 %v382, %v381
  %v445 = vpack.c.b16 %v384, %v383
  %v446 = vpack.c.b16 %v386, %v385
  %v447 = vpack.c.b16 %v388, %v387
  %v448 = vpack.c.b16 %v390, %v389
  %v449 = vpack.c.b16 %v392, %v391
  %v450 = vpack.c.b16 %v394, %v393
  %v451 = vpack.c.b16 %v396, %v395
  %v452 = vpack.c.b16 %v398, %v397
  %v453 = vpack.c.b16 %v400, %v399
  %v454 = vpack.c.b16 %v402, %v401
  %v455 = vpack.c.b16 %v404, %v403
  %v456 = vpack.c.b16 %v406, %v405
  %v457 = vpack.c.b16 %v408, %v407
  %v458 = vpack.c.b16 %v410, %v409
  %v459 = vpack.c.b16 %v412, %v411
  %v460 = vpack.c.b16 %v414, %v413
  %v461 = vpack.c.b16 %v416, %v415
  %v462 = vpack.c.b16 %v418, %v417
  %v463 = vpack.c.b16 %v420, %v419
  %v464 = vpack.c.b16 %v422, %v421
  %v465 = vpack.c.b16 %v424, %v423
  %v466 = vpack.c.b16 %v426, %v425
  %v467 = vpack.c.b16 %v428, %v427
  %v468 = vpack.c.b16 %v430, %v429
  %v469 = vpack.c.b16 %v432, %v431
  %v470 = vpack.c.b16 %v434, %v433
  %v471 = vpack.c.b16 %v436, %v435
  %v472 = vpack.c.b16 %v438, %v437
  %v473 = vpack.c.b16 %v440, %v439
  %v474 = vpack.c.b16 %v442, %v441
  %507 = vmatprep.subr.bf16.mxu0 0
  %508 = vmatpush1.bf16.msra.mxu0 %v443
  %509 = vmatprep.subr.bf16.mxu0 0
  %510 = vmatpush1.bf16.msra.mxu0 %v444
  %511 = vmatprep.subr.bf16.mxu0 0
  %512 = vmatpush1.bf16.msra.mxu0 %v445
  %513 = vmatprep.subr.bf16.mxu0 0
  %514 = vmatpush1.bf16.msra.mxu0 %v446
  %515 = vmatprep.subr.bf16.mxu0 0
  %516 = vmatpush1.bf16.msra.mxu0 %v447
  %517 = vmatprep.subr.bf16.mxu0 0
  %518 = vmatpush1.bf16.msra.mxu0 %v448
  %519 = vmatprep.subr.bf16.mxu0 0
  %520 = vmatpush1.bf16.msra.mxu0 %v449
  %521 = vmatprep.subr.bf16.mxu0 0
  %522 = vmatpush1.bf16.msra.mxu0 %v450
  %523 = vmatprep.subr.bf16.mxu0 0
  %524 = vmatpush1.bf16.msra.mxu0 %v451
  %525 = vmatprep.subr.bf16.mxu0 0
  %526 = vmatpush1.bf16.msra.mxu0 %v452
  %527 = vmatprep.subr.bf16.mxu0 0
  %528 = vmatpush1.bf16.msra.mxu0 %v453
  %529 = vmatprep.subr.bf16.mxu0 0
  %530 = vmatpush1.bf16.msra.mxu0 %v454
  %531 = vmatprep.subr.bf16.mxu0 0
  %532 = vmatpush1.bf16.msra.mxu0 %v455
  %533 = vmatprep.subr.bf16.mxu0 0
  %534 = vmatpush1.bf16.msra.mxu0 %v456
  %535 = vmatprep.subr.bf16.mxu0 0
  %536 = vmatpush1.bf16.msra.mxu0 %v457
  %537 = vmatprep.subr.bf16.mxu0 0
  %538 = vmatpush1.bf16.msra.mxu0 %v458
  %539 = vmatprep.mubr.bf16.mxu0 %v234
  %540 = vmatmul.mubr.bf16.gmra.mrb[0].mxu0 %v222
  %v541 = vpop.f32.mrb[0].mxu0
  %v542 = vadd.f32 0.0, %v541
  %v543 = vpop.f32.mrb[0].mxu0
  %v544 = vpop.f32.mrb[0].mxu0
  %v545 = vadd.f32 0.0, %v544
  %v546 = vpop.f32.mrb[0].mxu0
  %547 = vmatprep.mubr.bf16.mxu0 %v274
  %548 = vmatmul.mubr.bf16.gmra.mrb[0].mxu0 %v266
  %v549 = vpop.f32.mrb[0].mxu0
  %v550 = vadd.f32 0.0, %v549
  %v551 = vpop.f32.mrb[0].mxu0
  %v552 = vpop.f32.mrb[0].mxu0
  %v553 = vadd.f32 0.0, %v552
  %v554 = vpop.f32.mrb[0].mxu0
  %555 = vmatprep.mubr.bf16.mxu0 %v296
  %556 = vmatmul.mubr.bf16.gmra.mrb[0].mxu0 %v293
  %v557 = vpop.f32.mrb[0].mxu0
  %v558 = vadd.f32 0.0, %v557
  %v559 = vpop.f32.mrb[0].mxu0
  %v560 = vpop.f32.mrb[0].mxu0
  %v561 = vpop.f32.mrb[0].mxu0
  %562 = vdwg.mxu0
  %563 = vmatprep.subr.bf16.mxu0 0
  %564 = vmatpush1.bf16.msra.mxu0 %v459
  %565 = vmatprep.subr.bf16.mxu0 0
  %566 = vmatpush1.bf16.msra.mxu0 %v460
  %567 = vmatprep.subr.bf16.mxu0 0
  %568 = vmatpush1.bf16.msra.mxu0 %v461
  %569 = vmatprep.subr.bf16.mxu0 0
  %570 = vmatpush1.bf16.msra.mxu0 %v462
  %571 = vmatprep.subr.bf16.mxu0 0
  %572 = vmatpush1.bf16.msra.mxu0 %v463
  %573 = vmatprep.subr.bf16.mxu0 0
  %574 = vmatpush1.bf16.msra.mxu0 %v464
  %575 = vmatprep.subr.bf16.mxu0 0
  %576 = vmatpush1.bf16.msra.mxu0 %v465
  %577 = vmatprep.subr.bf16.mxu0 0
  %578 = vmatpush1.bf16.msra.mxu0 %v466
  %579 = vmatprep.subr.bf16.mxu0 0
  %580 = vmatpush1.bf16.msra.mxu0 %v467
  %581 = vmatprep.subr.bf16.mxu0 0
  %582 = vmatpush1.bf16.msra.mxu0 %v468
  %583 = vmatprep.subr.bf16.mxu0 0
  %584 = vmatpush1.bf16.msra.mxu0 %v469
  %585 = vmatprep.subr.bf16.mxu0 0
  %586 = vmatpush1.bf16.msra.mxu0 %v470
  %587 = vmatprep.subr.bf16.mxu0 0
  %588 = vmatpush1.bf16.msra.mxu0 %v471
  %589 = vmatprep.subr.bf16.mxu0 0
  %590 = vmatpush1.bf16.msra.mxu0 %v472
  %591 = vmatprep.subr.bf16.mxu0 0
  %592 = vmatpush1.bf16.msra.mxu0 %v473
  %593 = vmatprep.subr.bf16.mxu0 0
  %594 = vmatpush1.bf16.msra.mxu0 %v474
  %595 = vmatprep.mubr.bf16.mxu0 %v258
  %596 = vmatmul.mubr.bf16.gmra.mrb[0].mxu0 %v246
  %v597 = vpop.f32.mrb[0].mxu0
  %v598 = vadd.f32 %v542, %v597
  %v599 = vpop.f32.mrb[0].mxu0
  %v600 = vpop.f32.mrb[0].mxu0
  %v601 = vadd.f32 %v545, %v600
  %v602 = vpop.f32.mrb[0].mxu0
  %603 = vmatprep.mubr.bf16.mxu0 %v290
  %604 = vmatmul.mubr.bf16.gmra.mrb[0].mxu0 %v282
  %v605 = vpop.f32.mrb[0].mxu0
  %v606 = vadd.f32 %v550, %v605
  %v607 = vpop.f32.mrb[0].mxu0
  %v608 = vpop.f32.mrb[0].mxu0
  %v609 = vadd.f32 %v553, %v608
  %v610 = vpop.f32.mrb[0].mxu0
  %611 = vmatprep.mubr.bf16.mxu0 %v302
  %612 = vmatmul.mubr.bf16.gmra.mrb[0].mxu0 %v299
  %v613 = vpop.f32.mrb[0].mxu0
  %v614 = vadd.f32 %v558, %v613
  %v615 = vpop.f32.mrb[0].mxu0
  %v616 = vpop.f32.mrb[0].mxu0
  %v617 = vpop.f32.mrb[0].mxu0
  %618 = vdwg.mxu0
  %v619 = vpack.c.b16 %v190, %v190
  %v620 = vpack.c.b16 %v191, %v191
  %v621 = vpack.c.b16 %v192, %v192
  %v622 = vpack.c.b16 %v193, %v193
  %v699 = vunpack.c.l.b16 %v31
  %v700 = vunpack.c.l.b16 %v32
  %v701 = vunpack.c.l.b16 %v33
  %v702 = vunpack.c.l.b16 %v34
  %v703 = vunpack.c.l.b16 %v35
  %v704 = vunpack.c.l.b16 %v36
  %v705 = vunpack.c.l.b16 %v37
  %v706 = vunpack.c.l.b16 %v38
  %v707 = vunpack.c.l.b16 %v39
  %v708 = vunpack.c.l.b16 %v40
  %v709 = vunpack.c.l.b16 %v41
  %v710 = vunpack.c.l.b16 %v42
  %v711 = vunpack.c.l.b16 %v43
  %v712 = vunpack.c.l.b16 %v44
  %v713 = vunpack.c.l.b16 %v45
  %v714 = vunpack.c.l.b16 %v46
  %v715 = vunpack.c.l.b16 %v47
  %v716 = vunpack.c.l.b16 %v48
  %v717 = vunpack.c.l.b16 %v49
  %v718 = vunpack.c.l.b16 %v50
  %v719 = vunpack.c.l.b16 %v51
  %v720 = vunpack.c.l.b16 %v52
  %v721 = vunpack.c.l.b16 %v53
  %v722 = vunpack.c.l.b16 %v54
  %v723 = vunpack.c.l.b16 %v55
  %v724 = vunpack.c.l.b16 %v56
  %v725 = vunpack.c.l.b16 %v57
  %v726 = vunpack.c.l.b16 %v58
  %v727 = vunpack.c.l.b16 %v59
  %v728 = vunpack.c.l.b16 %v60
  %v729 = vunpack.c.l.b16 %v61
  %v730 = vunpack.c.l.b16 %v62
  %v731 = vunpack.c.l.b16 %v63
  %v732 = vunpack.c.l.b16 %v64
  %v733 = vunpack.c.l.b16 %v65
  %v734 = vunpack.c.l.b16 %v66
  %v735 = vunpack.c.l.b16 %v67
  %v736 = vunpack.c.l.b16 %v68
  %v737 = vunpack.c.l.b16 %v69
  %v738 = vunpack.c.l.b16 %v70
  %v739 = vunpack.c.l.b16 %v71
  %v740 = vunpack.c.l.b16 %v72
  %v741 = vunpack.c.l.b16 %v73
  %v742 = vunpack.c.l.b16 %v74
  %v743 = vunpack.c.l.b16 %v75
  %v744 = vunpack.c.l.b16 %v76
  %v745 = vunpack.c.l.b16 %v77
  %v746 = vunpack.c.l.b16 %v78
  %v747 = vunpack.c.l.b16 %v79
  %v748 = vunpack.c.l.b16 %v80
  %v749 = vunpack.c.l.b16 %v81
  %v750 = vunpack.c.l.b16 %v82
  %v751 = vunpack.c.l.b16 %v83
  %v752 = vunpack.c.l.b16 %v84
  %v753 = vunpack.c.l.b16 %v85
  %v754 = vunpack.c.l.b16 %v86
  %v755 = vunpack.c.l.b16 %v87
  %v756 = vunpack.c.l.b16 %v88
  %v757 = vunpack.c.l.b16 %v89
  %v758 = vunpack.c.l.b16 %v90
  %v759 = vunpack.c.l.b16 %v91
  %v760 = vunpack.c.l.b16 %v92
  %v761 = vunpack.c.l.b16 %v93
  %v762 = vunpack.c.l.b16 %v94
  %v763 = vpack.c.b16 %v700, %v699
  %v764 = vpack.c.b16 %v702, %v701
  %v765 = vpack.c.b16 %v704, %v703
  %v766 = vpack.c.b16 %v706, %v705
  %v767 = vpack.c.b16 %v708, %v707
  %v768 = vpack.c.b16 %v710, %v709
  %v769 = vpack.c.b16 %v712, %v711
  %v770 = vpack.c.b16 %v714, %v713
  %v771 = vpack.c.b16 %v716, %v715
  %v772 = vpack.c.b16 %v718, %v717
  %v773 = vpack.c.b16 %v720, %v719
  %v774 = vpack.c.b16 %v722, %v721
  %v775 = vpack.c.b16 %v724, %v723
  %v776 = vpack.c.b16 %v726, %v725
  %v777 = vpack.c.b16 %v728, %v727
  %v778 = vpack.c.b16 %v730, %v729
  %v779 = vpack.c.b16 %v732, %v731
  %v780 = vpack.c.b16 %v734, %v733
  %v781 = vpack.c.b16 %v736, %v735
  %v782 = vpack.c.b16 %v738, %v737
  %v783 = vpack.c.b16 %v740, %v739
  %v784 = vpack.c.b16 %v742, %v741
  %v785 = vpack.c.b16 %v744, %v743
  %v786 = vpack.c.b16 %v746, %v745
  %v787 = vpack.c.b16 %v748, %v747
  %v788 = vpack.c.b16 %v750, %v749
  %v789 = vpack.c.b16 %v752, %v751
  %v790 = vpack.c.b16 %v754, %v753
  %v791 = vpack.c.b16 %v756, %v755
  %v792 = vpack.c.b16 %v758, %v757
  %v793 = vpack.c.b16 %v760, %v759
  %v794 = vpack.c.b16 %v762, %v761
  %827 = vmatprep.subr.bf16.mxu0 0
  %828 = vmatpush1.bf16.msra.mxu0 %v763
  %829 = vmatprep.subr.bf16.mxu0 0
  %830 = vmatpush1.bf16.msra.mxu0 %v764
  %831 = vmatprep.subr.bf16.mxu0 0
  %832 = vmatpush1.bf16.msra.mxu0 %v765
  %833 = vmatprep.subr.bf16.mxu0 0
  %834 = vmatpush1.bf16.msra.mxu0 %v766
  %835 = vmatprep.subr.bf16.mxu0 0
  %836 = vmatpush1.bf16.msra.mxu0 %v767
  %837 = vmatprep.subr.bf16.mxu0 0
  %838 = vmatpush1.bf16.msra.mxu0 %v768
  %839 = vmatprep.subr.bf16.mxu0 0
  %840 = vmatpush1.bf16.msra.mxu0 %v769
  %841 = vmatprep.subr.bf16.mxu0 0
  %842 = vmatpush1.bf16.msra.mxu0 %v770
  %843 = vmatprep.subr.bf16.mxu0 0
  %844 = vmatpush1.bf16.msra.mxu0 %v771
  %845 = vmatprep.subr.bf16.mxu0 0
  %846 = vmatpush1.bf16.msra.mxu0 %v772
  %847 = vmatprep.subr.bf16.mxu0 0
  %848 = vmatpush1.bf16.msra.mxu0 %v773
  %849 = vmatprep.subr.bf16.mxu0 0
  %850 = vmatpush1.bf16.msra.mxu0 %v774
  %851 = vmatprep.subr.bf16.mxu0 0
  %852 = vmatpush1.bf16.msra.mxu0 %v775
  %853 = vmatprep.subr.bf16.mxu0 0
  %854 = vmatpush1.bf16.msra.mxu0 %v776
  %855 = vmatprep.subr.bf16.mxu0 0
  %856 = vmatpush1.bf16.msra.mxu0 %v777
  %857 = vmatprep.subr.bf16.mxu0 0
  %858 = vmatpush1.bf16.msra.mxu0 %v778
  %859 = vmatprep.mubr.bf16.mxu0 %v199
  %860 = vmatmul.mubr.bf16.gmra.mrb[0].mxu0 %v198
  %v861 = vpop.f32.mrb[0].mxu0
  %v862 = vadd.f32 %v598, %v861
  %v863 = vpop.f32.mrb[0].mxu0
  %v864 = vpop.f32.mrb[0].mxu0
  %v865 = vadd.f32 %v601, %v864
  %v866 = vpop.f32.mrb[0].mxu0
  %867 = vmatprep.mubr.bf16.mxu0 %v203
  %868 = vmatmul.mubr.bf16.gmra.mrb[0].mxu0 %v202
  %v869 = vpop.f32.mrb[0].mxu0
  %v870 = vadd.f32 %v606, %v869
  %v871 = vpop.f32.mrb[0].mxu0
  %v872 = vpop.f32.mrb[0].mxu0
  %v873 = vadd.f32 %v609, %v872
  %v874 = vpop.f32.mrb[0].mxu0
  %875 = vmatprep.mubr.bf16.mxu0 %v620
  %876 = vmatmul.mubr.bf16.gmra.mrb[0].mxu0 %v619
  %v877 = vpop.f32.mrb[0].mxu0
  %v878 = vadd.f32 %v614, %v877
  %v879 = vpop.f32.mrb[0].mxu0
  %v880 = vpop.f32.mrb[0].mxu0
  %v881 = vpop.f32.mrb[0].mxu0
  %882 = vdwg.mxu0
  %883 = vmatprep.subr.bf16.mxu0 0
  %884 = vmatpush1.bf16.msra.mxu0 %v779
  %885 = vmatprep.subr.bf16.mxu0 0
  %886 = vmatpush1.bf16.msra.mxu0 %v780
  %887 = vmatprep.subr.bf16.mxu0 0
  %888 = vmatpush1.bf16.msra.mxu0 %v781
  %889 = vmatprep.subr.bf16.mxu0 0
  %890 = vmatpush1.bf16.msra.mxu0 %v782
  %891 = vmatprep.subr.bf16.mxu0 0
  %892 = vmatpush1.bf16.msra.mxu0 %v783
  %893 = vmatprep.subr.bf16.mxu0 0
  %894 = vmatpush1.bf16.msra.mxu0 %v784
  %895 = vmatprep.subr.bf16.mxu0 0
  %896 = vmatpush1.bf16.msra.mxu0 %v785
  %897 = vmatprep.subr.bf16.mxu0 0
  %898 = vmatpush1.bf16.msra.mxu0 %v786
  %899 = vmatprep.subr.bf16.mxu0 0
  %900 = vmatpush1.bf16.msra.mxu0 %v787
  %901 = vmatprep.subr.bf16.mxu0 0
  %902 = vmatpush1.bf16.msra.mxu0 %v788
  %903 = vmatprep.subr.bf16.mxu0 0
  %904 = vmatpush1.bf16.msra.mxu0 %v789
  %905 = vmatprep.subr.bf16.mxu0 0
  %906 = vmatpush1.bf16.msra.mxu0 %v790
  %907 = vmatprep.subr.bf16.mxu0 0
  %908 = vmatpush1.bf16.msra.mxu0 %v791
  %909 = vmatprep.subr.bf16.mxu0 0
  %910 = vmatpush1.bf16.msra.mxu0 %v792
  %911 = vmatprep.subr.bf16.mxu0 0
  %912 = vmatpush1.bf16.msra.mxu0 %v793
  %913 = vmatprep.subr.bf16.mxu0 0
  %914 = vmatpush1.bf16.msra.mxu0 %v794
  %915 = vmatprep.mubr.bf16.mxu0 %v201
  %916 = vmatmul.mubr.bf16.gmra.mrb[0].mxu0 %v200
  %v917 = vpop.f32.mrb[0].mxu0
  %v918 = vadd.f32 %v862, %v917
  %v919 = vpop.f32.mrb[0].mxu0
  %v920 = vpop.f32.mrb[0].mxu0
  %v921 = vadd.f32 %v865, %v920
  %v922 = vpop.f32.mrb[0].mxu0
  %923 = vmatprep.mubr.bf16.mxu0 %v205
  %924 = vmatmul.mubr.bf16.gmra.mrb[0].mxu0 %v204
  %v925 = vpop.f32.mrb[0].mxu0
  %v926 = vadd.f32 %v870, %v925
  %v927 = vpop.f32.mrb[0].mxu0
  %v928 = vpop.f32.mrb[0].mxu0
  %v929 = vadd.f32 %v873, %v928
  %v930 = vpop.f32.mrb[0].mxu0
  %931 = vmatprep.mubr.bf16.mxu0 %v622
  %932 = vmatmul.mubr.bf16.gmra.mrb[0].mxu0 %v621
  %v933 = vpop.f32.mrb[0].mxu0
  %v934 = vadd.f32 %v878, %v933
  %v935 = vpop.f32.mrb[0].mxu0
  %v936 = vpop.f32.mrb[0].mxu0
  %v937 = vpop.f32.mrb[0].mxu0
  %938 = vdwg.mxu0
  %v939 = vld [vmem:[%s0] sm:$0xee]
  %v940 = vld [vmem:[%s0 + $0x8] sm:$0xee]
  %s941 = scalar_lea.vmem %s1, 512
  %v942 = vld [vmem:[%s941] sm:$0xf]
  %v943 = vld [vmem:[%s941 + $0x4] sm:$0xf]
  %v944 = vld [vmem:[%s941 + $0x8] sm:$0xf]
  %v945 = vld [vmem:[%s941 + $0xc] sm:$0xf]
  %v946 = vld [vmem:[%s941 + $0x10] sm:$0xf]
  %v947 = vld [vmem:[%s941 + $0x14] sm:$0xf]
  %v948 = vld [vmem:[%s941 + $0x18] sm:$0xf]
  %v949 = vld [vmem:[%s941 + $0x1c] sm:$0xf]
  %v950 = vld [vmem:[%s941 + $0x20] sm:$0xf]
  %v951 = vld [vmem:[%s941 + $0x24] sm:$0xf]
  %v952 = vld [vmem:[%s941 + $0x28] sm:$0xf]
  %v953 = vld [vmem:[%s941 + $0x2c] sm:$0xf]
  %v954 = vld [vmem:[%s941 + $0x30] sm:$0xf]
  %v955 = vld [vmem:[%s941 + $0x34] sm:$0xf]
  %v956 = vld [vmem:[%s941 + $0x38] sm:$0xf]
  %v957 = vld [vmem:[%s941 + $0x3c] sm:$0xf]
  %v958 = vld [vmem:[%s941 + $0x40] sm:$0xf]
  %v959 = vld [vmem:[%s941 + $0x44] sm:$0xf]
  %v960 = vld [vmem:[%s941 + $0x48] sm:$0xf]
  %v961 = vld [vmem:[%s941 + $0x4c] sm:$0xf]
  %v962 = vld [vmem:[%s941 + $0x50] sm:$0xf]
  %v963 = vld [vmem:[%s941 + $0x54] sm:$0xf]
  %v964 = vld [vmem:[%s941 + $0x58] sm:$0xf]
  %v965 = vld [vmem:[%s941 + $0x5c] sm:$0xf]
  %v966 = vld [vmem:[%s941 + $0x60] sm:$0xf]
  %v967 = vld [vmem:[%s941 + $0x64] sm:$0xf]
  %v968 = vld [vmem:[%s941 + $0x68] sm:$0xf]
  %v969 = vld [vmem:[%s941 + $0x6c] sm:$0xf]
  %v970 = vld [vmem:[%s941 + $0x70] sm:$0xf]
  %v971 = vld [vmem:[%s941 + $0x74] sm:$0xf]
  %v972 = vld [vmem:[%s941 + $0x78] sm:$0xf]
  %v973 = vld [vmem:[%s941 + $0x7c] sm:$0xf]
  %v974 = vld [vmem:[%s941 + $0x80] sm:$0xf]
  %v975 = vld [vmem:[%s941 + $0x84] sm:$0xf]
  %v976 = vld [vmem:[%s941 + $0x88] sm:$0xf]
  %v977 = vld [vmem:[%s941 + $0x8c] sm:$0xf]
  %v978 = vld [vmem:[%s941 + $0x90] sm:$0xf]
  %v979 = vld [vmem:[%s941 + $0x94] sm:$0xf]
  %v980 = vld [vmem:[%s941 + $0x98] sm:$0xf]
  %v981 = vld [vmem:[%s941 + $0x9c] sm:$0xf]
  %v982 = vld [vmem:[%s941 + $0xa0] sm:$0xf]
  %v983 = vld [vmem:[%s941 + $0xa4] sm:$0xf]
  %v984 = vld [vmem:[%s941 + $0xa8] sm:$0xf]
  %v985 = vld [vmem:[%s941 + $0xac] sm:$0xf]
  %v986 = vld [vmem:[%s941 + $0xb0] sm:$0xf]
  %v987 = vld [vmem:[%s941 + $0xb4] sm:$0xf]
  %v988 = vld [vmem:[%s941 + $0xb8] sm:$0xf]
  %v989 = vld [vmem:[%s941 + $0xbc] sm:$0xf]
  %v990 = vld [vmem:[%s941 + $0xc0] sm:$0xf]
  %v991 = vld [vmem:[%s941 + $0xc4] sm:$0xf]
  %v992 = vld [vmem:[%s941 + $0xc8] sm:$0xf]
  %v993 = vld [vmem:[%s941 + $0xcc] sm:$0xf]
  %v994 = vld [vmem:[%s941 + $0xd0] sm:$0xf]
  %v995 = vld [vmem:[%s941 + $0xd4] sm:$0xf]
  %v996 = vld [vmem:[%s941 + $0xd8] sm:$0xf]
  %v997 = vld [vmem:[%s941 + $0xdc] sm:$0xf]
  %v998 = vld [vmem:[%s941 + $0xe0] sm:$0xf]
  %v999 = vld [vmem:[%s941 + $0xe4] sm:$0xf]
  %v1000 = vld [vmem:[%s941 + $0xe8] sm:$0xf]
  %v1001 = vld [vmem:[%s941 + $0xec] sm:$0xf]
  %v1002 = vld [vmem:[%s941 + $0xf0] sm:$0xf]
  %v1003 = vld [vmem:[%s941 + $0xf4] sm:$0xf]
  %v1004 = vld [vmem:[%s941 + $0xf8] sm:$0xf]
  %v1005 = vld [vmem:[%s941 + $0xfc] sm:$0xf]
  %v1008 = vunpack.c.l.b16 %v939
  %v1009 = vunpack.c.h.b16 %v939
  %v1010 = vunpack.c.l.b16 %v940
  %v1011 = vunpack.c.h.b16 %v940
  %v1012 = vpack.c.b16 %v178, %v1008
  %v1013 = vpack.c.b16 %v179, %v1009
  %v1014 = vpack.c.b16 %v180, %v1010
  %v1015 = vpack.c.b16 %v181, %v1011
  %vm1016 = vcmask 1046528
  %v1017 = vrot.slane %v1012, 1
  %v1018 = vrot.slane %v202, 1
  %v1019 = vsel %vm1016, %v1017, %v1018
  %v1020 = vrot.slane %v1013, 1
  %v1021 = vrot.slane %v203, 1
  %v1022 = vsel %vm1016, %v1020, %v1021
  %v1023 = vrot.slane %v1014, 1
  %v1024 = vrot.slane %v204, 1
  %v1025 = vsel %vm1016, %v1023, %v1024
  %v1026 = vrot.slane %v1015, 1
  %v1027 = vrot.slane %v205, 1
  %v1028 = vsel %vm1016, %v1026, %v1027
  %v1029 = vrot.slane %v206, 1
  %v1030 = vsel %vm1016, %v1018, %v1029
  %v1031 = vrot.slane %v207, 1
  %v1032 = vsel %vm1016, %v1021, %v1031
  %v1033 = vrot.slane %v208, 1
  %v1034 = vsel %vm1016, %v1024, %v1033
  %v1035 = vrot.slane %v209, 1
  %v1036 = vsel %vm1016, %v1027, %v1035
  %v1113 = vunpack.c.l.b16 %v942
  %v1114 = vunpack.c.l.b16 %v943
  %v1115 = vunpack.c.l.b16 %v944
  %v1116 = vunpack.c.l.b16 %v945
  %v1117 = vunpack.c.l.b16 %v946
  %v1118 = vunpack.c.l.b16 %v947
  %v1119 = vunpack.c.l.b16 %v948
  %v1120 = vunpack.c.l.b16 %v949
  %v1121 = vunpack.c.l.b16 %v950
  %v1122 = vunpack.c.l.b16 %v951
  %v1123 = vunpack.c.l.b16 %v952
  %v1124 = vunpack.c.l.b16 %v953
  %v1125 = vunpack.c.l.b16 %v954
  %v1126 = vunpack.c.l.b16 %v955
  %v1127 = vunpack.c.l.b16 %v956
  %v1128 = vunpack.c.l.b16 %v957
  %v1129 = vunpack.c.l.b16 %v958
  %v1130 = vunpack.c.l.b16 %v959
  %v1131 = vunpack.c.l.b16 %v960
  %v1132 = vunpack.c.l.b16 %v961
  %v1133 = vunpack.c.l.b16 %v962
  %v1134 = vunpack.c.l.b16 %v963
  %v1135 = vunpack.c.l.b16 %v964
  %v1136 = vunpack.c.l.b16 %v965
  %v1137 = vunpack.c.l.b16 %v966
  %v1138 = vunpack.c.l.b16 %v967
  %v1139 = vunpack.c.l.b16 %v968
  %v1140 = vunpack.c.l.b16 %v969
  %v1141 = vunpack.c.l.b16 %v970
  %v1142 = vunpack.c.l.b16 %v971
  %v1143 = vunpack.c.l.b16 %v972
  %v1144 = vunpack.c.l.b16 %v973
  %v1145 = vunpack.c.l.b16 %v974
  %v1146 = vunpack.c.l.b16 %v975
  %v1147 = vunpack.c.l.b16 %v976
  %v1148 = vunpack.c.l.b16 %v977
  %v1149 = vunpack.c.l.b16 %v978
  %v1150 = vunpack.c.l.b16 %v979
  %v1151 = vunpack.c.l.b16 %v980
  %v1152 = vunpack.c.l.b16 %v981
  %v1153 = vunpack.c.l.b16 %v982
  %v1154 = vunpack.c.l.b16 %v983
  %v1155 = vunpack.c.l.b16 %v984
  %v1156 = vunpack.c.l.b16 %v985
  %v1157 = vunpack.c.l.b16 %v986
  %v1158 = vunpack.c.l.b16 %v987
  %v1159 = vunpack.c.l.b16 %v988
  %v1160 = vunpack.c.l.b16 %v989
  %v1161 = vunpack.c.l.b16 %v990
  %v1162 = vunpack.c.l.b16 %v991
  %v1163 = vunpack.c.l.b16 %v992
  %v1164 = vunpack.c.l.b16 %v993
  %v1165 = vunpack.c.l.b16 %v994
  %v1166 = vunpack.c.l.b16 %v995
  %v1167 = vunpack.c.l.b16 %v996
  %v1168 = vunpack.c.l.b16 %v997
  %v1169 = vunpack.c.l.b16 %v998
  %v1170 = vunpack.c.l.b16 %v999
  %v1171 = vunpack.c.l.b16 %v1000
  %v1172 = vunpack.c.l.b16 %v1001
  %v1173 = vunpack.c.l.b16 %v1002
  %v1174 = vunpack.c.l.b16 %v1003
  %v1175 = vunpack.c.l.b16 %v1004
  %v1176 = vunpack.c.l.b16 %v1005
  %v1177 = vpack.c.b16 %v1114, %v1113
  %v1178 = vpack.c.b16 %v1116, %v1115
  %v1179 = vpack.c.b16 %v1118, %v1117
  %v1180 = vpack.c.b16 %v1120, %v1119
  %v1181 = vpack.c.b16 %v1122, %v1121
  %v1182 = vpack.c.b16 %v1124, %v1123
  %v1183 = vpack.c.b16 %v1126, %v1125
  %v1184 = vpack.c.b16 %v1128, %v1127
  %v1185 = vpack.c.b16 %v1130, %v1129
  %v1186 = vpack.c.b16 %v1132, %v1131
  %v1187 = vpack.c.b16 %v1134, %v1133
  %v1188 = vpack.c.b16 %v1136, %v1135
  %v1189 = vpack.c.b16 %v1138, %v1137
  %v1190 = vpack.c.b16 %v1140, %v1139
  %v1191 = vpack.c.b16 %v1142, %v1141
  %v1192 = vpack.c.b16 %v1144, %v1143
  %v1193 = vpack.c.b16 %v1146, %v1145
  %v1194 = vpack.c.b16 %v1148, %v1147
  %v1195 = vpack.c.b16 %v1150, %v1149
  %v1196 = vpack.c.b16 %v1152, %v1151
  %v1197 = vpack.c.b16 %v1154, %v1153
  %v1198 = vpack.c.b16 %v1156, %v1155
  %v1199 = vpack.c.b16 %v1158, %v1157
  %v1200 = vpack.c.b16 %v1160, %v1159
  %v1201 = vpack.c.b16 %v1162, %v1161
  %v1202 = vpack.c.b16 %v1164, %v1163
  %v1203 = vpack.c.b16 %v1166, %v1165
  %v1204 = vpack.c.b16 %v1168, %v1167
  %v1205 = vpack.c.b16 %v1170, %v1169
  %v1206 = vpack.c.b16 %v1172, %v1171
  %v1207 = vpack.c.b16 %v1174, %v1173
  %v1208 = vpack.c.b16 %v1176, %v1175
  %1241 = vmatprep.subr.bf16.mxu0 0
  %1242 = vmatpush1.bf16.msra.mxu0 %v1177
  %1243 = vmatprep.subr.bf16.mxu0 0
  %1244 = vmatpush1.bf16.msra.mxu0 %v1178
  %1245 = vmatprep.subr.bf16.mxu0 0
  %1246 = vmatpush1.bf16.msra.mxu0 %v1179
  %1247 = vmatprep.subr.bf16.mxu0 0
  %1248 = vmatpush1.bf16.msra.mxu0 %v1180
  %1249 = vmatprep.subr.bf16.mxu0 0
  %1250 = vmatpush1.bf16.msra.mxu0 %v1181
  %1251 = vmatprep.subr.bf16.mxu0 0
  %1252 = vmatpush1.bf16.msra.mxu0 %v1182
  %1253 = vmatprep.subr.bf16.mxu0 0
  %1254 = vmatpush1.bf16.msra.mxu0 %v1183
  %1255 = vmatprep.subr.bf16.mxu0 0
  %1256 = vmatpush1.bf16.msra.mxu0 %v1184
  %1257 = vmatprep.subr.bf16.mxu0 0
  %1258 = vmatpush1.bf16.msra.mxu0 %v1185
  %1259 = vmatprep.subr.bf16.mxu0 0
  %1260 = vmatpush1.bf16.msra.mxu0 %v1186
  %1261 = vmatprep.subr.bf16.mxu0 0
  %1262 = vmatpush1.bf16.msra.mxu0 %v1187
  %1263 = vmatprep.subr.bf16.mxu0 0
  %1264 = vmatpush1.bf16.msra.mxu0 %v1188
  %1265 = vmatprep.subr.bf16.mxu0 0
  %1266 = vmatpush1.bf16.msra.mxu0 %v1189
  %1267 = vmatprep.subr.bf16.mxu0 0
  %1268 = vmatpush1.bf16.msra.mxu0 %v1190
  %1269 = vmatprep.subr.bf16.mxu0 0
  %1270 = vmatpush1.bf16.msra.mxu0 %v1191
  %1271 = vmatprep.subr.bf16.mxu0 0
  %1272 = vmatpush1.bf16.msra.mxu0 %v1192
  %1273 = vmatprep.mubr.bf16.mxu0 %v1022
  %1274 = vmatmul.mubr.bf16.gmra.mrb[0].mxu0 %v1019
  %v1275 = vpop.f32.mrb[0].mxu0
  %v1276 = vadd.f32 0.0, %v1275
  %v1277 = vpop.f32.mrb[0].mxu0
  %v1278 = vpop.f32.mrb[0].mxu0
  %v1279 = vadd.f32 0.0, %v1278
  %v1280 = vpop.f32.mrb[0].mxu0
  %1281 = vmatprep.mubr.bf16.mxu0 %v1032
  %1282 = vmatmul.mubr.bf16.gmra.mrb[0].mxu0 %v1030
  %v1283 = vpop.f32.mrb[0].mxu0
  %v1284 = vadd.f32 0.0, %v1283
  %v1285 = vpop.f32.mrb[0].mxu0
  %v1286 = vpop.f32.mrb[0].mxu0
  %v1287 = vadd.f32 0.0, %v1286
  %v1288 = vpop.f32.mrb[0].mxu0
  %1289 = vmatprep.mubr.bf16.mxu0 %v1031
  %1290 = vmatmul.mubr.bf16.gmra.mrb[0].mxu0 %v1029
  %v1291 = vpop.f32.mrb[0].mxu0
  %v1292 = vadd.f32 0.0, %v1291
  %v1293 = vpop.f32.mrb[0].mxu0
  %v1294 = vpop.f32.mrb[0].mxu0
  %v1295 = vpop.f32.mrb[0].mxu0
  %1296 = vdwg.mxu0
  %1297 = vmatprep.subr.bf16.mxu0 0
  %1298 = vmatpush1.bf16.msra.mxu0 %v1193
  %1299 = vmatprep.subr.bf16.mxu0 0
  %1300 = vmatpush1.bf16.msra.mxu0 %v1194
  %1301 = vmatprep.subr.bf16.mxu0 0
  %1302 = vmatpush1.bf16.msra.mxu0 %v1195
  %1303 = vmatprep.subr.bf16.mxu0 0
  %1304 = vmatpush1.bf16.msra.mxu0 %v1196
  %1305 = vmatprep.subr.bf16.mxu0 0
  %1306 = vmatpush1.bf16.msra.mxu0 %v1197
  %1307 = vmatprep.subr.bf16.mxu0 0
  %1308 = vmatpush1.bf16.msra.mxu0 %v1198
  %1309 = vmatprep.subr.bf16.mxu0 0
  %1310 = vmatpush1.bf16.msra.mxu0 %v1199
  %1311 = vmatprep.subr.bf16.mxu0 0
  %1312 = vmatpush1.bf16.msra.mxu0 %v1200
  %1313 = vmatprep.subr.bf16.mxu0 0
  %1314 = vmatpush1.bf16.msra.mxu0 %v1201
  %1315 = vmatprep.subr.bf16.mxu0 0
  %1316 = vmatpush1.bf16.msra.mxu0 %v1202
  %1317 = vmatprep.subr.bf16.mxu0 0
  %1318 = vmatpush1.bf16.msra.mxu0 %v1203
  %1319 = vmatprep.subr.bf16.mxu0 0
  %1320 = vmatpush1.bf16.msra.mxu0 %v1204
  %1321 = vmatprep.subr.bf16.mxu0 0
  %1322 = vmatpush1.bf16.msra.mxu0 %v1205
  %1323 = vmatprep.subr.bf16.mxu0 0
  %1324 = vmatpush1.bf16.msra.mxu0 %v1206
  %1325 = vmatprep.subr.bf16.mxu0 0
  %1326 = vmatpush1.bf16.msra.mxu0 %v1207
  %1327 = vmatprep.subr.bf16.mxu0 0
  %1328 = vmatpush1.bf16.msra.mxu0 %v1208
  %1329 = vmatprep.mubr.bf16.mxu0 %v1028
  %1330 = vmatmul.mubr.bf16.gmra.mrb[0].mxu0 %v1025
  %v1331 = vpop.f32.mrb[0].mxu0
  %v1332 = vadd.f32 %v1276, %v1331
  %v1333 = vpop.f32.mrb[0].mxu0
  %v1334 = vpop.f32.mrb[0].mxu0
  %v1335 = vadd.f32 %v1279, %v1334
  %v1336 = vpop.f32.mrb[0].mxu0
  %1337 = vmatprep.mubr.bf16.mxu0 %v1036
  %1338 = vmatmul.mubr.bf16.gmra.mrb[0].mxu0 %v1034
  %v1339 = vpop.f32.mrb[0].mxu0
  %v1340 = vadd.f32 %v1284, %v1339
  %v1341 = vpop.f32.mrb[0].mxu0
  %v1342 = vpop.f32.mrb[0].mxu0
  %v1343 = vadd.f32 %v1287, %v1342
  %v1344 = vpop.f32.mrb[0].mxu0
  %1345 = vmatprep.mubr.bf16.mxu0 %v1035
  %1346 = vmatmul.mubr.bf16.gmra.mrb[0].mxu0 %v1033
  %v1347 = vpop.f32.mrb[0].mxu0
  %v1348 = vadd.f32 %v1292, %v1347
  %v1349 = vpop.f32.mrb[0].mxu0
  %v1350 = vpop.f32.mrb[0].mxu0
  %v1351 = vpop.f32.mrb[0].mxu0
  %1352 = vdwg.mxu0
  %v1353 = vadd.f32 %v918, %v1332
  %v1354 = vadd.f32 %v921, %v1335
  %v1355 = vadd.f32 %v926, %v1340
  %v1356 = vadd.f32 %v929, %v1343
  %v1357 = vadd.f32 %v934, %v1348
  %v1358 = vld [vmem:[%s0 + $0x50] sm:$0x33]
  %v1359 = vld [vmem:[%s0 + $0x58] sm:$0x33]
  %s1360 = scalar_lea.vmem %s1, 768
  %v1361 = vld [vmem:[%s1360] sm:$0xf]
  %v1362 = vld [vmem:[%s1360 + $0x4] sm:$0xf]
  %v1363 = vld [vmem:[%s1360 + $0x8] sm:$0xf]
  %v1364 = vld [vmem:[%s1360 + $0xc] sm:$0xf]
  %v1365 = vld [vmem:[%s1360 + $0x10] sm:$0xf]
  %v1366 = vld [vmem:[%s1360 + $0x14] sm:$0xf]
  %v1367 = vld [vmem:[%s1360 + $0x18] sm:$0xf]
  %v1368 = vld [vmem:[%s1360 + $0x1c] sm:$0xf]
  %v1369 = vld [vmem:[%s1360 + $0x20] sm:$0xf]
  %v1370 = vld [vmem:[%s1360 + $0x24] sm:$0xf]
  %v1371 = vld [vmem:[%s1360 + $0x28] sm:$0xf]
  %v1372 = vld [vmem:[%s1360 + $0x2c] sm:$0xf]
  %v1373 = vld [vmem:[%s1360 + $0x30] sm:$0xf]
  %v1374 = vld [vmem:[%s1360 + $0x34] sm:$0xf]
  %v1375 = vld [vmem:[%s1360 + $0x38] sm:$0xf]
  %v1376 = vld [vmem:[%s1360 + $0x3c] sm:$0xf]
  %v1377 = vld [vmem:[%s1360 + $0x40] sm:$0xf]
  %v1378 = vld [vmem:[%s1360 + $0x44] sm:$0xf]
  %v1379 = vld [vmem:[%s1360 + $0x48] sm:$0xf]
  %v1380 = vld [vmem:[%s1360 + $0x4c] sm:$0xf]
  %v1381 = vld [vmem:[%s1360 + $0x50] sm:$0xf]
  %v1382 = vld [vmem:[%s1360 + $0x54] sm:$0xf]
  %v1383 = vld [vmem:[%s1360 + $0x58] sm:$0xf]
  %v1384 = vld [vmem:[%s1360 + $0x5c] sm:$0xf]
  %v1385 = vld [vmem:[%s1360 + $0x60] sm:$0xf]
  %v1386 = vld [vmem:[%s1360 + $0x64] sm:$0xf]
  %v1387 = vld [vmem:[%s1360 + $0x68] sm:$0xf]
  %v1388 = vld [vmem:[%s1360 + $0x6c] sm:$0xf]
  %v1389 = vld [vmem:[%s1360 + $0x70] sm:$0xf]
  %v1390 = vld [vmem:[%s1360 + $0x74] sm:$0xf]
  %v1391 = vld [vmem:[%s1360 + $0x78] sm:$0xf]
  %v1392 = vld [vmem:[%s1360 + $0x7c] sm:$0xf]
  %v1393 = vld [vmem:[%s1360 + $0x80] sm:$0xf]
  %v1394 = vld [vmem:[%s1360 + $0x84] sm:$0xf]
  %v1395 = vld [vmem:[%s1360 + $0x88] sm:$0xf]
  %v1396 = vld [vmem:[%s1360 + $0x8c] sm:$0xf]
  %v1397 = vld [vmem:[%s1360 + $0x90] sm:$0xf]
  %v1398 = vld [vmem:[%s1360 + $0x94] sm:$0xf]
  %v1399 = vld [vmem:[%s1360 + $0x98] sm:$0xf]
  %v1400 = vld [vmem:[%s1360 + $0x9c] sm:$0xf]
  %v1401 = vld [vmem:[%s1360 + $0xa0] sm:$0xf]
  %v1402 = vld [vmem:[%s1360 + $0xa4] sm:$0xf]
  %v1403 = vld [vmem:[%s1360 + $0xa8] sm:$0xf]
  %v1404 = vld [vmem:[%s1360 + $0xac] sm:$0xf]
  %v1405 = vld [vmem:[%s1360 + $0xb0] sm:$0xf]
  %v1406 = vld [vmem:[%s1360 + $0xb4] sm:$0xf]
  %v1407 = vld [vmem:[%s1360 + $0xb8] sm:$0xf]
  %v1408 = vld [vmem:[%s1360 + $0xbc] sm:$0xf]
  %v1409 = vld [vmem:[%s1360 + $0xc0] sm:$0xf]
  %v1410 = vld [vmem:[%s1360 + $0xc4] sm:$0xf]
  %v1411 = vld [vmem:[%s1360 + $0xc8] sm:$0xf]
  %v1412 = vld [vmem:[%s1360 + $0xcc] sm:$0xf]
  %v1413 = vld [vmem:[%s1360 + $0xd0] sm:$0xf]
  %v1414 = vld [vmem:[%s1360 + $0xd4] sm:$0xf]
  %v1415 = vld [vmem:[%s1360 + $0xd8] sm:$0xf]
  %v1416 = vld [vmem:[%s1360 + $0xdc] sm:$0xf]
  %v1417 = vld [vmem:[%s1360 + $0xe0] sm:$0xf]
  %v1418 = vld [vmem:[%s1360 + $0xe4] sm:$0xf]
  %v1419 = vld [vmem:[%s1360 + $0xe8] sm:$0xf]
  %v1420 = vld [vmem:[%s1360 + $0xec] sm:$0xf]
  %v1421 = vld [vmem:[%s1360 + $0xf0] sm:$0xf]
  %v1422 = vld [vmem:[%s1360 + $0xf4] sm:$0xf]
  %v1423 = vld [vmem:[%s1360 + $0xf8] sm:$0xf]
  %v1424 = vld [vmem:[%s1360 + $0xfc] sm:$0xf]
  %v1427 = vunpack.c.l.b16 %v1358
  %v1428 = vunpack.c.h.b16 %v1358
  %v1429 = vunpack.c.l.b16 %v1359
  %v1430 = vunpack.c.h.b16 %v1359
  %v1431 = vpack.c.b16 %v1427, %v190
  %v1432 = vpack.c.b16 %v1428, %v191
  %v1433 = vpack.c.b16 %v1429, %v192
  %v1434 = vpack.c.b16 %v1430, %v193
  %vm1435 = vsmask.f32 6400
  %v1437 = vshrl.u32 %v1012, 16
  %v1439 = vrot.slane %v1437, 1
  %v1440 = vshll.u32 %v1012, 16
  %v1442 = vrot.slane %v1440, 2
  %v1443 = vor.u32 %v1439, %v1442
  %v1444 = vrot.slane %v259, 1
  %v1445 = vrot.slane %v219, 2
  %v1446 = vor.u32 %v1444, %v1445
  %v1447 = vsel %vm1435, %v1443, %v1446
  %v1449 = vshrl.u32 %v1013, 16
  %v1451 = vrot.slane %v1449, 1
  %v1452 = vshll.u32 %v1013, 16
  %v1454 = vrot.slane %v1452, 2
  %v1455 = vor.u32 %v1451, %v1454
  %v1456 = vrot.slane %v267, 1
  %v1457 = vrot.slane %v231, 2
  %v1458 = vor.u32 %v1456, %v1457
  %v1459 = vsel %vm1435, %v1455, %v1458
  %v1461 = vshrl.u32 %v1014, 16
  %v1463 = vrot.slane %v1461, 1
  %v1464 = vshll.u32 %v1014, 16
  %v1466 = vrot.slane %v1464, 2
  %v1467 = vor.u32 %v1463, %v1466
  %v1468 = vrot.slane %v275, 1
  %v1469 = vrot.slane %v243, 2
  %v1470 = vor.u32 %v1468, %v1469
  %v1471 = vsel %vm1435, %v1467, %v1470
  %v1473 = vshrl.u32 %v1015, 16
  %v1475 = vrot.slane %v1473, 1
  %v1476 = vshll.u32 %v1015, 16
  %v1478 = vrot.slane %v1476, 2
  %v1479 = vor.u32 %v1475, %v1478
  %v1480 = vrot.slane %v283, 1
  %v1481 = vrot.slane %v255, 2
  %v1482 = vor.u32 %v1480, %v1481
  %v1483 = vsel %vm1435, %v1479, %v1482
  %v1485 = vshrl.u32 %v1431, 16
  %v1487 = vrot.slane %v1485, 1
  %v1488 = vshll.u32 %v1431, 16
  %v1490 = vrot.slane %v1488, 2
  %v1491 = vor.u32 %v1487, %v1490
  %v1492 = vsel %vm1435, %v1446, %v1491
  %v1494 = vshrl.u32 %v1432, 16
  %v1496 = vrot.slane %v1494, 1
  %v1497 = vshll.u32 %v1432, 16
  %v1499 = vrot.slane %v1497, 2
  %v1500 = vor.u32 %v1496, %v1499
  %v1501 = vsel %vm1435, %v1458, %v1500
  %v1503 = vshrl.u32 %v1433, 16
  %v1505 = vrot.slane %v1503, 1
  %v1506 = vshll.u32 %v1433, 16
  %v1508 = vrot.slane %v1506, 2
  %v1509 = vor.u32 %v1505, %v1508
  %v1510 = vsel %vm1435, %v1470, %v1509
  %v1512 = vshrl.u32 %v1434, 16
  %v1514 = vrot.slane %v1512, 1
  %v1515 = vshll.u32 %v1434, 16
  %v1517 = vrot.slane %v1515, 2
  %v1518 = vor.u32 %v1514, %v1517
  %v1519 = vsel %vm1435, %v1482, %v1518
  %v1596 = vunpack.c.l.b16 %v1361
  %v1597 = vunpack.c.l.b16 %v1362
  %v1598 = vunpack.c.l.b16 %v1363
  %v1599 = vunpack.c.l.b16 %v1364
  %v1600 = vunpack.c.l.b16 %v1365
  %v1601 = vunpack.c.l.b16 %v1366
  %v1602 = vunpack.c.l.b16 %v1367
  %v1603 = vunpack.c.l.b16 %v1368
  %v1604 = vunpack.c.l.b16 %v1369
  %v1605 = vunpack.c.l.b16 %v1370
  %v1606 = vunpack.c.l.b16 %v1371
  %v1607 = vunpack.c.l.b16 %v1372
  %v1608 = vunpack.c.l.b16 %v1373
  %v1609 = vunpack.c.l.b16 %v1374
  %v1610 = vunpack.c.l.b16 %v1375
  %v1611 = vunpack.c.l.b16 %v1376
  %v1612 = vunpack.c.l.b16 %v1377
  %v1613 = vunpack.c.l.b16 %v1378
  %v1614 = vunpack.c.l.b16 %v1379
  %v1615 = vunpack.c.l.b16 %v1380
  %v1616 = vunpack.c.l.b16 %v1381
  %v1617 = vunpack.c.l.b16 %v1382
  %v1618 = vunpack.c.l.b16 %v1383
  %v1619 = vunpack.c.l.b16 %v1384
  %v1620 = vunpack.c.l.b16 %v1385
  %v1621 = vunpack.c.l.b16 %v1386
  %v1622 = vunpack.c.l.b16 %v1387
  %v1623 = vunpack.c.l.b16 %v1388
  %v1624 = vunpack.c.l.b16 %v1389
  %v1625 = vunpack.c.l.b16 %v1390
  %v1626 = vunpack.c.l.b16 %v1391
  %v1627 = vunpack.c.l.b16 %v1392
  %v1628 = vunpack.c.l.b16 %v1393
  %v1629 = vunpack.c.l.b16 %v1394
  %v1630 = vunpack.c.l.b16 %v1395
  %v1631 = vunpack.c.l.b16 %v1396
  %v1632 = vunpack.c.l.b16 %v1397
  %v1633 = vunpack.c.l.b16 %v1398
  %v1634 = vunpack.c.l.b16 %v1399
  %v1635 = vunpack.c.l.b16 %v1400
  %v1636 = vunpack.c.l.b16 %v1401
  %v1637 = vunpack.c.l.b16 %v1402
  %v1638 = vunpack.c.l.b16 %v1403
  %v1639 = vunpack.c.l.b16 %v1404
  %v1640 = vunpack.c.l.b16 %v1405
  %v1641 = vunpack.c.l.b16 %v1406
  %v1642 = vunpack.c.l.b16 %v1407
  %v1643 = vunpack.c.l.b16 %v1408
  %v1644 = vunpack.c.l.b16 %v1409
  %v1645 = vunpack.c.l.b16 %v1410
  %v1646 = vunpack.c.l.b16 %v1411
  %v1647 = vunpack.c.l.b16 %v1412
  %v1648 = vunpack.c.l.b16 %v1413
  %v1649 = vunpack.c.l.b16 %v1414
  %v1650 = vunpack.c.l.b16 %v1415
  %v1651 = vunpack.c.l.b16 %v1416
  %v1652 = vunpack.c.l.b16 %v1417
  %v1653 = vunpack.c.l.b16 %v1418
  %v1654 = vunpack.c.l.b16 %v1419
  %v1655 = vunpack.c.l.b16 %v1420
  %v1656 = vunpack.c.l.b16 %v1421
  %v1657 = vunpack.c.l.b16 %v1422
  %v1658 = vunpack.c.l.b16 %v1423
  %v1659 = vunpack.c.l.b16 %v1424
  %v1660 = vpack.c.b16 %v1597, %v1596
  %v1661 = vpack.c.b16 %v1599, %v1598
  %v1662 = vpack.c.b16 %v1601, %v1600
  %v1663 = vpack.c.b16 %v1603, %v1602
  %v1664 = vpack.c.b16 %v1605, %v1604
  %v1665 = vpack.c.b16 %v1607, %v1606
  %v1666 = vpack.c.b16 %v1609, %v1608
  %v1667 = vpack.c.b16 %v1611, %v1610
  %v1668 = vpack.c.b16 %v1613, %v1612
  %v1669 = vpack.c.b16 %v1615, %v1614
  %v1670 = vpack.c.b16 %v1617, %v1616
  %v1671 = vpack.c.b16 %v1619, %v1618
  %v1672 = vpack.c.b16 %v1621, %v1620
  %v1673 = vpack.c.b16 %v1623, %v1622
  %v1674 = vpack.c.b16 %v1625, %v1624
  %v1675 = vpack.c.b16 %v1627, %v1626
  %v1676 = vpack.c.b16 %v1629, %v1628
  %v1677 = vpack.c.b16 %v1631, %v1630
  %v1678 = vpack.c.b16 %v1633, %v1632
  %v1679 = vpack.c.b16 %v1635, %v1634
  %v1680 = vpack.c.b16 %v1637, %v1636
  %v1681 = vpack.c.b16 %v1639, %v1638
  %v1682 = vpack.c.b16 %v1641, %v1640
  %v1683 = vpack.c.b16 %v1643, %v1642
  %v1684 = vpack.c.b16 %v1645, %v1644
  %v1685 = vpack.c.b16 %v1647, %v1646
  %v1686 = vpack.c.b16 %v1649, %v1648
  %v1687 = vpack.c.b16 %v1651, %v1650
  %v1688 = vpack.c.b16 %v1653, %v1652
  %v1689 = vpack.c.b16 %v1655, %v1654
  %v1690 = vpack.c.b16 %v1657, %v1656
  %v1691 = vpack.c.b16 %v1659, %v1658
  %1724 = vmatprep.subr.bf16.mxu0 0
  %1725 = vmatpush1.bf16.msra.mxu0 %v1660
  %1726 = vmatprep.subr.bf16.mxu0 0
  %1727 = vmatpush1.bf16.msra.mxu0 %v1661
  %1728 = vmatprep.subr.bf16.mxu0 0
  %1729 = vmatpush1.bf16.msra.mxu0 %v1662
  %1730 = vmatprep.subr.bf16.mxu0 0
  %1731 = vmatpush1.bf16.msra.mxu0 %v1663
  %1732 = vmatprep.subr.bf16.mxu0 0
  %1733 = vmatpush1.bf16.msra.mxu0 %v1664
  %1734 = vmatprep.subr.bf16.mxu0 0
  %1735 = vmatpush1.bf16.msra.mxu0 %v1665
  %1736 = vmatprep.subr.bf16.mxu0 0
  %1737 = vmatpush1.bf16.msra.mxu0 %v1666
  %1738 = vmatprep.subr.bf16.mxu0 0
  %1739 = vmatpush1.bf16.msra.mxu0 %v1667
  %1740 = vmatprep.subr.bf16.mxu0 0
  %1741 = vmatpush1.bf16.msra.mxu0 %v1668
  %1742 = vmatprep.subr.bf16.mxu0 0
  %1743 = vmatpush1.bf16.msra.mxu0 %v1669
  %1744 = vmatprep.subr.bf16.mxu0 0
  %1745 = vmatpush1.bf16.msra.mxu0 %v1670
  %1746 = vmatprep.subr.bf16.mxu0 0
  %1747 = vmatpush1.bf16.msra.mxu0 %v1671
  %1748 = vmatprep.subr.bf16.mxu0 0
  %1749 = vmatpush1.bf16.msra.mxu0 %v1672
  %1750 = vmatprep.subr.bf16.mxu0 0
  %1751 = vmatpush1.bf16.msra.mxu0 %v1673
  %1752 = vmatprep.subr.bf16.mxu0 0
  %1753 = vmatpush1.bf16.msra.mxu0 %v1674
  %1754 = vmatprep.subr.bf16.mxu0 0
  %1755 = vmatpush1.bf16.msra.mxu0 %v1675
  %1756 = vmatprep.mubr.bf16.mxu0 %v1459
  %1757 = vmatmul.mubr.bf16.gmra.mrb[0].mxu0 %v1447
  %v1758 = vpop.f32.mrb[0].mxu0
  %v1759 = vadd.f32 0.0, %v1758
  %v1760 = vpop.f32.mrb[0].mxu0
  %v1761 = vpop.f32.mrb[0].mxu0
  %v1762 = vadd.f32 0.0, %v1761
  %v1763 = vpop.f32.mrb[0].mxu0
  %1764 = vmatprep.mubr.bf16.mxu0 %v1501
  %1765 = vmatmul.mubr.bf16.gmra.mrb[0].mxu0 %v1492
  %v1766 = vpop.f32.mrb[0].mxu0
  %v1767 = vadd.f32 0.0, %v1766
  %v1768 = vpop.f32.mrb[0].mxu0
  %v1769 = vpop.f32.mrb[0].mxu0
  %v1770 = vadd.f32 0.0, %v1769
  %v1771 = vpop.f32.mrb[0].mxu0
  %1772 = vmatprep.mubr.bf16.mxu0 %v1500
  %1773 = vmatmul.mubr.bf16.gmra.mrb[0].mxu0 %v1491
  %v1774 = vpop.f32.mrb[0].mxu0
  %v1775 = vadd.f32 0.0, %v1774
  %v1776 = vpop.f32.mrb[0].mxu0
  %v1777 = vpop.f32.mrb[0].mxu0
  %v1778 = vpop.f32.mrb[0].mxu0
  %1779 = vdwg.mxu0
  %1780 = vmatprep.subr.bf16.mxu0 0
  %1781 = vmatpush1.bf16.msra.mxu0 %v1676
  %1782 = vmatprep.subr.bf16.mxu0 0
  %1783 = vmatpush1.bf16.msra.mxu0 %v1677
  %1784 = vmatprep.subr.bf16.mxu0 0
  %1785 = vmatpush1.bf16.msra.mxu0 %v1678
  %1786 = vmatprep.subr.bf16.mxu0 0
  %1787 = vmatpush1.bf16.msra.mxu0 %v1679
  %1788 = vmatprep.subr.bf16.mxu0 0
  %1789 = vmatpush1.bf16.msra.mxu0 %v1680
  %1790 = vmatprep.subr.bf16.mxu0 0
  %1791 = vmatpush1.bf16.msra.mxu0 %v1681
  %1792 = vmatprep.subr.bf16.mxu0 0
  %1793 = vmatpush1.bf16.msra.mxu0 %v1682
  %1794 = vmatprep.subr.bf16.mxu0 0
  %1795 = vmatpush1.bf16.msra.mxu0 %v1683
  %1796 = vmatprep.subr.bf16.mxu0 0
  %1797 = vmatpush1.bf16.msra.mxu0 %v1684
  %1798 = vmatprep.subr.bf16.mxu0 0
  %1799 = vmatpush1.bf16.msra.mxu0 %v1685
  %1800 = vmatprep.subr.bf16.mxu0 0
  %1801 = vmatpush1.bf16.msra.mxu0 %v1686
  %1802 = vmatprep.subr.bf16.mxu0 0
  %1803 = vmatpush1.bf16.msra.mxu0 %v1687
  %1804 = vmatprep.subr.bf16.mxu0 0
  %1805 = vmatpush1.bf16.msra.mxu0 %v1688
  %1806 = vmatprep.subr.bf16.mxu0 0
  %1807 = vmatpush1.bf16.msra.mxu0 %v1689
  %1808 = vmatprep.subr.bf16.mxu0 0
  %1809 = vmatpush1.bf16.msra.mxu0 %v1690
  %1810 = vmatprep.subr.bf16.mxu0 0
  %1811 = vmatpush1.bf16.msra.mxu0 %v1691
  %1812 = vmatprep.mubr.bf16.mxu0 %v1483
  %1813 = vmatmul.mubr.bf16.gmra.mrb[0].mxu0 %v1471
  %v1814 = vpop.f32.mrb[0].mxu0
  %v1815 = vadd.f32 %v1759, %v1814
  %v1816 = vpop.f32.mrb[0].mxu0
  %v1817 = vpop.f32.mrb[0].mxu0
  %v1818 = vadd.f32 %v1762, %v1817
  %v1819 = vpop.f32.mrb[0].mxu0
  %1820 = vmatprep.mubr.bf16.mxu0 %v1519
  %1821 = vmatmul.mubr.bf16.gmra.mrb[0].mxu0 %v1510
  %v1822 = vpop.f32.mrb[0].mxu0
  %v1823 = vadd.f32 %v1767, %v1822
  %v1824 = vpop.f32.mrb[0].mxu0
  %v1825 = vpop.f32.mrb[0].mxu0
  %v1826 = vadd.f32 %v1770, %v1825
  %v1827 = vpop.f32.mrb[0].mxu0
  %1828 = vmatprep.mubr.bf16.mxu0 %v1518
  %1829 = vmatmul.mubr.bf16.gmra.mrb[0].mxu0 %v1509
  %v1830 = vpop.f32.mrb[0].mxu0
  %v1831 = vadd.f32 %v1775, %v1830
  %v1832 = vpop.f32.mrb[0].mxu0
  %v1833 = vpop.f32.mrb[0].mxu0
  %v1834 = vpop.f32.mrb[0].mxu0
  %1835 = vdwg.mxu0
  %v1836 = vadd.f32 %v1353, %v1815
  %v1837 = vadd.f32 %v1354, %v1818
  %v1838 = vadd.f32 %v1355, %v1823
  %v1839 = vadd.f32 %v1356, %v1826
  %v1840 = vadd.f32 %v1357, %v1831
  %v1841 = vld [vmem:[%s0] sm:$0xcc]
  %v1842 = vld [vmem:[%s0 + $0x8] sm:$0xcc]
  %s1843 = scalar_lea.vmem %s1, 1024
  %v1844 = vld [vmem:[%s1843] sm:$0xf]
  %v1845 = vld [vmem:[%s1843 + $0x4] sm:$0xf]
  %v1846 = vld [vmem:[%s1843 + $0x8] sm:$0xf]
  %v1847 = vld [vmem:[%s1843 + $0xc] sm:$0xf]
  %v1848 = vld [vmem:[%s1843 + $0x10] sm:$0xf]
  %v1849 = vld [vmem:[%s1843 + $0x14] sm:$0xf]
  %v1850 = vld [vmem:[%s1843 + $0x18] sm:$0xf]
  %v1851 = vld [vmem:[%s1843 + $0x1c] sm:$0xf]
  %v1852 = vld [vmem:[%s1843 + $0x20] sm:$0xf]
  %v1853 = vld [vmem:[%s1843 + $0x24] sm:$0xf]
  %v1854 = vld [vmem:[%s1843 + $0x28] sm:$0xf]
  %v1855 = vld [vmem:[%s1843 + $0x2c] sm:$0xf]
  %v1856 = vld [vmem:[%s1843 + $0x30] sm:$0xf]
  %v1857 = vld [vmem:[%s1843 + $0x34] sm:$0xf]
  %v1858 = vld [vmem:[%s1843 + $0x38] sm:$0xf]
  %v1859 = vld [vmem:[%s1843 + $0x3c] sm:$0xf]
  %v1860 = vld [vmem:[%s1843 + $0x40] sm:$0xf]
  %v1861 = vld [vmem:[%s1843 + $0x44] sm:$0xf]
  %v1862 = vld [vmem:[%s1843 + $0x48] sm:$0xf]
  %v1863 = vld [vmem:[%s1843 + $0x4c] sm:$0xf]
  %v1864 = vld [vmem:[%s1843 + $0x50] sm:$0xf]
  %v1865 = vld [vmem:[%s1843 + $0x54] sm:$0xf]
  %v1866 = vld [vmem:[%s1843 + $0x58] sm:$0xf]
  %v1867 = vld [vmem:[%s1843 + $0x5c] sm:$0xf]
  %v1868 = vld [vmem:[%s1843 + $0x60] sm:$0xf]
  %v1869 = vld [vmem:[%s1843 + $0x64] sm:$0xf]
  %v1870 = vld [vmem:[%s1843 + $0x68] sm:$0xf]
  %v1871 = vld [vmem:[%s1843 + $0x6c] sm:$0xf]
  %v1872 = vld [vmem:[%s1843 + $0x70] sm:$0xf]
  %v1873 = vld [vmem:[%s1843 + $0x74] sm:$0xf]
  %v1874 = vld [vmem:[%s1843 + $0x78] sm:$0xf]
  %v1875 = vld [vmem:[%s1843 + $0x7c] sm:$0xf]
  %v1876 = vld [vmem:[%s1843 + $0x80] sm:$0xf]
  %v1877 = vld [vmem:[%s1843 + $0x84] sm:$0xf]
  %v1878 = vld [vmem:[%s1843 + $0x88] sm:$0xf]
  %v1879 = vld [vmem:[%s1843 + $0x8c] sm:$0xf]
  %v1880 = vld [vmem:[%s1843 + $0x90] sm:$0xf]
  %v1881 = vld [vmem:[%s1843 + $0x94] sm:$0xf]
  %v1882 = vld [vmem:[%s1843 + $0x98] sm:$0xf]
  %v1883 = vld [vmem:[%s1843 + $0x9c] sm:$0xf]
  %v1884 = vld [vmem:[%s1843 + $0xa0] sm:$0xf]
  %v1885 = vld [vmem:[%s1843 + $0xa4] sm:$0xf]
  %v1886 = vld [vmem:[%s1843 + $0xa8] sm:$0xf]
  %v1887 = vld [vmem:[%s1843 + $0xac] sm:$0xf]
  %v1888 = vld [vmem:[%s1843 + $0xb0] sm:$0xf]
  %v1889 = vld [vmem:[%s1843 + $0xb4] sm:$0xf]
  %v1890 = vld [vmem:[%s1843 + $0xb8] sm:$0xf]
  %v1891 = vld [vmem:[%s1843 + $0xbc] sm:$0xf]
  %v1892 = vld [vmem:[%s1843 + $0xc0] sm:$0xf]
  %v1893 = vld [vmem:[%s1843 + $0xc4] sm:$0xf]
  %v1894 = vld [vmem:[%s1843 + $0xc8] sm:$0xf]
  %v1895 = vld [vmem:[%s1843 + $0xcc] sm:$0xf]
  %v1896 = vld [vmem:[%s1843 + $0xd0] sm:$0xf]
  %v1897 = vld [vmem:[%s1843 + $0xd4] sm:$0xf]
  %v1898 = vld [vmem:[%s1843 + $0xd8] sm:$0xf]
  %v1899 = vld [vmem:[%s1843 + $0xdc] sm:$0xf]
  %v1900 = vld [vmem:[%s1843 + $0xe0] sm:$0xf]
  %v1901 = vld [vmem:[%s1843 + $0xe4] sm:$0xf]
  %v1902 = vld [vmem:[%s1843 + $0xe8] sm:$0xf]
  %v1903 = vld [vmem:[%s1843 + $0xec] sm:$0xf]
  %v1904 = vld [vmem:[%s1843 + $0xf0] sm:$0xf]
  %v1905 = vld [vmem:[%s1843 + $0xf4] sm:$0xf]
  %v1906 = vld [vmem:[%s1843 + $0xf8] sm:$0xf]
  %v1907 = vld [vmem:[%s1843 + $0xfc] sm:$0xf]
  %v1910 = vunpack.c.l.b16 %v1841
  %v1911 = vunpack.c.h.b16 %v1841
  %v1912 = vunpack.c.l.b16 %v1842
  %v1913 = vunpack.c.h.b16 %v1842
  %v1914 = vpack.c.b16 %v178, %v1910
  %v1915 = vpack.c.b16 %v179, %v1911
  %v1916 = vpack.c.b16 %v180, %v1912
  %v1917 = vpack.c.b16 %v181, %v1913
  %vm1918 = vcmask 1045504
  %v1919 = vrot.slane %v1914, 2
  %v1920 = vrot.slane %v202, 2
  %v1921 = vsel %vm1918, %v1919, %v1920
  %v1922 = vrot.slane %v1915, 2
  %v1923 = vrot.slane %v203, 2
  %v1924 = vsel %vm1918, %v1922, %v1923
  %v1925 = vrot.slane %v1916, 2
  %v1926 = vrot.slane %v204, 2
  %v1927 = vsel %vm1918, %v1925, %v1926
  %v1928 = vrot.slane %v1917, 2
  %v1929 = vrot.slane %v205, 2
  %v1930 = vsel %vm1918, %v1928, %v1929
  %v1931 = vrot.slane %v1431, 2
  %v1932 = vsel %vm1918, %v1920, %v1931
  %v1933 = vrot.slane %v1432, 2
  %v1934 = vsel %vm1918, %v1923, %v1933
  %v1935 = vrot.slane %v1433, 2
  %v1936 = vsel %vm1918, %v1926, %v1935
  %v1937 = vrot.slane %v1434, 2
  %v1938 = vsel %vm1918, %v1929, %v1937
  %v2015 = vunpack.c.l.b16 %v1844
  %v2016 = vunpack.c.l.b16 %v1845
  %v2017 = vunpack.c.l.b16 %v1846
  %v2018 = vunpack.c.l.b16 %v1847
  %v2019 = vunpack.c.l.b16 %v1848
  %v2020 = vunpack.c.l.b16 %v1849
  %v2021 = vunpack.c.l.b16 %v1850
  %v2022 = vunpack.c.l.b16 %v1851
  %v2023 = vunpack.c.l.b16 %v1852
  %v2024 = vunpack.c.l.b16 %v1853
  %v2025 = vunpack.c.l.b16 %v1854
  %v2026 = vunpack.c.l.b16 %v1855
  %v2027 = vunpack.c.l.b16 %v1856
  %v2028 = vunpack.c.l.b16 %v1857
  %v2029 = vunpack.c.l.b16 %v1858
  %v2030 = vunpack.c.l.b16 %v1859
  %v2031 = vunpack.c.l.b16 %v1860
  %v2032 = vunpack.c.l.b16 %v1861
  %v2033 = vunpack.c.l.b16 %v1862
  %v2034 = vunpack.c.l.b16 %v1863
  %v2035 = vunpack.c.l.b16 %v1864
  %v2036 = vunpack.c.l.b16 %v1865
  %v2037 = vunpack.c.l.b16 %v1866
  %v2038 = vunpack.c.l.b16 %v1867
  %v2039 = vunpack.c.l.b16 %v1868
  %v2040 = vunpack.c.l.b16 %v1869
  %v2041 = vunpack.c.l.b16 %v1870
  %v2042 = vunpack.c.l.b16 %v1871
  %v2043 = vunpack.c.l.b16 %v1872
  %v2044 = vunpack.c.l.b16 %v1873
  %v2045 = vunpack.c.l.b16 %v1874
  %v2046 = vunpack.c.l.b16 %v1875
  %v2047 = vunpack.c.l.b16 %v1876
  %v2048 = vunpack.c.l.b16 %v1877
  %v2049 = vunpack.c.l.b16 %v1878
  %v2050 = vunpack.c.l.b16 %v1879
  %v2051 = vunpack.c.l.b16 %v1880
  %v2052 = vunpack.c.l.b16 %v1881
  %v2053 = vunpack.c.l.b16 %v1882
  %v2054 = vunpack.c.l.b16 %v1883
  %v2055 = vunpack.c.l.b16 %v1884
  %v2056 = vunpack.c.l.b16 %v1885
  %v2057 = vunpack.c.l.b16 %v1886
  %v2058 = vunpack.c.l.b16 %v1887
  %v2059 = vunpack.c.l.b16 %v1888
  %v2060 = vunpack.c.l.b16 %v1889
  %v2061 = vunpack.c.l.b16 %v1890
  %v2062 = vunpack.c.l.b16 %v1891
  %v2063 = vunpack.c.l.b16 %v1892
  %v2064 = vunpack.c.l.b16 %v1893
  %v2065 = vunpack.c.l.b16 %v1894
  %v2066 = vunpack.c.l.b16 %v1895
  %v2067 = vunpack.c.l.b16 %v1896
  %v2068 = vunpack.c.l.b16 %v1897
  %v2069 = vunpack.c.l.b16 %v1898
  %v2070 = vunpack.c.l.b16 %v1899
  %v2071 = vunpack.c.l.b16 %v1900
  %v2072 = vunpack.c.l.b16 %v1901
  %v2073 = vunpack.c.l.b16 %v1902
  %v2074 = vunpack.c.l.b16 %v1903
  %v2075 = vunpack.c.l.b16 %v1904
  %v2076 = vunpack.c.l.b16 %v1905
  %v2077 = vunpack.c.l.b16 %v1906
  %v2078 = vunpack.c.l.b16 %v1907
  %v2079 = vpack.c.b16 %v2016, %v2015
  %v2080 = vpack.c.b16 %v2018, %v2017
  %v2081 = vpack.c.b16 %v2020, %v2019
  %v2082 = vpack.c.b16 %v2022, %v2021
  %v2083 = vpack.c.b16 %v2024, %v2023
  %v2084 = vpack.c.b16 %v2026, %v2025
  %v2085 = vpack.c.b16 %v2028, %v2027
  %v2086 = vpack.c.b16 %v2030, %v2029
  %v2087 = vpack.c.b16 %v2032, %v2031
  %v2088 = vpack.c.b16 %v2034, %v2033
  %v2089 = vpack.c.b16 %v2036, %v2035
  %v2090 = vpack.c.b16 %v2038, %v2037
  %v2091 = vpack.c.b16 %v2040, %v2039
  %v2092 = vpack.c.b16 %v2042, %v2041
  %v2093 = vpack.c.b16 %v2044, %v2043
  %v2094 = vpack.c.b16 %v2046, %v2045
  %v2095 = vpack.c.b16 %v2048, %v2047
  %v2096 = vpack.c.b16 %v2050, %v2049
  %v2097 = vpack.c.b16 %v2052, %v2051
  %v2098 = vpack.c.b16 %v2054, %v2053
  %v2099 = vpack.c.b16 %v2056, %v2055
  %v2100 = vpack.c.b16 %v2058, %v2057
  %v2101 = vpack.c.b16 %v2060, %v2059
  %v2102 = vpack.c.b16 %v2062, %v2061
  %v2103 = vpack.c.b16 %v2064, %v2063
  %v2104 = vpack.c.b16 %v2066, %v2065
  %v2105 = vpack.c.b16 %v2068, %v2067
  %v2106 = vpack.c.b16 %v2070, %v2069
  %v2107 = vpack.c.b16 %v2072, %v2071
  %v2108 = vpack.c.b16 %v2074, %v2073
  %v2109 = vpack.c.b16 %v2076, %v2075
  %v2110 = vpack.c.b16 %v2078, %v2077
  %2143 = vmatprep.subr.bf16.mxu0 0
  %2144 = vmatpush1.bf16.msra.mxu0 %v2079
  %2145 = vmatprep.subr.bf16.mxu0 0
  %2146 = vmatpush1.bf16.msra.mxu0 %v2080
  %2147 = vmatprep.subr.bf16.mxu0 0
  %2148 = vmatpush1.bf16.msra.mxu0 %v2081
  %2149 = vmatprep.subr.bf16.mxu0 0
  %2150 = vmatpush1.bf16.msra.mxu0 %v2082
  %2151 = vmatprep.subr.bf16.mxu0 0
  %2152 = vmatpush1.bf16.msra.mxu0 %v2083
  %2153 = vmatprep.subr.bf16.mxu0 0
  %2154 = vmatpush1.bf16.msra.mxu0 %v2084
  %2155 = vmatprep.subr.bf16.mxu0 0
  %2156 = vmatpush1.bf16.msra.mxu0 %v2085
  %2157 = vmatprep.subr.bf16.mxu0 0
  %2158 = vmatpush1.bf16.msra.mxu0 %v2086
  %2159 = vmatprep.subr.bf16.mxu0 0
  %2160 = vmatpush1.bf16.msra.mxu0 %v2087
  %2161 = vmatprep.subr.bf16.mxu0 0
  %2162 = vmatpush1.bf16.msra.mxu0 %v2088
  %2163 = vmatprep.subr.bf16.mxu0 0
  %2164 = vmatpush1.bf16.msra.mxu0 %v2089
  %2165 = vmatprep.subr.bf16.mxu0 0
  %2166 = vmatpush1.bf16.msra.mxu0 %v2090
  %2167 = vmatprep.subr.bf16.mxu0 0
  %2168 = vmatpush1.bf16.msra.mxu0 %v2091
  %2169 = vmatprep.subr.bf16.mxu0 0
  %2170 = vmatpush1.bf16.msra.mxu0 %v2092
  %2171 = vmatprep.subr.bf16.mxu0 0
  %2172 = vmatpush1.bf16.msra.mxu0 %v2093
  %2173 = vmatprep.subr.bf16.mxu0 0
  %2174 = vmatpush1.bf16.msra.mxu0 %v2094
  %2175 = vmatprep.mubr.bf16.mxu0 %v1924
  %2176 = vmatmul.mubr.bf16.gmra.mrb[0].mxu0 %v1921
  %v2177 = vpop.f32.mrb[0].mxu0
  %v2178 = vadd.f32 0.0, %v2177
  %v2179 = vpop.f32.mrb[0].mxu0
  %v2180 = vpop.f32.mrb[0].mxu0
  %v2181 = vadd.f32 0.0, %v2180
  %v2182 = vpop.f32.mrb[0].mxu0
  %2183 = vmatprep.mubr.bf16.mxu0 %v1934
  %2184 = vmatmul.mubr.bf16.gmra.mrb[0].mxu0 %v1932
  %v2185 = vpop.f32.mrb[0].mxu0
  %v2186 = vadd.f32 0.0, %v2185
  %v2187 = vpop.f32.mrb[0].mxu0
  %v2188 = vpop.f32.mrb[0].mxu0
  %v2189 = vadd.f32 0.0, %v2188
  %v2190 = vpop.f32.mrb[0].mxu0
  %2191 = vmatprep.mubr.bf16.mxu0 %v1933
  %2192 = vmatmul.mubr.bf16.gmra.mrb[0].mxu0 %v1931
  %v2193 = vpop.f32.mrb[0].mxu0
  %v2194 = vadd.f32 0.0, %v2193
  %v2195 = vpop.f32.mrb[0].mxu0
  %v2196 = vpop.f32.mrb[0].mxu0
  %v2197 = vpop.f32.mrb[0].mxu0
  %2198 = vdwg.mxu0
  %2199 = vmatprep.subr.bf16.mxu0 0
  %2200 = vmatpush1.bf16.msra.mxu0 %v2095
  %2201 = vmatprep.subr.bf16.mxu0 0
  %2202 = vmatpush1.bf16.msra.mxu0 %v2096
  %2203 = vmatprep.subr.bf16.mxu0 0
  %2204 = vmatpush1.bf16.msra.mxu0 %v2097
  %2205 = vmatprep.subr.bf16.mxu0 0
  %2206 = vmatpush1.bf16.msra.mxu0 %v2098
  %2207 = vmatprep.subr.bf16.mxu0 0
  %2208 = vmatpush1.bf16.msra.mxu0 %v2099
  %2209 = vmatprep.subr.bf16.mxu0 0
  %2210 = vmatpush1.bf16.msra.mxu0 %v2100
  %2211 = vmatprep.subr.bf16.mxu0 0
  %2212 = vmatpush1.bf16.msra.mxu0 %v2101
  %2213 = vmatprep.subr.bf16.mxu0 0
  %2214 = vmatpush1.bf16.msra.mxu0 %v2102
  %2215 = vmatprep.subr.bf16.mxu0 0
  %2216 = vmatpush1.bf16.msra.mxu0 %v2103
  %2217 = vmatprep.subr.bf16.mxu0 0
  %2218 = vmatpush1.bf16.msra.mxu0 %v2104
  %2219 = vmatprep.subr.bf16.mxu0 0
  %2220 = vmatpush1.bf16.msra.mxu0 %v2105
  %2221 = vmatprep.subr.bf16.mxu0 0
  %2222 = vmatpush1.bf16.msra.mxu0 %v2106
  %2223 = vmatprep.subr.bf16.mxu0 0
  %2224 = vmatpush1.bf16.msra.mxu0 %v2107
  %2225 = vmatprep.subr.bf16.mxu0 0
  %2226 = vmatpush1.bf16.msra.mxu0 %v2108
  %2227 = vmatprep.subr.bf16.mxu0 0
  %2228 = vmatpush1.bf16.msra.mxu0 %v2109
  %2229 = vmatprep.subr.bf16.mxu0 0
  %2230 = vmatpush1.bf16.msra.mxu0 %v2110
  %2231 = vmatprep.mubr.bf16.mxu0 %v1930
  %2232 = vmatmul.mubr.bf16.gmra.mrb[0].mxu0 %v1927
  %v2233 = vpop.f32.mrb[0].mxu0
  %v2234 = vadd.f32 %v2178, %v2233
  %v2235 = vpop.f32.mrb[0].mxu0
  %v2236 = vpop.f32.mrb[0].mxu0
  %v2237 = vadd.f32 %v2181, %v2236
  %v2238 = vpop.f32.mrb[0].mxu0
  %2239 = vmatprep.mubr.bf16.mxu0 %v1938
  %2240 = vmatmul.mubr.bf16.gmra.mrb[0].mxu0 %v1936
  %v2241 = vpop.f32.mrb[0].mxu0
  %v2242 = vadd.f32 %v2186, %v2241
  %v2243 = vpop.f32.mrb[0].mxu0
  %v2244 = vpop.f32.mrb[0].mxu0
  %v2245 = vadd.f32 %v2189, %v2244
  %v2246 = vpop.f32.mrb[0].mxu0
  %2247 = vmatprep.mubr.bf16.mxu0 %v1937
  %2248 = vmatmul.mubr.bf16.gmra.mrb[0].mxu0 %v1935
  %v2249 = vpop.f32.mrb[0].mxu0
  %v2250 = vadd.f32 %v2194, %v2249
  %v2251 = vpop.f32.mrb[0].mxu0
  %v2252 = vpop.f32.mrb[0].mxu0
  %v2253 = vpop.f32.mrb[0].mxu0
  %2254 = vdwg.mxu0
  %v2255 = vadd.f32 %v1836, %v2234
  %v2256 = vadd.f32 %v1837, %v2237
  %v2257 = vadd.f32 %v1838, %v2242
  %v2258 = vadd.f32 %v1839, %v2245
  %v2259 = vadd.f32 %v1840, %v2250
  %v2260 = vld [vmem:[%s4] sm:$0xff]
  %v2261 = vld [vmem:[%s4 + $0x8] sm:$0xff]
  %v2262 = vld [vmem:[%s4 + $0x10] sm:$0xff]
  %v2263 = vld [vmem:[%s4 + $0x18] sm:$0xff]
  %v2264 = vld [vmem:[%s4 + $0x20] sm:$0xff]
  %2266 = vset.pattern.permute.xlu0 0
  %2267 = vperm.xlu0 %2266, %v2260
  %v2268 = vpop.permute.xlu0 %2267
  %2271 = vset.pattern.permute.xlu0 0
  %2272 = vperm.xlu0 %2271, %v2261
  %v2273 = vpop.permute.xlu0 %2272
  %2276 = vset.pattern.permute.xlu0 0
  %2277 = vperm.xlu0 %2276, %v2262
  %v2278 = vpop.permute.xlu0 %2277
  %2281 = vset.pattern.permute.xlu0 0
  %2282 = vperm.xlu0 %2281, %v2263
  %v2283 = vpop.permute.xlu0 %2282
  %2286 = vset.pattern.permute.xlu0 0
  %2287 = vperm.xlu0 %2286, %v2264
  %v2288 = vpop.permute.xlu0 %2287
  %v2290 = vmul.f32 %v2255, %v2268
  %v2291 = vmul.f32 %v2256, %v2273
  %v2292 = vmul.f32 %v2257, %v2278
  %v2293 = vmul.f32 %v2258, %v2283
  %v2294 = vmul.f32 %v2259, %v2288
  %v2295 = vadd.f32 %v2290, %v2291
  %v2296 = vadd.f32 %v2295, %v2292
  %v2297 = vadd.f32 %v2296, %v2293
  %v2298 = vadd.f32 %v2297, %v2294
  %v2299 = vrot.slane %v2298, 4
  %v2300 = vadd.f32 %v2298, %v2299
  %v2301 = vrot.slane %v2300, 2
  %v2302 = vadd.f32 %v2300, %v2301
  %v2303 = vrot.slane %v2302, 1
  %v2304 = vadd.f32 %v2302, %v2303
  %v2305 = vmul.f32 %v2304, 0.03125
  %v2306 = vmul.f32 %v2290, %v2290
  %v2307 = vmul.f32 %v2291, %v2291
  %v2308 = vmul.f32 %v2292, %v2292
  %v2309 = vmul.f32 %v2293, %v2293
  %v2310 = vmul.f32 %v2294, %v2294
  %v2311 = vadd.f32 %v2306, %v2307
  %v2312 = vadd.f32 %v2311, %v2308
  %v2313 = vadd.f32 %v2312, %v2309
  %v2314 = vadd.f32 %v2313, %v2310
  %v2315 = vrot.slane %v2314, 4
  %v2316 = vadd.f32 %v2314, %v2315
  %v2317 = vrot.slane %v2316, 2
  %v2318 = vadd.f32 %v2316, %v2317
  %v2319 = vrot.slane %v2318, 1
  %v2320 = vadd.f32 %v2318, %v2319
  %v2321 = vmul.f32 %v2320, 0.03125
  %v2322 = vmul.f32 %v2305, %v2305
  %v2323 = vsub.f32 %v2321, %v2322
  %v2324 = vld [vmem:[%s2] sm:$0x1]
  %v2325 = vadd.f32 %v2323, 1e-05
  %v2326 = vrsqrt.pop %v2325
  %v2327 = vmul.f32 %v2324, %v2326
  %v2328 = vld [vmem:[%s3] sm:$0x1]
  %v2329 = vmul.f32 %v2305, %v2327
  %v2330 = vsub.f32 %v2328, %v2329
  %v2332 = vlaneseq
  %v2333 = vshrl.u32 %v2332, 7
  %v2334 = vsub.s32 0, %v2333
  %v2335 = vrot.slane %v2327, %v2334
  %v2337 = vmul.f32 %v2290, %v2335
  %v2338 = vmul.f32 %v2291, %v2335
  %v2339 = vmul.f32 %v2292, %v2335
  %v2340 = vmul.f32 %v2293, %v2335
  %v2341 = vmul.f32 %v2294, %v2335
  %v2343 = vlaneseq
  %v2344 = vshrl.u32 %v2343, 7
  %v2345 = vsub.s32 0, %v2344
  %v2346 = vrot.slane %v2330, %v2345
  %v2348 = vadd.f32 %v2337, %v2346
  %v2349 = vadd.f32 %v2338, %v2346
  %v2350 = vadd.f32 %v2339, %v2346
  %v2351 = vadd.f32 %v2340, %v2346
  %v2352 = vadd.f32 %v2341, %v2346
  %v2353 = vmul.f32 %v2348, %v2268
  %v2354 = vmul.f32 %v2349, %v2273
  %v2355 = vmul.f32 %v2350, %v2278
  %v2356 = vmul.f32 %v2351, %v2283
  %v2357 = vmul.f32 %v2352, %v2288
  %2358 = vst [vmem:[%s5] sm:$0x3] 0.0
  %2359 = vst [vmem:[%s5 + $0x2] sm:$0xff] %v2353
  %2360 = vst [vmem:[%s5 + $0xa] sm:$0xff] %v2354
  %2361 = vst [vmem:[%s5 + $0x12] sm:$0xff] %v2355
  %2362 = vst [vmem:[%s5 + $0x1a] sm:$0xff] %v2356
  %2363 = vst [vmem:[%s5 + $0x22] sm:$0xff] %v2357
  %2364 = vst [vmem:[%s5 + $0x2a] sm:$0x3] 0.0
  // Predicated region
  $region22: #{_lambda_.9} parent=0 // pred_check
    _
  $region23: #{_lambda_.9} parent=0 // pred_check_branch
    %2366 = sbr.rel (0) target = $region25
  $region24: #{_lambda_.9} parent=0 // pred_region
    _
  $region25: #{_lambda_.9} parent=0 // pred_fallthru
    _
  // Predicated region
  $region26: #{_lambda_.9} parent=0 // pred_check
    _
  $region27: #{_lambda_.9} parent=0 // pred_check_branch
    %2368 = sbr.rel (0) target = $region29
  $region28: #{_lambda_.9} parent=0 // pred_region
    _
  $region29: #{_lambda_.9} parent=0 // pred_fallthru
    _

</llo_original>
